<compile_context>
chip_gen: v7x
topology: tpu7x:2x2x1
jax: 0.10.0
libtpu: 0.0.40
codegen_flags: <defaults>
</compile_context>

<pallas_src>
import functools
import math

import jax
import jax.numpy as jnp
from jax import lax
from jax.experimental import pallas as pl
from jax.experimental.pallas import tpu as pltpu

# ----------------------------------------------------------------------------
# Model configuration (small, synthetic-scale)
# ----------------------------------------------------------------------------
FPN_CH = 32
NUM_CLASSES = 3            # foreground classes (sigmoid classification)
ANCHOR_RATIOS = (0.5, 2.0)
NUM_ANCHORS = len(ANCHOR_RATIOS)
STRIDES = (2, 4, 8)        # strides of the 3 FPN levels for a 16x16 input
ANCHOR_SCALE = 4
LANE = 128                 # TPU lane width

# M-tile cap for the conv matmuls.  With K_pad <= 1152 and C_pad = 128 the
# double-buffered bf16 working set at tm=256 is ~1.5 MiB, comfortably inside
# the default scoped VMEM of every generation (16 MiB v5e, 32 MiB v6e/v7x,
# 64 MiB physical on v7x).  For real detector resolutions bump toward
# 512-1024 (v5e) / 1024-2048 (v6e, v7x) as the review suggests.
TM_CAP = 256
# Row tile for the gridded loss reduction ((ROW_TILE, 128) f32 per input).
ROW_TILE = 256


def _round_up(x, m):
    return ((x + m - 1) // m) * m


# ----------------------------------------------------------------------------
# Pallas kernels
# ----------------------------------------------------------------------------
def _matmul_bias_kernel(apply_relu, x_ref, w_ref, b_ref, o_ref):
    """One M-tile of im2col'ed conv: bf16 matmul (f32 acc) + bias (+ ReLU)."""
    acc = jnp.dot(x_ref[...], w_ref[...], preferred_element_type=jnp.float32)
    acc = acc + b_ref[...]                      # (1, C_pad) broadcasts
    if apply_relu:
        acc = jnp.maximum(acc, 0.0)
    o_ref[...] = acc.astype(o_ref.dtype)


def _matmul_conv(patches, w2, b2, relu, out_dtype=jnp.bfloat16):
    """(M, K_pad) x (K_pad, C_pad) matmul with an M-tiled, pipelined grid.

    K_pad / C_pad are already 128-lane multiples (weights prepped at init);
    M is padded here to a multiple of the tile (itself a multiple of 16 for
    bf16 sublane packing) so every store is an unmasked full vreg.
    """
    M, K_pad = patches.shape
    C_pad = w2.shape[1]
    tm = min(TM_CAP, _round_up(M, 16))
    M_pad = _round_up(M, tm)
    if M_pad != M:
        patches = jnp.pad(patches, ((0, M_pad - M), (0, 0)))
    grid_m = M_pad // tm

    out_bytes = M_pad * C_pad * jnp.dtype(out_dtype).itemsize
    cost = pl.CostEstimate(
        flops=2 * M_pad * K_pad * C_pad,
        transcendentals=0,
        bytes_accessed=2 * (M_pad * K_pad + K_pad * C_pad)
        + 4 * C_pad + out_bytes)

    out = pl.pallas_call(
        functools.partial(_matmul_bias_kernel, relu),
        grid_spec=pltpu.PrefetchScalarGridSpec(
            num_scalar_prefetch=0,
            grid=(grid_m,),
            in_specs=[
                pl.BlockSpec((tm, K_pad), lambda i: (i, 0)),
                pl.BlockSpec((K_pad, C_pad), lambda i: (0, 0)),  # resident W
                pl.BlockSpec((1, C_pad), lambda i: (0, 0)),      # resident b
            ],
            out_specs=pl.BlockSpec((tm, C_pad), lambda i: (i, 0))),
        out_shape=jax.ShapeDtypeStruct((M_pad, C_pad), out_dtype),
        compiler_params=pltpu.CompilerParams(
            dimension_semantics=("parallel",)),
        cost_estimate=cost,
    )(patches, w2, b2)
    if M_pad != M:
        out = out[:M]
    return out


def _im2col(x, KH, KW, stride):
    """SAME-padding im2col with the stride applied up front (no wasted rows).

    TODO(synk): still XLA glue; move into the kernel via halo DMA + shifted
    pl.ds slices (or a 9-tap accumulation) to cut HBM read traffic ~9x.
    """
    N, H, W, C = x.shape
    Ho, Wo = -(-H // stride), -(-W // stride)
    if KH == 1 and KW == 1 and stride == 1:
        return x.reshape(N * H * W, C), Ho, Wo
    ph, pw = KH // 2, KW // 2
    xp = jnp.pad(x, ((0, 0), (ph, ph), (pw, pw), (0, 0)))
    cols = []
    for kh in range(KH):
        for kw in range(KW):
            cols.append(lax.slice(
                xp, (0, kh, kw, 0),
                (N, kh + (Ho - 1) * stride + 1, kw + (Wo - 1) * stride + 1, C),
                (1, stride, stride, 1)))
    patches = jnp.concatenate(cols, axis=-1).reshape(N * Ho * Wo, KH * KW * C)
    return patches, Ho, Wo


def conv2d(x, layer, ksize, stride=1, relu=False, out_dtype=jnp.bfloat16):
    """SAME convolution on channel-padded NHWC bf16 activations.

    `layer` holds pre-padded / pre-cast (K_pad, C_pad) weights and (1, C_pad)
    bias built once at init.  Output stays channel-padded to 128.
    """
    N = x.shape[0]
    patches, Ho, Wo = _im2col(x, ksize, ksize, stride)
    K_w = layer["w2"].shape[0]
    if patches.shape[1] != K_w:               # only the 3-channel image input
        patches = jnp.pad(patches, ((0, 0), (0, K_w - patches.shape[1])))
    out = _matmul_conv(patches, layer["w2"], layer["b2"], relu, out_dtype)
    return out.reshape(N, Ho, Wo, layer["w2"].shape[1])


def conv2d_levels(feats, layer, ksize, relu, out_dtype=jnp.bfloat16):
    """Shared-weight SAME conv over several FPN levels.

    Every level (and the batch) is folded into the matmul M dimension so one
    tiled pallas_call covers a whole RetinaHead stage.
    """
    shapes = [f.shape for f in feats]
    patches = jnp.concatenate(
        [_im2col(f, ksize, ksize, 1)[0] for f in feats], axis=0)
    out = _matmul_conv(patches, layer["w2"], layer["b2"], relu, out_dtype)
    C_pad = layer["w2"].shape[1]
    outs, off = [], 0
    for (N, H, W, _) in shapes:
        m = N * H * W
        outs.append(out[off:off + m].reshape(N, H, W, C_pad))
        off += m
    return outs


def _loss_kernel(alpha, beta, cx_ref, ct_ref, cw_ref,
                 bp_ref, bt_ref, bw_ref, o_ref, acc_c, acc_b):
    """Sigmoid focal loss (gamma=2) + smooth-L1, gridded over row tiles.

    Per-lane partial sums are kept in VMEM scratch; the cross-lane reduction
    happens once in the finalize step.
    """
    step = pl.program_id(0)

    @pl.when(step == 0)
    def _():
        acc_c[...] = jnp.zeros_like(acc_c)
        acc_b[...] = jnp.zeros_like(acc_b)

    x = cx_ref[...]
    t = ct_ref[...]
    w = cw_ref[...]
    # numerically-stable sigmoid: exp on the EUP, approx reciprocal (no divide)
    e = jnp.exp(-jnp.abs(x))
    inv1pe = pl.reciprocal(1.0 + e, approx=True)
    p = jnp.where(x >= 0, inv1pe, e * inv1pe)
    pt = p * t + (1.0 - p) * (1.0 - t)
    bce = jnp.maximum(x, 0.0) - x * t + jnp.log(1.0 + e)
    alpha_t = alpha * t + (1.0 - alpha) * (1.0 - t)
    one_m_pt = 1.0 - pt
    focal = alpha_t * one_m_pt * one_m_pt * bce          # gamma == 2.0
    acc_c[...] += jnp.sum(focal * w, axis=0, keepdims=True)

    d = jnp.abs(bp_ref[...] - bt_ref[...])
    sl1 = jnp.where(d < beta, (0.5 / beta) * d * d, d - 0.5 * beta)
    acc_b[...] += jnp.sum(sl1 * bw_ref[...], axis=0, keepdims=True)

    @pl.when(step == pl.num_programs(0) - 1)
    def _():
        s_cls = jnp.sum(acc_c[...])
        s_box = jnp.sum(acc_b[...])
        lane = lax.broadcasted_iota(jnp.int32, o_ref.shape, 1)
        o_ref[...] = jnp.where(lane == 0, s_cls,
                               jnp.where(lane == 1, s_box, 0.0))


def focal_smoothl1_loss(cls_logits, cls_targets, label_weights,
                        bbox_preds, bbox_targets, bbox_weights, avg_factor,
                        alpha=0.25, beta=1.0 / 9.0):
    rows_c = pl.cdiv(cls_logits.size, LANE)
    rows_b = pl.cdiv(bbox_preds.size, LANE)
    max_rows = max(rows_c, rows_b)
    tr = min(ROW_TILE, _round_up(max_rows, 8))
    tiles = pl.cdiv(max_rows, tr)
    rows_pad = tiles * tr

    def lane_pack(a):
        v = a.reshape(-1).astype(jnp.float32)
        v = jnp.pad(v, (0, rows_pad * LANE - v.shape[0]))
        return v.reshape(rows_pad, LANE)

    cx = lane_pack(cls_logits)
    ct = lane_pack(cls_targets)
    cw = lane_pack(jnp.broadcast_to(label_weights, cls_logits.shape))
    bp = lane_pack(bbox_preds)
    bt = lane_pack(bbox_targets)
    bw = lane_pack(bbox_weights)

    cost = pl.CostEstimate(
        flops=40 * rows_pad * LANE,
        transcendentals=3 * rows_pad * LANE,
        bytes_accessed=6 * rows_pad * LANE * 4 + LANE * 4)

    out = pl.pallas_call(
        functools.partial(_loss_kernel, alpha, beta),
        grid_spec=pltpu.PrefetchScalarGridSpec(
            num_scalar_prefetch=0,
            grid=(tiles,),
            in_specs=[pl.BlockSpec((tr, LANE), lambda i: (i, 0))
                      for _ in range(6)],
            out_specs=pl.BlockSpec((1, LANE), lambda i: (0, 0)),
            scratch_shapes=[pltpu.VMEM((1, LANE), jnp.float32),
                            pltpu.VMEM((1, LANE), jnp.float32)]),
        out_shape=jax.ShapeDtypeStruct((1, LANE), jnp.float32),
        compiler_params=pltpu.CompilerParams(
            dimension_semantics=("arbitrary",)),
        cost_estimate=cost,
    )(cx, ct, cw, bp, bt, bw)

    inv_avg = 1.0 / avg_factor
    return out[0, 0] * inv_avg, out[0, 1] * inv_avg


# ----------------------------------------------------------------------------
# Parameters (deterministic synthetic init) + one-time weight preparation
# ----------------------------------------------------------------------------
def _init_conv(key, kh, kw, cin, cout, bias=0.0):
    scale = 1.0 / math.sqrt(kh * kw * cin)
    w = jax.random.normal(key, (kh, kw, cin, cout), jnp.float32) * scale
    b = jnp.full((cout,), bias, jnp.float32)
    return {"w": w, "b": b}


def init_params(key):
    ks = jax.random.split(key, 16)
    p = {}
    # mini-ResNet backbone
    p["bb_conv1"] = _init_conv(ks[0], 3, 3, 3, 16)
    p["bb_conv2"] = _init_conv(ks[1], 3, 3, 16, 32)
    p["bb_conv3"] = _init_conv(ks[2], 3, 3, 32, 64)
    p["bb_conv4"] = _init_conv(ks[3], 3, 3, 64, 128)
    # FPN neck
    p["fpn_lat2"] = _init_conv(ks[4], 1, 1, 32, FPN_CH)
    p["fpn_lat3"] = _init_conv(ks[5], 1, 1, 64, FPN_CH)
    p["fpn_lat4"] = _init_conv(ks[6], 1, 1, 128, FPN_CH)
    p["fpn_out2"] = _init_conv(ks[7], 3, 3, FPN_CH, FPN_CH)
    p["fpn_out3"] = _init_conv(ks[8], 3, 3, FPN_CH, FPN_CH)
    p["fpn_out4"] = _init_conv(ks[9], 3, 3, FPN_CH, FPN_CH)
    # RetinaHead (params shared across levels)
    p["cls_conv0"] = _init_conv(ks[10], 3, 3, FPN_CH, FPN_CH)
    p["cls_conv1"] = _init_conv(ks[11], 3, 3, FPN_CH, FPN_CH)
    p["reg_conv0"] = _init_conv(ks[12], 3, 3, FPN_CH, FPN_CH)
    p["reg_conv1"] = _init_conv(ks[13], 3, 3, FPN_CH, FPN_CH)
    prior_bias = -math.log((1.0 - 0.01) / 0.01)
    p["retina_cls"] = _init_conv(ks[14], 3, 3, FPN_CH,
                                 NUM_ANCHORS * NUM_CLASSES, bias=prior_bias)
    p["retina_reg"] = _init_conv(ks[15], 3, 3, FPN_CH, NUM_ANCHORS * 4)
    return p


def _prep_conv(w, b, cin_pad):
    """Pad Cin -> cin_pad (zero rows), flatten taps, pad K & Cout to 128,
    cast the matmul operand to bf16.  Runs once at init, not per step."""
    KH, KW, Cin, Cout = w.shape
    if cin_pad > Cin:
        w = jnp.pad(w, ((0, 0), (0, 0), (0, cin_pad - Cin), (0, 0)))
    K = KH * KW * cin_pad
    K_pad = _round_up(K, LANE)
    C_pad = _round_up(Cout, LANE)
    w2 = w.reshape(K, Cout)
    if K_pad != K:
        w2 = jnp.pad(w2, ((0, K_pad - K), (0, 0)))
    if C_pad != Cout:
        w2 = jnp.pad(w2, ((0, 0), (0, C_pad - Cout)))
        b = jnp.pad(b, (0, C_pad - Cout))
    return {"w2": w2.astype(jnp.bfloat16),
            "b2": b.reshape(1, C_pad).astype(jnp.float32)}


def prepare_params(raw):
    """Hoisted weight prep: bf16 cast, 128-padding, and the RetinaHead
    cls|reg concat / block-diagonal fusion, all done once."""
    p = {}
    p["bb_conv1"] = _prep_conv(raw["bb_conv1"]["w"], raw["bb_conv1"]["b"],
                               cin_pad=3)           # true image channels
    for name in ("bb_conv2", "bb_conv3", "bb_conv4",
                 "fpn_lat2", "fpn_lat3", "fpn_lat4",
                 "fpn_out2", "fpn_out3", "fpn_out4"):
        p[name] = _prep_conv(raw[name]["w"], raw[name]["b"], cin_pad=LANE)

    nc = NUM_ANCHORS * NUM_CLASSES
    nr = NUM_ANCHORS * 4

    # head stage 0: 32 -> 64 ([cls | reg] concatenated along Cout)
    w0 = jnp.concatenate([raw["cls_conv0"]["w"], raw["reg_conv0"]["w"]], -1)
    b0 = jnp.concatenate([raw["cls_conv0"]["b"], raw["reg_conv0"]["b"]], 0)

    # head stage 1: 64 -> 64, block-diagonal over [cls | reg] channels
    wc1, wr1 = raw["cls_conv1"]["w"], raw["reg_conv1"]["w"]
    z32 = jnp.zeros_like(wc1)
    w1 = jnp.concatenate([jnp.concatenate([wc1, z32], -1),
                          jnp.concatenate([z32, wr1], -1)], axis=2)
    b1 = jnp.concatenate([raw["cls_conv1"]["b"], raw["reg_conv1"]["b"]], 0)

    # head stage 2: 64 -> (6 + 8), block-diagonal
    wcls, wreg = raw["retina_cls"]["w"], raw["retina_reg"]["w"]
    zc = jnp.zeros((3, 3, FPN_CH, nr), jnp.float32)
    zr = jnp.zeros((3, 3, FPN_CH, nc), jnp.float32)
    w2 = jnp.concatenate([jnp.concatenate([wcls, zc], -1),
                          jnp.concatenate([zr, wreg], -1)], axis=2)
    b2 = jnp.concatenate([raw["retina_cls"]["b"], raw["retina_reg"]["b"]], 0)

    p["head_s0"] = _prep_conv(w0, b0, cin_pad=LANE)
    p["head_s1"] = _prep_conv(w1, b1, cin_pad=LANE)
    p["head_s2"] = _prep_conv(w2, b2, cin_pad=LANE)
    return p


# ----------------------------------------------------------------------------
# backbone / neck / head
# ----------------------------------------------------------------------------
def backbone(p, x):
    c1 = conv2d(x, p["bb_conv1"], ksize=3, relu=True)
    c2 = conv2d(c1, p["bb_conv2"], ksize=3, stride=2, relu=True)
    c3 = conv2d(c2, p["bb_conv3"], ksize=3, stride=2, relu=True)
    c4 = conv2d(c3, p["bb_conv4"], ksize=3, stride=2, relu=True)
    return c2, c3, c4


def upsample2(x):
    # TODO(synk): nearest-neighbor upsample + FPN add still runs as XLA glue
    # between pallas_calls; fusing it into the lateral conv output is a
    # follow-up.
    return jnp.repeat(jnp.repeat(x, 2, axis=1), 2, axis=2)


def neck(p, feats):
    c2, c3, c4 = feats
    m4 = conv2d(c4, p["fpn_lat4"], ksize=1)
    m3 = conv2d(c3, p["fpn_lat3"], ksize=1) + upsample2(m4)
    m2 = conv2d(c2, p["fpn_lat2"], ksize=1) + upsample2(m3)
    p2 = conv2d(m2, p["fpn_out2"], ksize=3)
    p3 = conv2d(m3, p["fpn_out3"], ksize=3)
    p4 = conv2d(m4, p["fpn_out4"], ksize=3)
    return p2, p3, p4


def bbox_head(p, feats):
    """RetinaHead with cls / reg branches fused per stage and all three FPN
    levels folded into one tiled pallas_call per stage (shared weights).
    The fused block-diagonal weights were built once in prepare_params."""
    nc = NUM_ANCHORS * NUM_CLASSES
    nr = NUM_ANCHORS * 4
    h0 = conv2d_levels(list(feats), p["head_s0"], ksize=3, relu=True)
    h1 = conv2d_levels(h0, p["head_s1"], ksize=3, relu=True)
    # final stage in f32 so the logits feeding the loss are not bf16-rounded
    h2 = conv2d_levels(h1, p["head_s2"], ksize=3, relu=False,
                       out_dtype=jnp.float32)
    cls_scores = [h[..., :nc] for h in h2]
    bbox_preds = [h[..., nc:nc + nr] for h in h2]
    return cls_scores, bbox_preds


# ----------------------------------------------------------------------------
# anchors, target assignment (plain-JAX glue), loss
# ----------------------------------------------------------------------------
def gen_level_anchors(H, W, stride):
    base = stride * ANCHOR_SCALE
    ys, xs = jnp.meshgrid(jnp.arange(H, dtype=jnp.float32),
                          jnp.arange(W, dtype=jnp.float32), indexing="ij")
    cx = (xs.reshape(-1) + 0.5) * stride
    cy = (ys.reshape(-1) + 0.5) * stride
    per_ratio = []
    for r in ANCHOR_RATIOS:
        w = base / math.sqrt(r)
        h = base * math.sqrt(r)
        per_ratio.append(jnp.stack(
            [cx - w / 2, cy - h / 2, cx + w / 2, cy + h / 2], axis=-1))
    return jnp.stack(per_ratio, axis=1).reshape(-1, 4)   # (H*W*A, 4)


def box_iou(a, b):
    area_a = (a[:, 2] - a[:, 0]) * (a[:, 3] - a[:, 1])
    area_b = (b[:, 2] - b[:, 0]) * (b[:, 3] - b[:, 1])
    lt = jnp.maximum(a[:, None, :2], b[None, :, :2])
    rb = jnp.minimum(a[:, None, 2:], b[None, :, 2:])
    wh = jnp.clip(rb - lt, 0.0)
    inter = wh[..., 0] * wh[..., 1]
    return inter / (area_a[:, None] + area_b[None, :] - inter + 1e-6)


def bbox2delta(anchors, gt):
    aw = anchors[:, 2] - anchors[:, 0]
    ah = anchors[:, 3] - anchors[:, 1]
    ax = (anchors[:, 0] + anchors[:, 2]) * 0.5
    ay = (anchors[:, 1] + anchors[:, 3]) * 0.5
    gw = gt[:, 2] - gt[:, 0]
    gh = gt[:, 3] - gt[:, 1]
    gx = (gt[:, 0] + gt[:, 2]) * 0.5
    gy = (gt[:, 1] + gt[:, 3]) * 0.5
    return jnp.stack([(gx - ax) / aw, (gy - ay) / ah,
                      jnp.log(gw / aw), jnp.log(gh / ah)], axis=-1)


def build_targets(anchors, gt_bboxes, gt_labels, pos_thr=0.5, neg_thr=0.4):
    # TODO(synk): simplified max-IoU assigner (no force-match of each gt to its
    # best anchor, no random sampler); target building is plain-JAX glue.
    ious = box_iou(anchors, gt_bboxes)               # (A, G)
    max_iou = ious.max(axis=1)
    gi = ious.argmax(axis=1)
    pos = max_iou >= pos_thr
    neg = max_iou < neg_thr
    labels = jnp.where(pos, gt_labels[gi], 0)
    cls_t = jax.nn.one_hot(labels - 1, NUM_CLASSES, dtype=jnp.float32)
    cls_t = cls_t * pos[:, None].astype(jnp.float32)
    label_w = (pos | neg).astype(jnp.float32)[:, None]
    bw = pos[:, None].astype(jnp.float32) * jnp.ones((1, 4), jnp.float32)
    btgt = bbox2delta(anchors, gt_bboxes[gi]) * bw
    return cls_t, label_w, btgt, bw, pos.astype(jnp.float32)


def retina_loss(cls_scores, bbox_preds, gt_bboxes, gt_labels):
    N = cls_scores[0].shape[0]
    anchors = jnp.concatenate(
        [gen_level_anchors(c.shape[1], c.shape[2], s)
         for c, s in zip(cls_scores, STRIDES)], axis=0)
    cls_flat = jnp.concatenate(
        [c.reshape(N, -1, NUM_CLASSES).astype(jnp.float32)
         for c in cls_scores], axis=1)
    reg_flat = jnp.concatenate(
        [r.reshape(N, -1, 4).astype(jnp.float32) for r in bbox_preds], axis=1)

    cls_ts, lws, bts, bws, poss = [], [], [], [], []
    for i in range(N):
        ct, lw, bt, bw, pos = build_targets(anchors, gt_bboxes[i], gt_labels[i])
        cls_ts.append(ct); lws.append(lw); bts.append(bt)
        bws.append(bw); poss.append(pos)
    cls_t = jnp.stack(cls_ts).reshape(-1, NUM_CLASSES)
    lw = jnp.stack(lws).reshape(-1, 1)
    bt = jnp.stack(bts).reshape(-1, 4)
    bw = jnp.stack(bws).reshape(-1, 4)
    num_pos = jnp.sum(jnp.stack(poss))
    avg = jnp.maximum(num_pos, 1.0)

    loss_cls, loss_bbox = focal_smoothl1_loss(
        cls_flat.reshape(-1, NUM_CLASSES), cls_t, lw,
        reg_flat.reshape(-1, 4), bt, bw, avg)
    return {"loss_cls": loss_cls, "loss_bbox": loss_bbox}


# ----------------------------------------------------------------------------
# RetinaNet.forward == forward_train
# ----------------------------------------------------------------------------
def retinanet_forward(params, img, img_metas, gt_bboxes, gt_labels):
    # img arrives NCHW (PyTorch convention); kernels run in NHWC bf16 with
    # 128-lane channel padding carried end-to-end.
    x = jnp.transpose(img, (0, 2, 3, 1)).astype(jnp.bfloat16)
    feats = backbone(params, x)                          # extract_feat: backbone
    feats = neck(params, feats)                          # extract_feat: neck
    cls_scores, bbox_preds = bbox_head(params, feats)    # bbox_head(x)
    return retina_loss(cls_scores, bbox_preds, gt_bboxes, gt_labels)


if __name__ == "__main__":
    key = jax.random.PRNGKey(0)
    kp, ki = jax.random.split(key)
    params = prepare_params(init_params(kp))   # weight prep hoisted out of step

    img = jax.random.normal(ki, (2, 3, 16, 16), jnp.float32)   # NCHW
    gt_bboxes = jnp.array([[[2.0, 2.0, 10.0, 12.0],
                            [5.0, 4.0, 14.0, 15.0]],
                           [[1.0, 3.0, 8.0, 9.0],
                            [6.0, 6.0, 15.0, 14.0]]], jnp.float32)
    gt_labels = jnp.array([[1, 2], [3, 1]], jnp.int32)
    img_metas = [{"img_shape": (16, 16, 3)}, {"img_shape": (16, 16, 3)}]

    fwd = jax.jit(lambda p, im, gb, gl:
                  retinanet_forward(p, im, img_metas, gb, gl))
    losses = fwd(params, img, gt_bboxes, gt_labels)
    jax.block_until_ready(losses)
    print("KERNEL_OK")
</pallas_src>

<mosaic_0001>
module attributes {stable_mosaic.version = 11 : i64} {
  func.func @_matmul_bias_kernel(%arg0: i32, %arg1: memref<256x128xbf16, #tpu.memory_space<vmem>>, %arg2: memref<128x128xbf16, #tpu.memory_space<vmem>>, %arg3: memref<1x128xf32, #tpu.memory_space<vmem>>, %arg4: memref<256x128xbf16, #tpu.memory_space<vmem>>) attributes {dimension_semantics = [#tpu.dimension_semantics<parallel>], iteration_bounds = array<i64: 2>, scalar_prefetch = 0 : i64, scratch_operands = 0 : i64, tpu.core_type = #tpu.core_type<tc>, window_params = [{transform_indices = @transform_0, window_bounds = array<i64: 256, 128>}, {pipeline_mode = #tpu.pipeline_mode<synchronous>, transform_indices = @transform_1, window_bounds = array<i64: 128, 128>}, {pipeline_mode = #tpu.pipeline_mode<synchronous>, transform_indices = @transform_2, window_bounds = array<i64: 1, 128>}, {transform_indices = @transform_3, window_bounds = array<i64: 256, 128>}]} {
    %c0 = arith.constant 0 : index
    %c0_0 = arith.constant 0 : index
    %0 = vector.load %arg1[%c0, %c0_0] : memref<256x128xbf16, #tpu.memory_space<vmem>>, vector<256x128xbf16>
    %c0_1 = arith.constant 0 : index
    %c0_2 = arith.constant 0 : index
    %1 = vector.load %arg2[%c0_1, %c0_2] : memref<128x128xbf16, #tpu.memory_space<vmem>>, vector<128x128xbf16>
    %cst = arith.constant dense<0.000000e+00> : vector<256x128xf32>
    %2 = tpu.matmul %0, %1, %cst {dimension_numbers = #tpu.dot_dimension_numbers<[1], [0], [0], [1], [0, 0, 1, 1], [], []>} : vector<256x128xbf16>, vector<128x128xbf16>, vector<256x128xf32> -> vector<256x128xf32>
    %c0_3 = arith.constant 0 : index
    %c0_4 = arith.constant 0 : index
    %3 = vector.load %arg3[%c0_3, %c0_4] : memref<1x128xf32, #tpu.memory_space<vmem>>, vector<1x128xf32>
    %4 = vector.broadcast %3 : vector<1x128xf32> to vector<256x128xf32>
    %5 = arith.addf %2, %4 : vector<256x128xf32>
    %cst_5 = arith.constant 0.000000e+00 : f32
    %6 = vector.broadcast %cst_5 : f32 to vector<256x128xf32>
    %7 = arith.maximumf %5, %6 : vector<256x128xf32>
    %8 = arith.truncf %7 : vector<256x128xf32> to vector<256x128xbf16>
    %c0_6 = arith.constant 0 : index
    %c0_7 = arith.constant 0 : index
    %9 = vector.load %arg4[%c0_6, %c0_7] : memref<256x128xbf16, #tpu.memory_space<vmem>>, vector<256x128xbf16>
    tpu.vector_store %arg4[%c0_6, %c0_7], %8 {strides = array<i32>} : memref<256x128xbf16, #tpu.memory_space<vmem>>, vector<256x128xbf16>,
    return
  }
  func.func @transform_0(%arg0: i32) -> (i32, i32) {
    %c0_i32 = arith.constant 0 : i32
    %c0_i32_0 = arith.constant 0 : i32
    return %arg0, %c0_i32 : i32, i32
  }
  func.func @transform_1(%arg0: i32) -> (i32, i32) {
    %c0_i32 = arith.constant 0 : i32
    %c0_i32_0 = arith.constant 0 : i32
    %c0_i32_1 = arith.constant 0 : i32
    return %c0_i32, %c0_i32_0 : i32, i32
  }
  func.func @transform_2(%arg0: i32) -> (i32, i32) {
    %c0_i32 = arith.constant 0 : i32
    %c0_i32_0 = arith.constant 0 : i32
    %c0_i32_1 = arith.constant 0 : i32
    return %c0_i32, %c0_i32_0 : i32, i32
  }
  func.func @transform_3(%arg0: i32) -> (i32, i32) {
    %c0_i32 = arith.constant 0 : i32
    %c0_i32_0 = arith.constant 0 : i32
    return %arg0, %c0_i32 : i32, i32
  }
}

module attributes {stable_mosaic.version = 11 : i64} {
  func.func @_matmul_bias_kernel(%arg0: i32, %arg1: memref<128x1152xbf16, #tpu.memory_space<vmem>>, %arg2: memref<1152x128xbf16, #tpu.memory_space<vmem>>, %arg3: memref<1x128xf32, #tpu.memory_space<vmem>>, %arg4: memref<128x128xbf16, #tpu.memory_space<vmem>>) attributes {dimension_semantics = [#tpu.dimension_semantics<parallel>], iteration_bounds = array<i64: 1>, scalar_prefetch = 0 : i64, scratch_operands = 0 : i64, tpu.core_type = #tpu.core_type<tc>, window_params = [{transform_indices = @transform_0, window_bounds = array<i64: 128, 1152>}, {pipeline_mode = #tpu.pipeline_mode<synchronous>, transform_indices = @transform_1, window_bounds = array<i64: 1152, 128>}, {pipeline_mode = #tpu.pipeline_mode<synchronous>, transform_indices = @transform_2, window_bounds = array<i64: 1, 128>}, {transform_indices = @transform_3, window_bounds = array<i64: 128, 128>}]} {
    %c0 = arith.constant 0 : index
    %c0_0 = arith.constant 0 : index
    %0 = vector.load %arg1[%c0, %c0_0] : memref<128x1152xbf16, #tpu.memory_space<vmem>>, vector<128x1152xbf16>
    %c0_1 = arith.constant 0 : index
    %c0_2 = arith.constant 0 : index
    %1 = vector.load %arg2[%c0_1, %c0_2] : memref<1152x128xbf16, #tpu.memory_space<vmem>>, vector<1152x128xbf16>
    %cst = arith.constant dense<0.000000e+00> : vector<128x128xf32>
    %2 = tpu.matmul %0, %1, %cst {dimension_numbers = #tpu.dot_dimension_numbers<[1], [0], [0], [1], [0, 0, 1, 1], [], []>} : vector<128x1152xbf16>, vector<1152x128xbf16>, vector<128x128xf32> -> vector<128x128xf32>
    %c0_3 = arith.constant 0 : index
    %c0_4 = arith.constant 0 : index
    %3 = vector.load %arg3[%c0_3, %c0_4] : memref<1x128xf32, #tpu.memory_space<vmem>>, vector<1x128xf32>
    %4 = vector.broadcast %3 : vector<1x128xf32> to vector<128x128xf32>
    %5 = arith.addf %2, %4 : vector<128x128xf32>
    %cst_5 = arith.constant 0.000000e+00 : f32
    %6 = vector.broadcast %cst_5 : f32 to vector<128x128xf32>
    %7 = arith.maximumf %5, %6 : vector<128x128xf32>
    %8 = arith.truncf %7 : vector<128x128xf32> to vector<128x128xbf16>
    %c0_6 = arith.constant 0 : index
    %c0_7 = arith.constant 0 : index
    %9 = vector.load %arg4[%c0_6, %c0_7] : memref<128x128xbf16, #tpu.memory_space<vmem>>, vector<128x128xbf16>
    tpu.vector_store %arg4[%c0_6, %c0_7], %8 {strides = array<i32>} : memref<128x128xbf16, #tpu.memory_space<vmem>>, vector<128x128xbf16>,
    return
  }
  func.func @transform_0(%arg0: i32) -> (i32, i32) {
    %c0_i32 = arith.constant 0 : i32
    %c0_i32_0 = arith.constant 0 : i32
    return %arg0, %c0_i32 : i32, i32
  }
  func.func @transform_1(%arg0: i32) -> (i32, i32) {
    %c0_i32 = arith.constant 0 : i32
    %c0_i32_0 = arith.constant 0 : i32
    %c0_i32_1 = arith.constant 0 : i32
    return %c0_i32, %c0_i32_0 : i32, i32
  }
  func.func @transform_2(%arg0: i32) -> (i32, i32) {
    %c0_i32 = arith.constant 0 : i32
    %c0_i32_0 = arith.constant 0 : i32
    %c0_i32_1 = arith.constant 0 : i32
    return %c0_i32, %c0_i32_0 : i32, i32
  }
  func.func @transform_3(%arg0: i32) -> (i32, i32) {
    %c0_i32 = arith.constant 0 : i32
    %c0_i32_0 = arith.constant 0 : i32
    return %arg0, %c0_i32 : i32, i32
  }
}

module attributes {stable_mosaic.version = 11 : i64} {
  func.func @_matmul_bias_kernel(%arg0: i32, %arg1: memref<32x1152xbf16, #tpu.memory_space<vmem>>, %arg2: memref<1152x128xbf16, #tpu.memory_space<vmem>>, %arg3: memref<1x128xf32, #tpu.memory_space<vmem>>, %arg4: memref<32x128xbf16, #tpu.memory_space<vmem>>) attributes {dimension_semantics = [#tpu.dimension_semantics<parallel>], iteration_bounds = array<i64: 1>, scalar_prefetch = 0 : i64, scratch_operands = 0 : i64, tpu.core_type = #tpu.core_type<tc>, window_params = [{transform_indices = @transform_0, window_bounds = array<i64: 32, 1152>}, {pipeline_mode = #tpu.pipeline_mode<synchronous>, transform_indices = @transform_1, window_bounds = array<i64: 1152, 128>}, {pipeline_mode = #tpu.pipeline_mode<synchronous>, transform_indices = @transform_2, window_bounds = array<i64: 1, 128>}, {transform_indices = @transform_3, window_bounds = array<i64: 32, 128>}]} {
    %c0 = arith.constant 0 : index
    %c0_0 = arith.constant 0 : index
    %0 = vector.load %arg1[%c0, %c0_0] : memref<32x1152xbf16, #tpu.memory_space<vmem>>, vector<32x1152xbf16>
    %c0_1 = arith.constant 0 : index
    %c0_2 = arith.constant 0 : index
    %1 = vector.load %arg2[%c0_1, %c0_2] : memref<1152x128xbf16, #tpu.memory_space<vmem>>, vector<1152x128xbf16>
    %cst = arith.constant dense<0.000000e+00> : vector<32x128xf32>
    %2 = tpu.matmul %0, %1, %cst {dimension_numbers = #tpu.dot_dimension_numbers<[1], [0], [0], [1], [0, 0, 1, 1], [], []>} : vector<32x1152xbf16>, vector<1152x128xbf16>, vector<32x128xf32> -> vector<32x128xf32>
    %c0_3 = arith.constant 0 : index
    %c0_4 = arith.constant 0 : index
    %3 = vector.load %arg3[%c0_3, %c0_4] : memref<1x128xf32, #tpu.memory_space<vmem>>, vector<1x128xf32>
    %4 = vector.broadcast %3 : vector<1x128xf32> to vector<32x128xf32>
    %5 = arith.addf %2, %4 : vector<32x128xf32>
    %cst_5 = arith.constant 0.000000e+00 : f32
    %6 = vector.broadcast %cst_5 : f32 to vector<32x128xf32>
    %7 = arith.maximumf %5, %6 : vector<32x128xf32>
    %8 = arith.truncf %7 : vector<32x128xf32> to vector<32x128xbf16>
    %c0_6 = arith.constant 0 : index
    %c0_7 = arith.constant 0 : index
    %9 = vector.load %arg4[%c0_6, %c0_7] : memref<32x128xbf16, #tpu.memory_space<vmem>>, vector<32x128xbf16>
    tpu.vector_store %arg4[%c0_6, %c0_7], %8 {strides = array<i32>} : memref<32x128xbf16, #tpu.memory_space<vmem>>, vector<32x128xbf16>,
    return
  }
  func.func @transform_0(%arg0: i32) -> (i32, i32) {
    %c0_i32 = arith.constant 0 : i32
    %c0_i32_0 = arith.constant 0 : i32
    return %arg0, %c0_i32 : i32, i32
  }
  func.func @transform_1(%arg0: i32) -> (i32, i32) {
    %c0_i32 = arith.constant 0 : i32
    %c0_i32_0 = arith.constant 0 : i32
    %c0_i32_1 = arith.constant 0 : i32
    return %c0_i32, %c0_i32_0 : i32, i32
  }
  func.func @transform_2(%arg0: i32) -> (i32, i32) {
    %c0_i32 = arith.constant 0 : i32
    %c0_i32_0 = arith.constant 0 : i32
    %c0_i32_1 = arith.constant 0 : i32
    return %c0_i32, %c0_i32_0 : i32, i32
  }
  func.func @transform_3(%arg0: i32) -> (i32, i32) {
    %c0_i32 = arith.constant 0 : i32
    %c0_i32_0 = arith.constant 0 : i32
    return %arg0, %c0_i32 : i32, i32
  }
}

module attributes {stable_mosaic.version = 11 : i64} {
  func.func @_matmul_bias_kernel(%arg0: i32, %arg1: memref<16x128xbf16, #tpu.memory_space<vmem>>, %arg2: memref<128x128xbf16, #tpu.memory_space<vmem>>, %arg3: memref<1x128xf32, #tpu.memory_space<vmem>>, %arg4: memref<16x128xbf16, #tpu.memory_space<vmem>>) attributes {dimension_semantics = [#tpu.dimension_semantics<parallel>], iteration_bounds = array<i64: 1>, scalar_prefetch = 0 : i64, scratch_operands = 0 : i64, tpu.core_type = #tpu.core_type<tc>, window_params = [{transform_indices = @transform_0, window_bounds = array<i64: 16, 128>}, {pipeline_mode = #tpu.pipeline_mode<synchronous>, transform_indices = @transform_1, window_bounds = array<i64: 128, 128>}, {pipeline_mode = #tpu.pipeline_mode<synchronous>, transform_indices = @transform_2, window_bounds = array<i64: 1, 128>}, {transform_indices = @transform_3, window_bounds = array<i64: 16, 128>}]} {
    %c0 = arith.constant 0 : index
    %c0_0 = arith.constant 0 : index
    %0 = vector.load %arg1[%c0, %c0_0] : memref<16x128xbf16, #tpu.memory_space<vmem>>, vector<16x128xbf16>
    %c0_1 = arith.constant 0 : index
    %c0_2 = arith.constant 0 : index
    %1 = vector.load %arg2[%c0_1, %c0_2] : memref<128x128xbf16, #tpu.memory_space<vmem>>, vector<128x128xbf16>
    %cst = arith.constant dense<0.000000e+00> : vector<16x128xf32>
    %2 = tpu.matmul %0, %1, %cst {dimension_numbers = #tpu.dot_dimension_numbers<[1], [0], [0], [1], [0, 0, 1, 1], [], []>} : vector<16x128xbf16>, vector<128x128xbf16>, vector<16x128xf32> -> vector<16x128xf32>
    %c0_3 = arith.constant 0 : index
    %c0_4 = arith.constant 0 : index
    %3 = vector.load %arg3[%c0_3, %c0_4] : memref<1x128xf32, #tpu.memory_space<vmem>>, vector<1x128xf32>
    %4 = vector.broadcast %3 : vector<1x128xf32> to vector<16x128xf32>
    %5 = arith.addf %2, %4 : vector<16x128xf32>
    %6 = arith.truncf %5 : vector<16x128xf32> to vector<16x128xbf16>
    %c0_5 = arith.constant 0 : index
    %c0_6 = arith.constant 0 : index
    %7 = vector.load %arg4[%c0_5, %c0_6] : memref<16x128xbf16, #tpu.memory_space<vmem>>, vector<16x128xbf16>
    tpu.vector_store %arg4[%c0_5, %c0_6], %6 {strides = array<i32>} : memref<16x128xbf16, #tpu.memory_space<vmem>>, vector<16x128xbf16>,
    return
  }
  func.func @transform_0(%arg0: i32) -> (i32, i32) {
    %c0_i32 = arith.constant 0 : i32
    %c0_i32_0 = arith.constant 0 : i32
    return %arg0, %c0_i32 : i32, i32
  }
  func.func @transform_1(%arg0: i32) -> (i32, i32) {
    %c0_i32 = arith.constant 0 : i32
    %c0_i32_0 = arith.constant 0 : i32
    %c0_i32_1 = arith.constant 0 : i32
    return %c0_i32, %c0_i32_0 : i32, i32
  }
  func.func @transform_2(%arg0: i32) -> (i32, i32) {
    %c0_i32 = arith.constant 0 : i32
    %c0_i32_0 = arith.constant 0 : i32
    %c0_i32_1 = arith.constant 0 : i32
    return %c0_i32, %c0_i32_0 : i32, i32
  }
  func.func @transform_3(%arg0: i32) -> (i32, i32) {
    %c0_i32 = arith.constant 0 : i32
    %c0_i32_0 = arith.constant 0 : i32
    return %arg0, %c0_i32 : i32, i32
  }
}

module attributes {stable_mosaic.version = 11 : i64} {
  func.func @_matmul_bias_kernel(%arg0: i32, %arg1: memref<16x1152xbf16, #tpu.memory_space<vmem>>, %arg2: memref<1152x128xbf16, #tpu.memory_space<vmem>>, %arg3: memref<1x128xf32, #tpu.memory_space<vmem>>, %arg4: memref<16x128xbf16, #tpu.memory_space<vmem>>) attributes {dimension_semantics = [#tpu.dimension_semantics<parallel>], iteration_bounds = array<i64: 1>, scalar_prefetch = 0 : i64, scratch_operands = 0 : i64, tpu.core_type = #tpu.core_type<tc>, window_params = [{transform_indices = @transform_0, window_bounds = array<i64: 16, 1152>}, {pipeline_mode = #tpu.pipeline_mode<synchronous>, transform_indices = @transform_1, window_bounds = array<i64: 1152, 128>}, {pipeline_mode = #tpu.pipeline_mode<synchronous>, transform_indices = @transform_2, window_bounds = array<i64: 1, 128>}, {transform_indices = @transform_3, window_bounds = array<i64: 16, 128>}]} {
    %c0 = arith.constant 0 : index
    %c0_0 = arith.constant 0 : index
    %0 = vector.load %arg1[%c0, %c0_0] : memref<16x1152xbf16, #tpu.memory_space<vmem>>, vector<16x1152xbf16>
    %c0_1 = arith.constant 0 : index
    %c0_2 = arith.constant 0 : index
    %1 = vector.load %arg2[%c0_1, %c0_2] : memref<1152x128xbf16, #tpu.memory_space<vmem>>, vector<1152x128xbf16>
    %cst = arith.constant dense<0.000000e+00> : vector<16x128xf32>
    %2 = tpu.matmul %0, %1, %cst {dimension_numbers = #tpu.dot_dimension_numbers<[1], [0], [0], [1], [0, 0, 1, 1], [], []>} : vector<16x1152xbf16>, vector<1152x128xbf16>, vector<16x128xf32> -> vector<16x128xf32>
    %c0_3 = arith.constant 0 : index
    %c0_4 = arith.constant 0 : index
    %3 = vector.load %arg3[%c0_3, %c0_4] : memref<1x128xf32, #tpu.memory_space<vmem>>, vector<1x128xf32>
    %4 = vector.broadcast %3 : vector<1x128xf32> to vector<16x128xf32>
    %5 = arith.addf %2, %4 : vector<16x128xf32>
    %cst_5 = arith.constant 0.000000e+00 : f32
    %6 = vector.broadcast %cst_5 : f32 to vector<16x128xf32>
    %7 = arith.maximumf %5, %6 : vector<16x128xf32>
    %8 = arith.truncf %7 : vector<16x128xf32> to vector<16x128xbf16>
    %c0_6 = arith.constant 0 : index
    %c0_7 = arith.constant 0 : index
    %9 = vector.load %arg4[%c0_6, %c0_7] : memref<16x128xbf16, #tpu.memory_space<vmem>>, vector<16x128xbf16>
    tpu.vector_store %arg4[%c0_6, %c0_7], %8 {strides = array<i32>} : memref<16x128xbf16, #tpu.memory_space<vmem>>, vector<16x128xbf16>,
    return
  }
  func.func @transform_0(%arg0: i32) -> (i32, i32) {
    %c0_i32 = arith.constant 0 : i32
    %c0_i32_0 = arith.constant 0 : i32
    return %arg0, %c0_i32 : i32, i32
  }
  func.func @transform_1(%arg0: i32) -> (i32, i32) {
    %c0_i32 = arith.constant 0 : i32
    %c0_i32_0 = arith.constant 0 : i32
    %c0_i32_1 = arith.constant 0 : i32
    return %c0_i32, %c0_i32_0 : i32, i32
  }
  func.func @transform_2(%arg0: i32) -> (i32, i32) {
    %c0_i32 = arith.constant 0 : i32
    %c0_i32_0 = arith.constant 0 : i32
    %c0_i32_1 = arith.constant 0 : i32
    return %c0_i32, %c0_i32_0 : i32, i32
  }
  func.func @transform_3(%arg0: i32) -> (i32, i32) {
    %c0_i32 = arith.constant 0 : i32
    %c0_i32_0 = arith.constant 0 : i32
    return %arg0, %c0_i32 : i32, i32
  }
}

module attributes {stable_mosaic.version = 11 : i64} {
  func.func @_matmul_bias_kernel(%arg0: i32, %arg1: memref<32x128xbf16, #tpu.memory_space<vmem>>, %arg2: memref<128x128xbf16, #tpu.memory_space<vmem>>, %arg3: memref<1x128xf32, #tpu.memory_space<vmem>>, %arg4: memref<32x128xbf16, #tpu.memory_space<vmem>>) attributes {dimension_semantics = [#tpu.dimension_semantics<parallel>], iteration_bounds = array<i64: 1>, scalar_prefetch = 0 : i64, scratch_operands = 0 : i64, tpu.core_type = #tpu.core_type<tc>, window_params = [{transform_indices = @transform_0, window_bounds = array<i64: 32, 128>}, {pipeline_mode = #tpu.pipeline_mode<synchronous>, transform_indices = @transform_1, window_bounds = array<i64: 128, 128>}, {pipeline_mode = #tpu.pipeline_mode<synchronous>, transform_indices = @transform_2, window_bounds = array<i64: 1, 128>}, {transform_indices = @transform_3, window_bounds = array<i64: 32, 128>}]} {
    %c0 = arith.constant 0 : index
    %c0_0 = arith.constant 0 : index
    %0 = vector.load %arg1[%c0, %c0_0] : memref<32x128xbf16, #tpu.memory_space<vmem>>, vector<32x128xbf16>
    %c0_1 = arith.constant 0 : index
    %c0_2 = arith.constant 0 : index
    %1 = vector.load %arg2[%c0_1, %c0_2] : memref<128x128xbf16, #tpu.memory_space<vmem>>, vector<128x128xbf16>
    %cst = arith.constant dense<0.000000e+00> : vector<32x128xf32>
    %2 = tpu.matmul %0, %1, %cst {dimension_numbers = #tpu.dot_dimension_numbers<[1], [0], [0], [1], [0, 0, 1, 1], [], []>} : vector<32x128xbf16>, vector<128x128xbf16>, vector<32x128xf32> -> vector<32x128xf32>
    %c0_3 = arith.constant 0 : index
    %c0_4 = arith.constant 0 : index
    %3 = vector.load %arg3[%c0_3, %c0_4] : memref<1x128xf32, #tpu.memory_space<vmem>>, vector<1x128xf32>
    %4 = vector.broadcast %3 : vector<1x128xf32> to vector<32x128xf32>
    %5 = arith.addf %2, %4 : vector<32x128xf32>
    %6 = arith.truncf %5 : vector<32x128xf32> to vector<32x128xbf16>
    %c0_5 = arith.constant 0 : index
    %c0_6 = arith.constant 0 : index
    %7 = vector.load %arg4[%c0_5, %c0_6] : memref<32x128xbf16, #tpu.memory_space<vmem>>, vector<32x128xbf16>
    tpu.vector_store %arg4[%c0_5, %c0_6], %6 {strides = array<i32>} : memref<32x128xbf16, #tpu.memory_space<vmem>>, vector<32x128xbf16>,
    return
  }
  func.func @transform_0(%arg0: i32) -> (i32, i32) {
    %c0_i32 = arith.constant 0 : i32
    %c0_i32_0 = arith.constant 0 : i32
    return %arg0, %c0_i32 : i32, i32
  }
  func.func @transform_1(%arg0: i32) -> (i32, i32) {
    %c0_i32 = arith.constant 0 : i32
    %c0_i32_0 = arith.constant 0 : i32
    %c0_i32_1 = arith.constant 0 : i32
    return %c0_i32, %c0_i32_0 : i32, i32
  }
  func.func @transform_2(%arg0: i32) -> (i32, i32) {
    %c0_i32 = arith.constant 0 : i32
    %c0_i32_0 = arith.constant 0 : i32
    %c0_i32_1 = arith.constant 0 : i32
    return %c0_i32, %c0_i32_0 : i32, i32
  }
  func.func @transform_3(%arg0: i32) -> (i32, i32) {
    %c0_i32 = arith.constant 0 : i32
    %c0_i32_0 = arith.constant 0 : i32
    return %arg0, %c0_i32 : i32, i32
  }
}

module attributes {stable_mosaic.version = 11 : i64} {
  func.func @_matmul_bias_kernel(%arg0: i32, %arg1: memref<128x128xbf16, #tpu.memory_space<vmem>>, %arg2: memref<128x128xbf16, #tpu.memory_space<vmem>>, %arg3: memref<1x128xf32, #tpu.memory_space<vmem>>, %arg4: memref<128x128xbf16, #tpu.memory_space<vmem>>) attributes {dimension_semantics = [#tpu.dimension_semantics<parallel>], iteration_bounds = array<i64: 1>, scalar_prefetch = 0 : i64, scratch_operands = 0 : i64, tpu.core_type = #tpu.core_type<tc>, window_params = [{transform_indices = @transform_0, window_bounds = array<i64: 128, 128>}, {pipeline_mode = #tpu.pipeline_mode<synchronous>, transform_indices = @transform_1, window_bounds = array<i64: 128, 128>}, {pipeline_mode = #tpu.pipeline_mode<synchronous>, transform_indices = @transform_2, window_bounds = array<i64: 1, 128>}, {transform_indices = @transform_3, window_bounds = array<i64: 128, 128>}]} {
    %c0 = arith.constant 0 : index
    %c0_0 = arith.constant 0 : index
    %0 = vector.load %arg1[%c0, %c0_0] : memref<128x128xbf16, #tpu.memory_space<vmem>>, vector<128x128xbf16>
    %c0_1 = arith.constant 0 : index
    %c0_2 = arith.constant 0 : index
    %1 = vector.load %arg2[%c0_1, %c0_2] : memref<128x128xbf16, #tpu.memory_space<vmem>>, vector<128x128xbf16>
    %cst = arith.constant dense<0.000000e+00> : vector<128x128xf32>
    %2 = tpu.matmul %0, %1, %cst {dimension_numbers = #tpu.dot_dimension_numbers<[1], [0], [0], [1], [0, 0, 1, 1], [], []>} : vector<128x128xbf16>, vector<128x128xbf16>, vector<128x128xf32> -> vector<128x128xf32>
    %c0_3 = arith.constant 0 : index
    %c0_4 = arith.constant 0 : index
    %3 = vector.load %arg3[%c0_3, %c0_4] : memref<1x128xf32, #tpu.memory_space<vmem>>, vector<1x128xf32>
    %4 = vector.broadcast %3 : vector<1x128xf32> to vector<128x128xf32>
    %5 = arith.addf %2, %4 : vector<128x128xf32>
    %6 = arith.truncf %5 : vector<128x128xf32> to vector<128x128xbf16>
    %c0_5 = arith.constant 0 : index
    %c0_6 = arith.constant 0 : index
    %7 = vector.load %arg4[%c0_5, %c0_6] : memref<128x128xbf16, #tpu.memory_space<vmem>>, vector<128x128xbf16>
    tpu.vector_store %arg4[%c0_5, %c0_6], %6 {strides = array<i32>} : memref<128x128xbf16, #tpu.memory_space<vmem>>, vector<128x128xbf16>,
    return
  }
  func.func @transform_0(%arg0: i32) -> (i32, i32) {
    %c0_i32 = arith.constant 0 : i32
    %c0_i32_0 = arith.constant 0 : i32
    return %arg0, %c0_i32 : i32, i32
  }
  func.func @transform_1(%arg0: i32) -> (i32, i32) {
    %c0_i32 = arith.constant 0 : i32
    %c0_i32_0 = arith.constant 0 : i32
    %c0_i32_1 = arith.constant 0 : i32
    return %c0_i32, %c0_i32_0 : i32, i32
  }
  func.func @transform_2(%arg0: i32) -> (i32, i32) {
    %c0_i32 = arith.constant 0 : i32
    %c0_i32_0 = arith.constant 0 : i32
    %c0_i32_1 = arith.constant 0 : i32
    return %c0_i32, %c0_i32_0 : i32, i32
  }
  func.func @transform_3(%arg0: i32) -> (i32, i32) {
    %c0_i32 = arith.constant 0 : i32
    %c0_i32_0 = arith.constant 0 : i32
    return %arg0, %c0_i32 : i32, i32
  }
}

module attributes {stable_mosaic.version = 11 : i64} {
  func.func @_matmul_bias_kernel(%arg0: i32, %arg1: memref<128x1152xbf16, #tpu.memory_space<vmem>>, %arg2: memref<1152x128xbf16, #tpu.memory_space<vmem>>, %arg3: memref<1x128xf32, #tpu.memory_space<vmem>>, %arg4: memref<128x128xbf16, #tpu.memory_space<vmem>>) attributes {dimension_semantics = [#tpu.dimension_semantics<parallel>], iteration_bounds = array<i64: 1>, scalar_prefetch = 0 : i64, scratch_operands = 0 : i64, tpu.core_type = #tpu.core_type<tc>, window_params = [{transform_indices = @transform_0, window_bounds = array<i64: 128, 1152>}, {pipeline_mode = #tpu.pipeline_mode<synchronous>, transform_indices = @transform_1, window_bounds = array<i64: 1152, 128>}, {pipeline_mode = #tpu.pipeline_mode<synchronous>, transform_indices = @transform_2, window_bounds = array<i64: 1, 128>}, {transform_indices = @transform_3, window_bounds = array<i64: 128, 128>}]} {
    %c0 = arith.constant 0 : index
    %c0_0 = arith.constant 0 : index
    %0 = vector.load %arg1[%c0, %c0_0] : memref<128x1152xbf16, #tpu.memory_space<vmem>>, vector<128x1152xbf16>
    %c0_1 = arith.constant 0 : index
    %c0_2 = arith.constant 0 : index
    %1 = vector.load %arg2[%c0_1, %c0_2] : memref<1152x128xbf16, #tpu.memory_space<vmem>>, vector<1152x128xbf16>
    %cst = arith.constant dense<0.000000e+00> : vector<128x128xf32>
    %2 = tpu.matmul %0, %1, %cst {dimension_numbers = #tpu.dot_dimension_numbers<[1], [0], [0], [1], [0, 0, 1, 1], [], []>} : vector<128x1152xbf16>, vector<1152x128xbf16>, vector<128x128xf32> -> vector<128x128xf32>
    %c0_3 = arith.constant 0 : index
    %c0_4 = arith.constant 0 : index
    %3 = vector.load %arg3[%c0_3, %c0_4] : memref<1x128xf32, #tpu.memory_space<vmem>>, vector<1x128xf32>
    %4 = vector.broadcast %3 : vector<1x128xf32> to vector<128x128xf32>
    %5 = arith.addf %2, %4 : vector<128x128xf32>
    %6 = arith.truncf %5 : vector<128x128xf32> to vector<128x128xbf16>
    %c0_5 = arith.constant 0 : index
    %c0_6 = arith.constant 0 : index
    %7 = vector.load %arg4[%c0_5, %c0_6] : memref<128x128xbf16, #tpu.memory_space<vmem>>, vector<128x128xbf16>
    tpu.vector_store %arg4[%c0_5, %c0_6], %6 {strides = array<i32>} : memref<128x128xbf16, #tpu.memory_space<vmem>>, vector<128x128xbf16>,
    return
  }
  func.func @transform_0(%arg0: i32) -> (i32, i32) {
    %c0_i32 = arith.constant 0 : i32
    %c0_i32_0 = arith.constant 0 : i32
    return %arg0, %c0_i32 : i32, i32
  }
  func.func @transform_1(%arg0: i32) -> (i32, i32) {
    %c0_i32 = arith.constant 0 : i32
    %c0_i32_0 = arith.constant 0 : i32
    %c0_i32_1 = arith.constant 0 : i32
    return %c0_i32, %c0_i32_0 : i32, i32
  }
  func.func @transform_2(%arg0: i32) -> (i32, i32) {
    %c0_i32 = arith.constant 0 : i32
    %c0_i32_0 = arith.constant 0 : i32
    %c0_i32_1 = arith.constant 0 : i32
    return %c0_i32, %c0_i32_0 : i32, i32
  }
  func.func @transform_3(%arg0: i32) -> (i32, i32) {
    %c0_i32 = arith.constant 0 : i32
    %c0_i32_0 = arith.constant 0 : i32
    return %arg0, %c0_i32 : i32, i32
  }
}

module attributes {stable_mosaic.version = 11 : i64} {
  func.func @_matmul_bias_kernel(%arg0: i32, %arg1: memref<32x1152xbf16, #tpu.memory_space<vmem>>, %arg2: memref<1152x128xbf16, #tpu.memory_space<vmem>>, %arg3: memref<1x128xf32, #tpu.memory_space<vmem>>, %arg4: memref<32x128xbf16, #tpu.memory_space<vmem>>) attributes {dimension_semantics = [#tpu.dimension_semantics<parallel>], iteration_bounds = array<i64: 1>, scalar_prefetch = 0 : i64, scratch_operands = 0 : i64, tpu.core_type = #tpu.core_type<tc>, window_params = [{transform_indices = @transform_0, window_bounds = array<i64: 32, 1152>}, {pipeline_mode = #tpu.pipeline_mode<synchronous>, transform_indices = @transform_1, window_bounds = array<i64: 1152, 128>}, {pipeline_mode = #tpu.pipeline_mode<synchronous>, transform_indices = @transform_2, window_bounds = array<i64: 1, 128>}, {transform_indices = @transform_3, window_bounds = array<i64: 32, 128>}]} {
    %c0 = arith.constant 0 : index
    %c0_0 = arith.constant 0 : index
    %0 = vector.load %arg1[%c0, %c0_0] : memref<32x1152xbf16, #tpu.memory_space<vmem>>, vector<32x1152xbf16>
    %c0_1 = arith.constant 0 : index
    %c0_2 = arith.constant 0 : index
    %1 = vector.load %arg2[%c0_1, %c0_2] : memref<1152x128xbf16, #tpu.memory_space<vmem>>, vector<1152x128xbf16>
    %cst = arith.constant dense<0.000000e+00> : vector<32x128xf32>
    %2 = tpu.matmul %0, %1, %cst {dimension_numbers = #tpu.dot_dimension_numbers<[1], [0], [0], [1], [0, 0, 1, 1], [], []>} : vector<32x1152xbf16>, vector<1152x128xbf16>, vector<32x128xf32> -> vector<32x128xf32>
    %c0_3 = arith.constant 0 : index
    %c0_4 = arith.constant 0 : index
    %3 = vector.load %arg3[%c0_3, %c0_4] : memref<1x128xf32, #tpu.memory_space<vmem>>, vector<1x128xf32>
    %4 = vector.broadcast %3 : vector<1x128xf32> to vector<32x128xf32>
    %5 = arith.addf %2, %4 : vector<32x128xf32>
    %6 = arith.truncf %5 : vector<32x128xf32> to vector<32x128xbf16>
    %c0_5 = arith.constant 0 : index
    %c0_6 = arith.constant 0 : index
    %7 = vector.load %arg4[%c0_5, %c0_6] : memref<32x128xbf16, #tpu.memory_space<vmem>>, vector<32x128xbf16>
    tpu.vector_store %arg4[%c0_5, %c0_6], %6 {strides = array<i32>} : memref<32x128xbf16, #tpu.memory_space<vmem>>, vector<32x128xbf16>,
    return
  }
  func.func @transform_0(%arg0: i32) -> (i32, i32) {
    %c0_i32 = arith.constant 0 : i32
    %c0_i32_0 = arith.constant 0 : i32
    return %arg0, %c0_i32 : i32, i32
  }
  func.func @transform_1(%arg0: i32) -> (i32, i32) {
    %c0_i32 = arith.constant 0 : i32
    %c0_i32_0 = arith.constant 0 : i32
    %c0_i32_1 = arith.constant 0 : i32
    return %c0_i32, %c0_i32_0 : i32, i32
  }
  func.func @transform_2(%arg0: i32) -> (i32, i32) {
    %c0_i32 = arith.constant 0 : i32
    %c0_i32_0 = arith.constant 0 : i32
    %c0_i32_1 = arith.constant 0 : i32
    return %c0_i32, %c0_i32_0 : i32, i32
  }
  func.func @transform_3(%arg0: i32) -> (i32, i32) {
    %c0_i32 = arith.constant 0 : i32
    %c0_i32_0 = arith.constant 0 : i32
    return %arg0, %c0_i32 : i32, i32
  }
}

module attributes {stable_mosaic.version = 11 : i64} {
  func.func @_matmul_bias_kernel(%arg0: i32, %arg1: memref<16x1152xbf16, #tpu.memory_space<vmem>>, %arg2: memref<1152x128xbf16, #tpu.memory_space<vmem>>, %arg3: memref<1x128xf32, #tpu.memory_space<vmem>>, %arg4: memref<16x128xbf16, #tpu.memory_space<vmem>>) attributes {dimension_semantics = [#tpu.dimension_semantics<parallel>], iteration_bounds = array<i64: 1>, scalar_prefetch = 0 : i64, scratch_operands = 0 : i64, tpu.core_type = #tpu.core_type<tc>, window_params = [{transform_indices = @transform_0, window_bounds = array<i64: 16, 1152>}, {pipeline_mode = #tpu.pipeline_mode<synchronous>, transform_indices = @transform_1, window_bounds = array<i64: 1152, 128>}, {pipeline_mode = #tpu.pipeline_mode<synchronous>, transform_indices = @transform_2, window_bounds = array<i64: 1, 128>}, {transform_indices = @transform_3, window_bounds = array<i64: 16, 128>}]} {
    %c0 = arith.constant 0 : index
    %c0_0 = arith.constant 0 : index
    %0 = vector.load %arg1[%c0, %c0_0] : memref<16x1152xbf16, #tpu.memory_space<vmem>>, vector<16x1152xbf16>
    %c0_1 = arith.constant 0 : index
    %c0_2 = arith.constant 0 : index
    %1 = vector.load %arg2[%c0_1, %c0_2] : memref<1152x128xbf16, #tpu.memory_space<vmem>>, vector<1152x128xbf16>
    %cst = arith.constant dense<0.000000e+00> : vector<16x128xf32>
    %2 = tpu.matmul %0, %1, %cst {dimension_numbers = #tpu.dot_dimension_numbers<[1], [0], [0], [1], [0, 0, 1, 1], [], []>} : vector<16x1152xbf16>, vector<1152x128xbf16>, vector<16x128xf32> -> vector<16x128xf32>
    %c0_3 = arith.constant 0 : index
    %c0_4 = arith.constant 0 : index
    %3 = vector.load %arg3[%c0_3, %c0_4] : memref<1x128xf32, #tpu.memory_space<vmem>>, vector<1x128xf32>
    %4 = vector.broadcast %3 : vector<1x128xf32> to vector<16x128xf32>
    %5 = arith.addf %2, %4 : vector<16x128xf32>
    %6 = arith.truncf %5 : vector<16x128xf32> to vector<16x128xbf16>
    %c0_5 = arith.constant 0 : index
    %c0_6 = arith.constant 0 : index
    %7 = vector.load %arg4[%c0_5, %c0_6] : memref<16x128xbf16, #tpu.memory_space<vmem>>, vector<16x128xbf16>
    tpu.vector_store %arg4[%c0_5, %c0_6], %6 {strides = array<i32>} : memref<16x128xbf16, #tpu.memory_space<vmem>>, vector<16x128xbf16>,
    return
  }
  func.func @transform_0(%arg0: i32) -> (i32, i32) {
    %c0_i32 = arith.constant 0 : i32
    %c0_i32_0 = arith.constant 0 : i32
    return %arg0, %c0_i32 : i32, i32
  }
  func.func @transform_1(%arg0: i32) -> (i32, i32) {
    %c0_i32 = arith.constant 0 : i32
    %c0_i32_0 = arith.constant 0 : i32
    %c0_i32_1 = arith.constant 0 : i32
    return %c0_i32, %c0_i32_0 : i32, i32
  }
  func.func @transform_2(%arg0: i32) -> (i32, i32) {
    %c0_i32 = arith.constant 0 : i32
    %c0_i32_0 = arith.constant 0 : i32
    %c0_i32_1 = arith.constant 0 : i32
    return %c0_i32, %c0_i32_0 : i32, i32
  }
  func.func @transform_3(%arg0: i32) -> (i32, i32) {
    %c0_i32 = arith.constant 0 : i32
    %c0_i32_0 = arith.constant 0 : i32
    return %arg0, %c0_i32 : i32, i32
  }
}

module attributes {stable_mosaic.version = 11 : i64} {
  func.func @_matmul_bias_kernel(%arg0: i32, %arg1: memref<176x1152xbf16, #tpu.memory_space<vmem>>, %arg2: memref<1152x128xbf16, #tpu.memory_space<vmem>>, %arg3: memref<1x128xf32, #tpu.memory_space<vmem>>, %arg4: memref<176x128xbf16, #tpu.memory_space<vmem>>) attributes {dimension_semantics = [#tpu.dimension_semantics<parallel>], iteration_bounds = array<i64: 1>, scalar_prefetch = 0 : i64, scratch_operands = 0 : i64, tpu.core_type = #tpu.core_type<tc>, window_params = [{transform_indices = @transform_0, window_bounds = array<i64: 176, 1152>}, {pipeline_mode = #tpu.pipeline_mode<synchronous>, transform_indices = @transform_1, window_bounds = array<i64: 1152, 128>}, {pipeline_mode = #tpu.pipeline_mode<synchronous>, transform_indices = @transform_2, window_bounds = array<i64: 1, 128>}, {transform_indices = @transform_3, window_bounds = array<i64: 176, 128>}]} {
    %c0 = arith.constant 0 : index
    %c0_0 = arith.constant 0 : index
    %0 = vector.load %arg1[%c0, %c0_0] : memref<176x1152xbf16, #tpu.memory_space<vmem>>, vector<176x1152xbf16>
    %c0_1 = arith.constant 0 : index
    %c0_2 = arith.constant 0 : index
    %1 = vector.load %arg2[%c0_1, %c0_2] : memref<1152x128xbf16, #tpu.memory_space<vmem>>, vector<1152x128xbf16>
    %cst = arith.constant dense<0.000000e+00> : vector<176x128xf32>
    %2 = tpu.matmul %0, %1, %cst {dimension_numbers = #tpu.dot_dimension_numbers<[1], [0], [0], [1], [0, 0, 1, 1], [], []>} : vector<176x1152xbf16>, vector<1152x128xbf16>, vector<176x128xf32> -> vector<176x128xf32>
    %c0_3 = arith.constant 0 : index
    %c0_4 = arith.constant 0 : index
    %3 = vector.load %arg3[%c0_3, %c0_4] : memref<1x128xf32, #tpu.memory_space<vmem>>, vector<1x128xf32>
    %4 = vector.broadcast %3 : vector<1x128xf32> to vector<176x128xf32>
    %5 = arith.addf %2, %4 : vector<176x128xf32>
    %cst_5 = arith.constant 0.000000e+00 : f32
    %6 = vector.broadcast %cst_5 : f32 to vector<176x128xf32>
    %7 = arith.maximumf %5, %6 : vector<176x128xf32>
    %8 = arith.truncf %7 : vector<176x128xf32> to vector<176x128xbf16>
    %c0_6 = arith.constant 0 : index
    %c0_7 = arith.constant 0 : index
    %9 = vector.load %arg4[%c0_6, %c0_7] : memref<176x128xbf16, #tpu.memory_space<vmem>>, vector<176x128xbf16>
    tpu.vector_store %arg4[%c0_6, %c0_7], %8 {strides = array<i32>} : memref<176x128xbf16, #tpu.memory_space<vmem>>, vector<176x128xbf16>,
    return
  }
  func.func @transform_0(%arg0: i32) -> (i32, i32) {
    %c0_i32 = arith.constant 0 : i32
    %c0_i32_0 = arith.constant 0 : i32
    return %arg0, %c0_i32 : i32, i32
  }
  func.func @transform_1(%arg0: i32) -> (i32, i32) {
    %c0_i32 = arith.constant 0 : i32
    %c0_i32_0 = arith.constant 0 : i32
    %c0_i32_1 = arith.constant 0 : i32
    return %c0_i32, %c0_i32_0 : i32, i32
  }
  func.func @transform_2(%arg0: i32) -> (i32, i32) {
    %c0_i32 = arith.constant 0 : i32
    %c0_i32_0 = arith.constant 0 : i32
    %c0_i32_1 = arith.constant 0 : i32
    return %c0_i32, %c0_i32_0 : i32, i32
  }
  func.func @transform_3(%arg0: i32) -> (i32, i32) {
    %c0_i32 = arith.constant 0 : i32
    %c0_i32_0 = arith.constant 0 : i32
    return %arg0, %c0_i32 : i32, i32
  }
}

module attributes {stable_mosaic.version = 11 : i64} {
  func.func @_matmul_bias_kernel(%arg0: i32, %arg1: memref<176x1152xbf16, #tpu.memory_space<vmem>>, %arg2: memref<1152x128xbf16, #tpu.memory_space<vmem>>, %arg3: memref<1x128xf32, #tpu.memory_space<vmem>>, %arg4: memref<176x128xf32, #tpu.memory_space<vmem>>) attributes {dimension_semantics = [#tpu.dimension_semantics<parallel>], iteration_bounds = array<i64: 1>, scalar_prefetch = 0 : i64, scratch_operands = 0 : i64, tpu.core_type = #tpu.core_type<tc>, window_params = [{transform_indices = @transform_0, window_bounds = array<i64: 176, 1152>}, {pipeline_mode = #tpu.pipeline_mode<synchronous>, transform_indices = @transform_1, window_bounds = array<i64: 1152, 128>}, {pipeline_mode = #tpu.pipeline_mode<synchronous>, transform_indices = @transform_2, window_bounds = array<i64: 1, 128>}, {transform_indices = @transform_3, window_bounds = array<i64: 176, 128>}]} {
    %c0 = arith.constant 0 : index
    %c0_0 = arith.constant 0 : index
    %0 = vector.load %arg1[%c0, %c0_0] : memref<176x1152xbf16, #tpu.memory_space<vmem>>, vector<176x1152xbf16>
    %c0_1 = arith.constant 0 : index
    %c0_2 = arith.constant 0 : index
    %1 = vector.load %arg2[%c0_1, %c0_2] : memref<1152x128xbf16, #tpu.memory_space<vmem>>, vector<1152x128xbf16>
    %cst = arith.constant dense<0.000000e+00> : vector<176x128xf32>
    %2 = tpu.matmul %0, %1, %cst {dimension_numbers = #tpu.dot_dimension_numbers<[1], [0], [0], [1], [0, 0, 1, 1], [], []>} : vector<176x1152xbf16>, vector<1152x128xbf16>, vector<176x128xf32> -> vector<176x128xf32>
    %c0_3 = arith.constant 0 : index
    %c0_4 = arith.constant 0 : index
    %3 = vector.load %arg3[%c0_3, %c0_4] : memref<1x128xf32, #tpu.memory_space<vmem>>, vector<1x128xf32>
    %4 = vector.broadcast %3 : vector<1x128xf32> to vector<176x128xf32>
    %5 = arith.addf %2, %4 : vector<176x128xf32>
    %c0_5 = arith.constant 0 : index
    %c0_6 = arith.constant 0 : index
    %6 = vector.load %arg4[%c0_5, %c0_6] : memref<176x128xf32, #tpu.memory_space<vmem>>, vector<176x128xf32>
    tpu.vector_store %arg4[%c0_5, %c0_6], %5 {strides = array<i32>} : memref<176x128xf32, #tpu.memory_space<vmem>>, vector<176x128xf32>,
    return
  }
  func.func @transform_0(%arg0: i32) -> (i32, i32) {
    %c0_i32 = arith.constant 0 : i32
    %c0_i32_0 = arith.constant 0 : i32
    return %arg0, %c0_i32 : i32, i32
  }
  func.func @transform_1(%arg0: i32) -> (i32, i32) {
    %c0_i32 = arith.constant 0 : i32
    %c0_i32_0 = arith.constant 0 : i32
    %c0_i32_1 = arith.constant 0 : i32
    return %c0_i32, %c0_i32_0 : i32, i32
  }
  func.func @transform_2(%arg0: i32) -> (i32, i32) {
    %c0_i32 = arith.constant 0 : i32
    %c0_i32_0 = arith.constant 0 : i32
    %c0_i32_1 = arith.constant 0 : i32
    return %c0_i32, %c0_i32_0 : i32, i32
  }
  func.func @transform_3(%arg0: i32) -> (i32, i32) {
    %c0_i32 = arith.constant 0 : i32
    %c0_i32_0 = arith.constant 0 : i32
    return %arg0, %c0_i32 : i32, i32
  }
}

module attributes {stable_mosaic.version = 11 : i64} {
  func.func @_loss_kernel(%arg0: i32, %arg1: memref<16x128xf32, #tpu.memory_space<vmem>>, %arg2: memref<16x128xf32, #tpu.memory_space<vmem>>, %arg3: memref<16x128xf32, #tpu.memory_space<vmem>>, %arg4: memref<16x128xf32, #tpu.memory_space<vmem>>, %arg5: memref<16x128xf32, #tpu.memory_space<vmem>>, %arg6: memref<16x128xf32, #tpu.memory_space<vmem>>, %arg7: memref<1x128xf32, #tpu.memory_space<vmem>>, %arg8: memref<1x128xf32, #tpu.memory_space<vmem>>, %arg9: memref<1x128xf32, #tpu.memory_space<vmem>>) attributes {dimension_semantics = [#tpu.dimension_semantics<arbitrary>], iteration_bounds = array<i64: 1>, scalar_prefetch = 0 : i64, scratch_operands = 2 : i64, tpu.core_type = #tpu.core_type<tc>, window_params = [{transform_indices = @transform_0, window_bounds = array<i64: 16, 128>}, {transform_indices = @transform_1, window_bounds = array<i64: 16, 128>}, {transform_indices = @transform_2, window_bounds = array<i64: 16, 128>}, {transform_indices = @transform_3, window_bounds = array<i64: 16, 128>}, {transform_indices = @transform_4, window_bounds = array<i64: 16, 128>}, {transform_indices = @transform_5, window_bounds = array<i64: 16, 128>}, {pipeline_mode = #tpu.pipeline_mode<synchronous>, transform_indices = @transform_6, window_bounds = array<i64: 1, 128>}]} {
    %c0_i32 = arith.constant 0 : i32
    %0 = arith.cmpi eq, %arg0, %c0_i32 : i32
    %1 = arith.extui %0 : i1 to i32
    %c0_i32_0 = arith.constant 0 : i32
    %2 = arith.cmpi ne, %1, %c0_i32_0 : i32
    scf.if %2 {
      %cst_37 = arith.constant 0.000000e+00 : f32
      %72 = vector.broadcast %cst_37 : f32 to vector<1x128xf32>
      %c0_38 = arith.constant 0 : index
      %c0_39 = arith.constant 0 : index
      %73 = vector.load %arg8[%c0_38, %c0_39] : memref<1x128xf32, #tpu.memory_space<vmem>>, vector<1x128xf32>
      tpu.vector_store %arg8[%c0_38, %c0_39], %72 {strides = array<i32>} : memref<1x128xf32, #tpu.memory_space<vmem>>, vector<1x128xf32>,
      %cst_40 = arith.constant 0.000000e+00 : f32
      %74 = vector.broadcast %cst_40 : f32 to vector<1x128xf32>
      %c0_41 = arith.constant 0 : index
      %c0_42 = arith.constant 0 : index
      %75 = vector.load %arg9[%c0_41, %c0_42] : memref<1x128xf32, #tpu.memory_space<vmem>>, vector<1x128xf32>
      tpu.vector_store %arg9[%c0_41, %c0_42], %74 {strides = array<i32>} : memref<1x128xf32, #tpu.memory_space<vmem>>, vector<1x128xf32>,
    } else {
    }
    %c0 = arith.constant 0 : index
    %c0_1 = arith.constant 0 : index
    %3 = vector.load %arg1[%c0, %c0_1] : memref<16x128xf32, #tpu.memory_space<vmem>>, vector<16x128xf32>
    %c0_2 = arith.constant 0 : index
    %c0_3 = arith.constant 0 : index
    %4 = vector.load %arg2[%c0_2, %c0_3] : memref<16x128xf32, #tpu.memory_space<vmem>>, vector<16x128xf32>
    %c0_4 = arith.constant 0 : index
    %c0_5 = arith.constant 0 : index
    %5 = vector.load %arg3[%c0_4, %c0_5] : memref<16x128xf32, #tpu.memory_space<vmem>>, vector<16x128xf32>
    %6 = math.absf %3 : vector<16x128xf32>
    %cst = arith.constant 0.000000e+00 : f32
    %7 = vector.broadcast %cst : f32 to vector<16x128xf32>
    %8 = arith.subf %7, %6 : vector<16x128xf32>
    %9 = math.exp %8 : vector<16x128xf32>
    %cst_6 = arith.constant 1.000000e+00 : f32
    %10 = vector.broadcast %cst_6 : f32 to vector<16x128xf32>
    %11 = arith.addf %10, %9 : vector<16x128xf32>
    %12 = tpu.reciprocal %11 {approx = true} : vector<16x128xf32> -> vector<16x128xf32>
    %cst_7 = arith.constant 0.000000e+00 : f32
    %13 = vector.broadcast %cst_7 : f32 to vector<16x128xf32>
    %14 = arith.cmpf oge, %3, %13 : vector<16x128xf32>
    %15 = arith.mulf %9, %12 : vector<16x128xf32>
    %16 = arith.select %14, %12, %15 : vector<16x128xi1>, vector<16x128xf32>
    %17 = arith.mulf %16, %4 : vector<16x128xf32>
    %cst_8 = arith.constant 1.000000e+00 : f32
    %18 = vector.broadcast %cst_8 : f32 to vector<16x128xf32>
    %19 = arith.subf %18, %16 : vector<16x128xf32>
    %cst_9 = arith.constant 1.000000e+00 : f32
    %20 = vector.broadcast %cst_9 : f32 to vector<16x128xf32>
    %21 = arith.subf %20, %4 : vector<16x128xf32>
    %22 = arith.mulf %19, %21 : vector<16x128xf32>
    %23 = arith.addf %17, %22 : vector<16x128xf32>
    %cst_10 = arith.constant 0.000000e+00 : f32
    %24 = vector.broadcast %cst_10 : f32 to vector<16x128xf32>
    %25 = arith.maximumf %3, %24 : vector<16x128xf32>
    %26 = arith.mulf %3, %4 : vector<16x128xf32>
    %27 = arith.subf %25, %26 : vector<16x128xf32>
    %cst_11 = arith.constant 1.000000e+00 : f32
    %28 = vector.broadcast %cst_11 : f32 to vector<16x128xf32>
    %29 = arith.addf %28, %9 : vector<16x128xf32>
    %30 = math.log %29 : vector<16x128xf32>
    %31 = arith.addf %27, %30 : vector<16x128xf32>
    %cst_12 = arith.constant 2.500000e-01 : f32
    %32 = vector.broadcast %cst_12 : f32 to vector<16x128xf32>
    %33 = arith.mulf %32, %4 : vector<16x128xf32>
    %cst_13 = arith.constant 1.000000e+00 : f32
    %34 = vector.broadcast %cst_13 : f32 to vector<16x128xf32>
    %35 = arith.subf %34, %4 : vector<16x128xf32>
    %cst_14 = arith.constant 7.500000e-01 : f32
    %36 = vector.broadcast %cst_14 : f32 to vector<16x128xf32>
    %37 = arith.mulf %36, %35 : vector<16x128xf32>
    %38 = arith.addf %33, %37 : vector<16x128xf32>
    %cst_15 = arith.constant 1.000000e+00 : f32
    %39 = vector.broadcast %cst_15 : f32 to vector<16x128xf32>
    %40 = arith.subf %39, %23 : vector<16x128xf32>
    %41 = arith.mulf %38, %40 : vector<16x128xf32>
    %42 = arith.mulf %41, %40 : vector<16x128xf32>
    %43 = arith.mulf %42, %31 : vector<16x128xf32>
    %c0_16 = arith.constant 0 : index
    %c0_17 = arith.constant 0 : index
    %44 = vector.load %arg8[%c0_16, %c0_17] : memref<1x128xf32, #tpu.memory_space<vmem>>, vector<1x128xf32>
    %45 = arith.mulf %43, %5 : vector<16x128xf32>
    %cst_18 = arith.constant dense<0.000000e+00> : vector<128xf32>
    %46 = vector.multi_reduction <add>, %45, %cst_18 [0] : vector<16x128xf32> to vector<128xf32>
    %47 = vector.shape_cast %46 : vector<128xf32> to vector<1x128xf32>
    %48 = arith.addf %44, %47 : vector<1x128xf32>
    %c0_19 = arith.constant 0 : index
    %c0_20 = arith.constant 0 : index
    %49 = vector.load %arg8[%c0_19, %c0_20] : memref<1x128xf32, #tpu.memory_space<vmem>>, vector<1x128xf32>
    tpu.vector_store %arg8[%c0_19, %c0_20], %48 {strides = array<i32>} : memref<1x128xf32, #tpu.memory_space<vmem>>, vector<1x128xf32>,
    %c0_21 = arith.constant 0 : index
    %c0_22 = arith.constant 0 : index
    %50 = vector.load %arg4[%c0_21, %c0_22] : memref<16x128xf32, #tpu.memory_space<vmem>>, vector<16x128xf32>
    %c0_23 = arith.constant 0 : index
    %c0_24 = arith.constant 0 : index
    %51 = vector.load %arg5[%c0_23, %c0_24] : memref<16x128xf32, #tpu.memory_space<vmem>>, vector<16x128xf32>
    %52 = arith.subf %50, %51 : vector<16x128xf32>
    %53 = math.absf %52 : vector<16x128xf32>
    %cst_25 = arith.constant 0.111111112 : f32
    %54 = vector.broadcast %cst_25 : f32 to vector<16x128xf32>
    %55 = arith.cmpf olt, %53, %54 : vector<16x128xf32>
    %cst_26 = arith.constant 4.500000e+00 : f32
    %56 = vector.broadcast %cst_26 : f32 to vector<16x128xf32>
    %57 = arith.mulf %56, %53 : vector<16x128xf32>
    %58 = arith.mulf %57, %53 : vector<16x128xf32>
    %cst_27 = arith.constant 0.055555556 : f32
    %59 = vector.broadcast %cst_27 : f32 to vector<16x128xf32>
    %60 = arith.subf %53, %59 : vector<16x128xf32>
    %61 = arith.select %55, %58, %60 : vector<16x128xi1>, vector<16x128xf32>
    %c0_28 = arith.constant 0 : index
    %c0_29 = arith.constant 0 : index
    %62 = vector.load %arg9[%c0_28, %c0_29] : memref<1x128xf32, #tpu.memory_space<vmem>>, vector<1x128xf32>
    %c0_30 = arith.constant 0 : index
    %c0_31 = arith.constant 0 : index
    %63 = vector.load %arg6[%c0_30, %c0_31] : memref<16x128xf32, #tpu.memory_space<vmem>>, vector<16x128xf32>
    %64 = arith.mulf %61, %63 : vector<16x128xf32>
    %cst_32 = arith.constant dense<0.000000e+00> : vector<128xf32>
    %65 = vector.multi_reduction <add>, %64, %cst_32 [0] : vector<16x128xf32> to vector<128xf32>
    %66 = vector.shape_cast %65 : vector<128xf32> to vector<1x128xf32>
    %67 = arith.addf %62, %66 : vector<1x128xf32>
    %c0_33 = arith.constant 0 : index
    %c0_34 = arith.constant 0 : index
    %68 = vector.load %arg9[%c0_33, %c0_34] : memref<1x128xf32, #tpu.memory_space<vmem>>, vector<1x128xf32>
    tpu.vector_store %arg9[%c0_33, %c0_34], %67 {strides = array<i32>} : memref<1x128xf32, #tpu.memory_space<vmem>>, vector<1x128xf32>,
    %c0_i32_35 = arith.constant 0 : i32
    %69 = arith.cmpi eq, %arg0, %c0_i32_35 : i32
    %70 = arith.extui %69 : i1 to i32
    %c0_i32_36 = arith.constant 0 : i32
    %71 = arith.cmpi ne, %70, %c0_i32_36 : i32
    scf.if %71 {
      %c0_37 = arith.constant 0 : index
      %c0_38 = arith.constant 0 : index
      %72 = vector.load %arg8[%c0_37, %c0_38] : memref<1x128xf32, #tpu.memory_space<vmem>>, vector<1x128xf32>
      %73 = vector.shape_cast %72 : vector<1x128xf32> to vector<1x1x128xf32>
      %cst_39 = arith.constant dense<0.000000e+00> : vector<1xf32>
      %74 = vector.multi_reduction <add>, %73, %cst_39 [1, 2] : vector<1x1x128xf32> to vector<1xf32>
      %75 = vector.shape_cast %74 : vector<1xf32> to vector<1x1x1xf32>
      %76 = vector.extract %75[0, 0, 0] : f32 from vector<1x1x1xf32>
      %c0_40 = arith.constant 0 : index
      %c0_41 = arith.constant 0 : index
      %77 = vector.load %arg9[%c0_40, %c0_41] : memref<1x128xf32, #tpu.memory_space<vmem>>, vector<1x128xf32>
      %78 = vector.shape_cast %77 : vector<1x128xf32> to vector<1x1x128xf32>
      %cst_42 = arith.constant dense<0.000000e+00> : vector<1xf32>
      %79 = vector.multi_reduction <add>, %78, %cst_42 [1, 2] : vector<1x1x128xf32> to vector<1xf32>
      %80 = vector.shape_cast %79 : vector<1xf32> to vector<1x1x1xf32>
      %81 = vector.extract %80[0, 0, 0] : f32 from vector<1x1x1xf32>
      %82 = tpu.iota {dimensions = array<i32: 1>} : vector<1x128xi32>
      %c0_i32_43 = arith.constant 0 : i32
      %83 = vector.broadcast %c0_i32_43 : i32 to vector<1x128xi32>
      %84 = arith.cmpi eq, %82, %83 : vector<1x128xi32>
      %c1_i32 = arith.constant 1 : i32
      %85 = vector.broadcast %c1_i32 : i32 to vector<1x128xi32>
      %86 = arith.cmpi eq, %82, %85 : vector<1x128xi32>
      %cst_44 = arith.constant 0.000000e+00 : f32
      %87 = vector.broadcast %81 : f32 to vector<1x128xf32>
      %88 = vector.broadcast %cst_44 : f32 to vector<1x128xf32>
      %89 = arith.select %86, %87, %88 : vector<1x128xi1>, vector<1x128xf32>
      %90 = vector.broadcast %76 : f32 to vector<1x128xf32>
      %91 = arith.select %84, %90, %89 : vector<1x128xi1>, vector<1x128xf32>
      %c0_45 = arith.constant 0 : index
      %c0_46 = arith.constant 0 : index
      %92 = vector.load %arg7[%c0_45, %c0_46] : memref<1x128xf32, #tpu.memory_space<vmem>>, vector<1x128xf32>
      tpu.vector_store %arg7[%c0_45, %c0_46], %91 {strides = array<i32>} : memref<1x128xf32, #tpu.memory_space<vmem>>, vector<1x128xf32>,
    } else {
    }
    return
  }
  func.func @transform_0(%arg0: i32) -> (i32, i32) {
    %c0_i32 = arith.constant 0 : i32
    %c0_i32_0 = arith.constant 0 : i32
    return %arg0, %c0_i32 : i32, i32
  }
  func.func @transform_1(%arg0: i32) -> (i32, i32) {
    %c0_i32 = arith.constant 0 : i32
    %c0_i32_0 = arith.constant 0 : i32
    return %arg0, %c0_i32 : i32, i32
  }
  func.func @transform_2(%arg0: i32) -> (i32, i32) {
    %c0_i32 = arith.constant 0 : i32
    %c0_i32_0 = arith.constant 0 : i32
    return %arg0, %c0_i32 : i32, i32
  }
  func.func @transform_3(%arg0: i32) -> (i32, i32) {
    %c0_i32 = arith.constant 0 : i32
    %c0_i32_0 = arith.constant 0 : i32
    return %arg0, %c0_i32 : i32, i32
  }
  func.func @transform_4(%arg0: i32) -> (i32, i32) {
    %c0_i32 = arith.constant 0 : i32
    %c0_i32_0 = arith.constant 0 : i32
    return %arg0, %c0_i32 : i32, i32
  }
  func.func @transform_5(%arg0: i32) -> (i32, i32) {
    %c0_i32 = arith.constant 0 : i32
    %c0_i32_0 = arith.constant 0 : i32
    return %arg0, %c0_i32 : i32, i32
  }
  func.func @transform_6(%arg0: i32) -> (i32, i32) {
    %c0_i32 = arith.constant 0 : i32
    %c0_i32_0 = arith.constant 0 : i32
    %c0_i32_1 = arith.constant 0 : i32
    return %c0_i32, %c0_i32_0 : i32, i32
  }
}

</mosaic_0001>

<llo_original>
// kernel: _lambda_.14
$region0: #{_lambda_.14}
  #allocation0 [shape = 'u32[]', space=smem, size = 0x4, offset = 0x4, fixed_abs, tag = 'smem constant byte address 0x4 - core index']
  #allocation1 [shape = 'u32[144,128]{1,0:T(1,128)}', space=vmem, size = 0x12000, scoped, tag = 'internal scratch']
  %s0 = inlined_call_operand.vmem [shape: bf16[512,128], index: 0, kind: input, shape index: {}]
  %s1 = inlined_call_operand.vmem [shape: bf16[128,128], index: 1, kind: input, shape index: {}]
  %s2 = inlined_call_operand.vmem [shape: f32[1,128], index: 2, kind: input, shape index: {}]
  %s3 = inlined_call_operand.vmem [shape: bf16[512,128], index: 3, kind: output, shape index: {}]
  %s4 = sld [smem:[#allocation0]]
  $region45: #{_lambda_.14} parent=0
    _
  %s6 = ssub.s32 1, %s4
  %s7 = scalar_select 0, %s6, %s4
  loop: start=0, step=1, limit=4
  $region2: #{_lambda_.14} parent=0 // loop_pre_header
    _
  $region3: #{_lambda_.14} parent=0 // loop_header
    %s9 = sphi 0, %s13
    %p10 = scmp.ge.s32.totalorder %s9, 4
    %s19 = sphi 0, %s21
    %s22 = sphi 0, %s19
    %s23 = sphi 0, %s22
    %s39 = sphi 0, %s23
    %s43 = sphi 0, %s43
    %s45 = sphi 0, %s43
    %s46 = sphi 0, %s45
    %s60 = sphi 0, %s46
    %s64 = sphi 0, %s64
    %s66 = sphi 0, %s64
    %s67 = sphi 0, %s66
    %s81 = sphi 0, %s67
    %s87 = sphi 0, %s89
    %s90 = sphi 0, %s87
    %s91 = sphi 0, %s90
    %s107 = sphi 0, %s91
  $region4: #{_lambda_.14} parent=0 // loop_header_branch
    %12 = sbr.rel (%p10) target = $region8
  $region5: #{_lambda_.14} parent=0 // loop_body
    %s14 = ssub.s32 %s9, 1
    %s15 = ssub.s32 %s9, 2
    %s16 = sadd.s32 %s9, 1
    %s17 = ssub.s32 %s9, %s16
    %p18 = scmp.eq.s32.totalorder %s17, 0
    %s20 = sadd.s32 %s19, 1
    %s21 = scalar_select %p18, %s19, %s20
    %p24 = pneg %p18
    %p25 = scmp.eq.s32.totalorder %s9, 1
    %p26 = por %p24, %p25
    %p27 = scmp.ne.s32.totalorder %s19, %s22
    %p28 = scmp.eq.s32.totalorder %s9, 0
    %p29 = por %p27, %p28
    %p30 = scmp.ne.s32.totalorder %s19, %s22
    %p31 = scmp.eq.s32.totalorder %s14, 1
    %p32 = por %p30, %p31
    %p33 = scmp.ne.s32.totalorder %s22, %s23
    %p34 = scmp.eq.s32.totalorder %s14, 0
    %p35 = por %p33, %p34
    %p36 = scmp.ne.s32.totalorder %s22, %s23
    %p37 = scmp.eq.s32.totalorder %s15, 1
    %p38 = por %p36, %p37
    %p40 = scmp.ne.s32.totalorder %s23, %s39
    %p41 = scmp.eq.s32.totalorder %s15, 0
    %p42 = por %p40, %p41
    %s44 = sadd.s32 %s43, 1
    %p47 = scmp.eq.s32.totalorder %s9, 1
    %p48 = scmp.ne.s32.totalorder %s43, %s45
    %p49 = scmp.eq.s32.totalorder %s9, 0
    %p50 = por %p48, %p49
    %p51 = scmp.ne.s32.totalorder %s43, %s45
    %p52 = scmp.eq.s32.totalorder %s14, 1
    %p53 = por %p51, %p52
    %p54 = scmp.ne.s32.totalorder %s45, %s46
    %p55 = scmp.eq.s32.totalorder %s14, 0
    %p56 = por %p54, %p55
    %p57 = scmp.ne.s32.totalorder %s45, %s46
    %p58 = scmp.eq.s32.totalorder %s15, 1
    %p59 = por %p57, %p58
    %p61 = scmp.ne.s32.totalorder %s46, %s60
    %p62 = scmp.eq.s32.totalorder %s15, 0
    %p63 = por %p61, %p62
    %s65 = sadd.s32 %s64, 1
    %p68 = scmp.eq.s32.totalorder %s9, 1
    %p69 = scmp.ne.s32.totalorder %s64, %s66
    %p70 = scmp.eq.s32.totalorder %s9, 0
    %p71 = por %p69, %p70
    %p72 = scmp.ne.s32.totalorder %s64, %s66
    %p73 = scmp.eq.s32.totalorder %s14, 1
    %p74 = por %p72, %p73
    %p75 = scmp.ne.s32.totalorder %s66, %s67
    %p76 = scmp.eq.s32.totalorder %s14, 0
    %p77 = por %p75, %p76
    %p78 = scmp.ne.s32.totalorder %s66, %s67
    %p79 = scmp.eq.s32.totalorder %s15, 1
    %p80 = por %p78, %p79
    %p82 = scmp.ne.s32.totalorder %s67, %s81
    %p83 = scmp.eq.s32.totalorder %s15, 0
    %p84 = por %p82, %p83
    %s85 = ssub.s32 %s9, %s16
    %p86 = scmp.eq.s32.totalorder %s85, 0
    %s88 = sadd.s32 %s87, 1
    %s89 = scalar_select %p86, %s87, %s88
    %p92 = pneg %p86
    %p93 = scmp.eq.s32.totalorder %s9, 1
    %p94 = por %p92, %p93
    %p95 = scmp.ne.s32.totalorder %s87, %s90
    %p96 = scmp.eq.s32.totalorder %s9, 0
    %p97 = por %p95, %p96
    %p98 = scmp.ne.s32.totalorder %s87, %s90
    %p99 = scmp.eq.s32.totalorder %s14, 1
    %p100 = por %p98, %p99
    %p101 = scmp.ne.s32.totalorder %s90, %s91
    %p102 = scmp.eq.s32.totalorder %s14, 0
    %p103 = por %p101, %p102
    %p104 = scmp.ne.s32.totalorder %s90, %s91
    %p105 = scmp.eq.s32.totalorder %s15, 1
    %p106 = por %p104, %p105
    %p108 = scmp.ne.s32.totalorder %s91, %s107
    %p109 = scmp.eq.s32.totalorder %s15, 0
    %p110 = por %p108, %p109
    %p111 = scmp.le.s32.totalorder 1, %s9
    %p112 = scmp.lt.s32.totalorder %s9, 3
    %p113 = pnand %p111, %p112
    %p114 = pneg %p113
    // Predicated region
    $region9: #{_lambda_.14} parent=5 // pred_check
      _
    $region10: #{_lambda_.14} parent=5 // pred_check_branch
      %116 = sbr.rel (%p113) target = $region12
    $region11: #{_lambda_.14} parent=5 // pred_region
      %s117 = ssub.s32 %s9, 1
      // Predicated region
      $region13: #{_lambda_.14} parent=11 // pred_check
        %p118 = pneg %p56
      $region14: #{_lambda_.14} parent=11 // pred_check_branch
        %120 = sbr.rel (%p118) target = $region16
      $region15: #{_lambda_.14} parent=11 // pred_region
        _
      $region16: #{_lambda_.14} parent=11 // pred_fallthru
        _
      // Predicated region
      $region17: #{_lambda_.14} parent=11 // pred_check
        %p121 = pneg %p77
      $region18: #{_lambda_.14} parent=11 // pred_check_branch
        %123 = sbr.rel (%p121) target = $region20
      $region19: #{_lambda_.14} parent=11 // pred_region
        _
      $region20: #{_lambda_.14} parent=11 // pred_fallthru
        _
    $region12: #{_lambda_.14} parent=5 // pred_fallthru
      _
    %p124 = scmp.lt.s32.totalorder %s9, 2
    // Predicated region
    $region21: #{_lambda_.14} parent=5 // pred_check
      %p125 = pneg %p124
    $region22: #{_lambda_.14} parent=5 // pred_check_branch
      %127 = sbr.rel (%p125) target = $region24
    $region23: #{_lambda_.14} parent=5 // pred_region
      // Predicated region
      $region25: #{_lambda_.14} parent=23 // pred_check
        %p128 = pneg %p29
      $region26: #{_lambda_.14} parent=23 // pred_check_branch
        %130 = sbr.rel (%p128) target = $region28
      $region27: #{_lambda_.14} parent=23 // pred_region
        %s131 = smul.u32 32, %s9
        %p132 = scmp.lt.s32.totalorder %s131, 63
        %s133 = scalar_select %p132, %s131, 63
        %s134 = smul.addr %s133, 4
        %s135 = scalar_lea.vmem %s0, %s134
        %s136 = smul.u32 32, %s9
      $region28: #{_lambda_.14} parent=23 // pred_fallthru
        _
    $region24: #{_lambda_.14} parent=5 // pred_fallthru
      _
    %p137 = scmp.le.s32.totalorder 1, %s9
    %p138 = scmp.lt.s32.totalorder %s9, 3
    %p139 = pnand %p137, %p138
    %p140 = pneg %p139
    // Predicated region
    $region29: #{_lambda_.14} parent=5 // pred_check
      _
    $region30: #{_lambda_.14} parent=5 // pred_check_branch
      %142 = sbr.rel (%p139) target = $region32
    $region31: #{_lambda_.14} parent=5 // pred_region
      %s143 = ssub.s32 %s9, 1
      %s144 = smul.u32 32, %s14
      %p145 = scmp.lt.s32.totalorder %s144, 63
      %s146 = scalar_select %p145, %s144, 63
      %s147 = smul.addr %s146, 4
      %s148 = scalar_lea.vmem %s0, %s147
      %p149 = pneg %p35
      %p150 = pneg %p32
      %p151 = pneg %p56
      %p152 = pneg %p53
      %p153 = pneg %p77
      %p154 = pneg %p74
      %p155 = pneg %p103
      %p156 = pneg %p100
      %s157 = smul.u32 32, %s14
      %p158 = scmp.lt.s32.totalorder %s157, 63
      %s159 = scalar_select %p158, %s157, 63
      %s160 = smul.addr %s159, 4
      %s161 = scalar_lea.vmem %s3, %s160
      %s162 = smul.u32 32, %s14
      %p163 = scmp.lt.s32.totalorder %s162, 63
      %s164 = scalar_select %p163, %s162, 63
      %s165 = smul.addr %s164, 4
      %s166 = scalar_lea.vmem %s0, %s165
      %s167 = smul.u32 32, %s14
      %s168 = smul.u32 32, %s14
      %p169 = scmp.lt.s32.totalorder %s168, 63
      %s170 = scalar_select %p169, %s168, 63
      %s171 = smul.addr %s170, 4
      %s172 = scalar_lea.vmem %s3, %s171
      %s173 = smul.u32 32, %s14
      %v175 = vld [vmem:[%s166] sm:$0xf]
      %v176 = vld [vmem:[%s166 + $0x4] sm:$0xf]
      %v177 = vld [vmem:[%s166 + $0x8] sm:$0xf]
      %v178 = vld [vmem:[%s166 + $0xc] sm:$0xf]
      %v179 = vld [vmem:[%s166 + $0x10] sm:$0xf]
      %v180 = vld [vmem:[%s166 + $0x14] sm:$0xf]
      %v181 = vld [vmem:[%s166 + $0x18] sm:$0xf]
      %v182 = vld [vmem:[%s166 + $0x1c] sm:$0xf]
      %v183 = vld [vmem:[%s166 + $0x20] sm:$0xf]
      %v184 = vld [vmem:[%s166 + $0x24] sm:$0xf]
      %v185 = vld [vmem:[%s166 + $0x28] sm:$0xf]
      %v186 = vld [vmem:[%s166 + $0x2c] sm:$0xf]
      %v187 = vld [vmem:[%s166 + $0x30] sm:$0xf]
      %v188 = vld [vmem:[%s166 + $0x34] sm:$0xf]
      %v189 = vld [vmem:[%s166 + $0x38] sm:$0xf]
      %v190 = vld [vmem:[%s166 + $0x3c] sm:$0xf]
      %v191 = vld [vmem:[%s166 + $0x40] sm:$0xf]
      %v192 = vld [vmem:[%s166 + $0x44] sm:$0xf]
      %v193 = vld [vmem:[%s166 + $0x48] sm:$0xf]
      %v194 = vld [vmem:[%s166 + $0x4c] sm:$0xf]
      %v195 = vld [vmem:[%s166 + $0x50] sm:$0xf]
      %v196 = vld [vmem:[%s166 + $0x54] sm:$0xf]
      %v197 = vld [vmem:[%s166 + $0x58] sm:$0xf]
      %v198 = vld [vmem:[%s166 + $0x5c] sm:$0xf]
      %v199 = vld [vmem:[%s166 + $0x60] sm:$0xf]
      %v200 = vld [vmem:[%s166 + $0x64] sm:$0xf]
      %v201 = vld [vmem:[%s166 + $0x68] sm:$0xf]
      %v202 = vld [vmem:[%s166 + $0x6c] sm:$0xf]
      %v203 = vld [vmem:[%s166 + $0x70] sm:$0xf]
      %v204 = vld [vmem:[%s166 + $0x74] sm:$0xf]
      %v205 = vld [vmem:[%s166 + $0x78] sm:$0xf]
      %v206 = vld [vmem:[%s166 + $0x7c] sm:$0xf]
      %v207 = vld [vmem:[%s1] sm:$0xf]
      %v208 = vld [vmem:[%s1 + $0x4] sm:$0xf]
      %v209 = vld [vmem:[%s1 + $0x8] sm:$0xf]
      %v210 = vld [vmem:[%s1 + $0xc] sm:$0xf]
      %v211 = vld [vmem:[%s1 + $0x10] sm:$0xf]
      %v212 = vld [vmem:[%s1 + $0x14] sm:$0xf]
      %v213 = vld [vmem:[%s1 + $0x18] sm:$0xf]
      %v214 = vld [vmem:[%s1 + $0x1c] sm:$0xf]
      %v215 = vld [vmem:[%s1 + $0x20] sm:$0xf]
      %v216 = vld [vmem:[%s1 + $0x24] sm:$0xf]
      %v217 = vld [vmem:[%s1 + $0x28] sm:$0xf]
      %v218 = vld [vmem:[%s1 + $0x2c] sm:$0xf]
      %v219 = vld [vmem:[%s1 + $0x30] sm:$0xf]
      %v220 = vld [vmem:[%s1 + $0x34] sm:$0xf]
      %v221 = vld [vmem:[%s1 + $0x38] sm:$0xf]
      %v222 = vld [vmem:[%s1 + $0x3c] sm:$0xf]
      %v223 = vld [vmem:[%s2] sm:$0x1]
      %v225 = vlaneseq
      %v226 = vshrl.u32 %v225, 7
      %v227 = vsub.s32 0, %v226
      %v228 = vrot.slane %v223, %v227
      %v262 = vunpack.c.l.b16 %v175
      %v263 = vunpack.c.l.b16 %v176
      %v264 = vunpack.c.l.b16 %v177
      %v265 = vunpack.c.l.b16 %v178
      %v266 = vunpack.c.l.b16 %v179
      %v267 = vunpack.c.l.b16 %v180
      %v268 = vunpack.c.l.b16 %v181
      %v269 = vunpack.c.l.b16 %v182
      %v270 = vunpack.c.l.b16 %v183
      %v271 = vunpack.c.l.b16 %v184
      %v272 = vunpack.c.l.b16 %v185
      %v273 = vunpack.c.l.b16 %v186
      %v274 = vunpack.c.l.b16 %v187
      %v275 = vunpack.c.l.b16 %v188
      %v276 = vunpack.c.l.b16 %v189
      %v277 = vunpack.c.l.b16 %v190
      %v278 = vunpack.c.l.b16 %v191
      %v279 = vunpack.c.l.b16 %v192
      %v280 = vunpack.c.l.b16 %v193
      %v281 = vunpack.c.l.b16 %v194
      %v282 = vunpack.c.l.b16 %v195
      %v283 = vunpack.c.l.b16 %v196
      %v284 = vunpack.c.l.b16 %v197
      %v285 = vunpack.c.l.b16 %v198
      %v286 = vunpack.c.l.b16 %v199
      %v287 = vunpack.c.l.b16 %v200
      %v288 = vunpack.c.l.b16 %v201
      %v289 = vunpack.c.l.b16 %v202
      %v290 = vunpack.c.l.b16 %v203
      %v291 = vunpack.c.l.b16 %v204
      %v292 = vunpack.c.l.b16 %v205
      %v293 = vunpack.c.l.b16 %v206
      %v294 = vpack.c.b16 %v263, %v262
      %v295 = vpack.c.b16 %v265, %v264
      %v296 = vpack.c.b16 %v267, %v266
      %v297 = vpack.c.b16 %v269, %v268
      %v298 = vpack.c.b16 %v271, %v270
      %v299 = vpack.c.b16 %v273, %v272
      %v300 = vpack.c.b16 %v275, %v274
      %v301 = vpack.c.b16 %v277, %v276
      %v302 = vpack.c.b16 %v279, %v278
      %v303 = vpack.c.b16 %v281, %v280
      %v304 = vpack.c.b16 %v283, %v282
      %v305 = vpack.c.b16 %v285, %v284
      %v306 = vpack.c.b16 %v287, %v286
      %v307 = vpack.c.b16 %v289, %v288
      %v308 = vpack.c.b16 %v291, %v290
      %v309 = vpack.c.b16 %v293, %v292
      %v342 = vunpack.c.l.b16 %v207
      %v343 = vunpack.c.l.b16 %v208
      %v344 = vunpack.c.l.b16 %v209
      %v345 = vunpack.c.l.b16 %v210
      %v346 = vunpack.c.l.b16 %v211
      %v347 = vunpack.c.l.b16 %v212
      %v348 = vunpack.c.l.b16 %v213
      %v349 = vunpack.c.l.b16 %v214
      %v350 = vunpack.c.l.b16 %v215
      %v351 = vunpack.c.l.b16 %v216
      %v352 = vunpack.c.l.b16 %v217
      %v353 = vunpack.c.l.b16 %v218
      %v354 = vunpack.c.l.b16 %v219
      %v355 = vunpack.c.l.b16 %v220
      %v356 = vunpack.c.l.b16 %v221
      %v357 = vunpack.c.l.b16 %v222
      %v358 = vpack.c.b16 %v343, %v342
      %v359 = vpack.c.b16 %v345, %v344
      %v360 = vpack.c.b16 %v347, %v346
      %v361 = vpack.c.b16 %v349, %v348
      %v362 = vpack.c.b16 %v351, %v350
      %v363 = vpack.c.b16 %v353, %v352
      %v364 = vpack.c.b16 %v355, %v354
      %v365 = vpack.c.b16 %v357, %v356
      %374 = vmatprep.subr.bf16.mxu0 0
      %375 = vmatpush1.bf16.msra.mxu0 %v358
      %376 = vmatprep.subr.bf16.mxu0 0
      %377 = vmatpush1.bf16.msra.mxu0 %v359
      %378 = vmatprep.subr.bf16.mxu0 0
      %379 = vmatpush1.bf16.msra.mxu0 %v360
      %380 = vmatprep.subr.bf16.mxu0 0
      %381 = vmatpush1.bf16.msra.mxu0 %v361
      %382 = vmatprep.subr.bf16.mxu0 0
      %383 = vmatpush1.bf16.msra.mxu0 %v362
      %384 = vmatprep.subr.bf16.mxu0 0
      %385 = vmatpush1.bf16.msra.mxu0 %v363
      %386 = vmatprep.subr.bf16.mxu0 0
      %387 = vmatpush1.bf16.msra.mxu0 %v364
      %388 = vmatprep.subr.bf16.mxu0 0
      %389 = vmatpush1.bf16.msra.mxu0 %v365
      %390 = vmatprep.subr.bf16.mxu0 0
      %391 = vmatpush1.bf16.msra.mxu0 0
      %392 = vmatprep.subr.bf16.mxu0 0
      %393 = vmatpush1.bf16.msra.mxu0 0
      %394 = vmatprep.subr.bf16.mxu0 0
      %395 = vmatpush1.bf16.msra.mxu0 0
      %396 = vmatprep.subr.bf16.mxu0 0
      %397 = vmatpush1.bf16.msra.mxu0 0
      %398 = vmatprep.subr.bf16.mxu0 0
      %399 = vmatpush1.bf16.msra.mxu0 0
      %400 = vmatprep.subr.bf16.mxu0 0
      %401 = vmatpush1.bf16.msra.mxu0 0
      %402 = vmatprep.subr.bf16.mxu0 0
      %403 = vmatpush1.bf16.msra.mxu0 0
      %404 = vmatprep.subr.bf16.mxu0 0
      %405 = vmatpush1.bf16.msra.mxu0 0
      %406 = vmatprep.mubr.bf16.mxu0 0
      %407 = vmatmul.mubr.bf16.gmra.mrb[0].mxu0 %v294
      %v408 = vpop.f32.mrb[0].mxu0
      %v409 = vadd.f32 %v228, %v408
      %v410 = vpop.f32.mrb[0].mxu0
      %v411 = vpop.f32.mrb[0].mxu0
      %v412 = vadd.f32 %v228, %v411
      %v413 = vpop.f32.mrb[0].mxu0
      %414 = vmatprep.mubr.bf16.mxu0 0
      %415 = vmatmul.mubr.bf16.gmra.mrb[0].mxu0 %v295
      %v416 = vpop.f32.mrb[0].mxu0
      %v417 = vadd.f32 %v228, %v416
      %v418 = vpop.f32.mrb[0].mxu0
      %v419 = vpop.f32.mrb[0].mxu0
      %v420 = vadd.f32 %v228, %v419
      %v421 = vpop.f32.mrb[0].mxu0
      %422 = vmatprep.mubr.bf16.mxu0 0
      %423 = vmatmul.mubr.bf16.gmra.mrb[0].mxu0 %v296
      %v424 = vpop.f32.mrb[0].mxu0
      %v425 = vadd.f32 %v228, %v424
      %v426 = vpop.f32.mrb[0].mxu0
      %v427 = vpop.f32.mrb[0].mxu0
      %v428 = vadd.f32 %v228, %v427
      %v429 = vpop.f32.mrb[0].mxu0
      %430 = vmatprep.mubr.bf16.mxu0 0
      %431 = vmatmul.mubr.bf16.gmra.mrb[0].mxu0 %v297
      %v432 = vpop.f32.mrb[0].mxu0
      %v433 = vadd.f32 %v228, %v432
      %v434 = vpop.f32.mrb[0].mxu0
      %v435 = vpop.f32.mrb[0].mxu0
      %v436 = vadd.f32 %v228, %v435
      %v437 = vpop.f32.mrb[0].mxu0
      %438 = vmatprep.mubr.bf16.mxu0 0
      %439 = vmatmul.mubr.bf16.gmra.mrb[0].mxu0 %v298
      %v440 = vpop.f32.mrb[0].mxu0
      %v441 = vadd.f32 %v228, %v440
      %v442 = vpop.f32.mrb[0].mxu0
      %v443 = vpop.f32.mrb[0].mxu0
      %v444 = vadd.f32 %v228, %v443
      %v445 = vpop.f32.mrb[0].mxu0
      %446 = vmatprep.mubr.bf16.mxu0 0
      %447 = vmatmul.mubr.bf16.gmra.mrb[0].mxu0 %v299
      %v448 = vpop.f32.mrb[0].mxu0
      %v449 = vadd.f32 %v228, %v448
      %v450 = vpop.f32.mrb[0].mxu0
      %v451 = vpop.f32.mrb[0].mxu0
      %v452 = vadd.f32 %v228, %v451
      %v453 = vpop.f32.mrb[0].mxu0
      %454 = vmatprep.mubr.bf16.mxu0 0
      %455 = vmatmul.mubr.bf16.gmra.mrb[0].mxu0 %v300
      %v456 = vpop.f32.mrb[0].mxu0
      %v457 = vadd.f32 %v228, %v456
      %v458 = vpop.f32.mrb[0].mxu0
      %v459 = vpop.f32.mrb[0].mxu0
      %v460 = vadd.f32 %v228, %v459
      %v461 = vpop.f32.mrb[0].mxu0
      %462 = vmatprep.mubr.bf16.mxu0 0
      %463 = vmatmul.mubr.bf16.gmra.mrb[0].mxu0 %v301
      %v464 = vpop.f32.mrb[0].mxu0
      %v465 = vadd.f32 %v228, %v464
      %v466 = vpop.f32.mrb[0].mxu0
      %v467 = vpop.f32.mrb[0].mxu0
      %v468 = vadd.f32 %v228, %v467
      %v469 = vpop.f32.mrb[0].mxu0
      %470 = vmatprep.mubr.bf16.mxu0 0
      %471 = vmatmul.mubr.bf16.gmra.mrb[0].mxu0 %v302
      %v472 = vpop.f32.mrb[0].mxu0
      %v473 = vadd.f32 %v228, %v472
      %v474 = vpop.f32.mrb[0].mxu0
      %v475 = vpop.f32.mrb[0].mxu0
      %v476 = vadd.f32 %v228, %v475
      %v477 = vpop.f32.mrb[0].mxu0
      %478 = vmatprep.mubr.bf16.mxu0 0
      %479 = vmatmul.mubr.bf16.gmra.mrb[0].mxu0 %v303
      %v480 = vpop.f32.mrb[0].mxu0
      %v481 = vadd.f32 %v228, %v480
      %v482 = vpop.f32.mrb[0].mxu0
      %v483 = vpop.f32.mrb[0].mxu0
      %v484 = vadd.f32 %v228, %v483
      %v485 = vpop.f32.mrb[0].mxu0
      %486 = vmatprep.mubr.bf16.mxu0 0
      %487 = vmatmul.mubr.bf16.gmra.mrb[0].mxu0 %v304
      %v488 = vpop.f32.mrb[0].mxu0
      %v489 = vadd.f32 %v228, %v488
      %v490 = vpop.f32.mrb[0].mxu0
      %v491 = vpop.f32.mrb[0].mxu0
      %v492 = vadd.f32 %v228, %v491
      %v493 = vpop.f32.mrb[0].mxu0
      %494 = vmatprep.mubr.bf16.mxu0 0
      %495 = vmatmul.mubr.bf16.gmra.mrb[0].mxu0 %v305
      %v496 = vpop.f32.mrb[0].mxu0
      %v497 = vadd.f32 %v228, %v496
      %v498 = vpop.f32.mrb[0].mxu0
      %v499 = vpop.f32.mrb[0].mxu0
      %v500 = vadd.f32 %v228, %v499
      %v501 = vpop.f32.mrb[0].mxu0
      %502 = vmatprep.mubr.bf16.mxu0 0
      %503 = vmatmul.mubr.bf16.gmra.mrb[0].mxu0 %v306
      %v504 = vpop.f32.mrb[0].mxu0
      %v505 = vadd.f32 %v228, %v504
      %v506 = vpop.f32.mrb[0].mxu0
      %v507 = vpop.f32.mrb[0].mxu0
      %v508 = vadd.f32 %v228, %v507
      %v509 = vpop.f32.mrb[0].mxu0
      %510 = vmatprep.mubr.bf16.mxu0 0
      %511 = vmatmul.mubr.bf16.gmra.mrb[0].mxu0 %v307
      %v512 = vpop.f32.mrb[0].mxu0
      %v513 = vadd.f32 %v228, %v512
      %v514 = vpop.f32.mrb[0].mxu0
      %v515 = vpop.f32.mrb[0].mxu0
      %v516 = vadd.f32 %v228, %v515
      %v517 = vpop.f32.mrb[0].mxu0
      %518 = vmatprep.mubr.bf16.mxu0 0
      %519 = vmatmul.mubr.bf16.gmra.mrb[0].mxu0 %v308
      %v520 = vpop.f32.mrb[0].mxu0
      %v521 = vadd.f32 %v228, %v520
      %v522 = vpop.f32.mrb[0].mxu0
      %v523 = vpop.f32.mrb[0].mxu0
      %v524 = vadd.f32 %v228, %v523
      %v525 = vpop.f32.mrb[0].mxu0
      %526 = vmatprep.mubr.bf16.mxu0 0
      %527 = vmatmul.mubr.bf16.gmra.mrb[0].mxu0 %v309
      %v528 = vpop.f32.mrb[0].mxu0
      %v529 = vadd.f32 %v228, %v528
      %v530 = vpop.f32.mrb[0].mxu0
      %v531 = vpop.f32.mrb[0].mxu0
      %v532 = vadd.f32 %v228, %v531
      %v533 = vpop.f32.mrb[0].mxu0
      %534 = vdwg.mxu0
      %v535 = vmax.f32 %v409, 0.0
      %v536 = vmax.f32 %v412, 0.0
      %v537 = vmax.f32 %v417, 0.0
      %v538 = vmax.f32 %v420, 0.0
      %v539 = vmax.f32 %v425, 0.0
      %v540 = vmax.f32 %v428, 0.0
      %v541 = vmax.f32 %v433, 0.0
      %v542 = vmax.f32 %v436, 0.0
      %v543 = vmax.f32 %v441, 0.0
      %v544 = vmax.f32 %v444, 0.0
      %v545 = vmax.f32 %v449, 0.0
      %v546 = vmax.f32 %v452, 0.0
      %v547 = vmax.f32 %v457, 0.0
      %v548 = vmax.f32 %v460, 0.0
      %v549 = vmax.f32 %v465, 0.0
      %v550 = vmax.f32 %v468, 0.0
      %v551 = vmax.f32 %v473, 0.0
      %v552 = vmax.f32 %v476, 0.0
      %v553 = vmax.f32 %v481, 0.0
      %v554 = vmax.f32 %v484, 0.0
      %v555 = vmax.f32 %v489, 0.0
      %v556 = vmax.f32 %v492, 0.0
      %v557 = vmax.f32 %v497, 0.0
      %v558 = vmax.f32 %v500, 0.0
      %v559 = vmax.f32 %v505, 0.0
      %v560 = vmax.f32 %v508, 0.0
      %v561 = vmax.f32 %v513, 0.0
      %v562 = vmax.f32 %v516, 0.0
      %v563 = vmax.f32 %v521, 0.0
      %v564 = vmax.f32 %v524, 0.0
      %v565 = vmax.f32 %v529, 0.0
      %v566 = vmax.f32 %v532, 0.0
      %v567 = vpack.c.bf16 %v536, %v535
      %v568 = vpack.c.bf16 %v538, %v537
      %v569 = vpack.c.bf16 %v540, %v539
      %v570 = vpack.c.bf16 %v542, %v541
      %v571 = vpack.c.bf16 %v544, %v543
      %v572 = vpack.c.bf16 %v546, %v545
      %v573 = vpack.c.bf16 %v548, %v547
      %v574 = vpack.c.bf16 %v550, %v549
      %v575 = vpack.c.bf16 %v552, %v551
      %v576 = vpack.c.bf16 %v554, %v553
      %v577 = vpack.c.bf16 %v556, %v555
      %v578 = vpack.c.bf16 %v558, %v557
      %v579 = vpack.c.bf16 %v560, %v559
      %v580 = vpack.c.bf16 %v562, %v561
      %v581 = vpack.c.bf16 %v564, %v563
      %v582 = vpack.c.bf16 %v566, %v565
      %v599 = vunpack.c.l.b16 %v567
      %v600 = vunpack.c.h.b16 %v567
      %v601 = vunpack.c.l.b16 %v568
      %v602 = vunpack.c.h.b16 %v568
      %v603 = vunpack.c.l.b16 %v569
      %v604 = vunpack.c.h.b16 %v569
      %v605 = vunpack.c.l.b16 %v570
      %v606 = vunpack.c.h.b16 %v570
      %v607 = vunpack.c.l.b16 %v571
      %v608 = vunpack.c.h.b16 %v571
      %v609 = vunpack.c.l.b16 %v572
      %v610 = vunpack.c.h.b16 %v572
      %v611 = vunpack.c.l.b16 %v573
      %v612 = vunpack.c.h.b16 %v573
      %v613 = vunpack.c.l.b16 %v574
      %v614 = vunpack.c.h.b16 %v574
      %v615 = vunpack.c.l.b16 %v575
      %v616 = vunpack.c.h.b16 %v575
      %v617 = vunpack.c.l.b16 %v576
      %v618 = vunpack.c.h.b16 %v576
      %v619 = vunpack.c.l.b16 %v577
      %v620 = vunpack.c.h.b16 %v577
      %v621 = vunpack.c.l.b16 %v578
      %v622 = vunpack.c.h.b16 %v578
      %v623 = vunpack.c.l.b16 %v579
      %v624 = vunpack.c.h.b16 %v579
      %v625 = vunpack.c.l.b16 %v580
      %v626 = vunpack.c.h.b16 %v580
      %v627 = vunpack.c.l.b16 %v581
      %v628 = vunpack.c.h.b16 %v581
      %v629 = vunpack.c.l.b16 %v582
      %v630 = vunpack.c.h.b16 %v582
      %v631 = vpack.c.b16 %v599, %v599
      %v632 = vpack.c.b16 %v600, %v600
      %v633 = vpack.c.b16 %v601, %v601
      %v634 = vpack.c.b16 %v602, %v602
      %v635 = vpack.c.b16 %v603, %v603
      %v636 = vpack.c.b16 %v604, %v604
      %v637 = vpack.c.b16 %v605, %v605
      %v638 = vpack.c.b16 %v606, %v606
      %v639 = vpack.c.b16 %v607, %v607
      %v640 = vpack.c.b16 %v608, %v608
      %v641 = vpack.c.b16 %v609, %v609
      %v642 = vpack.c.b16 %v610, %v610
      %v643 = vpack.c.b16 %v611, %v611
      %v644 = vpack.c.b16 %v612, %v612
      %v645 = vpack.c.b16 %v613, %v613
      %v646 = vpack.c.b16 %v614, %v614
      %v647 = vpack.c.b16 %v615, %v615
      %v648 = vpack.c.b16 %v616, %v616
      %v649 = vpack.c.b16 %v617, %v617
      %v650 = vpack.c.b16 %v618, %v618
      %v651 = vpack.c.b16 %v619, %v619
      %v652 = vpack.c.b16 %v620, %v620
      %v653 = vpack.c.b16 %v621, %v621
      %v654 = vpack.c.b16 %v622, %v622
      %v655 = vpack.c.b16 %v623, %v623
      %v656 = vpack.c.b16 %v624, %v624
      %v657 = vpack.c.b16 %v625, %v625
      %v658 = vpack.c.b16 %v626, %v626
      %v659 = vpack.c.b16 %v627, %v627
      %v660 = vpack.c.b16 %v628, %v628
      %v661 = vpack.c.b16 %v629, %v629
      %v662 = vpack.c.b16 %v630, %v630
      %695 = vst [vmem:[%s172] sm:$0xf] %v631
      %696 = vst [vmem:[%s172 + $0x4] sm:$0xf] %v632
      %697 = vst [vmem:[%s172 + $0x8] sm:$0xf] %v633
      %698 = vst [vmem:[%s172 + $0xc] sm:$0xf] %v634
      %699 = vst [vmem:[%s172 + $0x10] sm:$0xf] %v635
      %700 = vst [vmem:[%s172 + $0x14] sm:$0xf] %v636
      %701 = vst [vmem:[%s172 + $0x18] sm:$0xf] %v637
      %702 = vst [vmem:[%s172 + $0x1c] sm:$0xf] %v638
      %703 = vst [vmem:[%s172 + $0x20] sm:$0xf] %v639
      %704 = vst [vmem:[%s172 + $0x24] sm:$0xf] %v640
      %705 = vst [vmem:[%s172 + $0x28] sm:$0xf] %v641
      %706 = vst [vmem:[%s172 + $0x2c] sm:$0xf] %v642
      %707 = vst [vmem:[%s172 + $0x30] sm:$0xf] %v643
      %708 = vst [vmem:[%s172 + $0x34] sm:$0xf] %v644
      %709 = vst [vmem:[%s172 + $0x38] sm:$0xf] %v645
      %710 = vst [vmem:[%s172 + $0x3c] sm:$0xf] %v646
      %711 = vst [vmem:[%s172 + $0x40] sm:$0xf] %v647
      %712 = vst [vmem:[%s172 + $0x44] sm:$0xf] %v648
      %713 = vst [vmem:[%s172 + $0x48] sm:$0xf] %v649
      %714 = vst [vmem:[%s172 + $0x4c] sm:$0xf] %v650
      %715 = vst [vmem:[%s172 + $0x50] sm:$0xf] %v651
      %716 = vst [vmem:[%s172 + $0x54] sm:$0xf] %v652
      %717 = vst [vmem:[%s172 + $0x58] sm:$0xf] %v653
      %718 = vst [vmem:[%s172 + $0x5c] sm:$0xf] %v654
      %719 = vst [vmem:[%s172 + $0x60] sm:$0xf] %v655
      %720 = vst [vmem:[%s172 + $0x64] sm:$0xf] %v656
      %721 = vst [vmem:[%s172 + $0x68] sm:$0xf] %v657
      %722 = vst [vmem:[%s172 + $0x6c] sm:$0xf] %v658
      %723 = vst [vmem:[%s172 + $0x70] sm:$0xf] %v659
      %724 = vst [vmem:[%s172 + $0x74] sm:$0xf] %v660
      %725 = vst [vmem:[%s172 + $0x78] sm:$0xf] %v661
      %726 = vst [vmem:[%s172 + $0x7c] sm:$0xf] %v662
      %s727 = smul.u32 32, %s14
      %p728 = scmp.lt.s32.totalorder %s727, 63
      %s729 = scalar_select %p728, %s727, 63
      %s730 = smul.addr %s729, 4
      %s731 = scalar_lea.vmem %s3, %s730
      // Predicated region
      $region33: #{_lambda_.14} parent=31 // pred_check
        %p732 = pneg %p100
      $region34: #{_lambda_.14} parent=31 // pred_check_branch
        %734 = sbr.rel (%p732) target = $region36
      $region35: #{_lambda_.14} parent=31 // pred_region
        %s735 = smul.u32 32, %s14
      $region36: #{_lambda_.14} parent=31 // pred_fallthru
        _
    $region32: #{_lambda_.14} parent=5 // pred_fallthru
      _
    %p736 = scmp.le.s32.totalorder 2, %s9
    // Predicated region
    $region37: #{_lambda_.14} parent=5 // pred_check
      %p737 = pneg %p736
    $region38: #{_lambda_.14} parent=5 // pred_check_branch
      %739 = sbr.rel (%p737) target = $region40
    $region39: #{_lambda_.14} parent=5 // pred_region
      %s740 = ssub.s32 %s9, 2
      // Predicated region
      $region41: #{_lambda_.14} parent=39 // pred_check
        %p741 = pneg %p106
      $region42: #{_lambda_.14} parent=39 // pred_check_branch
        %743 = sbr.rel (%p741) target = $region44
      $region43: #{_lambda_.14} parent=39 // pred_region
        %s744 = smul.u32 32, %s15
        %p745 = scmp.lt.s32.totalorder %s744, 63
        %s746 = scalar_select %p745, %s744, 63
        %s747 = smul.addr %s746, 4
        %s748 = scalar_lea.vmem %s3, %s747
      $region44: #{_lambda_.14} parent=39 // pred_fallthru
        _
    $region40: #{_lambda_.14} parent=5 // pred_fallthru
      _
  $region6: #{_lambda_.14} parent=0 // loop_footer
    %s13 = sadd.s32 1, %s9
  $region7: #{_lambda_.14} parent=0 // loop_footer_branch
    %8 = sbr.rel target = $region3
  $region8: #{_lambda_.14} parent=0 // loop_exit
    _

// kernel: _lambda_.15
$region0: #{_lambda_.15}
  #allocation0 [shape = 'u32[]', space=smem, size = 0x4, offset = 0x4, fixed_abs, tag = 'smem constant byte address 0x4 - core index']
  #allocation1 [shape = 'u32[144,128]{1,0:T(1,128)}', space=vmem, size = 0x12000, scoped, tag = 'internal scratch']
  %s0 = inlined_call_operand.vmem [shape: bf16[128,1152], index: 0, kind: input, shape index: {}]
  %s1 = inlined_call_operand.vmem [shape: bf16[1152,128], index: 1, kind: input, shape index: {}]
  %s2 = inlined_call_operand.vmem [shape: f32[1,128], index: 2, kind: input, shape index: {}]
  %s3 = inlined_call_operand.vmem [shape: bf16[128,128], index: 3, kind: output, shape index: {}]
  %s4 = sld [smem:[#allocation0]]
  $region22: #{_lambda_.15} parent=0
    _
  %s6 = ssub.s32 1, %s4
  %s7 = scalar_select 0, %s6, %s4
  // Predicated region
  $region2: #{_lambda_.15} parent=0 // pred_check
    _
  $region3: #{_lambda_.15} parent=0 // pred_check_branch
    %9 = sbr.rel (0) target = $region5
  $region4: #{_lambda_.15} parent=0 // pred_region
    _
  $region5: #{_lambda_.15} parent=0 // pred_fallthru
    _
  // Predicated region
  $region6: #{_lambda_.15} parent=0 // pred_check
    _
  $region7: #{_lambda_.15} parent=0 // pred_check_branch
    %11 = sbr.rel (0) target = $region9
  $region8: #{_lambda_.15} parent=0 // pred_region
    _
  $region9: #{_lambda_.15} parent=0 // pred_fallthru
    _
  // Predicated region
  $region10: #{_lambda_.15} parent=0 // pred_check
    _
  $region11: #{_lambda_.15} parent=0 // pred_check_branch
    %13 = sbr.rel (0) target = $region13
  $region12: #{_lambda_.15} parent=0 // pred_region
    _
  $region13: #{_lambda_.15} parent=0 // pred_fallthru
    _
  %v15 = vld [vmem:[%s0] sm:$0xff]
  %v16 = vld [vmem:[%s0 + $0x8] sm:$0xff]
  %v17 = vld [vmem:[%s0 + $0x10] sm:$0xff]
  %v18 = vld [vmem:[%s0 + $0x18] sm:$0xff]
  %v19 = vld [vmem:[%s0 + $0x20] sm:$0xf]
  %v20 = vld [vmem:[%s0 + $0x24] sm:$0xff]
  %v21 = vld [vmem:[%s0 + $0x2c] sm:$0xff]
  %v22 = vld [vmem:[%s0 + $0x34] sm:$0xff]
  %v23 = vld [vmem:[%s0 + $0x3c] sm:$0xff]
  %v24 = vld [vmem:[%s0 + $0x44] sm:$0xf]
  %v25 = vld [vmem:[%s0 + $0x48] sm:$0xff]
  %v26 = vld [vmem:[%s0 + $0x50] sm:$0xff]
  %v27 = vld [vmem:[%s0 + $0x58] sm:$0xff]
  %v28 = vld [vmem:[%s0 + $0x60] sm:$0xff]
  %v29 = vld [vmem:[%s0 + $0x68] sm:$0xf]
  %v30 = vld [vmem:[%s0 + $0x6c] sm:$0xff]
  %v31 = vld [vmem:[%s0 + $0x74] sm:$0xff]
  %v32 = vld [vmem:[%s0 + $0x7c] sm:$0xff]
  %v33 = vld [vmem:[%s0 + $0x84] sm:$0xff]
  %v34 = vld [vmem:[%s0 + $0x8c] sm:$0xf]
  %v35 = vld [vmem:[%s0 + $0x90] sm:$0xff]
  %v36 = vld [vmem:[%s0 + $0x98] sm:$0xff]
  %v37 = vld [vmem:[%s0 + $0xa0] sm:$0xff]
  %v38 = vld [vmem:[%s0 + $0xa8] sm:$0xff]
  %v39 = vld [vmem:[%s0 + $0xb0] sm:$0xf]
  %v40 = vld [vmem:[%s0 + $0xb4] sm:$0xff]
  %v41 = vld [vmem:[%s0 + $0xbc] sm:$0xff]
  %v42 = vld [vmem:[%s0 + $0xc4] sm:$0xff]
  %v43 = vld [vmem:[%s0 + $0xcc] sm:$0xff]
  %v44 = vld [vmem:[%s0 + $0xd4] sm:$0xf]
  %v45 = vld [vmem:[%s0 + $0xd8] sm:$0xff]
  %v46 = vld [vmem:[%s0 + $0xe0] sm:$0xff]
  %v47 = vld [vmem:[%s0 + $0xe8] sm:$0xff]
  %v48 = vld [vmem:[%s0 + $0xf0] sm:$0xff]
  %v49 = vld [vmem:[%s0 + $0xf8] sm:$0xf]
  %v50 = vld [vmem:[%s0 + $0xfc] sm:$0xff]
  %v51 = vld [vmem:[%s0 + $0x104] sm:$0xff]
  %v52 = vld [vmem:[%s0 + $0x10c] sm:$0xff]
  %v53 = vld [vmem:[%s0 + $0x114] sm:$0xff]
  %v54 = vld [vmem:[%s0 + $0x11c] sm:$0xf]
  %v55 = vld [vmem:[%s0 + $0x120] sm:$0xff]
  %v56 = vld [vmem:[%s0 + $0x128] sm:$0xff]
  %v57 = vld [vmem:[%s0 + $0x130] sm:$0xff]
  %v58 = vld [vmem:[%s0 + $0x138] sm:$0xff]
  %v59 = vld [vmem:[%s0 + $0x140] sm:$0xf]
  %v60 = vld [vmem:[%s0 + $0x144] sm:$0xff]
  %v61 = vld [vmem:[%s0 + $0x14c] sm:$0xff]
  %v62 = vld [vmem:[%s0 + $0x154] sm:$0xff]
  %v63 = vld [vmem:[%s0 + $0x15c] sm:$0xff]
  %v64 = vld [vmem:[%s0 + $0x164] sm:$0xf]
  %v65 = vld [vmem:[%s0 + $0x168] sm:$0xff]
  %v66 = vld [vmem:[%s0 + $0x170] sm:$0xff]
  %v67 = vld [vmem:[%s0 + $0x178] sm:$0xff]
  %v68 = vld [vmem:[%s0 + $0x180] sm:$0xff]
  %v69 = vld [vmem:[%s0 + $0x188] sm:$0xf]
  %v70 = vld [vmem:[%s0 + $0x18c] sm:$0xff]
  %v71 = vld [vmem:[%s0 + $0x194] sm:$0xff]
  %v72 = vld [vmem:[%s0 + $0x19c] sm:$0xff]
  %v73 = vld [vmem:[%s0 + $0x1a4] sm:$0xff]
  %v74 = vld [vmem:[%s0 + $0x1ac] sm:$0xf]
  %v75 = vld [vmem:[%s0 + $0x1b0] sm:$0xff]
  %v76 = vld [vmem:[%s0 + $0x1b8] sm:$0xff]
  %v77 = vld [vmem:[%s0 + $0x1c0] sm:$0xff]
  %v78 = vld [vmem:[%s0 + $0x1c8] sm:$0xff]
  %v79 = vld [vmem:[%s0 + $0x1d0] sm:$0xf]
  %v80 = vld [vmem:[%s0 + $0x1d4] sm:$0xff]
  %v81 = vld [vmem:[%s0 + $0x1dc] sm:$0xff]
  %v82 = vld [vmem:[%s0 + $0x1e4] sm:$0xff]
  %v83 = vld [vmem:[%s0 + $0x1ec] sm:$0xff]
  %v84 = vld [vmem:[%s0 + $0x1f4] sm:$0xf]
  %v85 = vld [vmem:[%s0 + $0x1f8] sm:$0xff]
  %v86 = vld [vmem:[%s0 + $0x200] sm:$0xff]
  %v87 = vld [vmem:[%s0 + $0x208] sm:$0xff]
  %v88 = vld [vmem:[%s0 + $0x210] sm:$0xff]
  %v89 = vld [vmem:[%s0 + $0x218] sm:$0xf]
  %v90 = vld [vmem:[%s0 + $0x21c] sm:$0xff]
  %v91 = vld [vmem:[%s0 + $0x224] sm:$0xff]
  %v92 = vld [vmem:[%s0 + $0x22c] sm:$0xff]
  %v93 = vld [vmem:[%s0 + $0x234] sm:$0xff]
  %v94 = vld [vmem:[%s0 + $0x23c] sm:$0xf]
  %v95 = vld [vmem:[%s1] sm:$0xf]
  %v96 = vld [vmem:[%s1 + $0x4] sm:$0xf]
  %v97 = vld [vmem:[%s1 + $0x8] sm:$0xf]
  %v98 = vld [vmem:[%s1 + $0xc] sm:$0xf]
  %v99 = vld [vmem:[%s1 + $0x10] sm:$0xf]
  %v100 = vld [vmem:[%s1 + $0x14] sm:$0xf]
  %v101 = vld [vmem:[%s1 + $0x18] sm:$0xf]
  %v102 = vld [vmem:[%s1 + $0x1c] sm:$0xf]
  %v103 = vld [vmem:[%s1 + $0x20] sm:$0xf]
  %v104 = vld [vmem:[%s1 + $0x24] sm:$0xf]
  %v105 = vld [vmem:[%s1 + $0x28] sm:$0xf]
  %v106 = vld [vmem:[%s1 + $0x2c] sm:$0xf]
  %v107 = vld [vmem:[%s1 + $0x30] sm:$0xf]
  %v108 = vld [vmem:[%s1 + $0x34] sm:$0xf]
  %v109 = vld [vmem:[%s1 + $0x38] sm:$0xf]
  %v110 = vld [vmem:[%s1 + $0x3c] sm:$0xf]
  %v111 = vld [vmem:[%s1 + $0x40] sm:$0xf]
  %v112 = vld [vmem:[%s1 + $0x44] sm:$0xf]
  %v113 = vld [vmem:[%s1 + $0x48] sm:$0xf]
  %v114 = vld [vmem:[%s1 + $0x4c] sm:$0xf]
  %v115 = vld [vmem:[%s1 + $0x50] sm:$0xf]
  %v116 = vld [vmem:[%s1 + $0x54] sm:$0xf]
  %v117 = vld [vmem:[%s1 + $0x58] sm:$0xf]
  %v118 = vld [vmem:[%s1 + $0x5c] sm:$0xf]
  %v119 = vld [vmem:[%s1 + $0x60] sm:$0xf]
  %v120 = vld [vmem:[%s1 + $0x64] sm:$0xf]
  %v121 = vld [vmem:[%s1 + $0x68] sm:$0xf]
  %v122 = vld [vmem:[%s1 + $0x6c] sm:$0xf]
  %v123 = vld [vmem:[%s1 + $0x70] sm:$0xf]
  %v124 = vld [vmem:[%s1 + $0x74] sm:$0xf]
  %v125 = vld [vmem:[%s1 + $0x78] sm:$0xf]
  %v126 = vld [vmem:[%s1 + $0x7c] sm:$0xf]
  %v127 = vld [vmem:[%s1 + $0x80] sm:$0xf]
  %v128 = vld [vmem:[%s1 + $0x84] sm:$0xf]
  %v129 = vld [vmem:[%s1 + $0x88] sm:$0xf]
  %v130 = vld [vmem:[%s1 + $0x8c] sm:$0xf]
  %v131 = vld [vmem:[%s1 + $0x90] sm:$0xf]
  %v132 = vld [vmem:[%s1 + $0x94] sm:$0xf]
  %v133 = vld [vmem:[%s1 + $0x98] sm:$0xf]
  %v134 = vld [vmem:[%s1 + $0x9c] sm:$0xf]
  %v135 = vld [vmem:[%s1 + $0xa0] sm:$0xf]
  %v136 = vld [vmem:[%s1 + $0xa4] sm:$0xf]
  %v137 = vld [vmem:[%s1 + $0xa8] sm:$0xf]
  %v138 = vld [vmem:[%s1 + $0xac] sm:$0xf]
  %v139 = vld [vmem:[%s1 + $0xb0] sm:$0xf]
  %v140 = vld [vmem:[%s1 + $0xb4] sm:$0xf]
  %v141 = vld [vmem:[%s1 + $0xb8] sm:$0xf]
  %v142 = vld [vmem:[%s1 + $0xbc] sm:$0xf]
  %v143 = vld [vmem:[%s1 + $0xc0] sm:$0xf]
  %v144 = vld [vmem:[%s1 + $0xc4] sm:$0xf]
  %v145 = vld [vmem:[%s1 + $0xc8] sm:$0xf]
  %v146 = vld [vmem:[%s1 + $0xcc] sm:$0xf]
  %v147 = vld [vmem:[%s1 + $0xd0] sm:$0xf]
  %v148 = vld [vmem:[%s1 + $0xd4] sm:$0xf]
  %v149 = vld [vmem:[%s1 + $0xd8] sm:$0xf]
  %v150 = vld [vmem:[%s1 + $0xdc] sm:$0xf]
  %v151 = vld [vmem:[%s1 + $0xe0] sm:$0xf]
  %v152 = vld [vmem:[%s1 + $0xe4] sm:$0xf]
  %v153 = vld [vmem:[%s1 + $0xe8] sm:$0xf]
  %v154 = vld [vmem:[%s1 + $0xec] sm:$0xf]
  %v155 = vld [vmem:[%s1 + $0xf0] sm:$0xf]
  %v156 = vld [vmem:[%s1 + $0xf4] sm:$0xf]
  %v157 = vld [vmem:[%s1 + $0xf8] sm:$0xf]
  %v158 = vld [vmem:[%s1 + $0xfc] sm:$0xf]
  %v159 = vld [vmem:[%s1 + $0x100] sm:$0xf]
  %v160 = vld [vmem:[%s1 + $0x104] sm:$0xf]
  %v161 = vld [vmem:[%s1 + $0x108] sm:$0xf]
  %v162 = vld [vmem:[%s1 + $0x10c] sm:$0xf]
  %v163 = vld [vmem:[%s1 + $0x110] sm:$0xf]
  %v164 = vld [vmem:[%s1 + $0x114] sm:$0xf]
  %v165 = vld [vmem:[%s1 + $0x118] sm:$0xf]
  %v166 = vld [vmem:[%s1 + $0x11c] sm:$0xf]
  %v167 = vld [vmem:[%s1 + $0x120] sm:$0xf]
  %v168 = vld [vmem:[%s1 + $0x124] sm:$0xf]
  %v169 = vld [vmem:[%s1 + $0x128] sm:$0xf]
  %v170 = vld [vmem:[%s1 + $0x12c] sm:$0xf]
  %v171 = vld [vmem:[%s1 + $0x130] sm:$0xf]
  %v172 = vld [vmem:[%s1 + $0x134] sm:$0xf]
  %v173 = vld [vmem:[%s1 + $0x138] sm:$0xf]
  %v174 = vld [vmem:[%s1 + $0x13c] sm:$0xf]
  %v175 = vld [vmem:[%s1 + $0x140] sm:$0xf]
  %v176 = vld [vmem:[%s1 + $0x144] sm:$0xf]
  %v177 = vld [vmem:[%s1 + $0x148] sm:$0xf]
  %v178 = vld [vmem:[%s1 + $0x14c] sm:$0xf]
  %v179 = vld [vmem:[%s1 + $0x150] sm:$0xf]
  %v180 = vld [vmem:[%s1 + $0x154] sm:$0xf]
  %v181 = vld [vmem:[%s1 + $0x158] sm:$0xf]
  %v182 = vld [vmem:[%s1 + $0x15c] sm:$0xf]
  %v183 = vld [vmem:[%s1 + $0x160] sm:$0xf]
  %v184 = vld [vmem:[%s1 + $0x164] sm:$0xf]
  %v185 = vld [vmem:[%s1 + $0x168] sm:$0xf]
  %v186 = vld [vmem:[%s1 + $0x16c] sm:$0xf]
  %v187 = vld [vmem:[%s1 + $0x170] sm:$0xf]
  %v188 = vld [vmem:[%s1 + $0x174] sm:$0xf]
  %v189 = vld [vmem:[%s1 + $0x178] sm:$0xf]
  %v190 = vld [vmem:[%s1 + $0x17c] sm:$0xf]
  %v191 = vld [vmem:[%s1 + $0x180] sm:$0xf]
  %v192 = vld [vmem:[%s1 + $0x184] sm:$0xf]
  %v193 = vld [vmem:[%s1 + $0x188] sm:$0xf]
  %v194 = vld [vmem:[%s1 + $0x18c] sm:$0xf]
  %v195 = vld [vmem:[%s1 + $0x190] sm:$0xf]
  %v196 = vld [vmem:[%s1 + $0x194] sm:$0xf]
  %v197 = vld [vmem:[%s1 + $0x198] sm:$0xf]
  %v198 = vld [vmem:[%s1 + $0x19c] sm:$0xf]
  %v199 = vld [vmem:[%s1 + $0x1a0] sm:$0xf]
  %v200 = vld [vmem:[%s1 + $0x1a4] sm:$0xf]
  %v201 = vld [vmem:[%s1 + $0x1a8] sm:$0xf]
  %v202 = vld [vmem:[%s1 + $0x1ac] sm:$0xf]
  %v203 = vld [vmem:[%s1 + $0x1b0] sm:$0xf]
  %v204 = vld [vmem:[%s1 + $0x1b4] sm:$0xf]
  %v205 = vld [vmem:[%s1 + $0x1b8] sm:$0xf]
  %v206 = vld [vmem:[%s1 + $0x1bc] sm:$0xf]
  %v207 = vld [vmem:[%s1 + $0x1c0] sm:$0xf]
  %v208 = vld [vmem:[%s1 + $0x1c4] sm:$0xf]
  %v209 = vld [vmem:[%s1 + $0x1c8] sm:$0xf]
  %v210 = vld [vmem:[%s1 + $0x1cc] sm:$0xf]
  %v211 = vld [vmem:[%s1 + $0x1d0] sm:$0xf]
  %v212 = vld [vmem:[%s1 + $0x1d4] sm:$0xf]
  %v213 = vld [vmem:[%s1 + $0x1d8] sm:$0xf]
  %v214 = vld [vmem:[%s1 + $0x1dc] sm:$0xf]
  %v215 = vld [vmem:[%s1 + $0x1e0] sm:$0xf]
  %v216 = vld [vmem:[%s1 + $0x1e4] sm:$0xf]
  %v217 = vld [vmem:[%s1 + $0x1e8] sm:$0xf]
  %v218 = vld [vmem:[%s1 + $0x1ec] sm:$0xf]
  %v219 = vld [vmem:[%s1 + $0x1f0] sm:$0xf]
  %v220 = vld [vmem:[%s1 + $0x1f4] sm:$0xf]
  %v221 = vld [vmem:[%s1 + $0x1f8] sm:$0xf]
  %v222 = vld [vmem:[%s1 + $0x1fc] sm:$0xf]
  %v223 = vld [vmem:[%s1 + $0x200] sm:$0xf]
  %v224 = vld [vmem:[%s1 + $0x204] sm:$0xf]
  %v225 = vld [vmem:[%s1 + $0x208] sm:$0xf]
  %v226 = vld [vmem:[%s1 + $0x20c] sm:$0xf]
  %v227 = vld [vmem:[%s1 + $0x210] sm:$0xf]
  %v228 = vld [vmem:[%s1 + $0x214] sm:$0xf]
  %v229 = vld [vmem:[%s1 + $0x218] sm:$0xf]
  %v230 = vld [vmem:[%s1 + $0x21c] sm:$0xf]
  %v231 = vld [vmem:[%s1 + $0x220] sm:$0xf]
  %v232 = vld [vmem:[%s1 + $0x224] sm:$0xf]
  %v233 = vld [vmem:[%s1 + $0x228] sm:$0xf]
  %v234 = vld [vmem:[%s1 + $0x22c] sm:$0xf]
  %v235 = vld [vmem:[%s1 + $0x230] sm:$0xf]
  %v236 = vld [vmem:[%s1 + $0x234] sm:$0xf]
  %v237 = vld [vmem:[%s1 + $0x238] sm:$0xf]
  %v238 = vld [vmem:[%s1 + $0x23c] sm:$0xf]
  %v239 = vld [vmem:[%s2] sm:$0x1]
  %v241 = vlaneseq
  %v242 = vshrl.u32 %v241, 7
  %v243 = vsub.s32 0, %v242
  %v244 = vrot.slane %v239, %v243
  %v326 = vunpack.c.l.b16 %v15
  %v327 = vunpack.c.h.b16 %v15
  %v328 = vunpack.c.l.b16 %v16
  %v329 = vunpack.c.h.b16 %v16
  %v330 = vunpack.c.l.b16 %v17
  %v331 = vunpack.c.h.b16 %v17
  %v332 = vunpack.c.l.b16 %v18
  %v333 = vunpack.c.h.b16 %v18
  %v334 = vunpack.c.l.b16 %v19
  %v335 = vunpack.c.l.b16 %v20
  %v336 = vunpack.c.h.b16 %v20
  %v337 = vunpack.c.l.b16 %v21
  %v338 = vunpack.c.h.b16 %v21
  %v339 = vunpack.c.l.b16 %v22
  %v340 = vunpack.c.h.b16 %v22
  %v341 = vunpack.c.l.b16 %v23
  %v342 = vunpack.c.h.b16 %v23
  %v343 = vunpack.c.l.b16 %v24
  %v344 = vunpack.c.l.b16 %v25
  %v345 = vunpack.c.h.b16 %v25
  %v346 = vunpack.c.l.b16 %v26
  %v347 = vunpack.c.h.b16 %v26
  %v348 = vunpack.c.l.b16 %v27
  %v349 = vunpack.c.h.b16 %v27
  %v350 = vunpack.c.l.b16 %v28
  %v351 = vunpack.c.h.b16 %v28
  %v352 = vunpack.c.l.b16 %v29
  %v353 = vunpack.c.l.b16 %v30
  %v354 = vunpack.c.h.b16 %v30
  %v355 = vunpack.c.l.b16 %v31
  %v356 = vunpack.c.h.b16 %v31
  %v357 = vunpack.c.l.b16 %v32
  %v358 = vunpack.c.h.b16 %v32
  %v359 = vunpack.c.l.b16 %v33
  %v360 = vunpack.c.h.b16 %v33
  %v361 = vunpack.c.l.b16 %v34
  %v362 = vunpack.c.l.b16 %v35
  %v363 = vunpack.c.h.b16 %v35
  %v364 = vunpack.c.l.b16 %v36
  %v365 = vunpack.c.h.b16 %v36
  %v366 = vunpack.c.l.b16 %v37
  %v367 = vunpack.c.h.b16 %v37
  %v368 = vunpack.c.l.b16 %v38
  %v369 = vunpack.c.h.b16 %v38
  %v370 = vunpack.c.l.b16 %v39
  %v371 = vunpack.c.l.b16 %v40
  %v372 = vunpack.c.h.b16 %v40
  %v373 = vunpack.c.l.b16 %v41
  %v374 = vunpack.c.h.b16 %v41
  %v375 = vunpack.c.l.b16 %v42
  %v376 = vunpack.c.h.b16 %v42
  %v377 = vunpack.c.l.b16 %v43
  %v378 = vunpack.c.h.b16 %v43
  %v379 = vunpack.c.l.b16 %v44
  %v380 = vunpack.c.l.b16 %v45
  %v381 = vunpack.c.h.b16 %v45
  %v382 = vunpack.c.l.b16 %v46
  %v383 = vunpack.c.h.b16 %v46
  %v384 = vunpack.c.l.b16 %v47
  %v385 = vunpack.c.h.b16 %v47
  %v386 = vunpack.c.l.b16 %v48
  %v387 = vunpack.c.h.b16 %v48
  %v388 = vunpack.c.l.b16 %v49
  %v389 = vunpack.c.l.b16 %v50
  %v390 = vunpack.c.h.b16 %v50
  %v391 = vunpack.c.l.b16 %v51
  %v392 = vunpack.c.h.b16 %v51
  %v393 = vunpack.c.l.b16 %v52
  %v394 = vunpack.c.h.b16 %v52
  %v395 = vunpack.c.l.b16 %v53
  %v396 = vunpack.c.h.b16 %v53
  %v397 = vunpack.c.l.b16 %v54
  %v398 = vunpack.c.l.b16 %v55
  %v399 = vunpack.c.h.b16 %v55
  %v400 = vunpack.c.l.b16 %v56
  %v401 = vunpack.c.h.b16 %v56
  %v402 = vunpack.c.l.b16 %v57
  %v403 = vunpack.c.h.b16 %v57
  %v404 = vunpack.c.l.b16 %v58
  %v405 = vunpack.c.h.b16 %v58
  %v406 = vunpack.c.l.b16 %v59
  %v407 = vunpack.c.l.b16 %v60
  %v408 = vunpack.c.h.b16 %v60
  %v409 = vunpack.c.l.b16 %v61
  %v410 = vunpack.c.h.b16 %v61
  %v411 = vunpack.c.l.b16 %v62
  %v412 = vunpack.c.h.b16 %v62
  %v413 = vunpack.c.l.b16 %v63
  %v414 = vunpack.c.h.b16 %v63
  %v415 = vunpack.c.l.b16 %v64
  %v416 = vunpack.c.l.b16 %v65
  %v417 = vunpack.c.h.b16 %v65
  %v418 = vunpack.c.l.b16 %v66
  %v419 = vunpack.c.h.b16 %v66
  %v420 = vunpack.c.l.b16 %v67
  %v421 = vunpack.c.h.b16 %v67
  %v422 = vunpack.c.l.b16 %v68
  %v423 = vunpack.c.h.b16 %v68
  %v424 = vunpack.c.l.b16 %v69
  %v425 = vunpack.c.l.b16 %v70
  %v426 = vunpack.c.h.b16 %v70
  %v427 = vunpack.c.l.b16 %v71
  %v428 = vunpack.c.h.b16 %v71
  %v429 = vunpack.c.l.b16 %v72
  %v430 = vunpack.c.h.b16 %v72
  %v431 = vunpack.c.l.b16 %v73
  %v432 = vunpack.c.h.b16 %v73
  %v433 = vunpack.c.l.b16 %v74
  %v434 = vunpack.c.l.b16 %v75
  %v435 = vunpack.c.h.b16 %v75
  %v436 = vunpack.c.l.b16 %v76
  %v437 = vunpack.c.h.b16 %v76
  %v438 = vunpack.c.l.b16 %v77
  %v439 = vunpack.c.h.b16 %v77
  %v440 = vunpack.c.l.b16 %v78
  %v441 = vunpack.c.h.b16 %v78
  %v442 = vunpack.c.l.b16 %v79
  %v443 = vunpack.c.l.b16 %v80
  %v444 = vunpack.c.h.b16 %v80
  %v445 = vunpack.c.l.b16 %v81
  %v446 = vunpack.c.h.b16 %v81
  %v447 = vunpack.c.l.b16 %v82
  %v448 = vunpack.c.h.b16 %v82
  %v449 = vunpack.c.l.b16 %v83
  %v450 = vunpack.c.h.b16 %v83
  %v451 = vunpack.c.l.b16 %v84
  %v452 = vunpack.c.l.b16 %v85
  %v453 = vunpack.c.h.b16 %v85
  %v454 = vunpack.c.l.b16 %v86
  %v455 = vunpack.c.h.b16 %v86
  %v456 = vunpack.c.l.b16 %v87
  %v457 = vunpack.c.h.b16 %v87
  %v458 = vunpack.c.l.b16 %v88
  %v459 = vunpack.c.h.b16 %v88
  %v460 = vunpack.c.l.b16 %v89
  %v461 = vunpack.c.l.b16 %v90
  %v462 = vunpack.c.h.b16 %v90
  %v463 = vunpack.c.l.b16 %v91
  %v464 = vunpack.c.h.b16 %v91
  %v465 = vunpack.c.l.b16 %v92
  %v466 = vunpack.c.h.b16 %v92
  %v467 = vunpack.c.l.b16 %v93
  %v468 = vunpack.c.h.b16 %v93
  %v469 = vunpack.c.l.b16 %v94
  %v470 = vpack.c.b16 %v335, %v326
  %v471 = vpack.c.b16 %v336, %v327
  %v472 = vpack.c.b16 %v337, %v328
  %v473 = vpack.c.b16 %v338, %v329
  %v474 = vpack.c.b16 %v339, %v330
  %v475 = vpack.c.b16 %v340, %v331
  %v476 = vpack.c.b16 %v341, %v332
  %v477 = vpack.c.b16 %v342, %v333
  %v478 = vpack.c.b16 %v343, %v334
  %v479 = vpack.c.b16 %v353, %v344
  %v480 = vpack.c.b16 %v354, %v345
  %v481 = vpack.c.b16 %v355, %v346
  %v482 = vpack.c.b16 %v356, %v347
  %v483 = vpack.c.b16 %v357, %v348
  %v484 = vpack.c.b16 %v358, %v349
  %v485 = vpack.c.b16 %v359, %v350
  %v486 = vpack.c.b16 %v360, %v351
  %v487 = vpack.c.b16 %v361, %v352
  %v488 = vpack.c.b16 %v371, %v362
  %v489 = vpack.c.b16 %v372, %v363
  %v490 = vpack.c.b16 %v373, %v364
  %v491 = vpack.c.b16 %v374, %v365
  %v492 = vpack.c.b16 %v375, %v366
  %v493 = vpack.c.b16 %v376, %v367
  %v494 = vpack.c.b16 %v377, %v368
  %v495 = vpack.c.b16 %v378, %v369
  %v496 = vpack.c.b16 %v379, %v370
  %v497 = vpack.c.b16 %v389, %v380
  %v498 = vpack.c.b16 %v390, %v381
  %v499 = vpack.c.b16 %v391, %v382
  %v500 = vpack.c.b16 %v392, %v383
  %v501 = vpack.c.b16 %v393, %v384
  %v502 = vpack.c.b16 %v394, %v385
  %v503 = vpack.c.b16 %v395, %v386
  %v504 = vpack.c.b16 %v396, %v387
  %v505 = vpack.c.b16 %v397, %v388
  %v506 = vpack.c.b16 %v407, %v398
  %v507 = vpack.c.b16 %v408, %v399
  %v508 = vpack.c.b16 %v409, %v400
  %v509 = vpack.c.b16 %v410, %v401
  %v510 = vpack.c.b16 %v411, %v402
  %v511 = vpack.c.b16 %v412, %v403
  %v512 = vpack.c.b16 %v413, %v404
  %v513 = vpack.c.b16 %v414, %v405
  %v514 = vpack.c.b16 %v415, %v406
  %v515 = vpack.c.b16 %v425, %v416
  %v516 = vpack.c.b16 %v426, %v417
  %v517 = vpack.c.b16 %v427, %v418
  %v518 = vpack.c.b16 %v428, %v419
  %v519 = vpack.c.b16 %v429, %v420
  %v520 = vpack.c.b16 %v430, %v421
  %v521 = vpack.c.b16 %v431, %v422
  %v522 = vpack.c.b16 %v432, %v423
  %v523 = vpack.c.b16 %v433, %v424
  %v524 = vpack.c.b16 %v443, %v434
  %v525 = vpack.c.b16 %v444, %v435
  %v526 = vpack.c.b16 %v445, %v436
  %v527 = vpack.c.b16 %v446, %v437
  %v528 = vpack.c.b16 %v447, %v438
  %v529 = vpack.c.b16 %v448, %v439
  %v530 = vpack.c.b16 %v449, %v440
  %v531 = vpack.c.b16 %v450, %v441
  %v532 = vpack.c.b16 %v451, %v442
  %v533 = vpack.c.b16 %v461, %v452
  %v534 = vpack.c.b16 %v462, %v453
  %v535 = vpack.c.b16 %v463, %v454
  %v536 = vpack.c.b16 %v464, %v455
  %v537 = vpack.c.b16 %v465, %v456
  %v538 = vpack.c.b16 %v466, %v457
  %v539 = vpack.c.b16 %v467, %v458
  %v540 = vpack.c.b16 %v468, %v459
  %v541 = vpack.c.b16 %v469, %v460
  %v758 = vunpack.c.l.b16 %v95
  %v759 = vunpack.c.l.b16 %v96
  %v760 = vunpack.c.l.b16 %v97
  %v761 = vunpack.c.l.b16 %v98
  %v762 = vunpack.c.l.b16 %v99
  %v763 = vunpack.c.l.b16 %v100
  %v764 = vunpack.c.l.b16 %v101
  %v765 = vunpack.c.l.b16 %v102
  %v766 = vunpack.c.l.b16 %v103
  %v767 = vunpack.c.l.b16 %v104
  %v768 = vunpack.c.l.b16 %v105
  %v769 = vunpack.c.l.b16 %v106
  %v770 = vunpack.c.l.b16 %v107
  %v771 = vunpack.c.l.b16 %v108
  %v772 = vunpack.c.l.b16 %v109
  %v773 = vunpack.c.l.b16 %v110
  %v774 = vunpack.c.l.b16 %v111
  %v775 = vunpack.c.l.b16 %v112
  %v776 = vunpack.c.l.b16 %v113
  %v777 = vunpack.c.l.b16 %v114
  %v778 = vunpack.c.l.b16 %v115
  %v779 = vunpack.c.l.b16 %v116
  %v780 = vunpack.c.l.b16 %v117
  %v781 = vunpack.c.l.b16 %v118
  %v782 = vunpack.c.l.b16 %v119
  %v783 = vunpack.c.l.b16 %v120
  %v784 = vunpack.c.l.b16 %v121
  %v785 = vunpack.c.l.b16 %v122
  %v786 = vunpack.c.l.b16 %v123
  %v787 = vunpack.c.l.b16 %v124
  %v788 = vunpack.c.l.b16 %v125
  %v789 = vunpack.c.l.b16 %v126
  %v790 = vunpack.c.l.b16 %v127
  %v791 = vunpack.c.l.b16 %v128
  %v792 = vunpack.c.l.b16 %v129
  %v793 = vunpack.c.l.b16 %v130
  %v794 = vunpack.c.l.b16 %v131
  %v795 = vunpack.c.l.b16 %v132
  %v796 = vunpack.c.l.b16 %v133
  %v797 = vunpack.c.l.b16 %v134
  %v798 = vunpack.c.l.b16 %v135
  %v799 = vunpack.c.l.b16 %v136
  %v800 = vunpack.c.l.b16 %v137
  %v801 = vunpack.c.l.b16 %v138
  %v802 = vunpack.c.l.b16 %v139
  %v803 = vunpack.c.l.b16 %v140
  %v804 = vunpack.c.l.b16 %v141
  %v805 = vunpack.c.l.b16 %v142
  %v806 = vunpack.c.l.b16 %v143
  %v807 = vunpack.c.l.b16 %v144
  %v808 = vunpack.c.l.b16 %v145
  %v809 = vunpack.c.l.b16 %v146
  %v810 = vunpack.c.l.b16 %v147
  %v811 = vunpack.c.l.b16 %v148
  %v812 = vunpack.c.l.b16 %v149
  %v813 = vunpack.c.l.b16 %v150
  %v814 = vunpack.c.l.b16 %v151
  %v815 = vunpack.c.l.b16 %v152
  %v816 = vunpack.c.l.b16 %v153
  %v817 = vunpack.c.l.b16 %v154
  %v818 = vunpack.c.l.b16 %v155
  %v819 = vunpack.c.l.b16 %v156
  %v820 = vunpack.c.l.b16 %v157
  %v821 = vunpack.c.l.b16 %v158
  %v822 = vunpack.c.l.b16 %v159
  %v823 = vunpack.c.l.b16 %v160
  %v824 = vunpack.c.l.b16 %v161
  %v825 = vunpack.c.l.b16 %v162
  %v826 = vunpack.c.l.b16 %v163
  %v827 = vunpack.c.l.b16 %v164
  %v828 = vunpack.c.l.b16 %v165
  %v829 = vunpack.c.l.b16 %v166
  %v830 = vunpack.c.l.b16 %v167
  %v831 = vunpack.c.l.b16 %v168
  %v832 = vunpack.c.l.b16 %v169
  %v833 = vunpack.c.l.b16 %v170
  %v834 = vunpack.c.l.b16 %v171
  %v835 = vunpack.c.l.b16 %v172
  %v836 = vunpack.c.l.b16 %v173
  %v837 = vunpack.c.l.b16 %v174
  %v838 = vunpack.c.l.b16 %v175
  %v839 = vunpack.c.l.b16 %v176
  %v840 = vunpack.c.l.b16 %v177
  %v841 = vunpack.c.l.b16 %v178
  %v842 = vunpack.c.l.b16 %v179
  %v843 = vunpack.c.l.b16 %v180
  %v844 = vunpack.c.l.b16 %v181
  %v845 = vunpack.c.l.b16 %v182
  %v846 = vunpack.c.l.b16 %v183
  %v847 = vunpack.c.l.b16 %v184
  %v848 = vunpack.c.l.b16 %v185
  %v849 = vunpack.c.l.b16 %v186
  %v850 = vunpack.c.l.b16 %v187
  %v851 = vunpack.c.l.b16 %v188
  %v852 = vunpack.c.l.b16 %v189
  %v853 = vunpack.c.l.b16 %v190
  %v854 = vunpack.c.l.b16 %v191
  %v855 = vunpack.c.l.b16 %v192
  %v856 = vunpack.c.l.b16 %v193
  %v857 = vunpack.c.l.b16 %v194
  %v858 = vunpack.c.l.b16 %v195
  %v859 = vunpack.c.l.b16 %v196
  %v860 = vunpack.c.l.b16 %v197
  %v861 = vunpack.c.l.b16 %v198
  %v862 = vunpack.c.l.b16 %v199
  %v863 = vunpack.c.l.b16 %v200
  %v864 = vunpack.c.l.b16 %v201
  %v865 = vunpack.c.l.b16 %v202
  %v866 = vunpack.c.l.b16 %v203
  %v867 = vunpack.c.l.b16 %v204
  %v868 = vunpack.c.l.b16 %v205
  %v869 = vunpack.c.l.b16 %v206
  %v870 = vunpack.c.l.b16 %v207
  %v871 = vunpack.c.l.b16 %v208
  %v872 = vunpack.c.l.b16 %v209
  %v873 = vunpack.c.l.b16 %v210
  %v874 = vunpack.c.l.b16 %v211
  %v875 = vunpack.c.l.b16 %v212
  %v876 = vunpack.c.l.b16 %v213
  %v877 = vunpack.c.l.b16 %v214
  %v878 = vunpack.c.l.b16 %v215
  %v879 = vunpack.c.l.b16 %v216
  %v880 = vunpack.c.l.b16 %v217
  %v881 = vunpack.c.l.b16 %v218
  %v882 = vunpack.c.l.b16 %v219
  %v883 = vunpack.c.l.b16 %v220
  %v884 = vunpack.c.l.b16 %v221
  %v885 = vunpack.c.l.b16 %v222
  %v886 = vunpack.c.l.b16 %v223
  %v887 = vunpack.c.l.b16 %v224
  %v888 = vunpack.c.l.b16 %v225
  %v889 = vunpack.c.l.b16 %v226
  %v890 = vunpack.c.l.b16 %v227
  %v891 = vunpack.c.l.b16 %v228
  %v892 = vunpack.c.l.b16 %v229
  %v893 = vunpack.c.l.b16 %v230
  %v894 = vunpack.c.l.b16 %v231
  %v895 = vunpack.c.l.b16 %v232
  %v896 = vunpack.c.l.b16 %v233
  %v897 = vunpack.c.l.b16 %v234
  %v898 = vunpack.c.l.b16 %v235
  %v899 = vunpack.c.l.b16 %v236
  %v900 = vunpack.c.l.b16 %v237
  %v901 = vunpack.c.l.b16 %v238
  %v902 = vpack.c.b16 %v759, %v758
  %v903 = vpack.c.b16 %v761, %v760
  %v904 = vpack.c.b16 %v763, %v762
  %v905 = vpack.c.b16 %v765, %v764
  %v906 = vpack.c.b16 %v767, %v766
  %v907 = vpack.c.b16 %v769, %v768
  %v908 = vpack.c.b16 %v771, %v770
  %v909 = vpack.c.b16 %v773, %v772
  %v910 = vpack.c.b16 %v775, %v774
  %v911 = vpack.c.b16 %v777, %v776
  %v912 = vpack.c.b16 %v779, %v778
  %v913 = vpack.c.b16 %v781, %v780
  %v914 = vpack.c.b16 %v783, %v782
  %v915 = vpack.c.b16 %v785, %v784
  %v916 = vpack.c.b16 %v787, %v786
  %v917 = vpack.c.b16 %v789, %v788
  %v918 = vpack.c.b16 %v791, %v790
  %v919 = vpack.c.b16 %v793, %v792
  %v920 = vpack.c.b16 %v795, %v794
  %v921 = vpack.c.b16 %v797, %v796
  %v922 = vpack.c.b16 %v799, %v798
  %v923 = vpack.c.b16 %v801, %v800
  %v924 = vpack.c.b16 %v803, %v802
  %v925 = vpack.c.b16 %v805, %v804
  %v926 = vpack.c.b16 %v807, %v806
  %v927 = vpack.c.b16 %v809, %v808
  %v928 = vpack.c.b16 %v811, %v810
  %v929 = vpack.c.b16 %v813, %v812
  %v930 = vpack.c.b16 %v815, %v814
  %v931 = vpack.c.b16 %v817, %v816
  %v932 = vpack.c.b16 %v819, %v818
  %v933 = vpack.c.b16 %v821, %v820
  %v934 = vpack.c.b16 %v823, %v822
  %v935 = vpack.c.b16 %v825, %v824
  %v936 = vpack.c.b16 %v827, %v826
  %v937 = vpack.c.b16 %v829, %v828
  %v938 = vpack.c.b16 %v831, %v830
  %v939 = vpack.c.b16 %v833, %v832
  %v940 = vpack.c.b16 %v835, %v834
  %v941 = vpack.c.b16 %v837, %v836
  %v942 = vpack.c.b16 %v839, %v838
  %v943 = vpack.c.b16 %v841, %v840
  %v944 = vpack.c.b16 %v843, %v842
  %v945 = vpack.c.b16 %v845, %v844
  %v946 = vpack.c.b16 %v847, %v846
  %v947 = vpack.c.b16 %v849, %v848
  %v948 = vpack.c.b16 %v851, %v850
  %v949 = vpack.c.b16 %v853, %v852
  %v950 = vpack.c.b16 %v855, %v854
  %v951 = vpack.c.b16 %v857, %v856
  %v952 = vpack.c.b16 %v859, %v858
  %v953 = vpack.c.b16 %v861, %v860
  %v954 = vpack.c.b16 %v863, %v862
  %v955 = vpack.c.b16 %v865, %v864
  %v956 = vpack.c.b16 %v867, %v866
  %v957 = vpack.c.b16 %v869, %v868
  %v958 = vpack.c.b16 %v871, %v870
  %v959 = vpack.c.b16 %v873, %v872
  %v960 = vpack.c.b16 %v875, %v874
  %v961 = vpack.c.b16 %v877, %v876
  %v962 = vpack.c.b16 %v879, %v878
  %v963 = vpack.c.b16 %v881, %v880
  %v964 = vpack.c.b16 %v883, %v882
  %v965 = vpack.c.b16 %v885, %v884
  %v966 = vpack.c.b16 %v887, %v886
  %v967 = vpack.c.b16 %v889, %v888
  %v968 = vpack.c.b16 %v891, %v890
  %v969 = vpack.c.b16 %v893, %v892
  %v970 = vpack.c.b16 %v895, %v894
  %v971 = vpack.c.b16 %v897, %v896
  %v972 = vpack.c.b16 %v899, %v898
  %v973 = vpack.c.b16 %v901, %v900
  %1046 = vmatprep.subr.bf16.mxu0 0
  %1047 = vmatpush1.bf16.msra.mxu0 %v902
  %1048 = vmatprep.subr.bf16.mxu0 0
  %1049 = vmatpush1.bf16.msra.mxu0 %v903
  %1050 = vmatprep.subr.bf16.mxu0 0
  %1051 = vmatpush1.bf16.msra.mxu0 %v904
  %1052 = vmatprep.subr.bf16.mxu0 0
  %1053 = vmatpush1.bf16.msra.mxu0 %v905
  %1054 = vmatprep.subr.bf16.mxu0 0
  %1055 = vmatpush1.bf16.msra.mxu0 %v906
  %1056 = vmatprep.subr.bf16.mxu0 0
  %1057 = vmatpush1.bf16.msra.mxu0 %v907
  %1058 = vmatprep.subr.bf16.mxu0 0
  %1059 = vmatpush1.bf16.msra.mxu0 %v908
  %1060 = vmatprep.subr.bf16.mxu0 0
  %1061 = vmatpush1.bf16.msra.mxu0 %v909
  %1062 = vmatprep.subr.bf16.mxu0 0
  %1063 = vmatpush1.bf16.msra.mxu0 %v910
  %1064 = vmatprep.subr.bf16.mxu0 0
  %1065 = vmatpush1.bf16.msra.mxu0 %v911
  %1066 = vmatprep.subr.bf16.mxu0 0
  %1067 = vmatpush1.bf16.msra.mxu0 %v912
  %1068 = vmatprep.subr.bf16.mxu0 0
  %1069 = vmatpush1.bf16.msra.mxu0 %v913
  %1070 = vmatprep.subr.bf16.mxu0 0
  %1071 = vmatpush1.bf16.msra.mxu0 %v914
  %1072 = vmatprep.subr.bf16.mxu0 0
  %1073 = vmatpush1.bf16.msra.mxu0 %v915
  %1074 = vmatprep.subr.bf16.mxu0 0
  %1075 = vmatpush1.bf16.msra.mxu0 %v916
  %1076 = vmatprep.subr.bf16.mxu0 0
  %1077 = vmatpush1.bf16.msra.mxu0 %v917
  %1078 = vmatprep.mubr.bf16.mxu0 %v471
  %1079 = vmatmul.mubr.bf16.gmra.mrb[0].mxu0 %v470
  %v1080 = vpop.f32.mrb[0].mxu0
  %v1081 = vadd.f32 %v244, %v1080
  %v1082 = vpop.f32.mrb[0].mxu0
  %v1083 = vpop.f32.mrb[0].mxu0
  %v1084 = vadd.f32 %v244, %v1083
  %v1085 = vpop.f32.mrb[0].mxu0
  %1086 = vmatprep.mubr.bf16.mxu0 %v480
  %1087 = vmatmul.mubr.bf16.gmra.mrb[0].mxu0 %v479
  %v1088 = vpop.f32.mrb[0].mxu0
  %v1089 = vadd.f32 %v244, %v1088
  %v1090 = vpop.f32.mrb[0].mxu0
  %v1091 = vpop.f32.mrb[0].mxu0
  %v1092 = vadd.f32 %v244, %v1091
  %v1093 = vpop.f32.mrb[0].mxu0
  %1094 = vmatprep.mubr.bf16.mxu0 %v489
  %1095 = vmatmul.mubr.bf16.gmra.mrb[0].mxu0 %v488
  %v1096 = vpop.f32.mrb[0].mxu0
  %v1097 = vadd.f32 %v244, %v1096
  %v1098 = vpop.f32.mrb[0].mxu0
  %v1099 = vpop.f32.mrb[0].mxu0
  %v1100 = vadd.f32 %v244, %v1099
  %v1101 = vpop.f32.mrb[0].mxu0
  %1102 = vmatprep.mubr.bf16.mxu0 %v498
  %1103 = vmatmul.mubr.bf16.gmra.mrb[0].mxu0 %v497
  %v1104 = vpop.f32.mrb[0].mxu0
  %v1105 = vadd.f32 %v244, %v1104
  %v1106 = vpop.f32.mrb[0].mxu0
  %v1107 = vpop.f32.mrb[0].mxu0
  %v1108 = vadd.f32 %v244, %v1107
  %v1109 = vpop.f32.mrb[0].mxu0
  %1110 = vmatprep.mubr.bf16.mxu0 %v507
  %1111 = vmatmul.mubr.bf16.gmra.mrb[0].mxu0 %v506
  %v1112 = vpop.f32.mrb[0].mxu0
  %v1113 = vadd.f32 %v244, %v1112
  %v1114 = vpop.f32.mrb[0].mxu0
  %v1115 = vpop.f32.mrb[0].mxu0
  %v1116 = vadd.f32 %v244, %v1115
  %v1117 = vpop.f32.mrb[0].mxu0
  %1118 = vmatprep.mubr.bf16.mxu0 %v516
  %1119 = vmatmul.mubr.bf16.gmra.mrb[0].mxu0 %v515
  %v1120 = vpop.f32.mrb[0].mxu0
  %v1121 = vadd.f32 %v244, %v1120
  %v1122 = vpop.f32.mrb[0].mxu0
  %v1123 = vpop.f32.mrb[0].mxu0
  %v1124 = vadd.f32 %v244, %v1123
  %v1125 = vpop.f32.mrb[0].mxu0
  %1126 = vmatprep.mubr.bf16.mxu0 %v525
  %1127 = vmatmul.mubr.bf16.gmra.mrb[0].mxu0 %v524
  %v1128 = vpop.f32.mrb[0].mxu0
  %v1129 = vadd.f32 %v244, %v1128
  %v1130 = vpop.f32.mrb[0].mxu0
  %v1131 = vpop.f32.mrb[0].mxu0
  %v1132 = vadd.f32 %v244, %v1131
  %v1133 = vpop.f32.mrb[0].mxu0
  %1134 = vmatprep.mubr.bf16.mxu0 %v534
  %1135 = vmatmul.mubr.bf16.gmra.mrb[0].mxu0 %v533
  %v1136 = vpop.f32.mrb[0].mxu0
  %v1137 = vadd.f32 %v244, %v1136
  %v1138 = vpop.f32.mrb[0].mxu0
  %v1139 = vpop.f32.mrb[0].mxu0
  %v1140 = vadd.f32 %v244, %v1139
  %v1141 = vpop.f32.mrb[0].mxu0
  %1142 = vdwg.mxu0
  %1143 = vmatprep.subr.bf16.mxu0 0
  %1144 = vmatpush1.bf16.msra.mxu0 %v918
  %1145 = vmatprep.subr.bf16.mxu0 0
  %1146 = vmatpush1.bf16.msra.mxu0 %v919
  %1147 = vmatprep.subr.bf16.mxu0 0
  %1148 = vmatpush1.bf16.msra.mxu0 %v920
  %1149 = vmatprep.subr.bf16.mxu0 0
  %1150 = vmatpush1.bf16.msra.mxu0 %v921
  %1151 = vmatprep.subr.bf16.mxu0 0
  %1152 = vmatpush1.bf16.msra.mxu0 %v922
  %1153 = vmatprep.subr.bf16.mxu0 0
  %1154 = vmatpush1.bf16.msra.mxu0 %v923
  %1155 = vmatprep.subr.bf16.mxu0 0
  %1156 = vmatpush1.bf16.msra.mxu0 %v924
  %1157 = vmatprep.subr.bf16.mxu0 0
  %1158 = vmatpush1.bf16.msra.mxu0 %v925
  %1159 = vmatprep.subr.bf16.mxu0 0
  %1160 = vmatpush1.bf16.msra.mxu0 %v926
  %1161 = vmatprep.subr.bf16.mxu0 0
  %1162 = vmatpush1.bf16.msra.mxu0 %v927
  %1163 = vmatprep.subr.bf16.mxu0 0
  %1164 = vmatpush1.bf16.msra.mxu0 %v928
  %1165 = vmatprep.subr.bf16.mxu0 0
  %1166 = vmatpush1.bf16.msra.mxu0 %v929
  %1167 = vmatprep.subr.bf16.mxu0 0
  %1168 = vmatpush1.bf16.msra.mxu0 %v930
  %1169 = vmatprep.subr.bf16.mxu0 0
  %1170 = vmatpush1.bf16.msra.mxu0 %v931
  %1171 = vmatprep.subr.bf16.mxu0 0
  %1172 = vmatpush1.bf16.msra.mxu0 %v932
  %1173 = vmatprep.subr.bf16.mxu0 0
  %1174 = vmatpush1.bf16.msra.mxu0 %v933
  %1175 = vmatprep.mubr.bf16.mxu0 %v473
  %1176 = vmatmul.mubr.bf16.gmra.mrb[0].mxu0 %v472
  %v1177 = vpop.f32.mrb[0].mxu0
  %v1178 = vadd.f32 %v1081, %v1177
  %v1179 = vpop.f32.mrb[0].mxu0
  %v1180 = vpop.f32.mrb[0].mxu0
  %v1181 = vadd.f32 %v1084, %v1180
  %v1182 = vpop.f32.mrb[0].mxu0
  %1183 = vmatprep.mubr.bf16.mxu0 %v482
  %1184 = vmatmul.mubr.bf16.gmra.mrb[0].mxu0 %v481
  %v1185 = vpop.f32.mrb[0].mxu0
  %v1186 = vadd.f32 %v1089, %v1185
  %v1187 = vpop.f32.mrb[0].mxu0
  %v1188 = vpop.f32.mrb[0].mxu0
  %v1189 = vadd.f32 %v1092, %v1188
  %v1190 = vpop.f32.mrb[0].mxu0
  %1191 = vmatprep.mubr.bf16.mxu0 %v491
  %1192 = vmatmul.mubr.bf16.gmra.mrb[0].mxu0 %v490
  %v1193 = vpop.f32.mrb[0].mxu0
  %v1194 = vadd.f32 %v1097, %v1193
  %v1195 = vpop.f32.mrb[0].mxu0
  %v1196 = vpop.f32.mrb[0].mxu0
  %v1197 = vadd.f32 %v1100, %v1196
  %v1198 = vpop.f32.mrb[0].mxu0
  %1199 = vmatprep.mubr.bf16.mxu0 %v500
  %1200 = vmatmul.mubr.bf16.gmra.mrb[0].mxu0 %v499
  %v1201 = vpop.f32.mrb[0].mxu0
  %v1202 = vadd.f32 %v1105, %v1201
  %v1203 = vpop.f32.mrb[0].mxu0
  %v1204 = vpop.f32.mrb[0].mxu0
  %v1205 = vadd.f32 %v1108, %v1204
  %v1206 = vpop.f32.mrb[0].mxu0
  %1207 = vmatprep.mubr.bf16.mxu0 %v509
  %1208 = vmatmul.mubr.bf16.gmra.mrb[0].mxu0 %v508
  %v1209 = vpop.f32.mrb[0].mxu0
  %v1210 = vadd.f32 %v1113, %v1209
  %v1211 = vpop.f32.mrb[0].mxu0
  %v1212 = vpop.f32.mrb[0].mxu0
  %v1213 = vadd.f32 %v1116, %v1212
  %v1214 = vpop.f32.mrb[0].mxu0
  %1215 = vmatprep.mubr.bf16.mxu0 %v518
  %1216 = vmatmul.mubr.bf16.gmra.mrb[0].mxu0 %v517
  %v1217 = vpop.f32.mrb[0].mxu0
  %v1218 = vadd.f32 %v1121, %v1217
  %v1219 = vpop.f32.mrb[0].mxu0
  %v1220 = vpop.f32.mrb[0].mxu0
  %v1221 = vadd.f32 %v1124, %v1220
  %v1222 = vpop.f32.mrb[0].mxu0
  %1223 = vmatprep.mubr.bf16.mxu0 %v527
  %1224 = vmatmul.mubr.bf16.gmra.mrb[0].mxu0 %v526
  %v1225 = vpop.f32.mrb[0].mxu0
  %v1226 = vadd.f32 %v1129, %v1225
  %v1227 = vpop.f32.mrb[0].mxu0
  %v1228 = vpop.f32.mrb[0].mxu0
  %v1229 = vadd.f32 %v1132, %v1228
  %v1230 = vpop.f32.mrb[0].mxu0
  %1231 = vmatprep.mubr.bf16.mxu0 %v536
  %1232 = vmatmul.mubr.bf16.gmra.mrb[0].mxu0 %v535
  %v1233 = vpop.f32.mrb[0].mxu0
  %v1234 = vadd.f32 %v1137, %v1233
  %v1235 = vpop.f32.mrb[0].mxu0
  %v1236 = vpop.f32.mrb[0].mxu0
  %v1237 = vadd.f32 %v1140, %v1236
  %v1238 = vpop.f32.mrb[0].mxu0
  %1239 = vdwg.mxu0
  %1240 = vmatprep.subr.bf16.mxu0 0
  %1241 = vmatpush1.bf16.msra.mxu0 %v934
  %1242 = vmatprep.subr.bf16.mxu0 0
  %1243 = vmatpush1.bf16.msra.mxu0 %v935
  %1244 = vmatprep.subr.bf16.mxu0 0
  %1245 = vmatpush1.bf16.msra.mxu0 %v936
  %1246 = vmatprep.subr.bf16.mxu0 0
  %1247 = vmatpush1.bf16.msra.mxu0 %v937
  %1248 = vmatprep.subr.bf16.mxu0 0
  %1249 = vmatpush1.bf16.msra.mxu0 %v938
  %1250 = vmatprep.subr.bf16.mxu0 0
  %1251 = vmatpush1.bf16.msra.mxu0 %v939
  %1252 = vmatprep.subr.bf16.mxu0 0
  %1253 = vmatpush1.bf16.msra.mxu0 %v940
  %1254 = vmatprep.subr.bf16.mxu0 0
  %1255 = vmatpush1.bf16.msra.mxu0 %v941
  %1256 = vmatprep.subr.bf16.mxu0 0
  %1257 = vmatpush1.bf16.msra.mxu0 %v942
  %1258 = vmatprep.subr.bf16.mxu0 0
  %1259 = vmatpush1.bf16.msra.mxu0 %v943
  %1260 = vmatprep.subr.bf16.mxu0 0
  %1261 = vmatpush1.bf16.msra.mxu0 %v944
  %1262 = vmatprep.subr.bf16.mxu0 0
  %1263 = vmatpush1.bf16.msra.mxu0 %v945
  %1264 = vmatprep.subr.bf16.mxu0 0
  %1265 = vmatpush1.bf16.msra.mxu0 %v946
  %1266 = vmatprep.subr.bf16.mxu0 0
  %1267 = vmatpush1.bf16.msra.mxu0 %v947
  %1268 = vmatprep.subr.bf16.mxu0 0
  %1269 = vmatpush1.bf16.msra.mxu0 %v948
  %1270 = vmatprep.subr.bf16.mxu0 0
  %1271 = vmatpush1.bf16.msra.mxu0 %v949
  %1272 = vmatprep.mubr.bf16.mxu0 %v475
  %1273 = vmatmul.mubr.bf16.gmra.mrb[0].mxu0 %v474
  %v1274 = vpop.f32.mrb[0].mxu0
  %v1275 = vadd.f32 %v1178, %v1274
  %v1276 = vpop.f32.mrb[0].mxu0
  %v1277 = vpop.f32.mrb[0].mxu0
  %v1278 = vadd.f32 %v1181, %v1277
  %v1279 = vpop.f32.mrb[0].mxu0
  %1280 = vmatprep.mubr.bf16.mxu0 %v484
  %1281 = vmatmul.mubr.bf16.gmra.mrb[0].mxu0 %v483
  %v1282 = vpop.f32.mrb[0].mxu0
  %v1283 = vadd.f32 %v1186, %v1282
  %v1284 = vpop.f32.mrb[0].mxu0
  %v1285 = vpop.f32.mrb[0].mxu0
  %v1286 = vadd.f32 %v1189, %v1285
  %v1287 = vpop.f32.mrb[0].mxu0
  %1288 = vmatprep.mubr.bf16.mxu0 %v493
  %1289 = vmatmul.mubr.bf16.gmra.mrb[0].mxu0 %v492
  %v1290 = vpop.f32.mrb[0].mxu0
  %v1291 = vadd.f32 %v1194, %v1290
  %v1292 = vpop.f32.mrb[0].mxu0
  %v1293 = vpop.f32.mrb[0].mxu0
  %v1294 = vadd.f32 %v1197, %v1293
  %v1295 = vpop.f32.mrb[0].mxu0
  %1296 = vmatprep.mubr.bf16.mxu0 %v502
  %1297 = vmatmul.mubr.bf16.gmra.mrb[0].mxu0 %v501
  %v1298 = vpop.f32.mrb[0].mxu0
  %v1299 = vadd.f32 %v1202, %v1298
  %v1300 = vpop.f32.mrb[0].mxu0
  %v1301 = vpop.f32.mrb[0].mxu0
  %v1302 = vadd.f32 %v1205, %v1301
  %v1303 = vpop.f32.mrb[0].mxu0
  %1304 = vmatprep.mubr.bf16.mxu0 %v511
  %1305 = vmatmul.mubr.bf16.gmra.mrb[0].mxu0 %v510
  %v1306 = vpop.f32.mrb[0].mxu0
  %v1307 = vadd.f32 %v1210, %v1306
  %v1308 = vpop.f32.mrb[0].mxu0
  %v1309 = vpop.f32.mrb[0].mxu0
  %v1310 = vadd.f32 %v1213, %v1309
  %v1311 = vpop.f32.mrb[0].mxu0
  %1312 = vmatprep.mubr.bf16.mxu0 %v520
  %1313 = vmatmul.mubr.bf16.gmra.mrb[0].mxu0 %v519
  %v1314 = vpop.f32.mrb[0].mxu0
  %v1315 = vadd.f32 %v1218, %v1314
  %v1316 = vpop.f32.mrb[0].mxu0
  %v1317 = vpop.f32.mrb[0].mxu0
  %v1318 = vadd.f32 %v1221, %v1317
  %v1319 = vpop.f32.mrb[0].mxu0
  %1320 = vmatprep.mubr.bf16.mxu0 %v529
  %1321 = vmatmul.mubr.bf16.gmra.mrb[0].mxu0 %v528
  %v1322 = vpop.f32.mrb[0].mxu0
  %v1323 = vadd.f32 %v1226, %v1322
  %v1324 = vpop.f32.mrb[0].mxu0
  %v1325 = vpop.f32.mrb[0].mxu0
  %v1326 = vadd.f32 %v1229, %v1325
  %v1327 = vpop.f32.mrb[0].mxu0
  %1328 = vmatprep.mubr.bf16.mxu0 %v538
  %1329 = vmatmul.mubr.bf16.gmra.mrb[0].mxu0 %v537
  %v1330 = vpop.f32.mrb[0].mxu0
  %v1331 = vadd.f32 %v1234, %v1330
  %v1332 = vpop.f32.mrb[0].mxu0
  %v1333 = vpop.f32.mrb[0].mxu0
  %v1334 = vadd.f32 %v1237, %v1333
  %v1335 = vpop.f32.mrb[0].mxu0
  %1336 = vdwg.mxu0
  %1337 = vmatprep.subr.bf16.mxu0 0
  %1338 = vmatpush1.bf16.msra.mxu0 %v950
  %1339 = vmatprep.subr.bf16.mxu0 0
  %1340 = vmatpush1.bf16.msra.mxu0 %v951
  %1341 = vmatprep.subr.bf16.mxu0 0
  %1342 = vmatpush1.bf16.msra.mxu0 %v952
  %1343 = vmatprep.subr.bf16.mxu0 0
  %1344 = vmatpush1.bf16.msra.mxu0 %v953
  %1345 = vmatprep.subr.bf16.mxu0 0
  %1346 = vmatpush1.bf16.msra.mxu0 %v954
  %1347 = vmatprep.subr.bf16.mxu0 0
  %1348 = vmatpush1.bf16.msra.mxu0 %v955
  %1349 = vmatprep.subr.bf16.mxu0 0
  %1350 = vmatpush1.bf16.msra.mxu0 %v956
  %1351 = vmatprep.subr.bf16.mxu0 0
  %1352 = vmatpush1.bf16.msra.mxu0 %v957
  %1353 = vmatprep.subr.bf16.mxu0 0
  %1354 = vmatpush1.bf16.msra.mxu0 %v958
  %1355 = vmatprep.subr.bf16.mxu0 0
  %1356 = vmatpush1.bf16.msra.mxu0 %v959
  %1357 = vmatprep.subr.bf16.mxu0 0
  %1358 = vmatpush1.bf16.msra.mxu0 %v960
  %1359 = vmatprep.subr.bf16.mxu0 0
  %1360 = vmatpush1.bf16.msra.mxu0 %v961
  %1361 = vmatprep.subr.bf16.mxu0 0
  %1362 = vmatpush1.bf16.msra.mxu0 %v962
  %1363 = vmatprep.subr.bf16.mxu0 0
  %1364 = vmatpush1.bf16.msra.mxu0 %v963
  %1365 = vmatprep.subr.bf16.mxu0 0
  %1366 = vmatpush1.bf16.msra.mxu0 %v964
  %1367 = vmatprep.subr.bf16.mxu0 0
  %1368 = vmatpush1.bf16.msra.mxu0 %v965
  %1369 = vmatprep.mubr.bf16.mxu0 %v477
  %1370 = vmatmul.mubr.bf16.gmra.mrb[0].mxu0 %v476
  %v1371 = vpop.f32.mrb[0].mxu0
  %v1372 = vadd.f32 %v1275, %v1371
  %v1373 = vpop.f32.mrb[0].mxu0
  %v1374 = vpop.f32.mrb[0].mxu0
  %v1375 = vadd.f32 %v1278, %v1374
  %v1376 = vpop.f32.mrb[0].mxu0
  %1377 = vmatprep.mubr.bf16.mxu0 %v486
  %1378 = vmatmul.mubr.bf16.gmra.mrb[0].mxu0 %v485
  %v1379 = vpop.f32.mrb[0].mxu0
  %v1380 = vadd.f32 %v1283, %v1379
  %v1381 = vpop.f32.mrb[0].mxu0
  %v1382 = vpop.f32.mrb[0].mxu0
  %v1383 = vadd.f32 %v1286, %v1382
  %v1384 = vpop.f32.mrb[0].mxu0
  %1385 = vmatprep.mubr.bf16.mxu0 %v495
  %1386 = vmatmul.mubr.bf16.gmra.mrb[0].mxu0 %v494
  %v1387 = vpop.f32.mrb[0].mxu0
  %v1388 = vadd.f32 %v1291, %v1387
  %v1389 = vpop.f32.mrb[0].mxu0
  %v1390 = vpop.f32.mrb[0].mxu0
  %v1391 = vadd.f32 %v1294, %v1390
  %v1392 = vpop.f32.mrb[0].mxu0
  %1393 = vmatprep.mubr.bf16.mxu0 %v504
  %1394 = vmatmul.mubr.bf16.gmra.mrb[0].mxu0 %v503
  %v1395 = vpop.f32.mrb[0].mxu0
  %v1396 = vadd.f32 %v1299, %v1395
  %v1397 = vpop.f32.mrb[0].mxu0
  %v1398 = vpop.f32.mrb[0].mxu0
  %v1399 = vadd.f32 %v1302, %v1398
  %v1400 = vpop.f32.mrb[0].mxu0
  %1401 = vmatprep.mubr.bf16.mxu0 %v513
  %1402 = vmatmul.mubr.bf16.gmra.mrb[0].mxu0 %v512
  %v1403 = vpop.f32.mrb[0].mxu0
  %v1404 = vadd.f32 %v1307, %v1403
  %v1405 = vpop.f32.mrb[0].mxu0
  %v1406 = vpop.f32.mrb[0].mxu0
  %v1407 = vadd.f32 %v1310, %v1406
  %v1408 = vpop.f32.mrb[0].mxu0
  %1409 = vmatprep.mubr.bf16.mxu0 %v522
  %1410 = vmatmul.mubr.bf16.gmra.mrb[0].mxu0 %v521
  %v1411 = vpop.f32.mrb[0].mxu0
  %v1412 = vadd.f32 %v1315, %v1411
  %v1413 = vpop.f32.mrb[0].mxu0
  %v1414 = vpop.f32.mrb[0].mxu0
  %v1415 = vadd.f32 %v1318, %v1414
  %v1416 = vpop.f32.mrb[0].mxu0
  %1417 = vmatprep.mubr.bf16.mxu0 %v531
  %1418 = vmatmul.mubr.bf16.gmra.mrb[0].mxu0 %v530
  %v1419 = vpop.f32.mrb[0].mxu0
  %v1420 = vadd.f32 %v1323, %v1419
  %v1421 = vpop.f32.mrb[0].mxu0
  %v1422 = vpop.f32.mrb[0].mxu0
  %v1423 = vadd.f32 %v1326, %v1422
  %v1424 = vpop.f32.mrb[0].mxu0
  %1425 = vmatprep.mubr.bf16.mxu0 %v540
  %1426 = vmatmul.mubr.bf16.gmra.mrb[0].mxu0 %v539
  %v1427 = vpop.f32.mrb[0].mxu0
  %v1428 = vadd.f32 %v1331, %v1427
  %v1429 = vpop.f32.mrb[0].mxu0
  %v1430 = vpop.f32.mrb[0].mxu0
  %v1431 = vadd.f32 %v1334, %v1430
  %v1432 = vpop.f32.mrb[0].mxu0
  %1433 = vdwg.mxu0
  %1434 = vmatprep.subr.bf16.mxu0 0
  %1435 = vmatpush1.bf16.msra.mxu0 %v966
  %1436 = vmatprep.subr.bf16.mxu0 0
  %1437 = vmatpush1.bf16.msra.mxu0 %v967
  %1438 = vmatprep.subr.bf16.mxu0 0
  %1439 = vmatpush1.bf16.msra.mxu0 %v968
  %1440 = vmatprep.subr.bf16.mxu0 0
  %1441 = vmatpush1.bf16.msra.mxu0 %v969
  %1442 = vmatprep.subr.bf16.mxu0 0
  %1443 = vmatpush1.bf16.msra.mxu0 %v970
  %1444 = vmatprep.subr.bf16.mxu0 0
  %1445 = vmatpush1.bf16.msra.mxu0 %v971
  %1446 = vmatprep.subr.bf16.mxu0 0
  %1447 = vmatpush1.bf16.msra.mxu0 %v972
  %1448 = vmatprep.subr.bf16.mxu0 0
  %1449 = vmatpush1.bf16.msra.mxu0 %v973
  %1450 = vmatprep.subr.bf16.mxu0 0
  %1451 = vmatpush1.bf16.msra.mxu0 0
  %1452 = vmatprep.subr.bf16.mxu0 0
  %1453 = vmatpush1.bf16.msra.mxu0 0
  %1454 = vmatprep.subr.bf16.mxu0 0
  %1455 = vmatpush1.bf16.msra.mxu0 0
  %1456 = vmatprep.subr.bf16.mxu0 0
  %1457 = vmatpush1.bf16.msra.mxu0 0
  %1458 = vmatprep.subr.bf16.mxu0 0
  %1459 = vmatpush1.bf16.msra.mxu0 0
  %1460 = vmatprep.subr.bf16.mxu0 0
  %1461 = vmatpush1.bf16.msra.mxu0 0
  %1462 = vmatprep.subr.bf16.mxu0 0
  %1463 = vmatpush1.bf16.msra.mxu0 0
  %1464 = vmatprep.subr.bf16.mxu0 0
  %1465 = vmatpush1.bf16.msra.mxu0 0
  %1466 = vmatprep.mubr.bf16.mxu0 0
  %1467 = vmatmul.mubr.bf16.gmra.mrb[0].mxu0 %v478
  %v1468 = vpop.f32.mrb[0].mxu0
  %v1469 = vadd.f32 %v1372, %v1468
  %v1470 = vpop.f32.mrb[0].mxu0
  %v1471 = vpop.f32.mrb[0].mxu0
  %v1472 = vadd.f32 %v1375, %v1471
  %v1473 = vpop.f32.mrb[0].mxu0
  %1474 = vmatprep.mubr.bf16.mxu0 0
  %1475 = vmatmul.mubr.bf16.gmra.mrb[0].mxu0 %v487
  %v1476 = vpop.f32.mrb[0].mxu0
  %v1477 = vadd.f32 %v1380, %v1476
  %v1478 = vpop.f32.mrb[0].mxu0
  %v1479 = vpop.f32.mrb[0].mxu0
  %v1480 = vadd.f32 %v1383, %v1479
  %v1481 = vpop.f32.mrb[0].mxu0
  %1482 = vmatprep.mubr.bf16.mxu0 0
  %1483 = vmatmul.mubr.bf16.gmra.mrb[0].mxu0 %v496
  %v1484 = vpop.f32.mrb[0].mxu0
  %v1485 = vadd.f32 %v1388, %v1484
  %v1486 = vpop.f32.mrb[0].mxu0
  %v1487 = vpop.f32.mrb[0].mxu0
  %v1488 = vadd.f32 %v1391, %v1487
  %v1489 = vpop.f32.mrb[0].mxu0
  %1490 = vmatprep.mubr.bf16.mxu0 0
  %1491 = vmatmul.mubr.bf16.gmra.mrb[0].mxu0 %v505
  %v1492 = vpop.f32.mrb[0].mxu0
  %v1493 = vadd.f32 %v1396, %v1492
  %v1494 = vpop.f32.mrb[0].mxu0
  %v1495 = vpop.f32.mrb[0].mxu0
  %v1496 = vadd.f32 %v1399, %v1495
  %v1497 = vpop.f32.mrb[0].mxu0
  %1498 = vmatprep.mubr.bf16.mxu0 0
  %1499 = vmatmul.mubr.bf16.gmra.mrb[0].mxu0 %v514
  %v1500 = vpop.f32.mrb[0].mxu0
  %v1501 = vadd.f32 %v1404, %v1500
  %v1502 = vpop.f32.mrb[0].mxu0
  %v1503 = vpop.f32.mrb[0].mxu0
  %v1504 = vadd.f32 %v1407, %v1503
  %v1505 = vpop.f32.mrb[0].mxu0
  %1506 = vmatprep.mubr.bf16.mxu0 0
  %1507 = vmatmul.mubr.bf16.gmra.mrb[0].mxu0 %v523
  %v1508 = vpop.f32.mrb[0].mxu0
  %v1509 = vadd.f32 %v1412, %v1508
  %v1510 = vpop.f32.mrb[0].mxu0
  %v1511 = vpop.f32.mrb[0].mxu0
  %v1512 = vadd.f32 %v1415, %v1511
  %v1513 = vpop.f32.mrb[0].mxu0
  %1514 = vmatprep.mubr.bf16.mxu0 0
  %1515 = vmatmul.mubr.bf16.gmra.mrb[0].mxu0 %v532
  %v1516 = vpop.f32.mrb[0].mxu0
  %v1517 = vadd.f32 %v1420, %v1516
  %v1518 = vpop.f32.mrb[0].mxu0
  %v1519 = vpop.f32.mrb[0].mxu0
  %v1520 = vadd.f32 %v1423, %v1519
  %v1521 = vpop.f32.mrb[0].mxu0
  %1522 = vmatprep.mubr.bf16.mxu0 0
  %1523 = vmatmul.mubr.bf16.gmra.mrb[0].mxu0 %v541
  %v1524 = vpop.f32.mrb[0].mxu0
  %v1525 = vadd.f32 %v1428, %v1524
  %v1526 = vpop.f32.mrb[0].mxu0
  %v1527 = vpop.f32.mrb[0].mxu0
  %v1528 = vadd.f32 %v1431, %v1527
  %v1529 = vpop.f32.mrb[0].mxu0
  %1530 = vdwg.mxu0
  %v1531 = vmax.f32 %v1469, 0.0
  %v1532 = vmax.f32 %v1472, 0.0
  %v1533 = vmax.f32 %v1477, 0.0
  %v1534 = vmax.f32 %v1480, 0.0
  %v1535 = vmax.f32 %v1485, 0.0
  %v1536 = vmax.f32 %v1488, 0.0
  %v1537 = vmax.f32 %v1493, 0.0
  %v1538 = vmax.f32 %v1496, 0.0
  %v1539 = vmax.f32 %v1501, 0.0
  %v1540 = vmax.f32 %v1504, 0.0
  %v1541 = vmax.f32 %v1509, 0.0
  %v1542 = vmax.f32 %v1512, 0.0
  %v1543 = vmax.f32 %v1517, 0.0
  %v1544 = vmax.f32 %v1520, 0.0
  %v1545 = vmax.f32 %v1525, 0.0
  %v1546 = vmax.f32 %v1528, 0.0
  %v1547 = vpack.c.bf16 %v1532, %v1531
  %v1548 = vpack.c.bf16 %v1534, %v1533
  %v1549 = vpack.c.bf16 %v1536, %v1535
  %v1550 = vpack.c.bf16 %v1538, %v1537
  %v1551 = vpack.c.bf16 %v1540, %v1539
  %v1552 = vpack.c.bf16 %v1542, %v1541
  %v1553 = vpack.c.bf16 %v1544, %v1543
  %v1554 = vpack.c.bf16 %v1546, %v1545
  %v1563 = vunpack.c.l.b16 %v1547
  %v1564 = vunpack.c.h.b16 %v1547
  %v1565 = vunpack.c.l.b16 %v1548
  %v1566 = vunpack.c.h.b16 %v1548
  %v1567 = vunpack.c.l.b16 %v1549
  %v1568 = vunpack.c.h.b16 %v1549
  %v1569 = vunpack.c.l.b16 %v1550
  %v1570 = vunpack.c.h.b16 %v1550
  %v1571 = vunpack.c.l.b16 %v1551
  %v1572 = vunpack.c.h.b16 %v1551
  %v1573 = vunpack.c.l.b16 %v1552
  %v1574 = vunpack.c.h.b16 %v1552
  %v1575 = vunpack.c.l.b16 %v1553
  %v1576 = vunpack.c.h.b16 %v1553
  %v1577 = vunpack.c.l.b16 %v1554
  %v1578 = vunpack.c.h.b16 %v1554
  %v1579 = vpack.c.b16 %v1563, %v1563
  %v1580 = vpack.c.b16 %v1564, %v1564
  %v1581 = vpack.c.b16 %v1565, %v1565
  %v1582 = vpack.c.b16 %v1566, %v1566
  %v1583 = vpack.c.b16 %v1567, %v1567
  %v1584 = vpack.c.b16 %v1568, %v1568
  %v1585 = vpack.c.b16 %v1569, %v1569
  %v1586 = vpack.c.b16 %v1570, %v1570
  %v1587 = vpack.c.b16 %v1571, %v1571
  %v1588 = vpack.c.b16 %v1572, %v1572
  %v1589 = vpack.c.b16 %v1573, %v1573
  %v1590 = vpack.c.b16 %v1574, %v1574
  %v1591 = vpack.c.b16 %v1575, %v1575
  %v1592 = vpack.c.b16 %v1576, %v1576
  %v1593 = vpack.c.b16 %v1577, %v1577
  %v1594 = vpack.c.b16 %v1578, %v1578
  %1611 = vst [vmem:[%s3] sm:$0xf] %v1579
  %1612 = vst [vmem:[%s3 + $0x4] sm:$0xf] %v1580
  %1613 = vst [vmem:[%s3 + $0x8] sm:$0xf] %v1581
  %1614 = vst [vmem:[%s3 + $0xc] sm:$0xf] %v1582
  %1615 = vst [vmem:[%s3 + $0x10] sm:$0xf] %v1583
  %1616 = vst [vmem:[%s3 + $0x14] sm:$0xf] %v1584
  %1617 = vst [vmem:[%s3 + $0x18] sm:$0xf] %v1585
  %1618 = vst [vmem:[%s3 + $0x1c] sm:$0xf] %v1586
  %1619 = vst [vmem:[%s3 + $0x20] sm:$0xf] %v1587
  %1620 = vst [vmem:[%s3 + $0x24] sm:$0xf] %v1588
  %1621 = vst [vmem:[%s3 + $0x28] sm:$0xf] %v1589
  %1622 = vst [vmem:[%s3 + $0x2c] sm:$0xf] %v1590
  %1623 = vst [vmem:[%s3 + $0x30] sm:$0xf] %v1591
  %1624 = vst [vmem:[%s3 + $0x34] sm:$0xf] %v1592
  %1625 = vst [vmem:[%s3 + $0x38] sm:$0xf] %v1593
  %1626 = vst [vmem:[%s3 + $0x3c] sm:$0xf] %v1594
  // Predicated region
  $region14: #{_lambda_.15} parent=0 // pred_check
    _
  $region15: #{_lambda_.15} parent=0 // pred_check_branch
    %1628 = sbr.rel (0) target = $region17
  $region16: #{_lambda_.15} parent=0 // pred_region
    _
  $region17: #{_lambda_.15} parent=0 // pred_fallthru
    _
  // Predicated region
  $region18: #{_lambda_.15} parent=0 // pred_check
    _
  $region19: #{_lambda_.15} parent=0 // pred_check_branch
    %1630 = sbr.rel (0) target = $region21
  $region20: #{_lambda_.15} parent=0 // pred_region
    _
  $region21: #{_lambda_.15} parent=0 // pred_fallthru
    _

// kernel: _lambda_.16
$region0: #{_lambda_.16}
  #allocation0 [shape = 'u32[]', space=smem, size = 0x4, offset = 0x4, fixed_abs, tag = 'smem constant byte address 0x4 - core index']
  #allocation1 [shape = 'u32[144,128]{1,0:T(1,128)}', space=vmem, size = 0x12000, scoped, tag = 'internal scratch']
  %s0 = inlined_call_operand.vmem [shape: bf16[32,1152], index: 0, kind: input, shape index: {}]
  %s1 = inlined_call_operand.vmem [shape: bf16[1152,128], index: 1, kind: input, shape index: {}]
  %s2 = inlined_call_operand.vmem [shape: f32[1,128], index: 2, kind: input, shape index: {}]
  %s3 = inlined_call_operand.vmem [shape: bf16[32,128], index: 3, kind: output, shape index: {}]
  %s4 = sld [smem:[#allocation0]]
  $region22: #{_lambda_.16} parent=0
    _
  %s6 = ssub.s32 1, %s4
  %s7 = scalar_select 0, %s6, %s4
  // Predicated region
  $region2: #{_lambda_.16} parent=0 // pred_check
    _
  $region3: #{_lambda_.16} parent=0 // pred_check_branch
    %9 = sbr.rel (0) target = $region5
  $region4: #{_lambda_.16} parent=0 // pred_region
    _
  $region5: #{_lambda_.16} parent=0 // pred_fallthru
    _
  // Predicated region
  $region6: #{_lambda_.16} parent=0 // pred_check
    _
  $region7: #{_lambda_.16} parent=0 // pred_check_branch
    %11 = sbr.rel (0) target = $region9
  $region8: #{_lambda_.16} parent=0 // pred_region
    _
  $region9: #{_lambda_.16} parent=0 // pred_fallthru
    _
  // Predicated region
  $region10: #{_lambda_.16} parent=0 // pred_check
    _
  $region11: #{_lambda_.16} parent=0 // pred_check_branch
    %13 = sbr.rel (0) target = $region13
  $region12: #{_lambda_.16} parent=0 // pred_region
    _
  $region13: #{_lambda_.16} parent=0 // pred_fallthru
    _
  %v15 = vld [vmem:[%s0] sm:$0xff]
  %v16 = vld [vmem:[%s0 + $0x8] sm:$0xff]
  %v17 = vld [vmem:[%s0 + $0x10] sm:$0xff]
  %v18 = vld [vmem:[%s0 + $0x18] sm:$0xff]
  %v19 = vld [vmem:[%s0 + $0x20] sm:$0xf]
  %v20 = vld [vmem:[%s0 + $0x24] sm:$0xff]
  %v21 = vld [vmem:[%s0 + $0x2c] sm:$0xff]
  %v22 = vld [vmem:[%s0 + $0x34] sm:$0xff]
  %v23 = vld [vmem:[%s0 + $0x3c] sm:$0xff]
  %v24 = vld [vmem:[%s0 + $0x44] sm:$0xf]
  %v25 = vld [vmem:[%s0 + $0x48] sm:$0xff]
  %v26 = vld [vmem:[%s0 + $0x50] sm:$0xff]
  %v27 = vld [vmem:[%s0 + $0x58] sm:$0xff]
  %v28 = vld [vmem:[%s0 + $0x60] sm:$0xff]
  %v29 = vld [vmem:[%s0 + $0x68] sm:$0xf]
  %v30 = vld [vmem:[%s0 + $0x6c] sm:$0xff]
  %v31 = vld [vmem:[%s0 + $0x74] sm:$0xff]
  %v32 = vld [vmem:[%s0 + $0x7c] sm:$0xff]
  %v33 = vld [vmem:[%s0 + $0x84] sm:$0xff]
  %v34 = vld [vmem:[%s0 + $0x8c] sm:$0xf]
  %v35 = vld [vmem:[%s1] sm:$0xf]
  %v36 = vld [vmem:[%s1 + $0x4] sm:$0xf]
  %v37 = vld [vmem:[%s1 + $0x8] sm:$0xf]
  %v38 = vld [vmem:[%s1 + $0xc] sm:$0xf]
  %v39 = vld [vmem:[%s1 + $0x10] sm:$0xf]
  %v40 = vld [vmem:[%s1 + $0x14] sm:$0xf]
  %v41 = vld [vmem:[%s1 + $0x18] sm:$0xf]
  %v42 = vld [vmem:[%s1 + $0x1c] sm:$0xf]
  %v43 = vld [vmem:[%s1 + $0x20] sm:$0xf]
  %v44 = vld [vmem:[%s1 + $0x24] sm:$0xf]
  %v45 = vld [vmem:[%s1 + $0x28] sm:$0xf]
  %v46 = vld [vmem:[%s1 + $0x2c] sm:$0xf]
  %v47 = vld [vmem:[%s1 + $0x30] sm:$0xf]
  %v48 = vld [vmem:[%s1 + $0x34] sm:$0xf]
  %v49 = vld [vmem:[%s1 + $0x38] sm:$0xf]
  %v50 = vld [vmem:[%s1 + $0x3c] sm:$0xf]
  %v51 = vld [vmem:[%s1 + $0x40] sm:$0xf]
  %v52 = vld [vmem:[%s1 + $0x44] sm:$0xf]
  %v53 = vld [vmem:[%s1 + $0x48] sm:$0xf]
  %v54 = vld [vmem:[%s1 + $0x4c] sm:$0xf]
  %v55 = vld [vmem:[%s1 + $0x50] sm:$0xf]
  %v56 = vld [vmem:[%s1 + $0x54] sm:$0xf]
  %v57 = vld [vmem:[%s1 + $0x58] sm:$0xf]
  %v58 = vld [vmem:[%s1 + $0x5c] sm:$0xf]
  %v59 = vld [vmem:[%s1 + $0x60] sm:$0xf]
  %v60 = vld [vmem:[%s1 + $0x64] sm:$0xf]
  %v61 = vld [vmem:[%s1 + $0x68] sm:$0xf]
  %v62 = vld [vmem:[%s1 + $0x6c] sm:$0xf]
  %v63 = vld [vmem:[%s1 + $0x70] sm:$0xf]
  %v64 = vld [vmem:[%s1 + $0x74] sm:$0xf]
  %v65 = vld [vmem:[%s1 + $0x78] sm:$0xf]
  %v66 = vld [vmem:[%s1 + $0x7c] sm:$0xf]
  %v67 = vld [vmem:[%s1 + $0x80] sm:$0xf]
  %v68 = vld [vmem:[%s1 + $0x84] sm:$0xf]
  %v69 = vld [vmem:[%s1 + $0x88] sm:$0xf]
  %v70 = vld [vmem:[%s1 + $0x8c] sm:$0xf]
  %v71 = vld [vmem:[%s1 + $0x90] sm:$0xf]
  %v72 = vld [vmem:[%s1 + $0x94] sm:$0xf]
  %v73 = vld [vmem:[%s1 + $0x98] sm:$0xf]
  %v74 = vld [vmem:[%s1 + $0x9c] sm:$0xf]
  %v75 = vld [vmem:[%s1 + $0xa0] sm:$0xf]
  %v76 = vld [vmem:[%s1 + $0xa4] sm:$0xf]
  %v77 = vld [vmem:[%s1 + $0xa8] sm:$0xf]
  %v78 = vld [vmem:[%s1 + $0xac] sm:$0xf]
  %v79 = vld [vmem:[%s1 + $0xb0] sm:$0xf]
  %v80 = vld [vmem:[%s1 + $0xb4] sm:$0xf]
  %v81 = vld [vmem:[%s1 + $0xb8] sm:$0xf]
  %v82 = vld [vmem:[%s1 + $0xbc] sm:$0xf]
  %v83 = vld [vmem:[%s1 + $0xc0] sm:$0xf]
  %v84 = vld [vmem:[%s1 + $0xc4] sm:$0xf]
  %v85 = vld [vmem:[%s1 + $0xc8] sm:$0xf]
  %v86 = vld [vmem:[%s1 + $0xcc] sm:$0xf]
  %v87 = vld [vmem:[%s1 + $0xd0] sm:$0xf]
  %v88 = vld [vmem:[%s1 + $0xd4] sm:$0xf]
  %v89 = vld [vmem:[%s1 + $0xd8] sm:$0xf]
  %v90 = vld [vmem:[%s1 + $0xdc] sm:$0xf]
  %v91 = vld [vmem:[%s1 + $0xe0] sm:$0xf]
  %v92 = vld [vmem:[%s1 + $0xe4] sm:$0xf]
  %v93 = vld [vmem:[%s1 + $0xe8] sm:$0xf]
  %v94 = vld [vmem:[%s1 + $0xec] sm:$0xf]
  %v95 = vld [vmem:[%s1 + $0xf0] sm:$0xf]
  %v96 = vld [vmem:[%s1 + $0xf4] sm:$0xf]
  %v97 = vld [vmem:[%s1 + $0xf8] sm:$0xf]
  %v98 = vld [vmem:[%s1 + $0xfc] sm:$0xf]
  %v99 = vld [vmem:[%s1 + $0x100] sm:$0xf]
  %v100 = vld [vmem:[%s1 + $0x104] sm:$0xf]
  %v101 = vld [vmem:[%s1 + $0x108] sm:$0xf]
  %v102 = vld [vmem:[%s1 + $0x10c] sm:$0xf]
  %v103 = vld [vmem:[%s1 + $0x110] sm:$0xf]
  %v104 = vld [vmem:[%s1 + $0x114] sm:$0xf]
  %v105 = vld [vmem:[%s1 + $0x118] sm:$0xf]
  %v106 = vld [vmem:[%s1 + $0x11c] sm:$0xf]
  %v107 = vld [vmem:[%s1 + $0x120] sm:$0xf]
  %v108 = vld [vmem:[%s1 + $0x124] sm:$0xf]
  %v109 = vld [vmem:[%s1 + $0x128] sm:$0xf]
  %v110 = vld [vmem:[%s1 + $0x12c] sm:$0xf]
  %v111 = vld [vmem:[%s1 + $0x130] sm:$0xf]
  %v112 = vld [vmem:[%s1 + $0x134] sm:$0xf]
  %v113 = vld [vmem:[%s1 + $0x138] sm:$0xf]
  %v114 = vld [vmem:[%s1 + $0x13c] sm:$0xf]
  %v115 = vld [vmem:[%s1 + $0x140] sm:$0xf]
  %v116 = vld [vmem:[%s1 + $0x144] sm:$0xf]
  %v117 = vld [vmem:[%s1 + $0x148] sm:$0xf]
  %v118 = vld [vmem:[%s1 + $0x14c] sm:$0xf]
  %v119 = vld [vmem:[%s1 + $0x150] sm:$0xf]
  %v120 = vld [vmem:[%s1 + $0x154] sm:$0xf]
  %v121 = vld [vmem:[%s1 + $0x158] sm:$0xf]
  %v122 = vld [vmem:[%s1 + $0x15c] sm:$0xf]
  %v123 = vld [vmem:[%s1 + $0x160] sm:$0xf]
  %v124 = vld [vmem:[%s1 + $0x164] sm:$0xf]
  %v125 = vld [vmem:[%s1 + $0x168] sm:$0xf]
  %v126 = vld [vmem:[%s1 + $0x16c] sm:$0xf]
  %v127 = vld [vmem:[%s1 + $0x170] sm:$0xf]
  %v128 = vld [vmem:[%s1 + $0x174] sm:$0xf]
  %v129 = vld [vmem:[%s1 + $0x178] sm:$0xf]
  %v130 = vld [vmem:[%s1 + $0x17c] sm:$0xf]
  %v131 = vld [vmem:[%s1 + $0x180] sm:$0xf]
  %v132 = vld [vmem:[%s1 + $0x184] sm:$0xf]
  %v133 = vld [vmem:[%s1 + $0x188] sm:$0xf]
  %v134 = vld [vmem:[%s1 + $0x18c] sm:$0xf]
  %v135 = vld [vmem:[%s1 + $0x190] sm:$0xf]
  %v136 = vld [vmem:[%s1 + $0x194] sm:$0xf]
  %v137 = vld [vmem:[%s1 + $0x198] sm:$0xf]
  %v138 = vld [vmem:[%s1 + $0x19c] sm:$0xf]
  %v139 = vld [vmem:[%s1 + $0x1a0] sm:$0xf]
  %v140 = vld [vmem:[%s1 + $0x1a4] sm:$0xf]
  %v141 = vld [vmem:[%s1 + $0x1a8] sm:$0xf]
  %v142 = vld [vmem:[%s1 + $0x1ac] sm:$0xf]
  %v143 = vld [vmem:[%s1 + $0x1b0] sm:$0xf]
  %v144 = vld [vmem:[%s1 + $0x1b4] sm:$0xf]
  %v145 = vld [vmem:[%s1 + $0x1b8] sm:$0xf]
  %v146 = vld [vmem:[%s1 + $0x1bc] sm:$0xf]
  %v147 = vld [vmem:[%s1 + $0x1c0] sm:$0xf]
  %v148 = vld [vmem:[%s1 + $0x1c4] sm:$0xf]
  %v149 = vld [vmem:[%s1 + $0x1c8] sm:$0xf]
  %v150 = vld [vmem:[%s1 + $0x1cc] sm:$0xf]
  %v151 = vld [vmem:[%s1 + $0x1d0] sm:$0xf]
  %v152 = vld [vmem:[%s1 + $0x1d4] sm:$0xf]
  %v153 = vld [vmem:[%s1 + $0x1d8] sm:$0xf]
  %v154 = vld [vmem:[%s1 + $0x1dc] sm:$0xf]
  %v155 = vld [vmem:[%s1 + $0x1e0] sm:$0xf]
  %v156 = vld [vmem:[%s1 + $0x1e4] sm:$0xf]
  %v157 = vld [vmem:[%s1 + $0x1e8] sm:$0xf]
  %v158 = vld [vmem:[%s1 + $0x1ec] sm:$0xf]
  %v159 = vld [vmem:[%s1 + $0x1f0] sm:$0xf]
  %v160 = vld [vmem:[%s1 + $0x1f4] sm:$0xf]
  %v161 = vld [vmem:[%s1 + $0x1f8] sm:$0xf]
  %v162 = vld [vmem:[%s1 + $0x1fc] sm:$0xf]
  %v163 = vld [vmem:[%s1 + $0x200] sm:$0xf]
  %v164 = vld [vmem:[%s1 + $0x204] sm:$0xf]
  %v165 = vld [vmem:[%s1 + $0x208] sm:$0xf]
  %v166 = vld [vmem:[%s1 + $0x20c] sm:$0xf]
  %v167 = vld [vmem:[%s1 + $0x210] sm:$0xf]
  %v168 = vld [vmem:[%s1 + $0x214] sm:$0xf]
  %v169 = vld [vmem:[%s1 + $0x218] sm:$0xf]
  %v170 = vld [vmem:[%s1 + $0x21c] sm:$0xf]
  %v171 = vld [vmem:[%s1 + $0x220] sm:$0xf]
  %v172 = vld [vmem:[%s1 + $0x224] sm:$0xf]
  %v173 = vld [vmem:[%s1 + $0x228] sm:$0xf]
  %v174 = vld [vmem:[%s1 + $0x22c] sm:$0xf]
  %v175 = vld [vmem:[%s1 + $0x230] sm:$0xf]
  %v176 = vld [vmem:[%s1 + $0x234] sm:$0xf]
  %v177 = vld [vmem:[%s1 + $0x238] sm:$0xf]
  %v178 = vld [vmem:[%s1 + $0x23c] sm:$0xf]
  %v179 = vld [vmem:[%s2] sm:$0x1]
  %v181 = vlaneseq
  %v182 = vshrl.u32 %v181, 7
  %v183 = vsub.s32 0, %v182
  %v184 = vrot.slane %v179, %v183
  %v206 = vunpack.c.l.b16 %v15
  %v207 = vunpack.c.h.b16 %v15
  %v208 = vunpack.c.l.b16 %v16
  %v209 = vunpack.c.h.b16 %v16
  %v210 = vunpack.c.l.b16 %v17
  %v211 = vunpack.c.h.b16 %v17
  %v212 = vunpack.c.l.b16 %v18
  %v213 = vunpack.c.h.b16 %v18
  %v214 = vunpack.c.l.b16 %v19
  %v215 = vunpack.c.l.b16 %v20
  %v216 = vunpack.c.h.b16 %v20
  %v217 = vunpack.c.l.b16 %v21
  %v218 = vunpack.c.h.b16 %v21
  %v219 = vunpack.c.l.b16 %v22
  %v220 = vunpack.c.h.b16 %v22
  %v221 = vunpack.c.l.b16 %v23
  %v222 = vunpack.c.h.b16 %v23
  %v223 = vunpack.c.l.b16 %v24
  %v224 = vunpack.c.l.b16 %v25
  %v225 = vunpack.c.h.b16 %v25
  %v226 = vunpack.c.l.b16 %v26
  %v227 = vunpack.c.h.b16 %v26
  %v228 = vunpack.c.l.b16 %v27
  %v229 = vunpack.c.h.b16 %v27
  %v230 = vunpack.c.l.b16 %v28
  %v231 = vunpack.c.h.b16 %v28
  %v232 = vunpack.c.l.b16 %v29
  %v233 = vunpack.c.l.b16 %v30
  %v234 = vunpack.c.h.b16 %v30
  %v235 = vunpack.c.l.b16 %v31
  %v236 = vunpack.c.h.b16 %v31
  %v237 = vunpack.c.l.b16 %v32
  %v238 = vunpack.c.h.b16 %v32
  %v239 = vunpack.c.l.b16 %v33
  %v240 = vunpack.c.h.b16 %v33
  %v241 = vunpack.c.l.b16 %v34
  %v242 = vpack.c.b16 %v215, %v206
  %v243 = vpack.c.b16 %v216, %v207
  %v244 = vpack.c.b16 %v217, %v208
  %v245 = vpack.c.b16 %v218, %v209
  %v246 = vpack.c.b16 %v219, %v210
  %v247 = vpack.c.b16 %v220, %v211
  %v248 = vpack.c.b16 %v221, %v212
  %v249 = vpack.c.b16 %v222, %v213
  %v250 = vpack.c.b16 %v223, %v214
  %v251 = vpack.c.b16 %v233, %v224
  %v252 = vpack.c.b16 %v234, %v225
  %v253 = vpack.c.b16 %v235, %v226
  %v254 = vpack.c.b16 %v236, %v227
  %v255 = vpack.c.b16 %v237, %v228
  %v256 = vpack.c.b16 %v238, %v229
  %v257 = vpack.c.b16 %v239, %v230
  %v258 = vpack.c.b16 %v240, %v231
  %v259 = vpack.c.b16 %v241, %v232
  %v422 = vunpack.c.l.b16 %v35
  %v423 = vunpack.c.l.b16 %v36
  %v424 = vunpack.c.l.b16 %v37
  %v425 = vunpack.c.l.b16 %v38
  %v426 = vunpack.c.l.b16 %v39
  %v427 = vunpack.c.l.b16 %v40
  %v428 = vunpack.c.l.b16 %v41
  %v429 = vunpack.c.l.b16 %v42
  %v430 = vunpack.c.l.b16 %v43
  %v431 = vunpack.c.l.b16 %v44
  %v432 = vunpack.c.l.b16 %v45
  %v433 = vunpack.c.l.b16 %v46
  %v434 = vunpack.c.l.b16 %v47
  %v435 = vunpack.c.l.b16 %v48
  %v436 = vunpack.c.l.b16 %v49
  %v437 = vunpack.c.l.b16 %v50
  %v438 = vunpack.c.l.b16 %v51
  %v439 = vunpack.c.l.b16 %v52
  %v440 = vunpack.c.l.b16 %v53
  %v441 = vunpack.c.l.b16 %v54
  %v442 = vunpack.c.l.b16 %v55
  %v443 = vunpack.c.l.b16 %v56
  %v444 = vunpack.c.l.b16 %v57
  %v445 = vunpack.c.l.b16 %v58
  %v446 = vunpack.c.l.b16 %v59
  %v447 = vunpack.c.l.b16 %v60
  %v448 = vunpack.c.l.b16 %v61
  %v449 = vunpack.c.l.b16 %v62
  %v450 = vunpack.c.l.b16 %v63
  %v451 = vunpack.c.l.b16 %v64
  %v452 = vunpack.c.l.b16 %v65
  %v453 = vunpack.c.l.b16 %v66
  %v454 = vunpack.c.l.b16 %v67
  %v455 = vunpack.c.l.b16 %v68
  %v456 = vunpack.c.l.b16 %v69
  %v457 = vunpack.c.l.b16 %v70
  %v458 = vunpack.c.l.b16 %v71
  %v459 = vunpack.c.l.b16 %v72
  %v460 = vunpack.c.l.b16 %v73
  %v461 = vunpack.c.l.b16 %v74
  %v462 = vunpack.c.l.b16 %v75
  %v463 = vunpack.c.l.b16 %v76
  %v464 = vunpack.c.l.b16 %v77
  %v465 = vunpack.c.l.b16 %v78
  %v466 = vunpack.c.l.b16 %v79
  %v467 = vunpack.c.l.b16 %v80
  %v468 = vunpack.c.l.b16 %v81
  %v469 = vunpack.c.l.b16 %v82
  %v470 = vunpack.c.l.b16 %v83
  %v471 = vunpack.c.l.b16 %v84
  %v472 = vunpack.c.l.b16 %v85
  %v473 = vunpack.c.l.b16 %v86
  %v474 = vunpack.c.l.b16 %v87
  %v475 = vunpack.c.l.b16 %v88
  %v476 = vunpack.c.l.b16 %v89
  %v477 = vunpack.c.l.b16 %v90
  %v478 = vunpack.c.l.b16 %v91
  %v479 = vunpack.c.l.b16 %v92
  %v480 = vunpack.c.l.b16 %v93
  %v481 = vunpack.c.l.b16 %v94
  %v482 = vunpack.c.l.b16 %v95
  %v483 = vunpack.c.l.b16 %v96
  %v484 = vunpack.c.l.b16 %v97
  %v485 = vunpack.c.l.b16 %v98
  %v486 = vunpack.c.l.b16 %v99
  %v487 = vunpack.c.l.b16 %v100
  %v488 = vunpack.c.l.b16 %v101
  %v489 = vunpack.c.l.b16 %v102
  %v490 = vunpack.c.l.b16 %v103
  %v491 = vunpack.c.l.b16 %v104
  %v492 = vunpack.c.l.b16 %v105
  %v493 = vunpack.c.l.b16 %v106
  %v494 = vunpack.c.l.b16 %v107
  %v495 = vunpack.c.l.b16 %v108
  %v496 = vunpack.c.l.b16 %v109
  %v497 = vunpack.c.l.b16 %v110
  %v498 = vunpack.c.l.b16 %v111
  %v499 = vunpack.c.l.b16 %v112
  %v500 = vunpack.c.l.b16 %v113
  %v501 = vunpack.c.l.b16 %v114
  %v502 = vunpack.c.l.b16 %v115
  %v503 = vunpack.c.l.b16 %v116
  %v504 = vunpack.c.l.b16 %v117
  %v505 = vunpack.c.l.b16 %v118
  %v506 = vunpack.c.l.b16 %v119
  %v507 = vunpack.c.l.b16 %v120
  %v508 = vunpack.c.l.b16 %v121
  %v509 = vunpack.c.l.b16 %v122
  %v510 = vunpack.c.l.b16 %v123
  %v511 = vunpack.c.l.b16 %v124
  %v512 = vunpack.c.l.b16 %v125
  %v513 = vunpack.c.l.b16 %v126
  %v514 = vunpack.c.l.b16 %v127
  %v515 = vunpack.c.l.b16 %v128
  %v516 = vunpack.c.l.b16 %v129
  %v517 = vunpack.c.l.b16 %v130
  %v518 = vunpack.c.l.b16 %v131
  %v519 = vunpack.c.l.b16 %v132
  %v520 = vunpack.c.l.b16 %v133
  %v521 = vunpack.c.l.b16 %v134
  %v522 = vunpack.c.l.b16 %v135
  %v523 = vunpack.c.l.b16 %v136
  %v524 = vunpack.c.l.b16 %v137
  %v525 = vunpack.c.l.b16 %v138
  %v526 = vunpack.c.l.b16 %v139
  %v527 = vunpack.c.l.b16 %v140
  %v528 = vunpack.c.l.b16 %v141
  %v529 = vunpack.c.l.b16 %v142
  %v530 = vunpack.c.l.b16 %v143
  %v531 = vunpack.c.l.b16 %v144
  %v532 = vunpack.c.l.b16 %v145
  %v533 = vunpack.c.l.b16 %v146
  %v534 = vunpack.c.l.b16 %v147
  %v535 = vunpack.c.l.b16 %v148
  %v536 = vunpack.c.l.b16 %v149
  %v537 = vunpack.c.l.b16 %v150
  %v538 = vunpack.c.l.b16 %v151
  %v539 = vunpack.c.l.b16 %v152
  %v540 = vunpack.c.l.b16 %v153
  %v541 = vunpack.c.l.b16 %v154
  %v542 = vunpack.c.l.b16 %v155
  %v543 = vunpack.c.l.b16 %v156
  %v544 = vunpack.c.l.b16 %v157
  %v545 = vunpack.c.l.b16 %v158
  %v546 = vunpack.c.l.b16 %v159
  %v547 = vunpack.c.l.b16 %v160
  %v548 = vunpack.c.l.b16 %v161
  %v549 = vunpack.c.l.b16 %v162
  %v550 = vunpack.c.l.b16 %v163
  %v551 = vunpack.c.l.b16 %v164
  %v552 = vunpack.c.l.b16 %v165
  %v553 = vunpack.c.l.b16 %v166
  %v554 = vunpack.c.l.b16 %v167
  %v555 = vunpack.c.l.b16 %v168
  %v556 = vunpack.c.l.b16 %v169
  %v557 = vunpack.c.l.b16 %v170
  %v558 = vunpack.c.l.b16 %v171
  %v559 = vunpack.c.l.b16 %v172
  %v560 = vunpack.c.l.b16 %v173
  %v561 = vunpack.c.l.b16 %v174
  %v562 = vunpack.c.l.b16 %v175
  %v563 = vunpack.c.l.b16 %v176
  %v564 = vunpack.c.l.b16 %v177
  %v565 = vunpack.c.l.b16 %v178
  %v566 = vpack.c.b16 %v423, %v422
  %v567 = vpack.c.b16 %v425, %v424
  %v568 = vpack.c.b16 %v427, %v426
  %v569 = vpack.c.b16 %v429, %v428
  %v570 = vpack.c.b16 %v431, %v430
  %v571 = vpack.c.b16 %v433, %v432
  %v572 = vpack.c.b16 %v435, %v434
  %v573 = vpack.c.b16 %v437, %v436
  %v574 = vpack.c.b16 %v439, %v438
  %v575 = vpack.c.b16 %v441, %v440
  %v576 = vpack.c.b16 %v443, %v442
  %v577 = vpack.c.b16 %v445, %v444
  %v578 = vpack.c.b16 %v447, %v446
  %v579 = vpack.c.b16 %v449, %v448
  %v580 = vpack.c.b16 %v451, %v450
  %v581 = vpack.c.b16 %v453, %v452
  %v582 = vpack.c.b16 %v455, %v454
  %v583 = vpack.c.b16 %v457, %v456
  %v584 = vpack.c.b16 %v459, %v458
  %v585 = vpack.c.b16 %v461, %v460
  %v586 = vpack.c.b16 %v463, %v462
  %v587 = vpack.c.b16 %v465, %v464
  %v588 = vpack.c.b16 %v467, %v466
  %v589 = vpack.c.b16 %v469, %v468
  %v590 = vpack.c.b16 %v471, %v470
  %v591 = vpack.c.b16 %v473, %v472
  %v592 = vpack.c.b16 %v475, %v474
  %v593 = vpack.c.b16 %v477, %v476
  %v594 = vpack.c.b16 %v479, %v478
  %v595 = vpack.c.b16 %v481, %v480
  %v596 = vpack.c.b16 %v483, %v482
  %v597 = vpack.c.b16 %v485, %v484
  %v598 = vpack.c.b16 %v487, %v486
  %v599 = vpack.c.b16 %v489, %v488
  %v600 = vpack.c.b16 %v491, %v490
  %v601 = vpack.c.b16 %v493, %v492
  %v602 = vpack.c.b16 %v495, %v494
  %v603 = vpack.c.b16 %v497, %v496
  %v604 = vpack.c.b16 %v499, %v498
  %v605 = vpack.c.b16 %v501, %v500
  %v606 = vpack.c.b16 %v503, %v502
  %v607 = vpack.c.b16 %v505, %v504
  %v608 = vpack.c.b16 %v507, %v506
  %v609 = vpack.c.b16 %v509, %v508
  %v610 = vpack.c.b16 %v511, %v510
  %v611 = vpack.c.b16 %v513, %v512
  %v612 = vpack.c.b16 %v515, %v514
  %v613 = vpack.c.b16 %v517, %v516
  %v614 = vpack.c.b16 %v519, %v518
  %v615 = vpack.c.b16 %v521, %v520
  %v616 = vpack.c.b16 %v523, %v522
  %v617 = vpack.c.b16 %v525, %v524
  %v618 = vpack.c.b16 %v527, %v526
  %v619 = vpack.c.b16 %v529, %v528
  %v620 = vpack.c.b16 %v531, %v530
  %v621 = vpack.c.b16 %v533, %v532
  %v622 = vpack.c.b16 %v535, %v534
  %v623 = vpack.c.b16 %v537, %v536
  %v624 = vpack.c.b16 %v539, %v538
  %v625 = vpack.c.b16 %v541, %v540
  %v626 = vpack.c.b16 %v543, %v542
  %v627 = vpack.c.b16 %v545, %v544
  %v628 = vpack.c.b16 %v547, %v546
  %v629 = vpack.c.b16 %v549, %v548
  %v630 = vpack.c.b16 %v551, %v550
  %v631 = vpack.c.b16 %v553, %v552
  %v632 = vpack.c.b16 %v555, %v554
  %v633 = vpack.c.b16 %v557, %v556
  %v634 = vpack.c.b16 %v559, %v558
  %v635 = vpack.c.b16 %v561, %v560
  %v636 = vpack.c.b16 %v563, %v562
  %v637 = vpack.c.b16 %v565, %v564
  %710 = vmatprep.subr.bf16.mxu0 0
  %711 = vmatpush1.bf16.msra.mxu0 %v566
  %712 = vmatprep.subr.bf16.mxu0 0
  %713 = vmatpush1.bf16.msra.mxu0 %v567
  %714 = vmatprep.subr.bf16.mxu0 0
  %715 = vmatpush1.bf16.msra.mxu0 %v568
  %716 = vmatprep.subr.bf16.mxu0 0
  %717 = vmatpush1.bf16.msra.mxu0 %v569
  %718 = vmatprep.subr.bf16.mxu0 0
  %719 = vmatpush1.bf16.msra.mxu0 %v570
  %720 = vmatprep.subr.bf16.mxu0 0
  %721 = vmatpush1.bf16.msra.mxu0 %v571
  %722 = vmatprep.subr.bf16.mxu0 0
  %723 = vmatpush1.bf16.msra.mxu0 %v572
  %724 = vmatprep.subr.bf16.mxu0 0
  %725 = vmatpush1.bf16.msra.mxu0 %v573
  %726 = vmatprep.subr.bf16.mxu0 0
  %727 = vmatpush1.bf16.msra.mxu0 %v574
  %728 = vmatprep.subr.bf16.mxu0 0
  %729 = vmatpush1.bf16.msra.mxu0 %v575
  %730 = vmatprep.subr.bf16.mxu0 0
  %731 = vmatpush1.bf16.msra.mxu0 %v576
  %732 = vmatprep.subr.bf16.mxu0 0
  %733 = vmatpush1.bf16.msra.mxu0 %v577
  %734 = vmatprep.subr.bf16.mxu0 0
  %735 = vmatpush1.bf16.msra.mxu0 %v578
  %736 = vmatprep.subr.bf16.mxu0 0
  %737 = vmatpush1.bf16.msra.mxu0 %v579
  %738 = vmatprep.subr.bf16.mxu0 0
  %739 = vmatpush1.bf16.msra.mxu0 %v580
  %740 = vmatprep.subr.bf16.mxu0 0
  %741 = vmatpush1.bf16.msra.mxu0 %v581
  %742 = vmatprep.mubr.bf16.mxu0 %v243
  %743 = vmatmul.mubr.bf16.gmra.mrb[0].mxu0 %v242
  %v744 = vpop.f32.mrb[0].mxu0
  %v745 = vadd.f32 %v184, %v744
  %v746 = vpop.f32.mrb[0].mxu0
  %v747 = vpop.f32.mrb[0].mxu0
  %v748 = vadd.f32 %v184, %v747
  %v749 = vpop.f32.mrb[0].mxu0
  %750 = vmatprep.mubr.bf16.mxu0 %v252
  %751 = vmatmul.mubr.bf16.gmra.mrb[0].mxu0 %v251
  %v752 = vpop.f32.mrb[0].mxu0
  %v753 = vadd.f32 %v184, %v752
  %v754 = vpop.f32.mrb[0].mxu0
  %v755 = vpop.f32.mrb[0].mxu0
  %v756 = vadd.f32 %v184, %v755
  %v757 = vpop.f32.mrb[0].mxu0
  %758 = vdwg.mxu0
  %759 = vmatprep.subr.bf16.mxu0 0
  %760 = vmatpush1.bf16.msra.mxu0 %v582
  %761 = vmatprep.subr.bf16.mxu0 0
  %762 = vmatpush1.bf16.msra.mxu0 %v583
  %763 = vmatprep.subr.bf16.mxu0 0
  %764 = vmatpush1.bf16.msra.mxu0 %v584
  %765 = vmatprep.subr.bf16.mxu0 0
  %766 = vmatpush1.bf16.msra.mxu0 %v585
  %767 = vmatprep.subr.bf16.mxu0 0
  %768 = vmatpush1.bf16.msra.mxu0 %v586
  %769 = vmatprep.subr.bf16.mxu0 0
  %770 = vmatpush1.bf16.msra.mxu0 %v587
  %771 = vmatprep.subr.bf16.mxu0 0
  %772 = vmatpush1.bf16.msra.mxu0 %v588
  %773 = vmatprep.subr.bf16.mxu0 0
  %774 = vmatpush1.bf16.msra.mxu0 %v589
  %775 = vmatprep.subr.bf16.mxu0 0
  %776 = vmatpush1.bf16.msra.mxu0 %v590
  %777 = vmatprep.subr.bf16.mxu0 0
  %778 = vmatpush1.bf16.msra.mxu0 %v591
  %779 = vmatprep.subr.bf16.mxu0 0
  %780 = vmatpush1.bf16.msra.mxu0 %v592
  %781 = vmatprep.subr.bf16.mxu0 0
  %782 = vmatpush1.bf16.msra.mxu0 %v593
  %783 = vmatprep.subr.bf16.mxu0 0
  %784 = vmatpush1.bf16.msra.mxu0 %v594
  %785 = vmatprep.subr.bf16.mxu0 0
  %786 = vmatpush1.bf16.msra.mxu0 %v595
  %787 = vmatprep.subr.bf16.mxu0 0
  %788 = vmatpush1.bf16.msra.mxu0 %v596
  %789 = vmatprep.subr.bf16.mxu0 0
  %790 = vmatpush1.bf16.msra.mxu0 %v597
  %791 = vmatprep.mubr.bf16.mxu0 %v245
  %792 = vmatmul.mubr.bf16.gmra.mrb[0].mxu0 %v244
  %v793 = vpop.f32.mrb[0].mxu0
  %v794 = vadd.f32 %v745, %v793
  %v795 = vpop.f32.mrb[0].mxu0
  %v796 = vpop.f32.mrb[0].mxu0
  %v797 = vadd.f32 %v748, %v796
  %v798 = vpop.f32.mrb[0].mxu0
  %799 = vmatprep.mubr.bf16.mxu0 %v254
  %800 = vmatmul.mubr.bf16.gmra.mrb[0].mxu0 %v253
  %v801 = vpop.f32.mrb[0].mxu0
  %v802 = vadd.f32 %v753, %v801
  %v803 = vpop.f32.mrb[0].mxu0
  %v804 = vpop.f32.mrb[0].mxu0
  %v805 = vadd.f32 %v756, %v804
  %v806 = vpop.f32.mrb[0].mxu0
  %807 = vdwg.mxu0
  %808 = vmatprep.subr.bf16.mxu0 0
  %809 = vmatpush1.bf16.msra.mxu0 %v598
  %810 = vmatprep.subr.bf16.mxu0 0
  %811 = vmatpush1.bf16.msra.mxu0 %v599
  %812 = vmatprep.subr.bf16.mxu0 0
  %813 = vmatpush1.bf16.msra.mxu0 %v600
  %814 = vmatprep.subr.bf16.mxu0 0
  %815 = vmatpush1.bf16.msra.mxu0 %v601
  %816 = vmatprep.subr.bf16.mxu0 0
  %817 = vmatpush1.bf16.msra.mxu0 %v602
  %818 = vmatprep.subr.bf16.mxu0 0
  %819 = vmatpush1.bf16.msra.mxu0 %v603
  %820 = vmatprep.subr.bf16.mxu0 0
  %821 = vmatpush1.bf16.msra.mxu0 %v604
  %822 = vmatprep.subr.bf16.mxu0 0
  %823 = vmatpush1.bf16.msra.mxu0 %v605
  %824 = vmatprep.subr.bf16.mxu0 0
  %825 = vmatpush1.bf16.msra.mxu0 %v606
  %826 = vmatprep.subr.bf16.mxu0 0
  %827 = vmatpush1.bf16.msra.mxu0 %v607
  %828 = vmatprep.subr.bf16.mxu0 0
  %829 = vmatpush1.bf16.msra.mxu0 %v608
  %830 = vmatprep.subr.bf16.mxu0 0
  %831 = vmatpush1.bf16.msra.mxu0 %v609
  %832 = vmatprep.subr.bf16.mxu0 0
  %833 = vmatpush1.bf16.msra.mxu0 %v610
  %834 = vmatprep.subr.bf16.mxu0 0
  %835 = vmatpush1.bf16.msra.mxu0 %v611
  %836 = vmatprep.subr.bf16.mxu0 0
  %837 = vmatpush1.bf16.msra.mxu0 %v612
  %838 = vmatprep.subr.bf16.mxu0 0
  %839 = vmatpush1.bf16.msra.mxu0 %v613
  %840 = vmatprep.mubr.bf16.mxu0 %v247
  %841 = vmatmul.mubr.bf16.gmra.mrb[0].mxu0 %v246
  %v842 = vpop.f32.mrb[0].mxu0
  %v843 = vadd.f32 %v794, %v842
  %v844 = vpop.f32.mrb[0].mxu0
  %v845 = vpop.f32.mrb[0].mxu0
  %v846 = vadd.f32 %v797, %v845
  %v847 = vpop.f32.mrb[0].mxu0
  %848 = vmatprep.mubr.bf16.mxu0 %v256
  %849 = vmatmul.mubr.bf16.gmra.mrb[0].mxu0 %v255
  %v850 = vpop.f32.mrb[0].mxu0
  %v851 = vadd.f32 %v802, %v850
  %v852 = vpop.f32.mrb[0].mxu0
  %v853 = vpop.f32.mrb[0].mxu0
  %v854 = vadd.f32 %v805, %v853
  %v855 = vpop.f32.mrb[0].mxu0
  %856 = vdwg.mxu0
  %857 = vmatprep.subr.bf16.mxu0 0
  %858 = vmatpush1.bf16.msra.mxu0 %v614
  %859 = vmatprep.subr.bf16.mxu0 0
  %860 = vmatpush1.bf16.msra.mxu0 %v615
  %861 = vmatprep.subr.bf16.mxu0 0
  %862 = vmatpush1.bf16.msra.mxu0 %v616
  %863 = vmatprep.subr.bf16.mxu0 0
  %864 = vmatpush1.bf16.msra.mxu0 %v617
  %865 = vmatprep.subr.bf16.mxu0 0
  %866 = vmatpush1.bf16.msra.mxu0 %v618
  %867 = vmatprep.subr.bf16.mxu0 0
  %868 = vmatpush1.bf16.msra.mxu0 %v619
  %869 = vmatprep.subr.bf16.mxu0 0
  %870 = vmatpush1.bf16.msra.mxu0 %v620
  %871 = vmatprep.subr.bf16.mxu0 0
  %872 = vmatpush1.bf16.msra.mxu0 %v621
  %873 = vmatprep.subr.bf16.mxu0 0
  %874 = vmatpush1.bf16.msra.mxu0 %v622
  %875 = vmatprep.subr.bf16.mxu0 0
  %876 = vmatpush1.bf16.msra.mxu0 %v623
  %877 = vmatprep.subr.bf16.mxu0 0
  %878 = vmatpush1.bf16.msra.mxu0 %v624
  %879 = vmatprep.subr.bf16.mxu0 0
  %880 = vmatpush1.bf16.msra.mxu0 %v625
  %881 = vmatprep.subr.bf16.mxu0 0
  %882 = vmatpush1.bf16.msra.mxu0 %v626
  %883 = vmatprep.subr.bf16.mxu0 0
  %884 = vmatpush1.bf16.msra.mxu0 %v627
  %885 = vmatprep.subr.bf16.mxu0 0
  %886 = vmatpush1.bf16.msra.mxu0 %v628
  %887 = vmatprep.subr.bf16.mxu0 0
  %888 = vmatpush1.bf16.msra.mxu0 %v629
  %889 = vmatprep.mubr.bf16.mxu0 %v249
  %890 = vmatmul.mubr.bf16.gmra.mrb[0].mxu0 %v248
  %v891 = vpop.f32.mrb[0].mxu0
  %v892 = vadd.f32 %v843, %v891
  %v893 = vpop.f32.mrb[0].mxu0
  %v894 = vpop.f32.mrb[0].mxu0
  %v895 = vadd.f32 %v846, %v894
  %v896 = vpop.f32.mrb[0].mxu0
  %897 = vmatprep.mubr.bf16.mxu0 %v258
  %898 = vmatmul.mubr.bf16.gmra.mrb[0].mxu0 %v257
  %v899 = vpop.f32.mrb[0].mxu0
  %v900 = vadd.f32 %v851, %v899
  %v901 = vpop.f32.mrb[0].mxu0
  %v902 = vpop.f32.mrb[0].mxu0
  %v903 = vadd.f32 %v854, %v902
  %v904 = vpop.f32.mrb[0].mxu0
  %905 = vdwg.mxu0
  %906 = vmatprep.subr.bf16.mxu0 0
  %907 = vmatpush1.bf16.msra.mxu0 %v630
  %908 = vmatprep.subr.bf16.mxu0 0
  %909 = vmatpush1.bf16.msra.mxu0 %v631
  %910 = vmatprep.subr.bf16.mxu0 0
  %911 = vmatpush1.bf16.msra.mxu0 %v632
  %912 = vmatprep.subr.bf16.mxu0 0
  %913 = vmatpush1.bf16.msra.mxu0 %v633
  %914 = vmatprep.subr.bf16.mxu0 0
  %915 = vmatpush1.bf16.msra.mxu0 %v634
  %916 = vmatprep.subr.bf16.mxu0 0
  %917 = vmatpush1.bf16.msra.mxu0 %v635
  %918 = vmatprep.subr.bf16.mxu0 0
  %919 = vmatpush1.bf16.msra.mxu0 %v636
  %920 = vmatprep.subr.bf16.mxu0 0
  %921 = vmatpush1.bf16.msra.mxu0 %v637
  %922 = vmatprep.subr.bf16.mxu0 0
  %923 = vmatpush1.bf16.msra.mxu0 0
  %924 = vmatprep.subr.bf16.mxu0 0
  %925 = vmatpush1.bf16.msra.mxu0 0
  %926 = vmatprep.subr.bf16.mxu0 0
  %927 = vmatpush1.bf16.msra.mxu0 0
  %928 = vmatprep.subr.bf16.mxu0 0
  %929 = vmatpush1.bf16.msra.mxu0 0
  %930 = vmatprep.subr.bf16.mxu0 0
  %931 = vmatpush1.bf16.msra.mxu0 0
  %932 = vmatprep.subr.bf16.mxu0 0
  %933 = vmatpush1.bf16.msra.mxu0 0
  %934 = vmatprep.subr.bf16.mxu0 0
  %935 = vmatpush1.bf16.msra.mxu0 0
  %936 = vmatprep.subr.bf16.mxu0 0
  %937 = vmatpush1.bf16.msra.mxu0 0
  %938 = vmatprep.mubr.bf16.mxu0 0
  %939 = vmatmul.mubr.bf16.gmra.mrb[0].mxu0 %v250
  %v940 = vpop.f32.mrb[0].mxu0
  %v941 = vadd.f32 %v892, %v940
  %v942 = vpop.f32.mrb[0].mxu0
  %v943 = vpop.f32.mrb[0].mxu0
  %v944 = vadd.f32 %v895, %v943
  %v945 = vpop.f32.mrb[0].mxu0
  %946 = vmatprep.mubr.bf16.mxu0 0
  %947 = vmatmul.mubr.bf16.gmra.mrb[0].mxu0 %v259
  %v948 = vpop.f32.mrb[0].mxu0
  %v949 = vadd.f32 %v900, %v948
  %v950 = vpop.f32.mrb[0].mxu0
  %v951 = vpop.f32.mrb[0].mxu0
  %v952 = vadd.f32 %v903, %v951
  %v953 = vpop.f32.mrb[0].mxu0
  %954 = vdwg.mxu0
  %v955 = vmax.f32 %v941, 0.0
  %v956 = vmax.f32 %v944, 0.0
  %v957 = vmax.f32 %v949, 0.0
  %v958 = vmax.f32 %v952, 0.0
  %v959 = vpack.c.bf16 %v956, %v955
  %v960 = vpack.c.bf16 %v958, %v957
  %v963 = vunpack.c.l.b16 %v959
  %v964 = vunpack.c.h.b16 %v959
  %v965 = vunpack.c.l.b16 %v960
  %v966 = vunpack.c.h.b16 %v960
  %v967 = vpack.c.b16 %v963, %v963
  %v968 = vpack.c.b16 %v964, %v964
  %v969 = vpack.c.b16 %v965, %v965
  %v970 = vpack.c.b16 %v966, %v966
  %975 = vst [vmem:[%s3] sm:$0xf] %v967
  %976 = vst [vmem:[%s3 + $0x4] sm:$0xf] %v968
  %977 = vst [vmem:[%s3 + $0x8] sm:$0xf] %v969
  %978 = vst [vmem:[%s3 + $0xc] sm:$0xf] %v970
  // Predicated region
  $region14: #{_lambda_.16} parent=0 // pred_check
    _
  $region15: #{_lambda_.16} parent=0 // pred_check_branch
    %980 = sbr.rel (0) target = $region17
  $region16: #{_lambda_.16} parent=0 // pred_region
    _
  $region17: #{_lambda_.16} parent=0 // pred_fallthru
    _
  // Predicated region
  $region18: #{_lambda_.16} parent=0 // pred_check
    _
  $region19: #{_lambda_.16} parent=0 // pred_check_branch
    %982 = sbr.rel (0) target = $region21
  $region20: #{_lambda_.16} parent=0 // pred_region
    _
  $region21: #{_lambda_.16} parent=0 // pred_fallthru
    _

// kernel: _lambda_.18
$region0: #{_lambda_.18}
  #allocation0 [shape = 'u32[]', space=smem, size = 0x4, offset = 0x4, fixed_abs, tag = 'smem constant byte address 0x4 - core index']
  #allocation1 [shape = 'u32[144,128]{1,0:T(1,128)}', space=vmem, size = 0x12000, scoped, tag = 'internal scratch']
  %s0 = inlined_call_operand.vmem [shape: bf16[16,128], index: 0, kind: input, shape index: {}]
  %s1 = inlined_call_operand.vmem [shape: bf16[128,128], index: 1, kind: input, shape index: {}]
  %s2 = inlined_call_operand.vmem [shape: f32[1,128], index: 2, kind: input, shape index: {}]
  %s3 = inlined_call_operand.vmem [shape: bf16[16,128], index: 3, kind: output, shape index: {}]
  %s4 = sld [smem:[#allocation0]]
  $region22: #{_lambda_.18} parent=0
    _
  %s6 = ssub.s32 1, %s4
  %s7 = scalar_select 0, %s6, %s4
  // Predicated region
  $region2: #{_lambda_.18} parent=0 // pred_check
    _
  $region3: #{_lambda_.18} parent=0 // pred_check_branch
    %9 = sbr.rel (0) target = $region5
  $region4: #{_lambda_.18} parent=0 // pred_region
    _
  $region5: #{_lambda_.18} parent=0 // pred_fallthru
    _
  // Predicated region
  $region6: #{_lambda_.18} parent=0 // pred_check
    _
  $region7: #{_lambda_.18} parent=0 // pred_check_branch
    %11 = sbr.rel (0) target = $region9
  $region8: #{_lambda_.18} parent=0 // pred_region
    _
  $region9: #{_lambda_.18} parent=0 // pred_fallthru
    _
  // Predicated region
  $region10: #{_lambda_.18} parent=0 // pred_check
    _
  $region11: #{_lambda_.18} parent=0 // pred_check_branch
    %13 = sbr.rel (0) target = $region13
  $region12: #{_lambda_.18} parent=0 // pred_region
    _
  $region13: #{_lambda_.18} parent=0 // pred_fallthru
    _
  %v15 = vld [vmem:[%s0] sm:$0xf]
  %v16 = vld [vmem:[%s0 + $0x4] sm:$0xf]
  %v17 = vld [vmem:[%s1] sm:$0xf]
  %v18 = vld [vmem:[%s1 + $0x4] sm:$0xf]
  %v19 = vld [vmem:[%s1 + $0x8] sm:$0xf]
  %v20 = vld [vmem:[%s1 + $0xc] sm:$0xf]
  %v21 = vld [vmem:[%s1 + $0x10] sm:$0xf]
  %v22 = vld [vmem:[%s1 + $0x14] sm:$0xf]
  %v23 = vld [vmem:[%s1 + $0x18] sm:$0xf]
  %v24 = vld [vmem:[%s1 + $0x1c] sm:$0xf]
  %v25 = vld [vmem:[%s1 + $0x20] sm:$0xf]
  %v26 = vld [vmem:[%s1 + $0x24] sm:$0xf]
  %v27 = vld [vmem:[%s1 + $0x28] sm:$0xf]
  %v28 = vld [vmem:[%s1 + $0x2c] sm:$0xf]
  %v29 = vld [vmem:[%s1 + $0x30] sm:$0xf]
  %v30 = vld [vmem:[%s1 + $0x34] sm:$0xf]
  %v31 = vld [vmem:[%s1 + $0x38] sm:$0xf]
  %v32 = vld [vmem:[%s1 + $0x3c] sm:$0xf]
  %v33 = vld [vmem:[%s2] sm:$0x1]
  %v35 = vlaneseq
  %v36 = vshrl.u32 %v35, 7
  %v37 = vsub.s32 0, %v36
  %v38 = vrot.slane %v33, %v37
  %v42 = vunpack.c.l.b16 %v15
  %v43 = vunpack.c.l.b16 %v16
  %v44 = vpack.c.b16 %v43, %v42
  %v62 = vunpack.c.l.b16 %v17
  %v63 = vunpack.c.l.b16 %v18
  %v64 = vunpack.c.l.b16 %v19
  %v65 = vunpack.c.l.b16 %v20
  %v66 = vunpack.c.l.b16 %v21
  %v67 = vunpack.c.l.b16 %v22
  %v68 = vunpack.c.l.b16 %v23
  %v69 = vunpack.c.l.b16 %v24
  %v70 = vunpack.c.l.b16 %v25
  %v71 = vunpack.c.l.b16 %v26
  %v72 = vunpack.c.l.b16 %v27
  %v73 = vunpack.c.l.b16 %v28
  %v74 = vunpack.c.l.b16 %v29
  %v75 = vunpack.c.l.b16 %v30
  %v76 = vunpack.c.l.b16 %v31
  %v77 = vunpack.c.l.b16 %v32
  %v78 = vpack.c.b16 %v63, %v62
  %v79 = vpack.c.b16 %v65, %v64
  %v80 = vpack.c.b16 %v67, %v66
  %v81 = vpack.c.b16 %v69, %v68
  %v82 = vpack.c.b16 %v71, %v70
  %v83 = vpack.c.b16 %v73, %v72
  %v84 = vpack.c.b16 %v75, %v74
  %v85 = vpack.c.b16 %v77, %v76
  %94 = vmatprep.subr.bf16.mxu0 0
  %95 = vmatpush1.bf16.msra.mxu0 %v78
  %96 = vmatprep.subr.bf16.mxu0 0
  %97 = vmatpush1.bf16.msra.mxu0 %v79
  %98 = vmatprep.subr.bf16.mxu0 0
  %99 = vmatpush1.bf16.msra.mxu0 %v80
  %100 = vmatprep.subr.bf16.mxu0 0
  %101 = vmatpush1.bf16.msra.mxu0 %v81
  %102 = vmatprep.subr.bf16.mxu0 0
  %103 = vmatpush1.bf16.msra.mxu0 %v82
  %104 = vmatprep.subr.bf16.mxu0 0
  %105 = vmatpush1.bf16.msra.mxu0 %v83
  %106 = vmatprep.subr.bf16.mxu0 0
  %107 = vmatpush1.bf16.msra.mxu0 %v84
  %108 = vmatprep.subr.bf16.mxu0 0
  %109 = vmatpush1.bf16.msra.mxu0 %v85
  %110 = vmatprep.subr.bf16.mxu0 0
  %111 = vmatpush1.bf16.msra.mxu0 0
  %112 = vmatprep.subr.bf16.mxu0 0
  %113 = vmatpush1.bf16.msra.mxu0 0
  %114 = vmatprep.subr.bf16.mxu0 0
  %115 = vmatpush1.bf16.msra.mxu0 0
  %116 = vmatprep.subr.bf16.mxu0 0
  %117 = vmatpush1.bf16.msra.mxu0 0
  %118 = vmatprep.subr.bf16.mxu0 0
  %119 = vmatpush1.bf16.msra.mxu0 0
  %120 = vmatprep.subr.bf16.mxu0 0
  %121 = vmatpush1.bf16.msra.mxu0 0
  %122 = vmatprep.subr.bf16.mxu0 0
  %123 = vmatpush1.bf16.msra.mxu0 0
  %124 = vmatprep.subr.bf16.mxu0 0
  %125 = vmatpush1.bf16.msra.mxu0 0
  %126 = vmatprep.mubr.bf16.mxu0 0
  %127 = vmatmul.mubr.bf16.gmra.mrb[0].mxu0 %v44
  %v128 = vpop.f32.mrb[0].mxu0
  %v129 = vadd.f32 %v38, %v128
  %v130 = vpop.f32.mrb[0].mxu0
  %v131 = vpop.f32.mrb[0].mxu0
  %v132 = vadd.f32 %v38, %v131
  %v133 = vpop.f32.mrb[0].mxu0
  %134 = vdwg.mxu0
  %v135 = vpack.c.bf16 %v132, %v129
  %v137 = vunpack.c.l.b16 %v135
  %v138 = vunpack.c.h.b16 %v135
  %v139 = vpack.c.b16 %v137, %v137
  %v140 = vpack.c.b16 %v138, %v138
  %143 = vst [vmem:[%s3] sm:$0xf] %v139
  %144 = vst [vmem:[%s3 + $0x4] sm:$0xf] %v140
  // Predicated region
  $region14: #{_lambda_.18} parent=0 // pred_check
    _
  $region15: #{_lambda_.18} parent=0 // pred_check_branch
    %146 = sbr.rel (0) target = $region17
  $region16: #{_lambda_.18} parent=0 // pred_region
    _
  $region17: #{_lambda_.18} parent=0 // pred_fallthru
    _
  // Predicated region
  $region18: #{_lambda_.18} parent=0 // pred_check
    _
  $region19: #{_lambda_.18} parent=0 // pred_check_branch
    %148 = sbr.rel (0) target = $region21
  $region20: #{_lambda_.18} parent=0 // pred_region
    _
  $region21: #{_lambda_.18} parent=0 // pred_fallthru
    _

// kernel: _lambda_.19
$region0: #{_lambda_.19}
  #allocation0 [shape = 'u32[]', space=smem, size = 0x4, offset = 0x4, fixed_abs, tag = 'smem constant byte address 0x4 - core index']
  #allocation1 [shape = 'u32[144,128]{1,0:T(1,128)}', space=vmem, size = 0x12000, scoped, tag = 'internal scratch']
  %s0 = inlined_call_operand.vmem [shape: bf16[32,128], index: 0, kind: input, shape index: {}]
  %s1 = inlined_call_operand.vmem [shape: bf16[128,128], index: 1, kind: input, shape index: {}]
  %s2 = inlined_call_operand.vmem [shape: f32[1,128], index: 2, kind: input, shape index: {}]
  %s3 = inlined_call_operand.vmem [shape: bf16[32,128], index: 3, kind: output, shape index: {}]
  %s4 = sld [smem:[#allocation0]]
  $region22: #{_lambda_.19} parent=0
    _
  %s6 = ssub.s32 1, %s4
  %s7 = scalar_select 0, %s6, %s4
  // Predicated region
  $region2: #{_lambda_.19} parent=0 // pred_check
    _
  $region3: #{_lambda_.19} parent=0 // pred_check_branch
    %9 = sbr.rel (0) target = $region5
  $region4: #{_lambda_.19} parent=0 // pred_region
    _
  $region5: #{_lambda_.19} parent=0 // pred_fallthru
    _
  // Predicated region
  $region6: #{_lambda_.19} parent=0 // pred_check
    _
  $region7: #{_lambda_.19} parent=0 // pred_check_branch
    %11 = sbr.rel (0) target = $region9
  $region8: #{_lambda_.19} parent=0 // pred_region
    _
  $region9: #{_lambda_.19} parent=0 // pred_fallthru
    _
  // Predicated region
  $region10: #{_lambda_.19} parent=0 // pred_check
    _
  $region11: #{_lambda_.19} parent=0 // pred_check_branch
    %13 = sbr.rel (0) target = $region13
  $region12: #{_lambda_.19} parent=0 // pred_region
    _
  $region13: #{_lambda_.19} parent=0 // pred_fallthru
    _
  %v15 = vld [vmem:[%s0] sm:$0xf]
  %v16 = vld [vmem:[%s0 + $0x4] sm:$0xf]
  %v17 = vld [vmem:[%s0 + $0x8] sm:$0xf]
  %v18 = vld [vmem:[%s0 + $0xc] sm:$0xf]
  %v19 = vld [vmem:[%s1] sm:$0xf]
  %v20 = vld [vmem:[%s1 + $0x4] sm:$0xf]
  %v21 = vld [vmem:[%s1 + $0x8] sm:$0xf]
  %v22 = vld [vmem:[%s1 + $0xc] sm:$0xf]
  %v23 = vld [vmem:[%s1 + $0x10] sm:$0xf]
  %v24 = vld [vmem:[%s1 + $0x14] sm:$0xf]
  %v25 = vld [vmem:[%s1 + $0x18] sm:$0xf]
  %v26 = vld [vmem:[%s1 + $0x1c] sm:$0xf]
  %v27 = vld [vmem:[%s1 + $0x20] sm:$0xf]
  %v28 = vld [vmem:[%s1 + $0x24] sm:$0xf]
  %v29 = vld [vmem:[%s1 + $0x28] sm:$0xf]
  %v30 = vld [vmem:[%s1 + $0x2c] sm:$0xf]
  %v31 = vld [vmem:[%s1 + $0x30] sm:$0xf]
  %v32 = vld [vmem:[%s1 + $0x34] sm:$0xf]
  %v33 = vld [vmem:[%s1 + $0x38] sm:$0xf]
  %v34 = vld [vmem:[%s1 + $0x3c] sm:$0xf]
  %v35 = vld [vmem:[%s2] sm:$0x1]
  %v37 = vlaneseq
  %v38 = vshrl.u32 %v37, 7
  %v39 = vsub.s32 0, %v38
  %v40 = vrot.slane %v35, %v39
  %v46 = vunpack.c.l.b16 %v15
  %v47 = vunpack.c.l.b16 %v16
  %v48 = vunpack.c.l.b16 %v17
  %v49 = vunpack.c.l.b16 %v18
  %v50 = vpack.c.b16 %v47, %v46
  %v51 = vpack.c.b16 %v49, %v48
  %v70 = vunpack.c.l.b16 %v19
  %v71 = vunpack.c.l.b16 %v20
  %v72 = vunpack.c.l.b16 %v21
  %v73 = vunpack.c.l.b16 %v22
  %v74 = vunpack.c.l.b16 %v23
  %v75 = vunpack.c.l.b16 %v24
  %v76 = vunpack.c.l.b16 %v25
  %v77 = vunpack.c.l.b16 %v26
  %v78 = vunpack.c.l.b16 %v27
  %v79 = vunpack.c.l.b16 %v28
  %v80 = vunpack.c.l.b16 %v29
  %v81 = vunpack.c.l.b16 %v30
  %v82 = vunpack.c.l.b16 %v31
  %v83 = vunpack.c.l.b16 %v32
  %v84 = vunpack.c.l.b16 %v33
  %v85 = vunpack.c.l.b16 %v34
  %v86 = vpack.c.b16 %v71, %v70
  %v87 = vpack.c.b16 %v73, %v72
  %v88 = vpack.c.b16 %v75, %v74
  %v89 = vpack.c.b16 %v77, %v76
  %v90 = vpack.c.b16 %v79, %v78
  %v91 = vpack.c.b16 %v81, %v80
  %v92 = vpack.c.b16 %v83, %v82
  %v93 = vpack.c.b16 %v85, %v84
  %102 = vmatprep.subr.bf16.mxu0 0
  %103 = vmatpush1.bf16.msra.mxu0 %v86
  %104 = vmatprep.subr.bf16.mxu0 0
  %105 = vmatpush1.bf16.msra.mxu0 %v87
  %106 = vmatprep.subr.bf16.mxu0 0
  %107 = vmatpush1.bf16.msra.mxu0 %v88
  %108 = vmatprep.subr.bf16.mxu0 0
  %109 = vmatpush1.bf16.msra.mxu0 %v89
  %110 = vmatprep.subr.bf16.mxu0 0
  %111 = vmatpush1.bf16.msra.mxu0 %v90
  %112 = vmatprep.subr.bf16.mxu0 0
  %113 = vmatpush1.bf16.msra.mxu0 %v91
  %114 = vmatprep.subr.bf16.mxu0 0
  %115 = vmatpush1.bf16.msra.mxu0 %v92
  %116 = vmatprep.subr.bf16.mxu0 0
  %117 = vmatpush1.bf16.msra.mxu0 %v93
  %118 = vmatprep.subr.bf16.mxu0 0
  %119 = vmatpush1.bf16.msra.mxu0 0
  %120 = vmatprep.subr.bf16.mxu0 0
  %121 = vmatpush1.bf16.msra.mxu0 0
  %122 = vmatprep.subr.bf16.mxu0 0
  %123 = vmatpush1.bf16.msra.mxu0 0
  %124 = vmatprep.subr.bf16.mxu0 0
  %125 = vmatpush1.bf16.msra.mxu0 0
  %126 = vmatprep.subr.bf16.mxu0 0
  %127 = vmatpush1.bf16.msra.mxu0 0
  %128 = vmatprep.subr.bf16.mxu0 0
  %129 = vmatpush1.bf16.msra.mxu0 0
  %130 = vmatprep.subr.bf16.mxu0 0
  %131 = vmatpush1.bf16.msra.mxu0 0
  %132 = vmatprep.subr.bf16.mxu0 0
  %133 = vmatpush1.bf16.msra.mxu0 0
  %134 = vmatprep.mubr.bf16.mxu0 0
  %135 = vmatmul.mubr.bf16.gmra.mrb[0].mxu0 %v50
  %v136 = vpop.f32.mrb[0].mxu0
  %v137 = vadd.f32 %v40, %v136
  %v138 = vpop.f32.mrb[0].mxu0
  %v139 = vpop.f32.mrb[0].mxu0
  %v140 = vadd.f32 %v40, %v139
  %v141 = vpop.f32.mrb[0].mxu0
  %142 = vmatprep.mubr.bf16.mxu0 0
  %143 = vmatmul.mubr.bf16.gmra.mrb[0].mxu0 %v51
  %v144 = vpop.f32.mrb[0].mxu0
  %v145 = vadd.f32 %v40, %v144
  %v146 = vpop.f32.mrb[0].mxu0
  %v147 = vpop.f32.mrb[0].mxu0
  %v148 = vadd.f32 %v40, %v147
  %v149 = vpop.f32.mrb[0].mxu0
  %150 = vdwg.mxu0
  %v151 = vpack.c.bf16 %v140, %v137
  %v152 = vpack.c.bf16 %v148, %v145
  %v155 = vunpack.c.l.b16 %v151
  %v156 = vunpack.c.h.b16 %v151
  %v157 = vunpack.c.l.b16 %v152
  %v158 = vunpack.c.h.b16 %v152
  %v159 = vpack.c.b16 %v155, %v155
  %v160 = vpack.c.b16 %v156, %v156
  %v161 = vpack.c.b16 %v157, %v157
  %v162 = vpack.c.b16 %v158, %v158
  %167 = vst [vmem:[%s3] sm:$0xf] %v159
  %168 = vst [vmem:[%s3 + $0x4] sm:$0xf] %v160
  %169 = vst [vmem:[%s3 + $0x8] sm:$0xf] %v161
  %170 = vst [vmem:[%s3 + $0xc] sm:$0xf] %v162
  // Predicated region
  $region14: #{_lambda_.19} parent=0 // pred_check
    _
  $region15: #{_lambda_.19} parent=0 // pred_check_branch
    %172 = sbr.rel (0) target = $region17
  $region16: #{_lambda_.19} parent=0 // pred_region
    _
  $region17: #{_lambda_.19} parent=0 // pred_fallthru
    _
  // Predicated region
  $region18: #{_lambda_.19} parent=0 // pred_check
    _
  $region19: #{_lambda_.19} parent=0 // pred_check_branch
    %174 = sbr.rel (0) target = $region21
  $region20: #{_lambda_.19} parent=0 // pred_region
    _
  $region21: #{_lambda_.19} parent=0 // pred_fallthru
    _

// kernel: _lambda_.20
$region0: #{_lambda_.20}
  #allocation0 [shape = 'u32[]', space=smem, size = 0x4, offset = 0x4, fixed_abs, tag = 'smem constant byte address 0x4 - core index']
  #allocation1 [shape = 'u32[144,128]{1,0:T(1,128)}', space=vmem, size = 0x12000, scoped, tag = 'internal scratch']
  %s0 = inlined_call_operand.vmem [shape: bf16[128,128], index: 0, kind: input, shape index: {}]
  %s1 = inlined_call_operand.vmem [shape: bf16[128,128], index: 1, kind: input, shape index: {}]
  %s2 = inlined_call_operand.vmem [shape: f32[1,128], index: 2, kind: input, shape index: {}]
  %s3 = inlined_call_operand.vmem [shape: bf16[128,128], index: 3, kind: output, shape index: {}]
  %s4 = sld [smem:[#allocation0]]
  $region22: #{_lambda_.20} parent=0
    _
  %s6 = ssub.s32 1, %s4
  %s7 = scalar_select 0, %s6, %s4
  // Predicated region
  $region2: #{_lambda_.20} parent=0 // pred_check
    _
  $region3: #{_lambda_.20} parent=0 // pred_check_branch
    %9 = sbr.rel (0) target = $region5
  $region4: #{_lambda_.20} parent=0 // pred_region
    _
  $region5: #{_lambda_.20} parent=0 // pred_fallthru
    _
  // Predicated region
  $region6: #{_lambda_.20} parent=0 // pred_check
    _
  $region7: #{_lambda_.20} parent=0 // pred_check_branch
    %11 = sbr.rel (0) target = $region9
  $region8: #{_lambda_.20} parent=0 // pred_region
    _
  $region9: #{_lambda_.20} parent=0 // pred_fallthru
    _
  // Predicated region
  $region10: #{_lambda_.20} parent=0 // pred_check
    _
  $region11: #{_lambda_.20} parent=0 // pred_check_branch
    %13 = sbr.rel (0) target = $region13
  $region12: #{_lambda_.20} parent=0 // pred_region
    _
  $region13: #{_lambda_.20} parent=0 // pred_fallthru
    _
  %v15 = vld [vmem:[%s0] sm:$0xf]
  %v16 = vld [vmem:[%s0 + $0x4] sm:$0xf]
  %v17 = vld [vmem:[%s0 + $0x8] sm:$0xf]
  %v18 = vld [vmem:[%s0 + $0xc] sm:$0xf]
  %v19 = vld [vmem:[%s0 + $0x10] sm:$0xf]
  %v20 = vld [vmem:[%s0 + $0x14] sm:$0xf]
  %v21 = vld [vmem:[%s0 + $0x18] sm:$0xf]
  %v22 = vld [vmem:[%s0 + $0x1c] sm:$0xf]
  %v23 = vld [vmem:[%s0 + $0x20] sm:$0xf]
  %v24 = vld [vmem:[%s0 + $0x24] sm:$0xf]
  %v25 = vld [vmem:[%s0 + $0x28] sm:$0xf]
  %v26 = vld [vmem:[%s0 + $0x2c] sm:$0xf]
  %v27 = vld [vmem:[%s0 + $0x30] sm:$0xf]
  %v28 = vld [vmem:[%s0 + $0x34] sm:$0xf]
  %v29 = vld [vmem:[%s0 + $0x38] sm:$0xf]
  %v30 = vld [vmem:[%s0 + $0x3c] sm:$0xf]
  %v31 = vld [vmem:[%s1] sm:$0xf]
  %v32 = vld [vmem:[%s1 + $0x4] sm:$0xf]
  %v33 = vld [vmem:[%s1 + $0x8] sm:$0xf]
  %v34 = vld [vmem:[%s1 + $0xc] sm:$0xf]
  %v35 = vld [vmem:[%s1 + $0x10] sm:$0xf]
  %v36 = vld [vmem:[%s1 + $0x14] sm:$0xf]
  %v37 = vld [vmem:[%s1 + $0x18] sm:$0xf]
  %v38 = vld [vmem:[%s1 + $0x1c] sm:$0xf]
  %v39 = vld [vmem:[%s1 + $0x20] sm:$0xf]
  %v40 = vld [vmem:[%s1 + $0x24] sm:$0xf]
  %v41 = vld [vmem:[%s1 + $0x28] sm:$0xf]
  %v42 = vld [vmem:[%s1 + $0x2c] sm:$0xf]
  %v43 = vld [vmem:[%s1 + $0x30] sm:$0xf]
  %v44 = vld [vmem:[%s1 + $0x34] sm:$0xf]
  %v45 = vld [vmem:[%s1 + $0x38] sm:$0xf]
  %v46 = vld [vmem:[%s1 + $0x3c] sm:$0xf]
  %v47 = vld [vmem:[%s2] sm:$0x1]
  %v49 = vlaneseq
  %v50 = vshrl.u32 %v49, 7
  %v51 = vsub.s32 0, %v50
  %v52 = vrot.slane %v47, %v51
  %v70 = vunpack.c.l.b16 %v15
  %v71 = vunpack.c.l.b16 %v16
  %v72 = vunpack.c.l.b16 %v17
  %v73 = vunpack.c.l.b16 %v18
  %v74 = vunpack.c.l.b16 %v19
  %v75 = vunpack.c.l.b16 %v20
  %v76 = vunpack.c.l.b16 %v21
  %v77 = vunpack.c.l.b16 %v22
  %v78 = vunpack.c.l.b16 %v23
  %v79 = vunpack.c.l.b16 %v24
  %v80 = vunpack.c.l.b16 %v25
  %v81 = vunpack.c.l.b16 %v26
  %v82 = vunpack.c.l.b16 %v27
  %v83 = vunpack.c.l.b16 %v28
  %v84 = vunpack.c.l.b16 %v29
  %v85 = vunpack.c.l.b16 %v30
  %v86 = vpack.c.b16 %v71, %v70
  %v87 = vpack.c.b16 %v73, %v72
  %v88 = vpack.c.b16 %v75, %v74
  %v89 = vpack.c.b16 %v77, %v76
  %v90 = vpack.c.b16 %v79, %v78
  %v91 = vpack.c.b16 %v81, %v80
  %v92 = vpack.c.b16 %v83, %v82
  %v93 = vpack.c.b16 %v85, %v84
  %v118 = vunpack.c.l.b16 %v31
  %v119 = vunpack.c.l.b16 %v32
  %v120 = vunpack.c.l.b16 %v33
  %v121 = vunpack.c.l.b16 %v34
  %v122 = vunpack.c.l.b16 %v35
  %v123 = vunpack.c.l.b16 %v36
  %v124 = vunpack.c.l.b16 %v37
  %v125 = vunpack.c.l.b16 %v38
  %v126 = vunpack.c.l.b16 %v39
  %v127 = vunpack.c.l.b16 %v40
  %v128 = vunpack.c.l.b16 %v41
  %v129 = vunpack.c.l.b16 %v42
  %v130 = vunpack.c.l.b16 %v43
  %v131 = vunpack.c.l.b16 %v44
  %v132 = vunpack.c.l.b16 %v45
  %v133 = vunpack.c.l.b16 %v46
  %v134 = vpack.c.b16 %v119, %v118
  %v135 = vpack.c.b16 %v121, %v120
  %v136 = vpack.c.b16 %v123, %v122
  %v137 = vpack.c.b16 %v125, %v124
  %v138 = vpack.c.b16 %v127, %v126
  %v139 = vpack.c.b16 %v129, %v128
  %v140 = vpack.c.b16 %v131, %v130
  %v141 = vpack.c.b16 %v133, %v132
  %150 = vmatprep.subr.bf16.mxu0 0
  %151 = vmatpush1.bf16.msra.mxu0 %v134
  %152 = vmatprep.subr.bf16.mxu0 0
  %153 = vmatpush1.bf16.msra.mxu0 %v135
  %154 = vmatprep.subr.bf16.mxu0 0
  %155 = vmatpush1.bf16.msra.mxu0 %v136
  %156 = vmatprep.subr.bf16.mxu0 0
  %157 = vmatpush1.bf16.msra.mxu0 %v137
  %158 = vmatprep.subr.bf16.mxu0 0
  %159 = vmatpush1.bf16.msra.mxu0 %v138
  %160 = vmatprep.subr.bf16.mxu0 0
  %161 = vmatpush1.bf16.msra.mxu0 %v139
  %162 = vmatprep.subr.bf16.mxu0 0
  %163 = vmatpush1.bf16.msra.mxu0 %v140
  %164 = vmatprep.subr.bf16.mxu0 0
  %165 = vmatpush1.bf16.msra.mxu0 %v141
  %166 = vmatprep.subr.bf16.mxu0 0
  %167 = vmatpush1.bf16.msra.mxu0 0
  %168 = vmatprep.subr.bf16.mxu0 0
  %169 = vmatpush1.bf16.msra.mxu0 0
  %170 = vmatprep.subr.bf16.mxu0 0
  %171 = vmatpush1.bf16.msra.mxu0 0
  %172 = vmatprep.subr.bf16.mxu0 0
  %173 = vmatpush1.bf16.msra.mxu0 0
  %174 = vmatprep.subr.bf16.mxu0 0
  %175 = vmatpush1.bf16.msra.mxu0 0
  %176 = vmatprep.subr.bf16.mxu0 0
  %177 = vmatpush1.bf16.msra.mxu0 0
  %178 = vmatprep.subr.bf16.mxu0 0
  %179 = vmatpush1.bf16.msra.mxu0 0
  %180 = vmatprep.subr.bf16.mxu0 0
  %181 = vmatpush1.bf16.msra.mxu0 0
  %182 = vmatprep.mubr.bf16.mxu0 0
  %183 = vmatmul.mubr.bf16.gmra.mrb[0].mxu0 %v86
  %v184 = vpop.f32.mrb[0].mxu0
  %v185 = vadd.f32 %v52, %v184
  %v186 = vpop.f32.mrb[0].mxu0
  %v187 = vpop.f32.mrb[0].mxu0
  %v188 = vadd.f32 %v52, %v187
  %v189 = vpop.f32.mrb[0].mxu0
  %190 = vmatprep.mubr.bf16.mxu0 0
  %191 = vmatmul.mubr.bf16.gmra.mrb[0].mxu0 %v87
  %v192 = vpop.f32.mrb[0].mxu0
  %v193 = vadd.f32 %v52, %v192
  %v194 = vpop.f32.mrb[0].mxu0
  %v195 = vpop.f32.mrb[0].mxu0
  %v196 = vadd.f32 %v52, %v195
  %v197 = vpop.f32.mrb[0].mxu0
  %198 = vmatprep.mubr.bf16.mxu0 0
  %199 = vmatmul.mubr.bf16.gmra.mrb[0].mxu0 %v88
  %v200 = vpop.f32.mrb[0].mxu0
  %v201 = vadd.f32 %v52, %v200
  %v202 = vpop.f32.mrb[0].mxu0
  %v203 = vpop.f32.mrb[0].mxu0
  %v204 = vadd.f32 %v52, %v203
  %v205 = vpop.f32.mrb[0].mxu0
  %206 = vmatprep.mubr.bf16.mxu0 0
  %207 = vmatmul.mubr.bf16.gmra.mrb[0].mxu0 %v89
  %v208 = vpop.f32.mrb[0].mxu0
  %v209 = vadd.f32 %v52, %v208
  %v210 = vpop.f32.mrb[0].mxu0
  %v211 = vpop.f32.mrb[0].mxu0
  %v212 = vadd.f32 %v52, %v211
  %v213 = vpop.f32.mrb[0].mxu0
  %214 = vmatprep.mubr.bf16.mxu0 0
  %215 = vmatmul.mubr.bf16.gmra.mrb[0].mxu0 %v90
  %v216 = vpop.f32.mrb[0].mxu0
  %v217 = vadd.f32 %v52, %v216
  %v218 = vpop.f32.mrb[0].mxu0
  %v219 = vpop.f32.mrb[0].mxu0
  %v220 = vadd.f32 %v52, %v219
  %v221 = vpop.f32.mrb[0].mxu0
  %222 = vmatprep.mubr.bf16.mxu0 0
  %223 = vmatmul.mubr.bf16.gmra.mrb[0].mxu0 %v91
  %v224 = vpop.f32.mrb[0].mxu0
  %v225 = vadd.f32 %v52, %v224
  %v226 = vpop.f32.mrb[0].mxu0
  %v227 = vpop.f32.mrb[0].mxu0
  %v228 = vadd.f32 %v52, %v227
  %v229 = vpop.f32.mrb[0].mxu0
  %230 = vmatprep.mubr.bf16.mxu0 0
  %231 = vmatmul.mubr.bf16.gmra.mrb[0].mxu0 %v92
  %v232 = vpop.f32.mrb[0].mxu0
  %v233 = vadd.f32 %v52, %v232
  %v234 = vpop.f32.mrb[0].mxu0
  %v235 = vpop.f32.mrb[0].mxu0
  %v236 = vadd.f32 %v52, %v235
  %v237 = vpop.f32.mrb[0].mxu0
  %238 = vmatprep.mubr.bf16.mxu0 0
  %239 = vmatmul.mubr.bf16.gmra.mrb[0].mxu0 %v93
  %v240 = vpop.f32.mrb[0].mxu0
  %v241 = vadd.f32 %v52, %v240
  %v242 = vpop.f32.mrb[0].mxu0
  %v243 = vpop.f32.mrb[0].mxu0
  %v244 = vadd.f32 %v52, %v243
  %v245 = vpop.f32.mrb[0].mxu0
  %246 = vdwg.mxu0
  %v247 = vpack.c.bf16 %v188, %v185
  %v248 = vpack.c.bf16 %v196, %v193
  %v249 = vpack.c.bf16 %v204, %v201
  %v250 = vpack.c.bf16 %v212, %v209
  %v251 = vpack.c.bf16 %v220, %v217
  %v252 = vpack.c.bf16 %v228, %v225
  %v253 = vpack.c.bf16 %v236, %v233
  %v254 = vpack.c.bf16 %v244, %v241
  %v263 = vunpack.c.l.b16 %v247
  %v264 = vunpack.c.h.b16 %v247
  %v265 = vunpack.c.l.b16 %v248
  %v266 = vunpack.c.h.b16 %v248
  %v267 = vunpack.c.l.b16 %v249
  %v268 = vunpack.c.h.b16 %v249
  %v269 = vunpack.c.l.b16 %v250
  %v270 = vunpack.c.h.b16 %v250
  %v271 = vunpack.c.l.b16 %v251
  %v272 = vunpack.c.h.b16 %v251
  %v273 = vunpack.c.l.b16 %v252
  %v274 = vunpack.c.h.b16 %v252
  %v275 = vunpack.c.l.b16 %v253
  %v276 = vunpack.c.h.b16 %v253
  %v277 = vunpack.c.l.b16 %v254
  %v278 = vunpack.c.h.b16 %v254
  %v279 = vpack.c.b16 %v263, %v263
  %v280 = vpack.c.b16 %v264, %v264
  %v281 = vpack.c.b16 %v265, %v265
  %v282 = vpack.c.b16 %v266, %v266
  %v283 = vpack.c.b16 %v267, %v267
  %v284 = vpack.c.b16 %v268, %v268
  %v285 = vpack.c.b16 %v269, %v269
  %v286 = vpack.c.b16 %v270, %v270
  %v287 = vpack.c.b16 %v271, %v271
  %v288 = vpack.c.b16 %v272, %v272
  %v289 = vpack.c.b16 %v273, %v273
  %v290 = vpack.c.b16 %v274, %v274
  %v291 = vpack.c.b16 %v275, %v275
  %v292 = vpack.c.b16 %v276, %v276
  %v293 = vpack.c.b16 %v277, %v277
  %v294 = vpack.c.b16 %v278, %v278
  %311 = vst [vmem:[%s3] sm:$0xf] %v279
  %312 = vst [vmem:[%s3 + $0x4] sm:$0xf] %v280
  %313 = vst [vmem:[%s3 + $0x8] sm:$0xf] %v281
  %314 = vst [vmem:[%s3 + $0xc] sm:$0xf] %v282
  %315 = vst [vmem:[%s3 + $0x10] sm:$0xf] %v283
  %316 = vst [vmem:[%s3 + $0x14] sm:$0xf] %v284
  %317 = vst [vmem:[%s3 + $0x18] sm:$0xf] %v285
  %318 = vst [vmem:[%s3 + $0x1c] sm:$0xf] %v286
  %319 = vst [vmem:[%s3 + $0x20] sm:$0xf] %v287
  %320 = vst [vmem:[%s3 + $0x24] sm:$0xf] %v288
  %321 = vst [vmem:[%s3 + $0x28] sm:$0xf] %v289
  %322 = vst [vmem:[%s3 + $0x2c] sm:$0xf] %v290
  %323 = vst [vmem:[%s3 + $0x30] sm:$0xf] %v291
  %324 = vst [vmem:[%s3 + $0x34] sm:$0xf] %v292
  %325 = vst [vmem:[%s3 + $0x38] sm:$0xf] %v293
  %326 = vst [vmem:[%s3 + $0x3c] sm:$0xf] %v294
  // Predicated region
  $region14: #{_lambda_.20} parent=0 // pred_check
    _
  $region15: #{_lambda_.20} parent=0 // pred_check_branch
    %328 = sbr.rel (0) target = $region17
  $region16: #{_lambda_.20} parent=0 // pred_region
    _
  $region17: #{_lambda_.20} parent=0 // pred_fallthru
    _
  // Predicated region
  $region18: #{_lambda_.20} parent=0 // pred_check
    _
  $region19: #{_lambda_.20} parent=0 // pred_check_branch
    %330 = sbr.rel (0) target = $region21
  $region20: #{_lambda_.20} parent=0 // pred_region
    _
  $region21: #{_lambda_.20} parent=0 // pred_fallthru
    _

// kernel: _lambda_.17
$region0: #{_lambda_.17}
  #allocation0 [shape = 'u32[]', space=smem, size = 0x4, offset = 0x4, fixed_abs, tag = 'smem constant byte address 0x4 - core index']
  #allocation1 [shape = 'u32[144,128]{1,0:T(1,128)}', space=vmem, size = 0x12000, scoped, tag = 'internal scratch']
  %s0 = inlined_call_operand.vmem [shape: bf16[16,1152], index: 0, kind: input, shape index: {}]
  %s1 = inlined_call_operand.vmem [shape: bf16[1152,128], index: 1, kind: input, shape index: {}]
  %s2 = inlined_call_operand.vmem [shape: f32[1,128], index: 2, kind: input, shape index: {}]
  %s3 = inlined_call_operand.vmem [shape: bf16[16,128], index: 3, kind: output, shape index: {}]
  %s4 = sld [smem:[#allocation0]]
  $region22: #{_lambda_.17} parent=0
    _
  %s6 = ssub.s32 1, %s4
  %s7 = scalar_select 0, %s6, %s4
  // Predicated region
  $region2: #{_lambda_.17} parent=0 // pred_check
    _
  $region3: #{_lambda_.17} parent=0 // pred_check_branch
    %9 = sbr.rel (0) target = $region5
  $region4: #{_lambda_.17} parent=0 // pred_region
    _
  $region5: #{_lambda_.17} parent=0 // pred_fallthru
    _
  // Predicated region
  $region6: #{_lambda_.17} parent=0 // pred_check
    _
  $region7: #{_lambda_.17} parent=0 // pred_check_branch
    %11 = sbr.rel (0) target = $region9
  $region8: #{_lambda_.17} parent=0 // pred_region
    _
  $region9: #{_lambda_.17} parent=0 // pred_fallthru
    _
  // Predicated region
  $region10: #{_lambda_.17} parent=0 // pred_check
    _
  $region11: #{_lambda_.17} parent=0 // pred_check_branch
    %13 = sbr.rel (0) target = $region13
  $region12: #{_lambda_.17} parent=0 // pred_region
    _
  $region13: #{_lambda_.17} parent=0 // pred_fallthru
    _
  %v15 = vld [vmem:[%s0] sm:$0xff]
  %v16 = vld [vmem:[%s0 + $0x8] sm:$0xff]
  %v17 = vld [vmem:[%s0 + $0x10] sm:$0xff]
  %v18 = vld [vmem:[%s0 + $0x18] sm:$0xff]
  %v19 = vld [vmem:[%s0 + $0x20] sm:$0xf]
  %v20 = vld [vmem:[%s0 + $0x24] sm:$0xff]
  %v21 = vld [vmem:[%s0 + $0x2c] sm:$0xff]
  %v22 = vld [vmem:[%s0 + $0x34] sm:$0xff]
  %v23 = vld [vmem:[%s0 + $0x3c] sm:$0xff]
  %v24 = vld [vmem:[%s0 + $0x44] sm:$0xf]
  %v25 = vld [vmem:[%s1] sm:$0xf]
  %v26 = vld [vmem:[%s1 + $0x4] sm:$0xf]
  %v27 = vld [vmem:[%s1 + $0x8] sm:$0xf]
  %v28 = vld [vmem:[%s1 + $0xc] sm:$0xf]
  %v29 = vld [vmem:[%s1 + $0x10] sm:$0xf]
  %v30 = vld [vmem:[%s1 + $0x14] sm:$0xf]
  %v31 = vld [vmem:[%s1 + $0x18] sm:$0xf]
  %v32 = vld [vmem:[%s1 + $0x1c] sm:$0xf]
  %v33 = vld [vmem:[%s1 + $0x20] sm:$0xf]
  %v34 = vld [vmem:[%s1 + $0x24] sm:$0xf]
  %v35 = vld [vmem:[%s1 + $0x28] sm:$0xf]
  %v36 = vld [vmem:[%s1 + $0x2c] sm:$0xf]
  %v37 = vld [vmem:[%s1 + $0x30] sm:$0xf]
  %v38 = vld [vmem:[%s1 + $0x34] sm:$0xf]
  %v39 = vld [vmem:[%s1 + $0x38] sm:$0xf]
  %v40 = vld [vmem:[%s1 + $0x3c] sm:$0xf]
  %v41 = vld [vmem:[%s1 + $0x40] sm:$0xf]
  %v42 = vld [vmem:[%s1 + $0x44] sm:$0xf]
  %v43 = vld [vmem:[%s1 + $0x48] sm:$0xf]
  %v44 = vld [vmem:[%s1 + $0x4c] sm:$0xf]
  %v45 = vld [vmem:[%s1 + $0x50] sm:$0xf]
  %v46 = vld [vmem:[%s1 + $0x54] sm:$0xf]
  %v47 = vld [vmem:[%s1 + $0x58] sm:$0xf]
  %v48 = vld [vmem:[%s1 + $0x5c] sm:$0xf]
  %v49 = vld [vmem:[%s1 + $0x60] sm:$0xf]
  %v50 = vld [vmem:[%s1 + $0x64] sm:$0xf]
  %v51 = vld [vmem:[%s1 + $0x68] sm:$0xf]
  %v52 = vld [vmem:[%s1 + $0x6c] sm:$0xf]
  %v53 = vld [vmem:[%s1 + $0x70] sm:$0xf]
  %v54 = vld [vmem:[%s1 + $0x74] sm:$0xf]
  %v55 = vld [vmem:[%s1 + $0x78] sm:$0xf]
  %v56 = vld [vmem:[%s1 + $0x7c] sm:$0xf]
  %v57 = vld [vmem:[%s1 + $0x80] sm:$0xf]
  %v58 = vld [vmem:[%s1 + $0x84] sm:$0xf]
  %v59 = vld [vmem:[%s1 + $0x88] sm:$0xf]
  %v60 = vld [vmem:[%s1 + $0x8c] sm:$0xf]
  %v61 = vld [vmem:[%s1 + $0x90] sm:$0xf]
  %v62 = vld [vmem:[%s1 + $0x94] sm:$0xf]
  %v63 = vld [vmem:[%s1 + $0x98] sm:$0xf]
  %v64 = vld [vmem:[%s1 + $0x9c] sm:$0xf]
  %v65 = vld [vmem:[%s1 + $0xa0] sm:$0xf]
  %v66 = vld [vmem:[%s1 + $0xa4] sm:$0xf]
  %v67 = vld [vmem:[%s1 + $0xa8] sm:$0xf]
  %v68 = vld [vmem:[%s1 + $0xac] sm:$0xf]
  %v69 = vld [vmem:[%s1 + $0xb0] sm:$0xf]
  %v70 = vld [vmem:[%s1 + $0xb4] sm:$0xf]
  %v71 = vld [vmem:[%s1 + $0xb8] sm:$0xf]
  %v72 = vld [vmem:[%s1 + $0xbc] sm:$0xf]
  %v73 = vld [vmem:[%s1 + $0xc0] sm:$0xf]
  %v74 = vld [vmem:[%s1 + $0xc4] sm:$0xf]
  %v75 = vld [vmem:[%s1 + $0xc8] sm:$0xf]
  %v76 = vld [vmem:[%s1 + $0xcc] sm:$0xf]
  %v77 = vld [vmem:[%s1 + $0xd0] sm:$0xf]
  %v78 = vld [vmem:[%s1 + $0xd4] sm:$0xf]
  %v79 = vld [vmem:[%s1 + $0xd8] sm:$0xf]
  %v80 = vld [vmem:[%s1 + $0xdc] sm:$0xf]
  %v81 = vld [vmem:[%s1 + $0xe0] sm:$0xf]
  %v82 = vld [vmem:[%s1 + $0xe4] sm:$0xf]
  %v83 = vld [vmem:[%s1 + $0xe8] sm:$0xf]
  %v84 = vld [vmem:[%s1 + $0xec] sm:$0xf]
  %v85 = vld [vmem:[%s1 + $0xf0] sm:$0xf]
  %v86 = vld [vmem:[%s1 + $0xf4] sm:$0xf]
  %v87 = vld [vmem:[%s1 + $0xf8] sm:$0xf]
  %v88 = vld [vmem:[%s1 + $0xfc] sm:$0xf]
  %v89 = vld [vmem:[%s1 + $0x100] sm:$0xf]
  %v90 = vld [vmem:[%s1 + $0x104] sm:$0xf]
  %v91 = vld [vmem:[%s1 + $0x108] sm:$0xf]
  %v92 = vld [vmem:[%s1 + $0x10c] sm:$0xf]
  %v93 = vld [vmem:[%s1 + $0x110] sm:$0xf]
  %v94 = vld [vmem:[%s1 + $0x114] sm:$0xf]
  %v95 = vld [vmem:[%s1 + $0x118] sm:$0xf]
  %v96 = vld [vmem:[%s1 + $0x11c] sm:$0xf]
  %v97 = vld [vmem:[%s1 + $0x120] sm:$0xf]
  %v98 = vld [vmem:[%s1 + $0x124] sm:$0xf]
  %v99 = vld [vmem:[%s1 + $0x128] sm:$0xf]
  %v100 = vld [vmem:[%s1 + $0x12c] sm:$0xf]
  %v101 = vld [vmem:[%s1 + $0x130] sm:$0xf]
  %v102 = vld [vmem:[%s1 + $0x134] sm:$0xf]
  %v103 = vld [vmem:[%s1 + $0x138] sm:$0xf]
  %v104 = vld [vmem:[%s1 + $0x13c] sm:$0xf]
  %v105 = vld [vmem:[%s1 + $0x140] sm:$0xf]
  %v106 = vld [vmem:[%s1 + $0x144] sm:$0xf]
  %v107 = vld [vmem:[%s1 + $0x148] sm:$0xf]
  %v108 = vld [vmem:[%s1 + $0x14c] sm:$0xf]
  %v109 = vld [vmem:[%s1 + $0x150] sm:$0xf]
  %v110 = vld [vmem:[%s1 + $0x154] sm:$0xf]
  %v111 = vld [vmem:[%s1 + $0x158] sm:$0xf]
  %v112 = vld [vmem:[%s1 + $0x15c] sm:$0xf]
  %v113 = vld [vmem:[%s1 + $0x160] sm:$0xf]
  %v114 = vld [vmem:[%s1 + $0x164] sm:$0xf]
  %v115 = vld [vmem:[%s1 + $0x168] sm:$0xf]
  %v116 = vld [vmem:[%s1 + $0x16c] sm:$0xf]
  %v117 = vld [vmem:[%s1 + $0x170] sm:$0xf]
  %v118 = vld [vmem:[%s1 + $0x174] sm:$0xf]
  %v119 = vld [vmem:[%s1 + $0x178] sm:$0xf]
  %v120 = vld [vmem:[%s1 + $0x17c] sm:$0xf]
  %v121 = vld [vmem:[%s1 + $0x180] sm:$0xf]
  %v122 = vld [vmem:[%s1 + $0x184] sm:$0xf]
  %v123 = vld [vmem:[%s1 + $0x188] sm:$0xf]
  %v124 = vld [vmem:[%s1 + $0x18c] sm:$0xf]
  %v125 = vld [vmem:[%s1 + $0x190] sm:$0xf]
  %v126 = vld [vmem:[%s1 + $0x194] sm:$0xf]
  %v127 = vld [vmem:[%s1 + $0x198] sm:$0xf]
  %v128 = vld [vmem:[%s1 + $0x19c] sm:$0xf]
  %v129 = vld [vmem:[%s1 + $0x1a0] sm:$0xf]
  %v130 = vld [vmem:[%s1 + $0x1a4] sm:$0xf]
  %v131 = vld [vmem:[%s1 + $0x1a8] sm:$0xf]
  %v132 = vld [vmem:[%s1 + $0x1ac] sm:$0xf]
  %v133 = vld [vmem:[%s1 + $0x1b0] sm:$0xf]
  %v134 = vld [vmem:[%s1 + $0x1b4] sm:$0xf]
  %v135 = vld [vmem:[%s1 + $0x1b8] sm:$0xf]
  %v136 = vld [vmem:[%s1 + $0x1bc] sm:$0xf]
  %v137 = vld [vmem:[%s1 + $0x1c0] sm:$0xf]
  %v138 = vld [vmem:[%s1 + $0x1c4] sm:$0xf]
  %v139 = vld [vmem:[%s1 + $0x1c8] sm:$0xf]
  %v140 = vld [vmem:[%s1 + $0x1cc] sm:$0xf]
  %v141 = vld [vmem:[%s1 + $0x1d0] sm:$0xf]
  %v142 = vld [vmem:[%s1 + $0x1d4] sm:$0xf]
  %v143 = vld [vmem:[%s1 + $0x1d8] sm:$0xf]
  %v144 = vld [vmem:[%s1 + $0x1dc] sm:$0xf]
  %v145 = vld [vmem:[%s1 + $0x1e0] sm:$0xf]
  %v146 = vld [vmem:[%s1 + $0x1e4] sm:$0xf]
  %v147 = vld [vmem:[%s1 + $0x1e8] sm:$0xf]
  %v148 = vld [vmem:[%s1 + $0x1ec] sm:$0xf]
  %v149 = vld [vmem:[%s1 + $0x1f0] sm:$0xf]
  %v150 = vld [vmem:[%s1 + $0x1f4] sm:$0xf]
  %v151 = vld [vmem:[%s1 + $0x1f8] sm:$0xf]
  %v152 = vld [vmem:[%s1 + $0x1fc] sm:$0xf]
  %v153 = vld [vmem:[%s1 + $0x200] sm:$0xf]
  %v154 = vld [vmem:[%s1 + $0x204] sm:$0xf]
  %v155 = vld [vmem:[%s1 + $0x208] sm:$0xf]
  %v156 = vld [vmem:[%s1 + $0x20c] sm:$0xf]
  %v157 = vld [vmem:[%s1 + $0x210] sm:$0xf]
  %v158 = vld [vmem:[%s1 + $0x214] sm:$0xf]
  %v159 = vld [vmem:[%s1 + $0x218] sm:$0xf]
  %v160 = vld [vmem:[%s1 + $0x21c] sm:$0xf]
  %v161 = vld [vmem:[%s1 + $0x220] sm:$0xf]
  %v162 = vld [vmem:[%s1 + $0x224] sm:$0xf]
  %v163 = vld [vmem:[%s1 + $0x228] sm:$0xf]
  %v164 = vld [vmem:[%s1 + $0x22c] sm:$0xf]
  %v165 = vld [vmem:[%s1 + $0x230] sm:$0xf]
  %v166 = vld [vmem:[%s1 + $0x234] sm:$0xf]
  %v167 = vld [vmem:[%s1 + $0x238] sm:$0xf]
  %v168 = vld [vmem:[%s1 + $0x23c] sm:$0xf]
  %v169 = vld [vmem:[%s2] sm:$0x1]
  %v171 = vlaneseq
  %v172 = vshrl.u32 %v171, 7
  %v173 = vsub.s32 0, %v172
  %v174 = vrot.slane %v169, %v173
  %v186 = vunpack.c.l.b16 %v15
  %v187 = vunpack.c.h.b16 %v15
  %v188 = vunpack.c.l.b16 %v16
  %v189 = vunpack.c.h.b16 %v16
  %v190 = vunpack.c.l.b16 %v17
  %v191 = vunpack.c.h.b16 %v17
  %v192 = vunpack.c.l.b16 %v18
  %v193 = vunpack.c.h.b16 %v18
  %v194 = vunpack.c.l.b16 %v19
  %v195 = vunpack.c.l.b16 %v20
  %v196 = vunpack.c.h.b16 %v20
  %v197 = vunpack.c.l.b16 %v21
  %v198 = vunpack.c.h.b16 %v21
  %v199 = vunpack.c.l.b16 %v22
  %v200 = vunpack.c.h.b16 %v22
  %v201 = vunpack.c.l.b16 %v23
  %v202 = vunpack.c.h.b16 %v23
  %v203 = vunpack.c.l.b16 %v24
  %v204 = vpack.c.b16 %v195, %v186
  %v205 = vpack.c.b16 %v196, %v187
  %v206 = vpack.c.b16 %v197, %v188
  %v207 = vpack.c.b16 %v198, %v189
  %v208 = vpack.c.b16 %v199, %v190
  %v209 = vpack.c.b16 %v200, %v191
  %v210 = vpack.c.b16 %v201, %v192
  %v211 = vpack.c.b16 %v202, %v193
  %v212 = vpack.c.b16 %v203, %v194
  %v366 = vunpack.c.l.b16 %v25
  %v367 = vunpack.c.l.b16 %v26
  %v368 = vunpack.c.l.b16 %v27
  %v369 = vunpack.c.l.b16 %v28
  %v370 = vunpack.c.l.b16 %v29
  %v371 = vunpack.c.l.b16 %v30
  %v372 = vunpack.c.l.b16 %v31
  %v373 = vunpack.c.l.b16 %v32
  %v374 = vunpack.c.l.b16 %v33
  %v375 = vunpack.c.l.b16 %v34
  %v376 = vunpack.c.l.b16 %v35
  %v377 = vunpack.c.l.b16 %v36
  %v378 = vunpack.c.l.b16 %v37
  %v379 = vunpack.c.l.b16 %v38
  %v380 = vunpack.c.l.b16 %v39
  %v381 = vunpack.c.l.b16 %v40
  %v382 = vunpack.c.l.b16 %v41
  %v383 = vunpack.c.l.b16 %v42
  %v384 = vunpack.c.l.b16 %v43
  %v385 = vunpack.c.l.b16 %v44
  %v386 = vunpack.c.l.b16 %v45
  %v387 = vunpack.c.l.b16 %v46
  %v388 = vunpack.c.l.b16 %v47
  %v389 = vunpack.c.l.b16 %v48
  %v390 = vunpack.c.l.b16 %v49
  %v391 = vunpack.c.l.b16 %v50
  %v392 = vunpack.c.l.b16 %v51
  %v393 = vunpack.c.l.b16 %v52
  %v394 = vunpack.c.l.b16 %v53
  %v395 = vunpack.c.l.b16 %v54
  %v396 = vunpack.c.l.b16 %v55
  %v397 = vunpack.c.l.b16 %v56
  %v398 = vunpack.c.l.b16 %v57
  %v399 = vunpack.c.l.b16 %v58
  %v400 = vunpack.c.l.b16 %v59
  %v401 = vunpack.c.l.b16 %v60
  %v402 = vunpack.c.l.b16 %v61
  %v403 = vunpack.c.l.b16 %v62
  %v404 = vunpack.c.l.b16 %v63
  %v405 = vunpack.c.l.b16 %v64
  %v406 = vunpack.c.l.b16 %v65
  %v407 = vunpack.c.l.b16 %v66
  %v408 = vunpack.c.l.b16 %v67
  %v409 = vunpack.c.l.b16 %v68
  %v410 = vunpack.c.l.b16 %v69
  %v411 = vunpack.c.l.b16 %v70
  %v412 = vunpack.c.l.b16 %v71
  %v413 = vunpack.c.l.b16 %v72
  %v414 = vunpack.c.l.b16 %v73
  %v415 = vunpack.c.l.b16 %v74
  %v416 = vunpack.c.l.b16 %v75
  %v417 = vunpack.c.l.b16 %v76
  %v418 = vunpack.c.l.b16 %v77
  %v419 = vunpack.c.l.b16 %v78
  %v420 = vunpack.c.l.b16 %v79
  %v421 = vunpack.c.l.b16 %v80
  %v422 = vunpack.c.l.b16 %v81
  %v423 = vunpack.c.l.b16 %v82
  %v424 = vunpack.c.l.b16 %v83
  %v425 = vunpack.c.l.b16 %v84
  %v426 = vunpack.c.l.b16 %v85
  %v427 = vunpack.c.l.b16 %v86
  %v428 = vunpack.c.l.b16 %v87
  %v429 = vunpack.c.l.b16 %v88
  %v430 = vunpack.c.l.b16 %v89
  %v431 = vunpack.c.l.b16 %v90
  %v432 = vunpack.c.l.b16 %v91
  %v433 = vunpack.c.l.b16 %v92
  %v434 = vunpack.c.l.b16 %v93
  %v435 = vunpack.c.l.b16 %v94
  %v436 = vunpack.c.l.b16 %v95
  %v437 = vunpack.c.l.b16 %v96
  %v438 = vunpack.c.l.b16 %v97
  %v439 = vunpack.c.l.b16 %v98
  %v440 = vunpack.c.l.b16 %v99
  %v441 = vunpack.c.l.b16 %v100
  %v442 = vunpack.c.l.b16 %v101
  %v443 = vunpack.c.l.b16 %v102
  %v444 = vunpack.c.l.b16 %v103
  %v445 = vunpack.c.l.b16 %v104
  %v446 = vunpack.c.l.b16 %v105
  %v447 = vunpack.c.l.b16 %v106
  %v448 = vunpack.c.l.b16 %v107
  %v449 = vunpack.c.l.b16 %v108
  %v450 = vunpack.c.l.b16 %v109
  %v451 = vunpack.c.l.b16 %v110
  %v452 = vunpack.c.l.b16 %v111
  %v453 = vunpack.c.l.b16 %v112
  %v454 = vunpack.c.l.b16 %v113
  %v455 = vunpack.c.l.b16 %v114
  %v456 = vunpack.c.l.b16 %v115
  %v457 = vunpack.c.l.b16 %v116
  %v458 = vunpack.c.l.b16 %v117
  %v459 = vunpack.c.l.b16 %v118
  %v460 = vunpack.c.l.b16 %v119
  %v461 = vunpack.c.l.b16 %v120
  %v462 = vunpack.c.l.b16 %v121
  %v463 = vunpack.c.l.b16 %v122
  %v464 = vunpack.c.l.b16 %v123
  %v465 = vunpack.c.l.b16 %v124
  %v466 = vunpack.c.l.b16 %v125
  %v467 = vunpack.c.l.b16 %v126
  %v468 = vunpack.c.l.b16 %v127
  %v469 = vunpack.c.l.b16 %v128
  %v470 = vunpack.c.l.b16 %v129
  %v471 = vunpack.c.l.b16 %v130
  %v472 = vunpack.c.l.b16 %v131
  %v473 = vunpack.c.l.b16 %v132
  %v474 = vunpack.c.l.b16 %v133
  %v475 = vunpack.c.l.b16 %v134
  %v476 = vunpack.c.l.b16 %v135
  %v477 = vunpack.c.l.b16 %v136
  %v478 = vunpack.c.l.b16 %v137
  %v479 = vunpack.c.l.b16 %v138
  %v480 = vunpack.c.l.b16 %v139
  %v481 = vunpack.c.l.b16 %v140
  %v482 = vunpack.c.l.b16 %v141
  %v483 = vunpack.c.l.b16 %v142
  %v484 = vunpack.c.l.b16 %v143
  %v485 = vunpack.c.l.b16 %v144
  %v486 = vunpack.c.l.b16 %v145
  %v487 = vunpack.c.l.b16 %v146
  %v488 = vunpack.c.l.b16 %v147
  %v489 = vunpack.c.l.b16 %v148
  %v490 = vunpack.c.l.b16 %v149
  %v491 = vunpack.c.l.b16 %v150
  %v492 = vunpack.c.l.b16 %v151
  %v493 = vunpack.c.l.b16 %v152
  %v494 = vunpack.c.l.b16 %v153
  %v495 = vunpack.c.l.b16 %v154
  %v496 = vunpack.c.l.b16 %v155
  %v497 = vunpack.c.l.b16 %v156
  %v498 = vunpack.c.l.b16 %v157
  %v499 = vunpack.c.l.b16 %v158
  %v500 = vunpack.c.l.b16 %v159
  %v501 = vunpack.c.l.b16 %v160
  %v502 = vunpack.c.l.b16 %v161
  %v503 = vunpack.c.l.b16 %v162
  %v504 = vunpack.c.l.b16 %v163
  %v505 = vunpack.c.l.b16 %v164
  %v506 = vunpack.c.l.b16 %v165
  %v507 = vunpack.c.l.b16 %v166
  %v508 = vunpack.c.l.b16 %v167
  %v509 = vunpack.c.l.b16 %v168
  %v510 = vpack.c.b16 %v367, %v366
  %v511 = vpack.c.b16 %v369, %v368
  %v512 = vpack.c.b16 %v371, %v370
  %v513 = vpack.c.b16 %v373, %v372
  %v514 = vpack.c.b16 %v375, %v374
  %v515 = vpack.c.b16 %v377, %v376
  %v516 = vpack.c.b16 %v379, %v378
  %v517 = vpack.c.b16 %v381, %v380
  %v518 = vpack.c.b16 %v383, %v382
  %v519 = vpack.c.b16 %v385, %v384
  %v520 = vpack.c.b16 %v387, %v386
  %v521 = vpack.c.b16 %v389, %v388
  %v522 = vpack.c.b16 %v391, %v390
  %v523 = vpack.c.b16 %v393, %v392
  %v524 = vpack.c.b16 %v395, %v394
  %v525 = vpack.c.b16 %v397, %v396
  %v526 = vpack.c.b16 %v399, %v398
  %v527 = vpack.c.b16 %v401, %v400
  %v528 = vpack.c.b16 %v403, %v402
  %v529 = vpack.c.b16 %v405, %v404
  %v530 = vpack.c.b16 %v407, %v406
  %v531 = vpack.c.b16 %v409, %v408
  %v532 = vpack.c.b16 %v411, %v410
  %v533 = vpack.c.b16 %v413, %v412
  %v534 = vpack.c.b16 %v415, %v414
  %v535 = vpack.c.b16 %v417, %v416
  %v536 = vpack.c.b16 %v419, %v418
  %v537 = vpack.c.b16 %v421, %v420
  %v538 = vpack.c.b16 %v423, %v422
  %v539 = vpack.c.b16 %v425, %v424
  %v540 = vpack.c.b16 %v427, %v426
  %v541 = vpack.c.b16 %v429, %v428
  %v542 = vpack.c.b16 %v431, %v430
  %v543 = vpack.c.b16 %v433, %v432
  %v544 = vpack.c.b16 %v435, %v434
  %v545 = vpack.c.b16 %v437, %v436
  %v546 = vpack.c.b16 %v439, %v438
  %v547 = vpack.c.b16 %v441, %v440
  %v548 = vpack.c.b16 %v443, %v442
  %v549 = vpack.c.b16 %v445, %v444
  %v550 = vpack.c.b16 %v447, %v446
  %v551 = vpack.c.b16 %v449, %v448
  %v552 = vpack.c.b16 %v451, %v450
  %v553 = vpack.c.b16 %v453, %v452
  %v554 = vpack.c.b16 %v455, %v454
  %v555 = vpack.c.b16 %v457, %v456
  %v556 = vpack.c.b16 %v459, %v458
  %v557 = vpack.c.b16 %v461, %v460
  %v558 = vpack.c.b16 %v463, %v462
  %v559 = vpack.c.b16 %v465, %v464
  %v560 = vpack.c.b16 %v467, %v466
  %v561 = vpack.c.b16 %v469, %v468
  %v562 = vpack.c.b16 %v471, %v470
  %v563 = vpack.c.b16 %v473, %v472
  %v564 = vpack.c.b16 %v475, %v474
  %v565 = vpack.c.b16 %v477, %v476
  %v566 = vpack.c.b16 %v479, %v478
  %v567 = vpack.c.b16 %v481, %v480
  %v568 = vpack.c.b16 %v483, %v482
  %v569 = vpack.c.b16 %v485, %v484
  %v570 = vpack.c.b16 %v487, %v486
  %v571 = vpack.c.b16 %v489, %v488
  %v572 = vpack.c.b16 %v491, %v490
  %v573 = vpack.c.b16 %v493, %v492
  %v574 = vpack.c.b16 %v495, %v494
  %v575 = vpack.c.b16 %v497, %v496
  %v576 = vpack.c.b16 %v499, %v498
  %v577 = vpack.c.b16 %v501, %v500
  %v578 = vpack.c.b16 %v503, %v502
  %v579 = vpack.c.b16 %v505, %v504
  %v580 = vpack.c.b16 %v507, %v506
  %v581 = vpack.c.b16 %v509, %v508
  %654 = vmatprep.subr.bf16.mxu0 0
  %655 = vmatpush1.bf16.msra.mxu0 %v510
  %656 = vmatprep.subr.bf16.mxu0 0
  %657 = vmatpush1.bf16.msra.mxu0 %v511
  %658 = vmatprep.subr.bf16.mxu0 0
  %659 = vmatpush1.bf16.msra.mxu0 %v512
  %660 = vmatprep.subr.bf16.mxu0 0
  %661 = vmatpush1.bf16.msra.mxu0 %v513
  %662 = vmatprep.subr.bf16.mxu0 0
  %663 = vmatpush1.bf16.msra.mxu0 %v514
  %664 = vmatprep.subr.bf16.mxu0 0
  %665 = vmatpush1.bf16.msra.mxu0 %v515
  %666 = vmatprep.subr.bf16.mxu0 0
  %667 = vmatpush1.bf16.msra.mxu0 %v516
  %668 = vmatprep.subr.bf16.mxu0 0
  %669 = vmatpush1.bf16.msra.mxu0 %v517
  %670 = vmatprep.subr.bf16.mxu0 0
  %671 = vmatpush1.bf16.msra.mxu0 %v518
  %672 = vmatprep.subr.bf16.mxu0 0
  %673 = vmatpush1.bf16.msra.mxu0 %v519
  %674 = vmatprep.subr.bf16.mxu0 0
  %675 = vmatpush1.bf16.msra.mxu0 %v520
  %676 = vmatprep.subr.bf16.mxu0 0
  %677 = vmatpush1.bf16.msra.mxu0 %v521
  %678 = vmatprep.subr.bf16.mxu0 0
  %679 = vmatpush1.bf16.msra.mxu0 %v522
  %680 = vmatprep.subr.bf16.mxu0 0
  %681 = vmatpush1.bf16.msra.mxu0 %v523
  %682 = vmatprep.subr.bf16.mxu0 0
  %683 = vmatpush1.bf16.msra.mxu0 %v524
  %684 = vmatprep.subr.bf16.mxu0 0
  %685 = vmatpush1.bf16.msra.mxu0 %v525
  %686 = vmatprep.mubr.bf16.mxu0 %v205
  %687 = vmatmul.mubr.bf16.gmra.mrb[0].mxu0 %v204
  %v688 = vpop.f32.mrb[0].mxu0
  %v689 = vadd.f32 %v174, %v688
  %v690 = vpop.f32.mrb[0].mxu0
  %v691 = vpop.f32.mrb[0].mxu0
  %v692 = vadd.f32 %v174, %v691
  %v693 = vpop.f32.mrb[0].mxu0
  %694 = vdwg.mxu0
  %695 = vmatprep.subr.bf16.mxu0 0
  %696 = vmatpush1.bf16.msra.mxu0 %v526
  %697 = vmatprep.subr.bf16.mxu0 0
  %698 = vmatpush1.bf16.msra.mxu0 %v527
  %699 = vmatprep.subr.bf16.mxu0 0
  %700 = vmatpush1.bf16.msra.mxu0 %v528
  %701 = vmatprep.subr.bf16.mxu0 0
  %702 = vmatpush1.bf16.msra.mxu0 %v529
  %703 = vmatprep.subr.bf16.mxu0 0
  %704 = vmatpush1.bf16.msra.mxu0 %v530
  %705 = vmatprep.subr.bf16.mxu0 0
  %706 = vmatpush1.bf16.msra.mxu0 %v531
  %707 = vmatprep.subr.bf16.mxu0 0
  %708 = vmatpush1.bf16.msra.mxu0 %v532
  %709 = vmatprep.subr.bf16.mxu0 0
  %710 = vmatpush1.bf16.msra.mxu0 %v533
  %711 = vmatprep.subr.bf16.mxu0 0
  %712 = vmatpush1.bf16.msra.mxu0 %v534
  %713 = vmatprep.subr.bf16.mxu0 0
  %714 = vmatpush1.bf16.msra.mxu0 %v535
  %715 = vmatprep.subr.bf16.mxu0 0
  %716 = vmatpush1.bf16.msra.mxu0 %v536
  %717 = vmatprep.subr.bf16.mxu0 0
  %718 = vmatpush1.bf16.msra.mxu0 %v537
  %719 = vmatprep.subr.bf16.mxu0 0
  %720 = vmatpush1.bf16.msra.mxu0 %v538
  %721 = vmatprep.subr.bf16.mxu0 0
  %722 = vmatpush1.bf16.msra.mxu0 %v539
  %723 = vmatprep.subr.bf16.mxu0 0
  %724 = vmatpush1.bf16.msra.mxu0 %v540
  %725 = vmatprep.subr.bf16.mxu0 0
  %726 = vmatpush1.bf16.msra.mxu0 %v541
  %727 = vmatprep.mubr.bf16.mxu0 %v207
  %728 = vmatmul.mubr.bf16.gmra.mrb[0].mxu0 %v206
  %v729 = vpop.f32.mrb[0].mxu0
  %v730 = vadd.f32 %v689, %v729
  %v731 = vpop.f32.mrb[0].mxu0
  %v732 = vpop.f32.mrb[0].mxu0
  %v733 = vadd.f32 %v692, %v732
  %v734 = vpop.f32.mrb[0].mxu0
  %735 = vdwg.mxu0
  %736 = vmatprep.subr.bf16.mxu0 0
  %737 = vmatpush1.bf16.msra.mxu0 %v542
  %738 = vmatprep.subr.bf16.mxu0 0
  %739 = vmatpush1.bf16.msra.mxu0 %v543
  %740 = vmatprep.subr.bf16.mxu0 0
  %741 = vmatpush1.bf16.msra.mxu0 %v544
  %742 = vmatprep.subr.bf16.mxu0 0
  %743 = vmatpush1.bf16.msra.mxu0 %v545
  %744 = vmatprep.subr.bf16.mxu0 0
  %745 = vmatpush1.bf16.msra.mxu0 %v546
  %746 = vmatprep.subr.bf16.mxu0 0
  %747 = vmatpush1.bf16.msra.mxu0 %v547
  %748 = vmatprep.subr.bf16.mxu0 0
  %749 = vmatpush1.bf16.msra.mxu0 %v548
  %750 = vmatprep.subr.bf16.mxu0 0
  %751 = vmatpush1.bf16.msra.mxu0 %v549
  %752 = vmatprep.subr.bf16.mxu0 0
  %753 = vmatpush1.bf16.msra.mxu0 %v550
  %754 = vmatprep.subr.bf16.mxu0 0
  %755 = vmatpush1.bf16.msra.mxu0 %v551
  %756 = vmatprep.subr.bf16.mxu0 0
  %757 = vmatpush1.bf16.msra.mxu0 %v552
  %758 = vmatprep.subr.bf16.mxu0 0
  %759 = vmatpush1.bf16.msra.mxu0 %v553
  %760 = vmatprep.subr.bf16.mxu0 0
  %761 = vmatpush1.bf16.msra.mxu0 %v554
  %762 = vmatprep.subr.bf16.mxu0 0
  %763 = vmatpush1.bf16.msra.mxu0 %v555
  %764 = vmatprep.subr.bf16.mxu0 0
  %765 = vmatpush1.bf16.msra.mxu0 %v556
  %766 = vmatprep.subr.bf16.mxu0 0
  %767 = vmatpush1.bf16.msra.mxu0 %v557
  %768 = vmatprep.mubr.bf16.mxu0 %v209
  %769 = vmatmul.mubr.bf16.gmra.mrb[0].mxu0 %v208
  %v770 = vpop.f32.mrb[0].mxu0
  %v771 = vadd.f32 %v730, %v770
  %v772 = vpop.f32.mrb[0].mxu0
  %v773 = vpop.f32.mrb[0].mxu0
  %v774 = vadd.f32 %v733, %v773
  %v775 = vpop.f32.mrb[0].mxu0
  %776 = vdwg.mxu0
  %777 = vmatprep.subr.bf16.mxu0 0
  %778 = vmatpush1.bf16.msra.mxu0 %v558
  %779 = vmatprep.subr.bf16.mxu0 0
  %780 = vmatpush1.bf16.msra.mxu0 %v559
  %781 = vmatprep.subr.bf16.mxu0 0
  %782 = vmatpush1.bf16.msra.mxu0 %v560
  %783 = vmatprep.subr.bf16.mxu0 0
  %784 = vmatpush1.bf16.msra.mxu0 %v561
  %785 = vmatprep.subr.bf16.mxu0 0
  %786 = vmatpush1.bf16.msra.mxu0 %v562
  %787 = vmatprep.subr.bf16.mxu0 0
  %788 = vmatpush1.bf16.msra.mxu0 %v563
  %789 = vmatprep.subr.bf16.mxu0 0
  %790 = vmatpush1.bf16.msra.mxu0 %v564
  %791 = vmatprep.subr.bf16.mxu0 0
  %792 = vmatpush1.bf16.msra.mxu0 %v565
  %793 = vmatprep.subr.bf16.mxu0 0
  %794 = vmatpush1.bf16.msra.mxu0 %v566
  %795 = vmatprep.subr.bf16.mxu0 0
  %796 = vmatpush1.bf16.msra.mxu0 %v567
  %797 = vmatprep.subr.bf16.mxu0 0
  %798 = vmatpush1.bf16.msra.mxu0 %v568
  %799 = vmatprep.subr.bf16.mxu0 0
  %800 = vmatpush1.bf16.msra.mxu0 %v569
  %801 = vmatprep.subr.bf16.mxu0 0
  %802 = vmatpush1.bf16.msra.mxu0 %v570
  %803 = vmatprep.subr.bf16.mxu0 0
  %804 = vmatpush1.bf16.msra.mxu0 %v571
  %805 = vmatprep.subr.bf16.mxu0 0
  %806 = vmatpush1.bf16.msra.mxu0 %v572
  %807 = vmatprep.subr.bf16.mxu0 0
  %808 = vmatpush1.bf16.msra.mxu0 %v573
  %809 = vmatprep.mubr.bf16.mxu0 %v211
  %810 = vmatmul.mubr.bf16.gmra.mrb[0].mxu0 %v210
  %v811 = vpop.f32.mrb[0].mxu0
  %v812 = vadd.f32 %v771, %v811
  %v813 = vpop.f32.mrb[0].mxu0
  %v814 = vpop.f32.mrb[0].mxu0
  %v815 = vadd.f32 %v774, %v814
  %v816 = vpop.f32.mrb[0].mxu0
  %817 = vdwg.mxu0
  %818 = vmatprep.subr.bf16.mxu0 0
  %819 = vmatpush1.bf16.msra.mxu0 %v574
  %820 = vmatprep.subr.bf16.mxu0 0
  %821 = vmatpush1.bf16.msra.mxu0 %v575
  %822 = vmatprep.subr.bf16.mxu0 0
  %823 = vmatpush1.bf16.msra.mxu0 %v576
  %824 = vmatprep.subr.bf16.mxu0 0
  %825 = vmatpush1.bf16.msra.mxu0 %v577
  %826 = vmatprep.subr.bf16.mxu0 0
  %827 = vmatpush1.bf16.msra.mxu0 %v578
  %828 = vmatprep.subr.bf16.mxu0 0
  %829 = vmatpush1.bf16.msra.mxu0 %v579
  %830 = vmatprep.subr.bf16.mxu0 0
  %831 = vmatpush1.bf16.msra.mxu0 %v580
  %832 = vmatprep.subr.bf16.mxu0 0
  %833 = vmatpush1.bf16.msra.mxu0 %v581
  %834 = vmatprep.subr.bf16.mxu0 0
  %835 = vmatpush1.bf16.msra.mxu0 0
  %836 = vmatprep.subr.bf16.mxu0 0
  %837 = vmatpush1.bf16.msra.mxu0 0
  %838 = vmatprep.subr.bf16.mxu0 0
  %839 = vmatpush1.bf16.msra.mxu0 0
  %840 = vmatprep.subr.bf16.mxu0 0
  %841 = vmatpush1.bf16.msra.mxu0 0
  %842 = vmatprep.subr.bf16.mxu0 0
  %843 = vmatpush1.bf16.msra.mxu0 0
  %844 = vmatprep.subr.bf16.mxu0 0
  %845 = vmatpush1.bf16.msra.mxu0 0
  %846 = vmatprep.subr.bf16.mxu0 0
  %847 = vmatpush1.bf16.msra.mxu0 0
  %848 = vmatprep.subr.bf16.mxu0 0
  %849 = vmatpush1.bf16.msra.mxu0 0
  %850 = vmatprep.mubr.bf16.mxu0 0
  %851 = vmatmul.mubr.bf16.gmra.mrb[0].mxu0 %v212
  %v852 = vpop.f32.mrb[0].mxu0
  %v853 = vadd.f32 %v812, %v852
  %v854 = vpop.f32.mrb[0].mxu0
  %v855 = vpop.f32.mrb[0].mxu0
  %v856 = vadd.f32 %v815, %v855
  %v857 = vpop.f32.mrb[0].mxu0
  %858 = vdwg.mxu0
  %v859 = vmax.f32 %v853, 0.0
  %v860 = vmax.f32 %v856, 0.0
  %v861 = vpack.c.bf16 %v860, %v859
  %v863 = vunpack.c.l.b16 %v861
  %v864 = vunpack.c.h.b16 %v861
  %v865 = vpack.c.b16 %v863, %v863
  %v866 = vpack.c.b16 %v864, %v864
  %869 = vst [vmem:[%s3] sm:$0xf] %v865
  %870 = vst [vmem:[%s3 + $0x4] sm:$0xf] %v866
  // Predicated region
  $region14: #{_lambda_.17} parent=0 // pred_check
    _
  $region15: #{_lambda_.17} parent=0 // pred_check_branch
    %872 = sbr.rel (0) target = $region17
  $region16: #{_lambda_.17} parent=0 // pred_region
    _
  $region17: #{_lambda_.17} parent=0 // pred_fallthru
    _
  // Predicated region
  $region18: #{_lambda_.17} parent=0 // pred_check
    _
  $region19: #{_lambda_.17} parent=0 // pred_check_branch
    %874 = sbr.rel (0) target = $region21
  $region20: #{_lambda_.17} parent=0 // pred_region
    _
  $region21: #{_lambda_.17} parent=0 // pred_fallthru
    _

// kernel: _lambda_.21
$region0: #{_lambda_.21}
  #allocation0 [shape = 'u32[]', space=smem, size = 0x4, offset = 0x4, fixed_abs, tag = 'smem constant byte address 0x4 - core index']
  #allocation1 [shape = 'u32[144,128]{1,0:T(1,128)}', space=vmem, size = 0x12000, scoped, tag = 'internal scratch']
  %s0 = inlined_call_operand.vmem [shape: bf16[128,1152], index: 0, kind: input, shape index: {}]
  %s1 = inlined_call_operand.vmem [shape: bf16[1152,128], index: 1, kind: input, shape index: {}]
  %s2 = inlined_call_operand.vmem [shape: f32[1,128], index: 2, kind: input, shape index: {}]
  %s3 = inlined_call_operand.vmem [shape: bf16[128,128], index: 3, kind: output, shape index: {}]
  %s4 = sld [smem:[#allocation0]]
  $region22: #{_lambda_.21} parent=0
    _
  %s6 = ssub.s32 1, %s4
  %s7 = scalar_select 0, %s6, %s4
  // Predicated region
  $region2: #{_lambda_.21} parent=0 // pred_check
    _
  $region3: #{_lambda_.21} parent=0 // pred_check_branch
    %9 = sbr.rel (0) target = $region5
  $region4: #{_lambda_.21} parent=0 // pred_region
    _
  $region5: #{_lambda_.21} parent=0 // pred_fallthru
    _
  // Predicated region
  $region6: #{_lambda_.21} parent=0 // pred_check
    _
  $region7: #{_lambda_.21} parent=0 // pred_check_branch
    %11 = sbr.rel (0) target = $region9
  $region8: #{_lambda_.21} parent=0 // pred_region
    _
  $region9: #{_lambda_.21} parent=0 // pred_fallthru
    _
  // Predicated region
  $region10: #{_lambda_.21} parent=0 // pred_check
    _
  $region11: #{_lambda_.21} parent=0 // pred_check_branch
    %13 = sbr.rel (0) target = $region13
  $region12: #{_lambda_.21} parent=0 // pred_region
    _
  $region13: #{_lambda_.21} parent=0 // pred_fallthru
    _
  %v15 = vld [vmem:[%s0] sm:$0xff]
  %v16 = vld [vmem:[%s0 + $0x8] sm:$0xff]
  %v17 = vld [vmem:[%s0 + $0x10] sm:$0xff]
  %v18 = vld [vmem:[%s0 + $0x18] sm:$0xff]
  %v19 = vld [vmem:[%s0 + $0x20] sm:$0xf]
  %v20 = vld [vmem:[%s0 + $0x24] sm:$0xff]
  %v21 = vld [vmem:[%s0 + $0x2c] sm:$0xff]
  %v22 = vld [vmem:[%s0 + $0x34] sm:$0xff]
  %v23 = vld [vmem:[%s0 + $0x3c] sm:$0xff]
  %v24 = vld [vmem:[%s0 + $0x44] sm:$0xf]
  %v25 = vld [vmem:[%s0 + $0x48] sm:$0xff]
  %v26 = vld [vmem:[%s0 + $0x50] sm:$0xff]
  %v27 = vld [vmem:[%s0 + $0x58] sm:$0xff]
  %v28 = vld [vmem:[%s0 + $0x60] sm:$0xff]
  %v29 = vld [vmem:[%s0 + $0x68] sm:$0xf]
  %v30 = vld [vmem:[%s0 + $0x6c] sm:$0xff]
  %v31 = vld [vmem:[%s0 + $0x74] sm:$0xff]
  %v32 = vld [vmem:[%s0 + $0x7c] sm:$0xff]
  %v33 = vld [vmem:[%s0 + $0x84] sm:$0xff]
  %v34 = vld [vmem:[%s0 + $0x8c] sm:$0xf]
  %v35 = vld [vmem:[%s0 + $0x90] sm:$0xff]
  %v36 = vld [vmem:[%s0 + $0x98] sm:$0xff]
  %v37 = vld [vmem:[%s0 + $0xa0] sm:$0xff]
  %v38 = vld [vmem:[%s0 + $0xa8] sm:$0xff]
  %v39 = vld [vmem:[%s0 + $0xb0] sm:$0xf]
  %v40 = vld [vmem:[%s0 + $0xb4] sm:$0xff]
  %v41 = vld [vmem:[%s0 + $0xbc] sm:$0xff]
  %v42 = vld [vmem:[%s0 + $0xc4] sm:$0xff]
  %v43 = vld [vmem:[%s0 + $0xcc] sm:$0xff]
  %v44 = vld [vmem:[%s0 + $0xd4] sm:$0xf]
  %v45 = vld [vmem:[%s0 + $0xd8] sm:$0xff]
  %v46 = vld [vmem:[%s0 + $0xe0] sm:$0xff]
  %v47 = vld [vmem:[%s0 + $0xe8] sm:$0xff]
  %v48 = vld [vmem:[%s0 + $0xf0] sm:$0xff]
  %v49 = vld [vmem:[%s0 + $0xf8] sm:$0xf]
  %v50 = vld [vmem:[%s0 + $0xfc] sm:$0xff]
  %v51 = vld [vmem:[%s0 + $0x104] sm:$0xff]
  %v52 = vld [vmem:[%s0 + $0x10c] sm:$0xff]
  %v53 = vld [vmem:[%s0 + $0x114] sm:$0xff]
  %v54 = vld [vmem:[%s0 + $0x11c] sm:$0xf]
  %v55 = vld [vmem:[%s0 + $0x120] sm:$0xff]
  %v56 = vld [vmem:[%s0 + $0x128] sm:$0xff]
  %v57 = vld [vmem:[%s0 + $0x130] sm:$0xff]
  %v58 = vld [vmem:[%s0 + $0x138] sm:$0xff]
  %v59 = vld [vmem:[%s0 + $0x140] sm:$0xf]
  %v60 = vld [vmem:[%s0 + $0x144] sm:$0xff]
  %v61 = vld [vmem:[%s0 + $0x14c] sm:$0xff]
  %v62 = vld [vmem:[%s0 + $0x154] sm:$0xff]
  %v63 = vld [vmem:[%s0 + $0x15c] sm:$0xff]
  %v64 = vld [vmem:[%s0 + $0x164] sm:$0xf]
  %v65 = vld [vmem:[%s0 + $0x168] sm:$0xff]
  %v66 = vld [vmem:[%s0 + $0x170] sm:$0xff]
  %v67 = vld [vmem:[%s0 + $0x178] sm:$0xff]
  %v68 = vld [vmem:[%s0 + $0x180] sm:$0xff]
  %v69 = vld [vmem:[%s0 + $0x188] sm:$0xf]
  %v70 = vld [vmem:[%s0 + $0x18c] sm:$0xff]
  %v71 = vld [vmem:[%s0 + $0x194] sm:$0xff]
  %v72 = vld [vmem:[%s0 + $0x19c] sm:$0xff]
  %v73 = vld [vmem:[%s0 + $0x1a4] sm:$0xff]
  %v74 = vld [vmem:[%s0 + $0x1ac] sm:$0xf]
  %v75 = vld [vmem:[%s0 + $0x1b0] sm:$0xff]
  %v76 = vld [vmem:[%s0 + $0x1b8] sm:$0xff]
  %v77 = vld [vmem:[%s0 + $0x1c0] sm:$0xff]
  %v78 = vld [vmem:[%s0 + $0x1c8] sm:$0xff]
  %v79 = vld [vmem:[%s0 + $0x1d0] sm:$0xf]
  %v80 = vld [vmem:[%s0 + $0x1d4] sm:$0xff]
  %v81 = vld [vmem:[%s0 + $0x1dc] sm:$0xff]
  %v82 = vld [vmem:[%s0 + $0x1e4] sm:$0xff]
  %v83 = vld [vmem:[%s0 + $0x1ec] sm:$0xff]
  %v84 = vld [vmem:[%s0 + $0x1f4] sm:$0xf]
  %v85 = vld [vmem:[%s0 + $0x1f8] sm:$0xff]
  %v86 = vld [vmem:[%s0 + $0x200] sm:$0xff]
  %v87 = vld [vmem:[%s0 + $0x208] sm:$0xff]
  %v88 = vld [vmem:[%s0 + $0x210] sm:$0xff]
  %v89 = vld [vmem:[%s0 + $0x218] sm:$0xf]
  %v90 = vld [vmem:[%s0 + $0x21c] sm:$0xff]
  %v91 = vld [vmem:[%s0 + $0x224] sm:$0xff]
  %v92 = vld [vmem:[%s0 + $0x22c] sm:$0xff]
  %v93 = vld [vmem:[%s0 + $0x234] sm:$0xff]
  %v94 = vld [vmem:[%s0 + $0x23c] sm:$0xf]
  %v95 = vld [vmem:[%s1] sm:$0xf]
  %v96 = vld [vmem:[%s1 + $0x4] sm:$0xf]
  %v97 = vld [vmem:[%s1 + $0x8] sm:$0xf]
  %v98 = vld [vmem:[%s1 + $0xc] sm:$0xf]
  %v99 = vld [vmem:[%s1 + $0x10] sm:$0xf]
  %v100 = vld [vmem:[%s1 + $0x14] sm:$0xf]
  %v101 = vld [vmem:[%s1 + $0x18] sm:$0xf]
  %v102 = vld [vmem:[%s1 + $0x1c] sm:$0xf]
  %v103 = vld [vmem:[%s1 + $0x20] sm:$0xf]
  %v104 = vld [vmem:[%s1 + $0x24] sm:$0xf]
  %v105 = vld [vmem:[%s1 + $0x28] sm:$0xf]
  %v106 = vld [vmem:[%s1 + $0x2c] sm:$0xf]
  %v107 = vld [vmem:[%s1 + $0x30] sm:$0xf]
  %v108 = vld [vmem:[%s1 + $0x34] sm:$0xf]
  %v109 = vld [vmem:[%s1 + $0x38] sm:$0xf]
  %v110 = vld [vmem:[%s1 + $0x3c] sm:$0xf]
  %v111 = vld [vmem:[%s1 + $0x40] sm:$0xf]
  %v112 = vld [vmem:[%s1 + $0x44] sm:$0xf]
  %v113 = vld [vmem:[%s1 + $0x48] sm:$0xf]
  %v114 = vld [vmem:[%s1 + $0x4c] sm:$0xf]
  %v115 = vld [vmem:[%s1 + $0x50] sm:$0xf]
  %v116 = vld [vmem:[%s1 + $0x54] sm:$0xf]
  %v117 = vld [vmem:[%s1 + $0x58] sm:$0xf]
  %v118 = vld [vmem:[%s1 + $0x5c] sm:$0xf]
  %v119 = vld [vmem:[%s1 + $0x60] sm:$0xf]
  %v120 = vld [vmem:[%s1 + $0x64] sm:$0xf]
  %v121 = vld [vmem:[%s1 + $0x68] sm:$0xf]
  %v122 = vld [vmem:[%s1 + $0x6c] sm:$0xf]
  %v123 = vld [vmem:[%s1 + $0x70] sm:$0xf]
  %v124 = vld [vmem:[%s1 + $0x74] sm:$0xf]
  %v125 = vld [vmem:[%s1 + $0x78] sm:$0xf]
  %v126 = vld [vmem:[%s1 + $0x7c] sm:$0xf]
  %v127 = vld [vmem:[%s1 + $0x80] sm:$0xf]
  %v128 = vld [vmem:[%s1 + $0x84] sm:$0xf]
  %v129 = vld [vmem:[%s1 + $0x88] sm:$0xf]
  %v130 = vld [vmem:[%s1 + $0x8c] sm:$0xf]
  %v131 = vld [vmem:[%s1 + $0x90] sm:$0xf]
  %v132 = vld [vmem:[%s1 + $0x94] sm:$0xf]
  %v133 = vld [vmem:[%s1 + $0x98] sm:$0xf]
  %v134 = vld [vmem:[%s1 + $0x9c] sm:$0xf]
  %v135 = vld [vmem:[%s1 + $0xa0] sm:$0xf]
  %v136 = vld [vmem:[%s1 + $0xa4] sm:$0xf]
  %v137 = vld [vmem:[%s1 + $0xa8] sm:$0xf]
  %v138 = vld [vmem:[%s1 + $0xac] sm:$0xf]
  %v139 = vld [vmem:[%s1 + $0xb0] sm:$0xf]
  %v140 = vld [vmem:[%s1 + $0xb4] sm:$0xf]
  %v141 = vld [vmem:[%s1 + $0xb8] sm:$0xf]
  %v142 = vld [vmem:[%s1 + $0xbc] sm:$0xf]
  %v143 = vld [vmem:[%s1 + $0xc0] sm:$0xf]
  %v144 = vld [vmem:[%s1 + $0xc4] sm:$0xf]
  %v145 = vld [vmem:[%s1 + $0xc8] sm:$0xf]
  %v146 = vld [vmem:[%s1 + $0xcc] sm:$0xf]
  %v147 = vld [vmem:[%s1 + $0xd0] sm:$0xf]
  %v148 = vld [vmem:[%s1 + $0xd4] sm:$0xf]
  %v149 = vld [vmem:[%s1 + $0xd8] sm:$0xf]
  %v150 = vld [vmem:[%s1 + $0xdc] sm:$0xf]
  %v151 = vld [vmem:[%s1 + $0xe0] sm:$0xf]
  %v152 = vld [vmem:[%s1 + $0xe4] sm:$0xf]
  %v153 = vld [vmem:[%s1 + $0xe8] sm:$0xf]
  %v154 = vld [vmem:[%s1 + $0xec] sm:$0xf]
  %v155 = vld [vmem:[%s1 + $0xf0] sm:$0xf]
  %v156 = vld [vmem:[%s1 + $0xf4] sm:$0xf]
  %v157 = vld [vmem:[%s1 + $0xf8] sm:$0xf]
  %v158 = vld [vmem:[%s1 + $0xfc] sm:$0xf]
  %v159 = vld [vmem:[%s1 + $0x100] sm:$0xf]
  %v160 = vld [vmem:[%s1 + $0x104] sm:$0xf]
  %v161 = vld [vmem:[%s1 + $0x108] sm:$0xf]
  %v162 = vld [vmem:[%s1 + $0x10c] sm:$0xf]
  %v163 = vld [vmem:[%s1 + $0x110] sm:$0xf]
  %v164 = vld [vmem:[%s1 + $0x114] sm:$0xf]
  %v165 = vld [vmem:[%s1 + $0x118] sm:$0xf]
  %v166 = vld [vmem:[%s1 + $0x11c] sm:$0xf]
  %v167 = vld [vmem:[%s1 + $0x120] sm:$0xf]
  %v168 = vld [vmem:[%s1 + $0x124] sm:$0xf]
  %v169 = vld [vmem:[%s1 + $0x128] sm:$0xf]
  %v170 = vld [vmem:[%s1 + $0x12c] sm:$0xf]
  %v171 = vld [vmem:[%s1 + $0x130] sm:$0xf]
  %v172 = vld [vmem:[%s1 + $0x134] sm:$0xf]
  %v173 = vld [vmem:[%s1 + $0x138] sm:$0xf]
  %v174 = vld [vmem:[%s1 + $0x13c] sm:$0xf]
  %v175 = vld [vmem:[%s1 + $0x140] sm:$0xf]
  %v176 = vld [vmem:[%s1 + $0x144] sm:$0xf]
  %v177 = vld [vmem:[%s1 + $0x148] sm:$0xf]
  %v178 = vld [vmem:[%s1 + $0x14c] sm:$0xf]
  %v179 = vld [vmem:[%s1 + $0x150] sm:$0xf]
  %v180 = vld [vmem:[%s1 + $0x154] sm:$0xf]
  %v181 = vld [vmem:[%s1 + $0x158] sm:$0xf]
  %v182 = vld [vmem:[%s1 + $0x15c] sm:$0xf]
  %v183 = vld [vmem:[%s1 + $0x160] sm:$0xf]
  %v184 = vld [vmem:[%s1 + $0x164] sm:$0xf]
  %v185 = vld [vmem:[%s1 + $0x168] sm:$0xf]
  %v186 = vld [vmem:[%s1 + $0x16c] sm:$0xf]
  %v187 = vld [vmem:[%s1 + $0x170] sm:$0xf]
  %v188 = vld [vmem:[%s1 + $0x174] sm:$0xf]
  %v189 = vld [vmem:[%s1 + $0x178] sm:$0xf]
  %v190 = vld [vmem:[%s1 + $0x17c] sm:$0xf]
  %v191 = vld [vmem:[%s1 + $0x180] sm:$0xf]
  %v192 = vld [vmem:[%s1 + $0x184] sm:$0xf]
  %v193 = vld [vmem:[%s1 + $0x188] sm:$0xf]
  %v194 = vld [vmem:[%s1 + $0x18c] sm:$0xf]
  %v195 = vld [vmem:[%s1 + $0x190] sm:$0xf]
  %v196 = vld [vmem:[%s1 + $0x194] sm:$0xf]
  %v197 = vld [vmem:[%s1 + $0x198] sm:$0xf]
  %v198 = vld [vmem:[%s1 + $0x19c] sm:$0xf]
  %v199 = vld [vmem:[%s1 + $0x1a0] sm:$0xf]
  %v200 = vld [vmem:[%s1 + $0x1a4] sm:$0xf]
  %v201 = vld [vmem:[%s1 + $0x1a8] sm:$0xf]
  %v202 = vld [vmem:[%s1 + $0x1ac] sm:$0xf]
  %v203 = vld [vmem:[%s1 + $0x1b0] sm:$0xf]
  %v204 = vld [vmem:[%s1 + $0x1b4] sm:$0xf]
  %v205 = vld [vmem:[%s1 + $0x1b8] sm:$0xf]
  %v206 = vld [vmem:[%s1 + $0x1bc] sm:$0xf]
  %v207 = vld [vmem:[%s1 + $0x1c0] sm:$0xf]
  %v208 = vld [vmem:[%s1 + $0x1c4] sm:$0xf]
  %v209 = vld [vmem:[%s1 + $0x1c8] sm:$0xf]
  %v210 = vld [vmem:[%s1 + $0x1cc] sm:$0xf]
  %v211 = vld [vmem:[%s1 + $0x1d0] sm:$0xf]
  %v212 = vld [vmem:[%s1 + $0x1d4] sm:$0xf]
  %v213 = vld [vmem:[%s1 + $0x1d8] sm:$0xf]
  %v214 = vld [vmem:[%s1 + $0x1dc] sm:$0xf]
  %v215 = vld [vmem:[%s1 + $0x1e0] sm:$0xf]
  %v216 = vld [vmem:[%s1 + $0x1e4] sm:$0xf]
  %v217 = vld [vmem:[%s1 + $0x1e8] sm:$0xf]
  %v218 = vld [vmem:[%s1 + $0x1ec] sm:$0xf]
  %v219 = vld [vmem:[%s1 + $0x1f0] sm:$0xf]
  %v220 = vld [vmem:[%s1 + $0x1f4] sm:$0xf]
  %v221 = vld [vmem:[%s1 + $0x1f8] sm:$0xf]
  %v222 = vld [vmem:[%s1 + $0x1fc] sm:$0xf]
  %v223 = vld [vmem:[%s1 + $0x200] sm:$0xf]
  %v224 = vld [vmem:[%s1 + $0x204] sm:$0xf]
  %v225 = vld [vmem:[%s1 + $0x208] sm:$0xf]
  %v226 = vld [vmem:[%s1 + $0x20c] sm:$0xf]
  %v227 = vld [vmem:[%s1 + $0x210] sm:$0xf]
  %v228 = vld [vmem:[%s1 + $0x214] sm:$0xf]
  %v229 = vld [vmem:[%s1 + $0x218] sm:$0xf]
  %v230 = vld [vmem:[%s1 + $0x21c] sm:$0xf]
  %v231 = vld [vmem:[%s1 + $0x220] sm:$0xf]
  %v232 = vld [vmem:[%s1 + $0x224] sm:$0xf]
  %v233 = vld [vmem:[%s1 + $0x228] sm:$0xf]
  %v234 = vld [vmem:[%s1 + $0x22c] sm:$0xf]
  %v235 = vld [vmem:[%s1 + $0x230] sm:$0xf]
  %v236 = vld [vmem:[%s1 + $0x234] sm:$0xf]
  %v237 = vld [vmem:[%s1 + $0x238] sm:$0xf]
  %v238 = vld [vmem:[%s1 + $0x23c] sm:$0xf]
  %v239 = vld [vmem:[%s2] sm:$0x1]
  %v241 = vlaneseq
  %v242 = vshrl.u32 %v241, 7
  %v243 = vsub.s32 0, %v242
  %v244 = vrot.slane %v239, %v243
  %v326 = vunpack.c.l.b16 %v15
  %v327 = vunpack.c.h.b16 %v15
  %v328 = vunpack.c.l.b16 %v16
  %v329 = vunpack.c.h.b16 %v16
  %v330 = vunpack.c.l.b16 %v17
  %v331 = vunpack.c.h.b16 %v17
  %v332 = vunpack.c.l.b16 %v18
  %v333 = vunpack.c.h.b16 %v18
  %v334 = vunpack.c.l.b16 %v19
  %v335 = vunpack.c.l.b16 %v20
  %v336 = vunpack.c.h.b16 %v20
  %v337 = vunpack.c.l.b16 %v21
  %v338 = vunpack.c.h.b16 %v21
  %v339 = vunpack.c.l.b16 %v22
  %v340 = vunpack.c.h.b16 %v22
  %v341 = vunpack.c.l.b16 %v23
  %v342 = vunpack.c.h.b16 %v23
  %v343 = vunpack.c.l.b16 %v24
  %v344 = vunpack.c.l.b16 %v25
  %v345 = vunpack.c.h.b16 %v25
  %v346 = vunpack.c.l.b16 %v26
  %v347 = vunpack.c.h.b16 %v26
  %v348 = vunpack.c.l.b16 %v27
  %v349 = vunpack.c.h.b16 %v27
  %v350 = vunpack.c.l.b16 %v28
  %v351 = vunpack.c.h.b16 %v28
  %v352 = vunpack.c.l.b16 %v29
  %v353 = vunpack.c.l.b16 %v30
  %v354 = vunpack.c.h.b16 %v30
  %v355 = vunpack.c.l.b16 %v31
  %v356 = vunpack.c.h.b16 %v31
  %v357 = vunpack.c.l.b16 %v32
  %v358 = vunpack.c.h.b16 %v32
  %v359 = vunpack.c.l.b16 %v33
  %v360 = vunpack.c.h.b16 %v33
  %v361 = vunpack.c.l.b16 %v34
  %v362 = vunpack.c.l.b16 %v35
  %v363 = vunpack.c.h.b16 %v35
  %v364 = vunpack.c.l.b16 %v36
  %v365 = vunpack.c.h.b16 %v36
  %v366 = vunpack.c.l.b16 %v37
  %v367 = vunpack.c.h.b16 %v37
  %v368 = vunpack.c.l.b16 %v38
  %v369 = vunpack.c.h.b16 %v38
  %v370 = vunpack.c.l.b16 %v39
  %v371 = vunpack.c.l.b16 %v40
  %v372 = vunpack.c.h.b16 %v40
  %v373 = vunpack.c.l.b16 %v41
  %v374 = vunpack.c.h.b16 %v41
  %v375 = vunpack.c.l.b16 %v42
  %v376 = vunpack.c.h.b16 %v42
  %v377 = vunpack.c.l.b16 %v43
  %v378 = vunpack.c.h.b16 %v43
  %v379 = vunpack.c.l.b16 %v44
  %v380 = vunpack.c.l.b16 %v45
  %v381 = vunpack.c.h.b16 %v45
  %v382 = vunpack.c.l.b16 %v46
  %v383 = vunpack.c.h.b16 %v46
  %v384 = vunpack.c.l.b16 %v47
  %v385 = vunpack.c.h.b16 %v47
  %v386 = vunpack.c.l.b16 %v48
  %v387 = vunpack.c.h.b16 %v48
  %v388 = vunpack.c.l.b16 %v49
  %v389 = vunpack.c.l.b16 %v50
  %v390 = vunpack.c.h.b16 %v50
  %v391 = vunpack.c.l.b16 %v51
  %v392 = vunpack.c.h.b16 %v51
  %v393 = vunpack.c.l.b16 %v52
  %v394 = vunpack.c.h.b16 %v52
  %v395 = vunpack.c.l.b16 %v53
  %v396 = vunpack.c.h.b16 %v53
  %v397 = vunpack.c.l.b16 %v54
  %v398 = vunpack.c.l.b16 %v55
  %v399 = vunpack.c.h.b16 %v55
  %v400 = vunpack.c.l.b16 %v56
  %v401 = vunpack.c.h.b16 %v56
  %v402 = vunpack.c.l.b16 %v57
  %v403 = vunpack.c.h.b16 %v57
  %v404 = vunpack.c.l.b16 %v58
  %v405 = vunpack.c.h.b16 %v58
  %v406 = vunpack.c.l.b16 %v59
  %v407 = vunpack.c.l.b16 %v60
  %v408 = vunpack.c.h.b16 %v60
  %v409 = vunpack.c.l.b16 %v61
  %v410 = vunpack.c.h.b16 %v61
  %v411 = vunpack.c.l.b16 %v62
  %v412 = vunpack.c.h.b16 %v62
  %v413 = vunpack.c.l.b16 %v63
  %v414 = vunpack.c.h.b16 %v63
  %v415 = vunpack.c.l.b16 %v64
  %v416 = vunpack.c.l.b16 %v65
  %v417 = vunpack.c.h.b16 %v65
  %v418 = vunpack.c.l.b16 %v66
  %v419 = vunpack.c.h.b16 %v66
  %v420 = vunpack.c.l.b16 %v67
  %v421 = vunpack.c.h.b16 %v67
  %v422 = vunpack.c.l.b16 %v68
  %v423 = vunpack.c.h.b16 %v68
  %v424 = vunpack.c.l.b16 %v69
  %v425 = vunpack.c.l.b16 %v70
  %v426 = vunpack.c.h.b16 %v70
  %v427 = vunpack.c.l.b16 %v71
  %v428 = vunpack.c.h.b16 %v71
  %v429 = vunpack.c.l.b16 %v72
  %v430 = vunpack.c.h.b16 %v72
  %v431 = vunpack.c.l.b16 %v73
  %v432 = vunpack.c.h.b16 %v73
  %v433 = vunpack.c.l.b16 %v74
  %v434 = vunpack.c.l.b16 %v75
  %v435 = vunpack.c.h.b16 %v75
  %v436 = vunpack.c.l.b16 %v76
  %v437 = vunpack.c.h.b16 %v76
  %v438 = vunpack.c.l.b16 %v77
  %v439 = vunpack.c.h.b16 %v77
  %v440 = vunpack.c.l.b16 %v78
  %v441 = vunpack.c.h.b16 %v78
  %v442 = vunpack.c.l.b16 %v79
  %v443 = vunpack.c.l.b16 %v80
  %v444 = vunpack.c.h.b16 %v80
  %v445 = vunpack.c.l.b16 %v81
  %v446 = vunpack.c.h.b16 %v81
  %v447 = vunpack.c.l.b16 %v82
  %v448 = vunpack.c.h.b16 %v82
  %v449 = vunpack.c.l.b16 %v83
  %v450 = vunpack.c.h.b16 %v83
  %v451 = vunpack.c.l.b16 %v84
  %v452 = vunpack.c.l.b16 %v85
  %v453 = vunpack.c.h.b16 %v85
  %v454 = vunpack.c.l.b16 %v86
  %v455 = vunpack.c.h.b16 %v86
  %v456 = vunpack.c.l.b16 %v87
  %v457 = vunpack.c.h.b16 %v87
  %v458 = vunpack.c.l.b16 %v88
  %v459 = vunpack.c.h.b16 %v88
  %v460 = vunpack.c.l.b16 %v89
  %v461 = vunpack.c.l.b16 %v90
  %v462 = vunpack.c.h.b16 %v90
  %v463 = vunpack.c.l.b16 %v91
  %v464 = vunpack.c.h.b16 %v91
  %v465 = vunpack.c.l.b16 %v92
  %v466 = vunpack.c.h.b16 %v92
  %v467 = vunpack.c.l.b16 %v93
  %v468 = vunpack.c.h.b16 %v93
  %v469 = vunpack.c.l.b16 %v94
  %v470 = vpack.c.b16 %v335, %v326
  %v471 = vpack.c.b16 %v336, %v327
  %v472 = vpack.c.b16 %v337, %v328
  %v473 = vpack.c.b16 %v338, %v329
  %v474 = vpack.c.b16 %v339, %v330
  %v475 = vpack.c.b16 %v340, %v331
  %v476 = vpack.c.b16 %v341, %v332
  %v477 = vpack.c.b16 %v342, %v333
  %v478 = vpack.c.b16 %v343, %v334
  %v479 = vpack.c.b16 %v353, %v344
  %v480 = vpack.c.b16 %v354, %v345
  %v481 = vpack.c.b16 %v355, %v346
  %v482 = vpack.c.b16 %v356, %v347
  %v483 = vpack.c.b16 %v357, %v348
  %v484 = vpack.c.b16 %v358, %v349
  %v485 = vpack.c.b16 %v359, %v350
  %v486 = vpack.c.b16 %v360, %v351
  %v487 = vpack.c.b16 %v361, %v352
  %v488 = vpack.c.b16 %v371, %v362
  %v489 = vpack.c.b16 %v372, %v363
  %v490 = vpack.c.b16 %v373, %v364
  %v491 = vpack.c.b16 %v374, %v365
  %v492 = vpack.c.b16 %v375, %v366
  %v493 = vpack.c.b16 %v376, %v367
  %v494 = vpack.c.b16 %v377, %v368
  %v495 = vpack.c.b16 %v378, %v369
  %v496 = vpack.c.b16 %v379, %v370
  %v497 = vpack.c.b16 %v389, %v380
  %v498 = vpack.c.b16 %v390, %v381
  %v499 = vpack.c.b16 %v391, %v382
  %v500 = vpack.c.b16 %v392, %v383
  %v501 = vpack.c.b16 %v393, %v384
  %v502 = vpack.c.b16 %v394, %v385
  %v503 = vpack.c.b16 %v395, %v386
  %v504 = vpack.c.b16 %v396, %v387
  %v505 = vpack.c.b16 %v397, %v388
  %v506 = vpack.c.b16 %v407, %v398
  %v507 = vpack.c.b16 %v408, %v399
  %v508 = vpack.c.b16 %v409, %v400
  %v509 = vpack.c.b16 %v410, %v401
  %v510 = vpack.c.b16 %v411, %v402
  %v511 = vpack.c.b16 %v412, %v403
  %v512 = vpack.c.b16 %v413, %v404
  %v513 = vpack.c.b16 %v414, %v405
  %v514 = vpack.c.b16 %v415, %v406
  %v515 = vpack.c.b16 %v425, %v416
  %v516 = vpack.c.b16 %v426, %v417
  %v517 = vpack.c.b16 %v427, %v418
  %v518 = vpack.c.b16 %v428, %v419
  %v519 = vpack.c.b16 %v429, %v420
  %v520 = vpack.c.b16 %v430, %v421
  %v521 = vpack.c.b16 %v431, %v422
  %v522 = vpack.c.b16 %v432, %v423
  %v523 = vpack.c.b16 %v433, %v424
  %v524 = vpack.c.b16 %v443, %v434
  %v525 = vpack.c.b16 %v444, %v435
  %v526 = vpack.c.b16 %v445, %v436
  %v527 = vpack.c.b16 %v446, %v437
  %v528 = vpack.c.b16 %v447, %v438
  %v529 = vpack.c.b16 %v448, %v439
  %v530 = vpack.c.b16 %v449, %v440
  %v531 = vpack.c.b16 %v450, %v441
  %v532 = vpack.c.b16 %v451, %v442
  %v533 = vpack.c.b16 %v461, %v452
  %v534 = vpack.c.b16 %v462, %v453
  %v535 = vpack.c.b16 %v463, %v454
  %v536 = vpack.c.b16 %v464, %v455
  %v537 = vpack.c.b16 %v465, %v456
  %v538 = vpack.c.b16 %v466, %v457
  %v539 = vpack.c.b16 %v467, %v458
  %v540 = vpack.c.b16 %v468, %v459
  %v541 = vpack.c.b16 %v469, %v460
  %v758 = vunpack.c.l.b16 %v95
  %v759 = vunpack.c.l.b16 %v96
  %v760 = vunpack.c.l.b16 %v97
  %v761 = vunpack.c.l.b16 %v98
  %v762 = vunpack.c.l.b16 %v99
  %v763 = vunpack.c.l.b16 %v100
  %v764 = vunpack.c.l.b16 %v101
  %v765 = vunpack.c.l.b16 %v102
  %v766 = vunpack.c.l.b16 %v103
  %v767 = vunpack.c.l.b16 %v104
  %v768 = vunpack.c.l.b16 %v105
  %v769 = vunpack.c.l.b16 %v106
  %v770 = vunpack.c.l.b16 %v107
  %v771 = vunpack.c.l.b16 %v108
  %v772 = vunpack.c.l.b16 %v109
  %v773 = vunpack.c.l.b16 %v110
  %v774 = vunpack.c.l.b16 %v111
  %v775 = vunpack.c.l.b16 %v112
  %v776 = vunpack.c.l.b16 %v113
  %v777 = vunpack.c.l.b16 %v114
  %v778 = vunpack.c.l.b16 %v115
  %v779 = vunpack.c.l.b16 %v116
  %v780 = vunpack.c.l.b16 %v117
  %v781 = vunpack.c.l.b16 %v118
  %v782 = vunpack.c.l.b16 %v119
  %v783 = vunpack.c.l.b16 %v120
  %v784 = vunpack.c.l.b16 %v121
  %v785 = vunpack.c.l.b16 %v122
  %v786 = vunpack.c.l.b16 %v123
  %v787 = vunpack.c.l.b16 %v124
  %v788 = vunpack.c.l.b16 %v125
  %v789 = vunpack.c.l.b16 %v126
  %v790 = vunpack.c.l.b16 %v127
  %v791 = vunpack.c.l.b16 %v128
  %v792 = vunpack.c.l.b16 %v129
  %v793 = vunpack.c.l.b16 %v130
  %v794 = vunpack.c.l.b16 %v131
  %v795 = vunpack.c.l.b16 %v132
  %v796 = vunpack.c.l.b16 %v133
  %v797 = vunpack.c.l.b16 %v134
  %v798 = vunpack.c.l.b16 %v135
  %v799 = vunpack.c.l.b16 %v136
  %v800 = vunpack.c.l.b16 %v137
  %v801 = vunpack.c.l.b16 %v138
  %v802 = vunpack.c.l.b16 %v139
  %v803 = vunpack.c.l.b16 %v140
  %v804 = vunpack.c.l.b16 %v141
  %v805 = vunpack.c.l.b16 %v142
  %v806 = vunpack.c.l.b16 %v143
  %v807 = vunpack.c.l.b16 %v144
  %v808 = vunpack.c.l.b16 %v145
  %v809 = vunpack.c.l.b16 %v146
  %v810 = vunpack.c.l.b16 %v147
  %v811 = vunpack.c.l.b16 %v148
  %v812 = vunpack.c.l.b16 %v149
  %v813 = vunpack.c.l.b16 %v150
  %v814 = vunpack.c.l.b16 %v151
  %v815 = vunpack.c.l.b16 %v152
  %v816 = vunpack.c.l.b16 %v153
  %v817 = vunpack.c.l.b16 %v154
  %v818 = vunpack.c.l.b16 %v155
  %v819 = vunpack.c.l.b16 %v156
  %v820 = vunpack.c.l.b16 %v157
  %v821 = vunpack.c.l.b16 %v158
  %v822 = vunpack.c.l.b16 %v159
  %v823 = vunpack.c.l.b16 %v160
  %v824 = vunpack.c.l.b16 %v161
  %v825 = vunpack.c.l.b16 %v162
  %v826 = vunpack.c.l.b16 %v163
  %v827 = vunpack.c.l.b16 %v164
  %v828 = vunpack.c.l.b16 %v165
  %v829 = vunpack.c.l.b16 %v166
  %v830 = vunpack.c.l.b16 %v167
  %v831 = vunpack.c.l.b16 %v168
  %v832 = vunpack.c.l.b16 %v169
  %v833 = vunpack.c.l.b16 %v170
  %v834 = vunpack.c.l.b16 %v171
  %v835 = vunpack.c.l.b16 %v172
  %v836 = vunpack.c.l.b16 %v173
  %v837 = vunpack.c.l.b16 %v174
  %v838 = vunpack.c.l.b16 %v175
  %v839 = vunpack.c.l.b16 %v176
  %v840 = vunpack.c.l.b16 %v177
  %v841 = vunpack.c.l.b16 %v178
  %v842 = vunpack.c.l.b16 %v179
  %v843 = vunpack.c.l.b16 %v180
  %v844 = vunpack.c.l.b16 %v181
  %v845 = vunpack.c.l.b16 %v182
  %v846 = vunpack.c.l.b16 %v183
  %v847 = vunpack.c.l.b16 %v184
  %v848 = vunpack.c.l.b16 %v185
  %v849 = vunpack.c.l.b16 %v186
  %v850 = vunpack.c.l.b16 %v187
  %v851 = vunpack.c.l.b16 %v188
  %v852 = vunpack.c.l.b16 %v189
  %v853 = vunpack.c.l.b16 %v190
  %v854 = vunpack.c.l.b16 %v191
  %v855 = vunpack.c.l.b16 %v192
  %v856 = vunpack.c.l.b16 %v193
  %v857 = vunpack.c.l.b16 %v194
  %v858 = vunpack.c.l.b16 %v195
  %v859 = vunpack.c.l.b16 %v196
  %v860 = vunpack.c.l.b16 %v197
  %v861 = vunpack.c.l.b16 %v198
  %v862 = vunpack.c.l.b16 %v199
  %v863 = vunpack.c.l.b16 %v200
  %v864 = vunpack.c.l.b16 %v201
  %v865 = vunpack.c.l.b16 %v202
  %v866 = vunpack.c.l.b16 %v203
  %v867 = vunpack.c.l.b16 %v204
  %v868 = vunpack.c.l.b16 %v205
  %v869 = vunpack.c.l.b16 %v206
  %v870 = vunpack.c.l.b16 %v207
  %v871 = vunpack.c.l.b16 %v208
  %v872 = vunpack.c.l.b16 %v209
  %v873 = vunpack.c.l.b16 %v210
  %v874 = vunpack.c.l.b16 %v211
  %v875 = vunpack.c.l.b16 %v212
  %v876 = vunpack.c.l.b16 %v213
  %v877 = vunpack.c.l.b16 %v214
  %v878 = vunpack.c.l.b16 %v215
  %v879 = vunpack.c.l.b16 %v216
  %v880 = vunpack.c.l.b16 %v217
  %v881 = vunpack.c.l.b16 %v218
  %v882 = vunpack.c.l.b16 %v219
  %v883 = vunpack.c.l.b16 %v220
  %v884 = vunpack.c.l.b16 %v221
  %v885 = vunpack.c.l.b16 %v222
  %v886 = vunpack.c.l.b16 %v223
  %v887 = vunpack.c.l.b16 %v224
  %v888 = vunpack.c.l.b16 %v225
  %v889 = vunpack.c.l.b16 %v226
  %v890 = vunpack.c.l.b16 %v227
  %v891 = vunpack.c.l.b16 %v228
  %v892 = vunpack.c.l.b16 %v229
  %v893 = vunpack.c.l.b16 %v230
  %v894 = vunpack.c.l.b16 %v231
  %v895 = vunpack.c.l.b16 %v232
  %v896 = vunpack.c.l.b16 %v233
  %v897 = vunpack.c.l.b16 %v234
  %v898 = vunpack.c.l.b16 %v235
  %v899 = vunpack.c.l.b16 %v236
  %v900 = vunpack.c.l.b16 %v237
  %v901 = vunpack.c.l.b16 %v238
  %v902 = vpack.c.b16 %v759, %v758
  %v903 = vpack.c.b16 %v761, %v760
  %v904 = vpack.c.b16 %v763, %v762
  %v905 = vpack.c.b16 %v765, %v764
  %v906 = vpack.c.b16 %v767, %v766
  %v907 = vpack.c.b16 %v769, %v768
  %v908 = vpack.c.b16 %v771, %v770
  %v909 = vpack.c.b16 %v773, %v772
  %v910 = vpack.c.b16 %v775, %v774
  %v911 = vpack.c.b16 %v777, %v776
  %v912 = vpack.c.b16 %v779, %v778
  %v913 = vpack.c.b16 %v781, %v780
  %v914 = vpack.c.b16 %v783, %v782
  %v915 = vpack.c.b16 %v785, %v784
  %v916 = vpack.c.b16 %v787, %v786
  %v917 = vpack.c.b16 %v789, %v788
  %v918 = vpack.c.b16 %v791, %v790
  %v919 = vpack.c.b16 %v793, %v792
  %v920 = vpack.c.b16 %v795, %v794
  %v921 = vpack.c.b16 %v797, %v796
  %v922 = vpack.c.b16 %v799, %v798
  %v923 = vpack.c.b16 %v801, %v800
  %v924 = vpack.c.b16 %v803, %v802
  %v925 = vpack.c.b16 %v805, %v804
  %v926 = vpack.c.b16 %v807, %v806
  %v927 = vpack.c.b16 %v809, %v808
  %v928 = vpack.c.b16 %v811, %v810
  %v929 = vpack.c.b16 %v813, %v812
  %v930 = vpack.c.b16 %v815, %v814
  %v931 = vpack.c.b16 %v817, %v816
  %v932 = vpack.c.b16 %v819, %v818
  %v933 = vpack.c.b16 %v821, %v820
  %v934 = vpack.c.b16 %v823, %v822
  %v935 = vpack.c.b16 %v825, %v824
  %v936 = vpack.c.b16 %v827, %v826
  %v937 = vpack.c.b16 %v829, %v828
  %v938 = vpack.c.b16 %v831, %v830
  %v939 = vpack.c.b16 %v833, %v832
  %v940 = vpack.c.b16 %v835, %v834
  %v941 = vpack.c.b16 %v837, %v836
  %v942 = vpack.c.b16 %v839, %v838
  %v943 = vpack.c.b16 %v841, %v840
  %v944 = vpack.c.b16 %v843, %v842
  %v945 = vpack.c.b16 %v845, %v844
  %v946 = vpack.c.b16 %v847, %v846
  %v947 = vpack.c.b16 %v849, %v848
  %v948 = vpack.c.b16 %v851, %v850
  %v949 = vpack.c.b16 %v853, %v852
  %v950 = vpack.c.b16 %v855, %v854
  %v951 = vpack.c.b16 %v857, %v856
  %v952 = vpack.c.b16 %v859, %v858
  %v953 = vpack.c.b16 %v861, %v860
  %v954 = vpack.c.b16 %v863, %v862
  %v955 = vpack.c.b16 %v865, %v864
  %v956 = vpack.c.b16 %v867, %v866
  %v957 = vpack.c.b16 %v869, %v868
  %v958 = vpack.c.b16 %v871, %v870
  %v959 = vpack.c.b16 %v873, %v872
  %v960 = vpack.c.b16 %v875, %v874
  %v961 = vpack.c.b16 %v877, %v876
  %v962 = vpack.c.b16 %v879, %v878
  %v963 = vpack.c.b16 %v881, %v880
  %v964 = vpack.c.b16 %v883, %v882
  %v965 = vpack.c.b16 %v885, %v884
  %v966 = vpack.c.b16 %v887, %v886
  %v967 = vpack.c.b16 %v889, %v888
  %v968 = vpack.c.b16 %v891, %v890
  %v969 = vpack.c.b16 %v893, %v892
  %v970 = vpack.c.b16 %v895, %v894
  %v971 = vpack.c.b16 %v897, %v896
  %v972 = vpack.c.b16 %v899, %v898
  %v973 = vpack.c.b16 %v901, %v900
  %1046 = vmatprep.subr.bf16.mxu0 0
  %1047 = vmatpush1.bf16.msra.mxu0 %v902
  %1048 = vmatprep.subr.bf16.mxu0 0
  %1049 = vmatpush1.bf16.msra.mxu0 %v903
  %1050 = vmatprep.subr.bf16.mxu0 0
  %1051 = vmatpush1.bf16.msra.mxu0 %v904
  %1052 = vmatprep.subr.bf16.mxu0 0
  %1053 = vmatpush1.bf16.msra.mxu0 %v905
  %1054 = vmatprep.subr.bf16.mxu0 0
  %1055 = vmatpush1.bf16.msra.mxu0 %v906
  %1056 = vmatprep.subr.bf16.mxu0 0
  %1057 = vmatpush1.bf16.msra.mxu0 %v907
  %1058 = vmatprep.subr.bf16.mxu0 0
  %1059 = vmatpush1.bf16.msra.mxu0 %v908
  %1060 = vmatprep.subr.bf16.mxu0 0
  %1061 = vmatpush1.bf16.msra.mxu0 %v909
  %1062 = vmatprep.subr.bf16.mxu0 0
  %1063 = vmatpush1.bf16.msra.mxu0 %v910
  %1064 = vmatprep.subr.bf16.mxu0 0
  %1065 = vmatpush1.bf16.msra.mxu0 %v911
  %1066 = vmatprep.subr.bf16.mxu0 0
  %1067 = vmatpush1.bf16.msra.mxu0 %v912
  %1068 = vmatprep.subr.bf16.mxu0 0
  %1069 = vmatpush1.bf16.msra.mxu0 %v913
  %1070 = vmatprep.subr.bf16.mxu0 0
  %1071 = vmatpush1.bf16.msra.mxu0 %v914
  %1072 = vmatprep.subr.bf16.mxu0 0
  %1073 = vmatpush1.bf16.msra.mxu0 %v915
  %1074 = vmatprep.subr.bf16.mxu0 0
  %1075 = vmatpush1.bf16.msra.mxu0 %v916
  %1076 = vmatprep.subr.bf16.mxu0 0
  %1077 = vmatpush1.bf16.msra.mxu0 %v917
  %1078 = vmatprep.mubr.bf16.mxu0 %v471
  %1079 = vmatmul.mubr.bf16.gmra.mrb[0].mxu0 %v470
  %v1080 = vpop.f32.mrb[0].mxu0
  %v1081 = vadd.f32 %v244, %v1080
  %v1082 = vpop.f32.mrb[0].mxu0
  %v1083 = vpop.f32.mrb[0].mxu0
  %v1084 = vadd.f32 %v244, %v1083
  %v1085 = vpop.f32.mrb[0].mxu0
  %1086 = vmatprep.mubr.bf16.mxu0 %v480
  %1087 = vmatmul.mubr.bf16.gmra.mrb[0].mxu0 %v479
  %v1088 = vpop.f32.mrb[0].mxu0
  %v1089 = vadd.f32 %v244, %v1088
  %v1090 = vpop.f32.mrb[0].mxu0
  %v1091 = vpop.f32.mrb[0].mxu0
  %v1092 = vadd.f32 %v244, %v1091
  %v1093 = vpop.f32.mrb[0].mxu0
  %1094 = vmatprep.mubr.bf16.mxu0 %v489
  %1095 = vmatmul.mubr.bf16.gmra.mrb[0].mxu0 %v488
  %v1096 = vpop.f32.mrb[0].mxu0
  %v1097 = vadd.f32 %v244, %v1096
  %v1098 = vpop.f32.mrb[0].mxu0
  %v1099 = vpop.f32.mrb[0].mxu0
  %v1100 = vadd.f32 %v244, %v1099
  %v1101 = vpop.f32.mrb[0].mxu0
  %1102 = vmatprep.mubr.bf16.mxu0 %v498
  %1103 = vmatmul.mubr.bf16.gmra.mrb[0].mxu0 %v497
  %v1104 = vpop.f32.mrb[0].mxu0
  %v1105 = vadd.f32 %v244, %v1104
  %v1106 = vpop.f32.mrb[0].mxu0
  %v1107 = vpop.f32.mrb[0].mxu0
  %v1108 = vadd.f32 %v244, %v1107
  %v1109 = vpop.f32.mrb[0].mxu0
  %1110 = vmatprep.mubr.bf16.mxu0 %v507
  %1111 = vmatmul.mubr.bf16.gmra.mrb[0].mxu0 %v506
  %v1112 = vpop.f32.mrb[0].mxu0
  %v1113 = vadd.f32 %v244, %v1112
  %v1114 = vpop.f32.mrb[0].mxu0
  %v1115 = vpop.f32.mrb[0].mxu0
  %v1116 = vadd.f32 %v244, %v1115
  %v1117 = vpop.f32.mrb[0].mxu0
  %1118 = vmatprep.mubr.bf16.mxu0 %v516
  %1119 = vmatmul.mubr.bf16.gmra.mrb[0].mxu0 %v515
  %v1120 = vpop.f32.mrb[0].mxu0
  %v1121 = vadd.f32 %v244, %v1120
  %v1122 = vpop.f32.mrb[0].mxu0
  %v1123 = vpop.f32.mrb[0].mxu0
  %v1124 = vadd.f32 %v244, %v1123
  %v1125 = vpop.f32.mrb[0].mxu0
  %1126 = vmatprep.mubr.bf16.mxu0 %v525
  %1127 = vmatmul.mubr.bf16.gmra.mrb[0].mxu0 %v524
  %v1128 = vpop.f32.mrb[0].mxu0
  %v1129 = vadd.f32 %v244, %v1128
  %v1130 = vpop.f32.mrb[0].mxu0
  %v1131 = vpop.f32.mrb[0].mxu0
  %v1132 = vadd.f32 %v244, %v1131
  %v1133 = vpop.f32.mrb[0].mxu0
  %1134 = vmatprep.mubr.bf16.mxu0 %v534
  %1135 = vmatmul.mubr.bf16.gmra.mrb[0].mxu0 %v533
  %v1136 = vpop.f32.mrb[0].mxu0
  %v1137 = vadd.f32 %v244, %v1136
  %v1138 = vpop.f32.mrb[0].mxu0
  %v1139 = vpop.f32.mrb[0].mxu0
  %v1140 = vadd.f32 %v244, %v1139
  %v1141 = vpop.f32.mrb[0].mxu0
  %1142 = vdwg.mxu0
  %1143 = vmatprep.subr.bf16.mxu0 0
  %1144 = vmatpush1.bf16.msra.mxu0 %v918
  %1145 = vmatprep.subr.bf16.mxu0 0
  %1146 = vmatpush1.bf16.msra.mxu0 %v919
  %1147 = vmatprep.subr.bf16.mxu0 0
  %1148 = vmatpush1.bf16.msra.mxu0 %v920
  %1149 = vmatprep.subr.bf16.mxu0 0
  %1150 = vmatpush1.bf16.msra.mxu0 %v921
  %1151 = vmatprep.subr.bf16.mxu0 0
  %1152 = vmatpush1.bf16.msra.mxu0 %v922
  %1153 = vmatprep.subr.bf16.mxu0 0
  %1154 = vmatpush1.bf16.msra.mxu0 %v923
  %1155 = vmatprep.subr.bf16.mxu0 0
  %1156 = vmatpush1.bf16.msra.mxu0 %v924
  %1157 = vmatprep.subr.bf16.mxu0 0
  %1158 = vmatpush1.bf16.msra.mxu0 %v925
  %1159 = vmatprep.subr.bf16.mxu0 0
  %1160 = vmatpush1.bf16.msra.mxu0 %v926
  %1161 = vmatprep.subr.bf16.mxu0 0
  %1162 = vmatpush1.bf16.msra.mxu0 %v927
  %1163 = vmatprep.subr.bf16.mxu0 0
  %1164 = vmatpush1.bf16.msra.mxu0 %v928
  %1165 = vmatprep.subr.bf16.mxu0 0
  %1166 = vmatpush1.bf16.msra.mxu0 %v929
  %1167 = vmatprep.subr.bf16.mxu0 0
  %1168 = vmatpush1.bf16.msra.mxu0 %v930
  %1169 = vmatprep.subr.bf16.mxu0 0
  %1170 = vmatpush1.bf16.msra.mxu0 %v931
  %1171 = vmatprep.subr.bf16.mxu0 0
  %1172 = vmatpush1.bf16.msra.mxu0 %v932
  %1173 = vmatprep.subr.bf16.mxu0 0
  %1174 = vmatpush1.bf16.msra.mxu0 %v933
  %1175 = vmatprep.mubr.bf16.mxu0 %v473
  %1176 = vmatmul.mubr.bf16.gmra.mrb[0].mxu0 %v472
  %v1177 = vpop.f32.mrb[0].mxu0
  %v1178 = vadd.f32 %v1081, %v1177
  %v1179 = vpop.f32.mrb[0].mxu0
  %v1180 = vpop.f32.mrb[0].mxu0
  %v1181 = vadd.f32 %v1084, %v1180
  %v1182 = vpop.f32.mrb[0].mxu0
  %1183 = vmatprep.mubr.bf16.mxu0 %v482
  %1184 = vmatmul.mubr.bf16.gmra.mrb[0].mxu0 %v481
  %v1185 = vpop.f32.mrb[0].mxu0
  %v1186 = vadd.f32 %v1089, %v1185
  %v1187 = vpop.f32.mrb[0].mxu0
  %v1188 = vpop.f32.mrb[0].mxu0
  %v1189 = vadd.f32 %v1092, %v1188
  %v1190 = vpop.f32.mrb[0].mxu0
  %1191 = vmatprep.mubr.bf16.mxu0 %v491
  %1192 = vmatmul.mubr.bf16.gmra.mrb[0].mxu0 %v490
  %v1193 = vpop.f32.mrb[0].mxu0
  %v1194 = vadd.f32 %v1097, %v1193
  %v1195 = vpop.f32.mrb[0].mxu0
  %v1196 = vpop.f32.mrb[0].mxu0
  %v1197 = vadd.f32 %v1100, %v1196
  %v1198 = vpop.f32.mrb[0].mxu0
  %1199 = vmatprep.mubr.bf16.mxu0 %v500
  %1200 = vmatmul.mubr.bf16.gmra.mrb[0].mxu0 %v499
  %v1201 = vpop.f32.mrb[0].mxu0
  %v1202 = vadd.f32 %v1105, %v1201
  %v1203 = vpop.f32.mrb[0].mxu0
  %v1204 = vpop.f32.mrb[0].mxu0
  %v1205 = vadd.f32 %v1108, %v1204
  %v1206 = vpop.f32.mrb[0].mxu0
  %1207 = vmatprep.mubr.bf16.mxu0 %v509
  %1208 = vmatmul.mubr.bf16.gmra.mrb[0].mxu0 %v508
  %v1209 = vpop.f32.mrb[0].mxu0
  %v1210 = vadd.f32 %v1113, %v1209
  %v1211 = vpop.f32.mrb[0].mxu0
  %v1212 = vpop.f32.mrb[0].mxu0
  %v1213 = vadd.f32 %v1116, %v1212
  %v1214 = vpop.f32.mrb[0].mxu0
  %1215 = vmatprep.mubr.bf16.mxu0 %v518
  %1216 = vmatmul.mubr.bf16.gmra.mrb[0].mxu0 %v517
  %v1217 = vpop.f32.mrb[0].mxu0
  %v1218 = vadd.f32 %v1121, %v1217
  %v1219 = vpop.f32.mrb[0].mxu0
  %v1220 = vpop.f32.mrb[0].mxu0
  %v1221 = vadd.f32 %v1124, %v1220
  %v1222 = vpop.f32.mrb[0].mxu0
  %1223 = vmatprep.mubr.bf16.mxu0 %v527
  %1224 = vmatmul.mubr.bf16.gmra.mrb[0].mxu0 %v526
  %v1225 = vpop.f32.mrb[0].mxu0
  %v1226 = vadd.f32 %v1129, %v1225
  %v1227 = vpop.f32.mrb[0].mxu0
  %v1228 = vpop.f32.mrb[0].mxu0
  %v1229 = vadd.f32 %v1132, %v1228
  %v1230 = vpop.f32.mrb[0].mxu0
  %1231 = vmatprep.mubr.bf16.mxu0 %v536
  %1232 = vmatmul.mubr.bf16.gmra.mrb[0].mxu0 %v535
  %v1233 = vpop.f32.mrb[0].mxu0
  %v1234 = vadd.f32 %v1137, %v1233
  %v1235 = vpop.f32.mrb[0].mxu0
  %v1236 = vpop.f32.mrb[0].mxu0
  %v1237 = vadd.f32 %v1140, %v1236
  %v1238 = vpop.f32.mrb[0].mxu0
  %1239 = vdwg.mxu0
  %1240 = vmatprep.subr.bf16.mxu0 0
  %1241 = vmatpush1.bf16.msra.mxu0 %v934
  %1242 = vmatprep.subr.bf16.mxu0 0
  %1243 = vmatpush1.bf16.msra.mxu0 %v935
  %1244 = vmatprep.subr.bf16.mxu0 0
  %1245 = vmatpush1.bf16.msra.mxu0 %v936
  %1246 = vmatprep.subr.bf16.mxu0 0
  %1247 = vmatpush1.bf16.msra.mxu0 %v937
  %1248 = vmatprep.subr.bf16.mxu0 0
  %1249 = vmatpush1.bf16.msra.mxu0 %v938
  %1250 = vmatprep.subr.bf16.mxu0 0
  %1251 = vmatpush1.bf16.msra.mxu0 %v939
  %1252 = vmatprep.subr.bf16.mxu0 0
  %1253 = vmatpush1.bf16.msra.mxu0 %v940
  %1254 = vmatprep.subr.bf16.mxu0 0
  %1255 = vmatpush1.bf16.msra.mxu0 %v941
  %1256 = vmatprep.subr.bf16.mxu0 0
  %1257 = vmatpush1.bf16.msra.mxu0 %v942
  %1258 = vmatprep.subr.bf16.mxu0 0
  %1259 = vmatpush1.bf16.msra.mxu0 %v943
  %1260 = vmatprep.subr.bf16.mxu0 0
  %1261 = vmatpush1.bf16.msra.mxu0 %v944
  %1262 = vmatprep.subr.bf16.mxu0 0
  %1263 = vmatpush1.bf16.msra.mxu0 %v945
  %1264 = vmatprep.subr.bf16.mxu0 0
  %1265 = vmatpush1.bf16.msra.mxu0 %v946
  %1266 = vmatprep.subr.bf16.mxu0 0
  %1267 = vmatpush1.bf16.msra.mxu0 %v947
  %1268 = vmatprep.subr.bf16.mxu0 0
  %1269 = vmatpush1.bf16.msra.mxu0 %v948
  %1270 = vmatprep.subr.bf16.mxu0 0
  %1271 = vmatpush1.bf16.msra.mxu0 %v949
  %1272 = vmatprep.mubr.bf16.mxu0 %v475
  %1273 = vmatmul.mubr.bf16.gmra.mrb[0].mxu0 %v474
  %v1274 = vpop.f32.mrb[0].mxu0
  %v1275 = vadd.f32 %v1178, %v1274
  %v1276 = vpop.f32.mrb[0].mxu0
  %v1277 = vpop.f32.mrb[0].mxu0
  %v1278 = vadd.f32 %v1181, %v1277
  %v1279 = vpop.f32.mrb[0].mxu0
  %1280 = vmatprep.mubr.bf16.mxu0 %v484
  %1281 = vmatmul.mubr.bf16.gmra.mrb[0].mxu0 %v483
  %v1282 = vpop.f32.mrb[0].mxu0
  %v1283 = vadd.f32 %v1186, %v1282
  %v1284 = vpop.f32.mrb[0].mxu0
  %v1285 = vpop.f32.mrb[0].mxu0
  %v1286 = vadd.f32 %v1189, %v1285
  %v1287 = vpop.f32.mrb[0].mxu0
  %1288 = vmatprep.mubr.bf16.mxu0 %v493
  %1289 = vmatmul.mubr.bf16.gmra.mrb[0].mxu0 %v492
  %v1290 = vpop.f32.mrb[0].mxu0
  %v1291 = vadd.f32 %v1194, %v1290
  %v1292 = vpop.f32.mrb[0].mxu0
  %v1293 = vpop.f32.mrb[0].mxu0
  %v1294 = vadd.f32 %v1197, %v1293
  %v1295 = vpop.f32.mrb[0].mxu0
  %1296 = vmatprep.mubr.bf16.mxu0 %v502
  %1297 = vmatmul.mubr.bf16.gmra.mrb[0].mxu0 %v501
  %v1298 = vpop.f32.mrb[0].mxu0
  %v1299 = vadd.f32 %v1202, %v1298
  %v1300 = vpop.f32.mrb[0].mxu0
  %v1301 = vpop.f32.mrb[0].mxu0
  %v1302 = vadd.f32 %v1205, %v1301
  %v1303 = vpop.f32.mrb[0].mxu0
  %1304 = vmatprep.mubr.bf16.mxu0 %v511
  %1305 = vmatmul.mubr.bf16.gmra.mrb[0].mxu0 %v510
  %v1306 = vpop.f32.mrb[0].mxu0
  %v1307 = vadd.f32 %v1210, %v1306
  %v1308 = vpop.f32.mrb[0].mxu0
  %v1309 = vpop.f32.mrb[0].mxu0
  %v1310 = vadd.f32 %v1213, %v1309
  %v1311 = vpop.f32.mrb[0].mxu0
  %1312 = vmatprep.mubr.bf16.mxu0 %v520
  %1313 = vmatmul.mubr.bf16.gmra.mrb[0].mxu0 %v519
  %v1314 = vpop.f32.mrb[0].mxu0
  %v1315 = vadd.f32 %v1218, %v1314
  %v1316 = vpop.f32.mrb[0].mxu0
  %v1317 = vpop.f32.mrb[0].mxu0
  %v1318 = vadd.f32 %v1221, %v1317
  %v1319 = vpop.f32.mrb[0].mxu0
  %1320 = vmatprep.mubr.bf16.mxu0 %v529
  %1321 = vmatmul.mubr.bf16.gmra.mrb[0].mxu0 %v528
  %v1322 = vpop.f32.mrb[0].mxu0
  %v1323 = vadd.f32 %v1226, %v1322
  %v1324 = vpop.f32.mrb[0].mxu0
  %v1325 = vpop.f32.mrb[0].mxu0
  %v1326 = vadd.f32 %v1229, %v1325
  %v1327 = vpop.f32.mrb[0].mxu0
  %1328 = vmatprep.mubr.bf16.mxu0 %v538
  %1329 = vmatmul.mubr.bf16.gmra.mrb[0].mxu0 %v537
  %v1330 = vpop.f32.mrb[0].mxu0
  %v1331 = vadd.f32 %v1234, %v1330
  %v1332 = vpop.f32.mrb[0].mxu0
  %v1333 = vpop.f32.mrb[0].mxu0
  %v1334 = vadd.f32 %v1237, %v1333
  %v1335 = vpop.f32.mrb[0].mxu0
  %1336 = vdwg.mxu0
  %1337 = vmatprep.subr.bf16.mxu0 0
  %1338 = vmatpush1.bf16.msra.mxu0 %v950
  %1339 = vmatprep.subr.bf16.mxu0 0
  %1340 = vmatpush1.bf16.msra.mxu0 %v951
  %1341 = vmatprep.subr.bf16.mxu0 0
  %1342 = vmatpush1.bf16.msra.mxu0 %v952
  %1343 = vmatprep.subr.bf16.mxu0 0
  %1344 = vmatpush1.bf16.msra.mxu0 %v953
  %1345 = vmatprep.subr.bf16.mxu0 0
  %1346 = vmatpush1.bf16.msra.mxu0 %v954
  %1347 = vmatprep.subr.bf16.mxu0 0
  %1348 = vmatpush1.bf16.msra.mxu0 %v955
  %1349 = vmatprep.subr.bf16.mxu0 0
  %1350 = vmatpush1.bf16.msra.mxu0 %v956
  %1351 = vmatprep.subr.bf16.mxu0 0
  %1352 = vmatpush1.bf16.msra.mxu0 %v957
  %1353 = vmatprep.subr.bf16.mxu0 0
  %1354 = vmatpush1.bf16.msra.mxu0 %v958
  %1355 = vmatprep.subr.bf16.mxu0 0
  %1356 = vmatpush1.bf16.msra.mxu0 %v959
  %1357 = vmatprep.subr.bf16.mxu0 0
  %1358 = vmatpush1.bf16.msra.mxu0 %v960
  %1359 = vmatprep.subr.bf16.mxu0 0
  %1360 = vmatpush1.bf16.msra.mxu0 %v961
  %1361 = vmatprep.subr.bf16.mxu0 0
  %1362 = vmatpush1.bf16.msra.mxu0 %v962
  %1363 = vmatprep.subr.bf16.mxu0 0
  %1364 = vmatpush1.bf16.msra.mxu0 %v963
  %1365 = vmatprep.subr.bf16.mxu0 0
  %1366 = vmatpush1.bf16.msra.mxu0 %v964
  %1367 = vmatprep.subr.bf16.mxu0 0
  %1368 = vmatpush1.bf16.msra.mxu0 %v965
  %1369 = vmatprep.mubr.bf16.mxu0 %v477
  %1370 = vmatmul.mubr.bf16.gmra.mrb[0].mxu0 %v476
  %v1371 = vpop.f32.mrb[0].mxu0
  %v1372 = vadd.f32 %v1275, %v1371
  %v1373 = vpop.f32.mrb[0].mxu0
  %v1374 = vpop.f32.mrb[0].mxu0
  %v1375 = vadd.f32 %v1278, %v1374
  %v1376 = vpop.f32.mrb[0].mxu0
  %1377 = vmatprep.mubr.bf16.mxu0 %v486
  %1378 = vmatmul.mubr.bf16.gmra.mrb[0].mxu0 %v485
  %v1379 = vpop.f32.mrb[0].mxu0
  %v1380 = vadd.f32 %v1283, %v1379
  %v1381 = vpop.f32.mrb[0].mxu0
  %v1382 = vpop.f32.mrb[0].mxu0
  %v1383 = vadd.f32 %v1286, %v1382
  %v1384 = vpop.f32.mrb[0].mxu0
  %1385 = vmatprep.mubr.bf16.mxu0 %v495
  %1386 = vmatmul.mubr.bf16.gmra.mrb[0].mxu0 %v494
  %v1387 = vpop.f32.mrb[0].mxu0
  %v1388 = vadd.f32 %v1291, %v1387
  %v1389 = vpop.f32.mrb[0].mxu0
  %v1390 = vpop.f32.mrb[0].mxu0
  %v1391 = vadd.f32 %v1294, %v1390
  %v1392 = vpop.f32.mrb[0].mxu0
  %1393 = vmatprep.mubr.bf16.mxu0 %v504
  %1394 = vmatmul.mubr.bf16.gmra.mrb[0].mxu0 %v503
  %v1395 = vpop.f32.mrb[0].mxu0
  %v1396 = vadd.f32 %v1299, %v1395
  %v1397 = vpop.f32.mrb[0].mxu0
  %v1398 = vpop.f32.mrb[0].mxu0
  %v1399 = vadd.f32 %v1302, %v1398
  %v1400 = vpop.f32.mrb[0].mxu0
  %1401 = vmatprep.mubr.bf16.mxu0 %v513
  %1402 = vmatmul.mubr.bf16.gmra.mrb[0].mxu0 %v512
  %v1403 = vpop.f32.mrb[0].mxu0
  %v1404 = vadd.f32 %v1307, %v1403
  %v1405 = vpop.f32.mrb[0].mxu0
  %v1406 = vpop.f32.mrb[0].mxu0
  %v1407 = vadd.f32 %v1310, %v1406
  %v1408 = vpop.f32.mrb[0].mxu0
  %1409 = vmatprep.mubr.bf16.mxu0 %v522
  %1410 = vmatmul.mubr.bf16.gmra.mrb[0].mxu0 %v521
  %v1411 = vpop.f32.mrb[0].mxu0
  %v1412 = vadd.f32 %v1315, %v1411
  %v1413 = vpop.f32.mrb[0].mxu0
  %v1414 = vpop.f32.mrb[0].mxu0
  %v1415 = vadd.f32 %v1318, %v1414
  %v1416 = vpop.f32.mrb[0].mxu0
  %1417 = vmatprep.mubr.bf16.mxu0 %v531
  %1418 = vmatmul.mubr.bf16.gmra.mrb[0].mxu0 %v530
  %v1419 = vpop.f32.mrb[0].mxu0
  %v1420 = vadd.f32 %v1323, %v1419
  %v1421 = vpop.f32.mrb[0].mxu0
  %v1422 = vpop.f32.mrb[0].mxu0
  %v1423 = vadd.f32 %v1326, %v1422
  %v1424 = vpop.f32.mrb[0].mxu0
  %1425 = vmatprep.mubr.bf16.mxu0 %v540
  %1426 = vmatmul.mubr.bf16.gmra.mrb[0].mxu0 %v539
  %v1427 = vpop.f32.mrb[0].mxu0
  %v1428 = vadd.f32 %v1331, %v1427
  %v1429 = vpop.f32.mrb[0].mxu0
  %v1430 = vpop.f32.mrb[0].mxu0
  %v1431 = vadd.f32 %v1334, %v1430
  %v1432 = vpop.f32.mrb[0].mxu0
  %1433 = vdwg.mxu0
  %1434 = vmatprep.subr.bf16.mxu0 0
  %1435 = vmatpush1.bf16.msra.mxu0 %v966
  %1436 = vmatprep.subr.bf16.mxu0 0
  %1437 = vmatpush1.bf16.msra.mxu0 %v967
  %1438 = vmatprep.subr.bf16.mxu0 0
  %1439 = vmatpush1.bf16.msra.mxu0 %v968
  %1440 = vmatprep.subr.bf16.mxu0 0
  %1441 = vmatpush1.bf16.msra.mxu0 %v969
  %1442 = vmatprep.subr.bf16.mxu0 0
  %1443 = vmatpush1.bf16.msra.mxu0 %v970
  %1444 = vmatprep.subr.bf16.mxu0 0
  %1445 = vmatpush1.bf16.msra.mxu0 %v971
  %1446 = vmatprep.subr.bf16.mxu0 0
  %1447 = vmatpush1.bf16.msra.mxu0 %v972
  %1448 = vmatprep.subr.bf16.mxu0 0
  %1449 = vmatpush1.bf16.msra.mxu0 %v973
  %1450 = vmatprep.subr.bf16.mxu0 0
  %1451 = vmatpush1.bf16.msra.mxu0 0
  %1452 = vmatprep.subr.bf16.mxu0 0
  %1453 = vmatpush1.bf16.msra.mxu0 0
  %1454 = vmatprep.subr.bf16.mxu0 0
  %1455 = vmatpush1.bf16.msra.mxu0 0
  %1456 = vmatprep.subr.bf16.mxu0 0
  %1457 = vmatpush1.bf16.msra.mxu0 0
  %1458 = vmatprep.subr.bf16.mxu0 0
  %1459 = vmatpush1.bf16.msra.mxu0 0
  %1460 = vmatprep.subr.bf16.mxu0 0
  %1461 = vmatpush1.bf16.msra.mxu0 0
  %1462 = vmatprep.subr.bf16.mxu0 0
  %1463 = vmatpush1.bf16.msra.mxu0 0
  %1464 = vmatprep.subr.bf16.mxu0 0
  %1465 = vmatpush1.bf16.msra.mxu0 0
  %1466 = vmatprep.mubr.bf16.mxu0 0
  %1467 = vmatmul.mubr.bf16.gmra.mrb[0].mxu0 %v478
  %v1468 = vpop.f32.mrb[0].mxu0
  %v1469 = vadd.f32 %v1372, %v1468
  %v1470 = vpop.f32.mrb[0].mxu0
  %v1471 = vpop.f32.mrb[0].mxu0
  %v1472 = vadd.f32 %v1375, %v1471
  %v1473 = vpop.f32.mrb[0].mxu0
  %1474 = vmatprep.mubr.bf16.mxu0 0
  %1475 = vmatmul.mubr.bf16.gmra.mrb[0].mxu0 %v487
  %v1476 = vpop.f32.mrb[0].mxu0
  %v1477 = vadd.f32 %v1380, %v1476
  %v1478 = vpop.f32.mrb[0].mxu0
  %v1479 = vpop.f32.mrb[0].mxu0
  %v1480 = vadd.f32 %v1383, %v1479
  %v1481 = vpop.f32.mrb[0].mxu0
  %1482 = vmatprep.mubr.bf16.mxu0 0
  %1483 = vmatmul.mubr.bf16.gmra.mrb[0].mxu0 %v496
  %v1484 = vpop.f32.mrb[0].mxu0
  %v1485 = vadd.f32 %v1388, %v1484
  %v1486 = vpop.f32.mrb[0].mxu0
  %v1487 = vpop.f32.mrb[0].mxu0
  %v1488 = vadd.f32 %v1391, %v1487
  %v1489 = vpop.f32.mrb[0].mxu0
  %1490 = vmatprep.mubr.bf16.mxu0 0
  %1491 = vmatmul.mubr.bf16.gmra.mrb[0].mxu0 %v505
  %v1492 = vpop.f32.mrb[0].mxu0
  %v1493 = vadd.f32 %v1396, %v1492
  %v1494 = vpop.f32.mrb[0].mxu0
  %v1495 = vpop.f32.mrb[0].mxu0
  %v1496 = vadd.f32 %v1399, %v1495
  %v1497 = vpop.f32.mrb[0].mxu0
  %1498 = vmatprep.mubr.bf16.mxu0 0
  %1499 = vmatmul.mubr.bf16.gmra.mrb[0].mxu0 %v514
  %v1500 = vpop.f32.mrb[0].mxu0
  %v1501 = vadd.f32 %v1404, %v1500
  %v1502 = vpop.f32.mrb[0].mxu0
  %v1503 = vpop.f32.mrb[0].mxu0
  %v1504 = vadd.f32 %v1407, %v1503
  %v1505 = vpop.f32.mrb[0].mxu0
  %1506 = vmatprep.mubr.bf16.mxu0 0
  %1507 = vmatmul.mubr.bf16.gmra.mrb[0].mxu0 %v523
  %v1508 = vpop.f32.mrb[0].mxu0
  %v1509 = vadd.f32 %v1412, %v1508
  %v1510 = vpop.f32.mrb[0].mxu0
  %v1511 = vpop.f32.mrb[0].mxu0
  %v1512 = vadd.f32 %v1415, %v1511
  %v1513 = vpop.f32.mrb[0].mxu0
  %1514 = vmatprep.mubr.bf16.mxu0 0
  %1515 = vmatmul.mubr.bf16.gmra.mrb[0].mxu0 %v532
  %v1516 = vpop.f32.mrb[0].mxu0
  %v1517 = vadd.f32 %v1420, %v1516
  %v1518 = vpop.f32.mrb[0].mxu0
  %v1519 = vpop.f32.mrb[0].mxu0
  %v1520 = vadd.f32 %v1423, %v1519
  %v1521 = vpop.f32.mrb[0].mxu0
  %1522 = vmatprep.mubr.bf16.mxu0 0
  %1523 = vmatmul.mubr.bf16.gmra.mrb[0].mxu0 %v541
  %v1524 = vpop.f32.mrb[0].mxu0
  %v1525 = vadd.f32 %v1428, %v1524
  %v1526 = vpop.f32.mrb[0].mxu0
  %v1527 = vpop.f32.mrb[0].mxu0
  %v1528 = vadd.f32 %v1431, %v1527
  %v1529 = vpop.f32.mrb[0].mxu0
  %1530 = vdwg.mxu0
  %v1531 = vpack.c.bf16 %v1472, %v1469
  %v1532 = vpack.c.bf16 %v1480, %v1477
  %v1533 = vpack.c.bf16 %v1488, %v1485
  %v1534 = vpack.c.bf16 %v1496, %v1493
  %v1535 = vpack.c.bf16 %v1504, %v1501
  %v1536 = vpack.c.bf16 %v1512, %v1509
  %v1537 = vpack.c.bf16 %v1520, %v1517
  %v1538 = vpack.c.bf16 %v1528, %v1525
  %v1547 = vunpack.c.l.b16 %v1531
  %v1548 = vunpack.c.h.b16 %v1531
  %v1549 = vunpack.c.l.b16 %v1532
  %v1550 = vunpack.c.h.b16 %v1532
  %v1551 = vunpack.c.l.b16 %v1533
  %v1552 = vunpack.c.h.b16 %v1533
  %v1553 = vunpack.c.l.b16 %v1534
  %v1554 = vunpack.c.h.b16 %v1534
  %v1555 = vunpack.c.l.b16 %v1535
  %v1556 = vunpack.c.h.b16 %v1535
  %v1557 = vunpack.c.l.b16 %v1536
  %v1558 = vunpack.c.h.b16 %v1536
  %v1559 = vunpack.c.l.b16 %v1537
  %v1560 = vunpack.c.h.b16 %v1537
  %v1561 = vunpack.c.l.b16 %v1538
  %v1562 = vunpack.c.h.b16 %v1538
  %v1563 = vpack.c.b16 %v1547, %v1547
  %v1564 = vpack.c.b16 %v1548, %v1548
  %v1565 = vpack.c.b16 %v1549, %v1549
  %v1566 = vpack.c.b16 %v1550, %v1550
  %v1567 = vpack.c.b16 %v1551, %v1551
  %v1568 = vpack.c.b16 %v1552, %v1552
  %v1569 = vpack.c.b16 %v1553, %v1553
  %v1570 = vpack.c.b16 %v1554, %v1554
  %v1571 = vpack.c.b16 %v1555, %v1555
  %v1572 = vpack.c.b16 %v1556, %v1556
  %v1573 = vpack.c.b16 %v1557, %v1557
  %v1574 = vpack.c.b16 %v1558, %v1558
  %v1575 = vpack.c.b16 %v1559, %v1559
  %v1576 = vpack.c.b16 %v1560, %v1560
  %v1577 = vpack.c.b16 %v1561, %v1561
  %v1578 = vpack.c.b16 %v1562, %v1562
  %1595 = vst [vmem:[%s3] sm:$0xf] %v1563
  %1596 = vst [vmem:[%s3 + $0x4] sm:$0xf] %v1564
  %1597 = vst [vmem:[%s3 + $0x8] sm:$0xf] %v1565
  %1598 = vst [vmem:[%s3 + $0xc] sm:$0xf] %v1566
  %1599 = vst [vmem:[%s3 + $0x10] sm:$0xf] %v1567
  %1600 = vst [vmem:[%s3 + $0x14] sm:$0xf] %v1568
  %1601 = vst [vmem:[%s3 + $0x18] sm:$0xf] %v1569
  %1602 = vst [vmem:[%s3 + $0x1c] sm:$0xf] %v1570
  %1603 = vst [vmem:[%s3 + $0x20] sm:$0xf] %v1571
  %1604 = vst [vmem:[%s3 + $0x24] sm:$0xf] %v1572
  %1605 = vst [vmem:[%s3 + $0x28] sm:$0xf] %v1573
  %1606 = vst [vmem:[%s3 + $0x2c] sm:$0xf] %v1574
  %1607 = vst [vmem:[%s3 + $0x30] sm:$0xf] %v1575
  %1608 = vst [vmem:[%s3 + $0x34] sm:$0xf] %v1576
  %1609 = vst [vmem:[%s3 + $0x38] sm:$0xf] %v1577
  %1610 = vst [vmem:[%s3 + $0x3c] sm:$0xf] %v1578
  // Predicated region
  $region14: #{_lambda_.21} parent=0 // pred_check
    _
  $region15: #{_lambda_.21} parent=0 // pred_check_branch
    %1612 = sbr.rel (0) target = $region17
  $region16: #{_lambda_.21} parent=0 // pred_region
    _
  $region17: #{_lambda_.21} parent=0 // pred_fallthru
    _
  // Predicated region
  $region18: #{_lambda_.21} parent=0 // pred_check
    _
  $region19: #{_lambda_.21} parent=0 // pred_check_branch
    %1614 = sbr.rel (0) target = $region21
  $region20: #{_lambda_.21} parent=0 // pred_region
    _
  $region21: #{_lambda_.21} parent=0 // pred_fallthru
    _

// kernel: _lambda_.22
$region0: #{_lambda_.22}
  #allocation0 [shape = 'u32[]', space=smem, size = 0x4, offset = 0x4, fixed_abs, tag = 'smem constant byte address 0x4 - core index']
  #allocation1 [shape = 'u32[144,128]{1,0:T(1,128)}', space=vmem, size = 0x12000, scoped, tag = 'internal scratch']
  %s0 = inlined_call_operand.vmem [shape: bf16[32,1152], index: 0, kind: input, shape index: {}]
  %s1 = inlined_call_operand.vmem [shape: bf16[1152,128], index: 1, kind: input, shape index: {}]
  %s2 = inlined_call_operand.vmem [shape: f32[1,128], index: 2, kind: input, shape index: {}]
  %s3 = inlined_call_operand.vmem [shape: bf16[32,128], index: 3, kind: output, shape index: {}]
  %s4 = sld [smem:[#allocation0]]
  $region22: #{_lambda_.22} parent=0
    _
  %s6 = ssub.s32 1, %s4
  %s7 = scalar_select 0, %s6, %s4
  // Predicated region
  $region2: #{_lambda_.22} parent=0 // pred_check
    _
  $region3: #{_lambda_.22} parent=0 // pred_check_branch
    %9 = sbr.rel (0) target = $region5
  $region4: #{_lambda_.22} parent=0 // pred_region
    _
  $region5: #{_lambda_.22} parent=0 // pred_fallthru
    _
  // Predicated region
  $region6: #{_lambda_.22} parent=0 // pred_check
    _
  $region7: #{_lambda_.22} parent=0 // pred_check_branch
    %11 = sbr.rel (0) target = $region9
  $region8: #{_lambda_.22} parent=0 // pred_region
    _
  $region9: #{_lambda_.22} parent=0 // pred_fallthru
    _
  // Predicated region
  $region10: #{_lambda_.22} parent=0 // pred_check
    _
  $region11: #{_lambda_.22} parent=0 // pred_check_branch
    %13 = sbr.rel (0) target = $region13
  $region12: #{_lambda_.22} parent=0 // pred_region
    _
  $region13: #{_lambda_.22} parent=0 // pred_fallthru
    _
  %v15 = vld [vmem:[%s0] sm:$0xff]
  %v16 = vld [vmem:[%s0 + $0x8] sm:$0xff]
  %v17 = vld [vmem:[%s0 + $0x10] sm:$0xff]
  %v18 = vld [vmem:[%s0 + $0x18] sm:$0xff]
  %v19 = vld [vmem:[%s0 + $0x20] sm:$0xf]
  %v20 = vld [vmem:[%s0 + $0x24] sm:$0xff]
  %v21 = vld [vmem:[%s0 + $0x2c] sm:$0xff]
  %v22 = vld [vmem:[%s0 + $0x34] sm:$0xff]
  %v23 = vld [vmem:[%s0 + $0x3c] sm:$0xff]
  %v24 = vld [vmem:[%s0 + $0x44] sm:$0xf]
  %v25 = vld [vmem:[%s0 + $0x48] sm:$0xff]
  %v26 = vld [vmem:[%s0 + $0x50] sm:$0xff]
  %v27 = vld [vmem:[%s0 + $0x58] sm:$0xff]
  %v28 = vld [vmem:[%s0 + $0x60] sm:$0xff]
  %v29 = vld [vmem:[%s0 + $0x68] sm:$0xf]
  %v30 = vld [vmem:[%s0 + $0x6c] sm:$0xff]
  %v31 = vld [vmem:[%s0 + $0x74] sm:$0xff]
  %v32 = vld [vmem:[%s0 + $0x7c] sm:$0xff]
  %v33 = vld [vmem:[%s0 + $0x84] sm:$0xff]
  %v34 = vld [vmem:[%s0 + $0x8c] sm:$0xf]
  %v35 = vld [vmem:[%s1] sm:$0xf]
  %v36 = vld [vmem:[%s1 + $0x4] sm:$0xf]
  %v37 = vld [vmem:[%s1 + $0x8] sm:$0xf]
  %v38 = vld [vmem:[%s1 + $0xc] sm:$0xf]
  %v39 = vld [vmem:[%s1 + $0x10] sm:$0xf]
  %v40 = vld [vmem:[%s1 + $0x14] sm:$0xf]
  %v41 = vld [vmem:[%s1 + $0x18] sm:$0xf]
  %v42 = vld [vmem:[%s1 + $0x1c] sm:$0xf]
  %v43 = vld [vmem:[%s1 + $0x20] sm:$0xf]
  %v44 = vld [vmem:[%s1 + $0x24] sm:$0xf]
  %v45 = vld [vmem:[%s1 + $0x28] sm:$0xf]
  %v46 = vld [vmem:[%s1 + $0x2c] sm:$0xf]
  %v47 = vld [vmem:[%s1 + $0x30] sm:$0xf]
  %v48 = vld [vmem:[%s1 + $0x34] sm:$0xf]
  %v49 = vld [vmem:[%s1 + $0x38] sm:$0xf]
  %v50 = vld [vmem:[%s1 + $0x3c] sm:$0xf]
  %v51 = vld [vmem:[%s1 + $0x40] sm:$0xf]
  %v52 = vld [vmem:[%s1 + $0x44] sm:$0xf]
  %v53 = vld [vmem:[%s1 + $0x48] sm:$0xf]
  %v54 = vld [vmem:[%s1 + $0x4c] sm:$0xf]
  %v55 = vld [vmem:[%s1 + $0x50] sm:$0xf]
  %v56 = vld [vmem:[%s1 + $0x54] sm:$0xf]
  %v57 = vld [vmem:[%s1 + $0x58] sm:$0xf]
  %v58 = vld [vmem:[%s1 + $0x5c] sm:$0xf]
  %v59 = vld [vmem:[%s1 + $0x60] sm:$0xf]
  %v60 = vld [vmem:[%s1 + $0x64] sm:$0xf]
  %v61 = vld [vmem:[%s1 + $0x68] sm:$0xf]
  %v62 = vld [vmem:[%s1 + $0x6c] sm:$0xf]
  %v63 = vld [vmem:[%s1 + $0x70] sm:$0xf]
  %v64 = vld [vmem:[%s1 + $0x74] sm:$0xf]
  %v65 = vld [vmem:[%s1 + $0x78] sm:$0xf]
  %v66 = vld [vmem:[%s1 + $0x7c] sm:$0xf]
  %v67 = vld [vmem:[%s1 + $0x80] sm:$0xf]
  %v68 = vld [vmem:[%s1 + $0x84] sm:$0xf]
  %v69 = vld [vmem:[%s1 + $0x88] sm:$0xf]
  %v70 = vld [vmem:[%s1 + $0x8c] sm:$0xf]
  %v71 = vld [vmem:[%s1 + $0x90] sm:$0xf]
  %v72 = vld [vmem:[%s1 + $0x94] sm:$0xf]
  %v73 = vld [vmem:[%s1 + $0x98] sm:$0xf]
  %v74 = vld [vmem:[%s1 + $0x9c] sm:$0xf]
  %v75 = vld [vmem:[%s1 + $0xa0] sm:$0xf]
  %v76 = vld [vmem:[%s1 + $0xa4] sm:$0xf]
  %v77 = vld [vmem:[%s1 + $0xa8] sm:$0xf]
  %v78 = vld [vmem:[%s1 + $0xac] sm:$0xf]
  %v79 = vld [vmem:[%s1 + $0xb0] sm:$0xf]
  %v80 = vld [vmem:[%s1 + $0xb4] sm:$0xf]
  %v81 = vld [vmem:[%s1 + $0xb8] sm:$0xf]
  %v82 = vld [vmem:[%s1 + $0xbc] sm:$0xf]
  %v83 = vld [vmem:[%s1 + $0xc0] sm:$0xf]
  %v84 = vld [vmem:[%s1 + $0xc4] sm:$0xf]
  %v85 = vld [vmem:[%s1 + $0xc8] sm:$0xf]
  %v86 = vld [vmem:[%s1 + $0xcc] sm:$0xf]
  %v87 = vld [vmem:[%s1 + $0xd0] sm:$0xf]
  %v88 = vld [vmem:[%s1 + $0xd4] sm:$0xf]
  %v89 = vld [vmem:[%s1 + $0xd8] sm:$0xf]
  %v90 = vld [vmem:[%s1 + $0xdc] sm:$0xf]
  %v91 = vld [vmem:[%s1 + $0xe0] sm:$0xf]
  %v92 = vld [vmem:[%s1 + $0xe4] sm:$0xf]
  %v93 = vld [vmem:[%s1 + $0xe8] sm:$0xf]
  %v94 = vld [vmem:[%s1 + $0xec] sm:$0xf]
  %v95 = vld [vmem:[%s1 + $0xf0] sm:$0xf]
  %v96 = vld [vmem:[%s1 + $0xf4] sm:$0xf]
  %v97 = vld [vmem:[%s1 + $0xf8] sm:$0xf]
  %v98 = vld [vmem:[%s1 + $0xfc] sm:$0xf]
  %v99 = vld [vmem:[%s1 + $0x100] sm:$0xf]
  %v100 = vld [vmem:[%s1 + $0x104] sm:$0xf]
  %v101 = vld [vmem:[%s1 + $0x108] sm:$0xf]
  %v102 = vld [vmem:[%s1 + $0x10c] sm:$0xf]
  %v103 = vld [vmem:[%s1 + $0x110] sm:$0xf]
  %v104 = vld [vmem:[%s1 + $0x114] sm:$0xf]
  %v105 = vld [vmem:[%s1 + $0x118] sm:$0xf]
  %v106 = vld [vmem:[%s1 + $0x11c] sm:$0xf]
  %v107 = vld [vmem:[%s1 + $0x120] sm:$0xf]
  %v108 = vld [vmem:[%s1 + $0x124] sm:$0xf]
  %v109 = vld [vmem:[%s1 + $0x128] sm:$0xf]
  %v110 = vld [vmem:[%s1 + $0x12c] sm:$0xf]
  %v111 = vld [vmem:[%s1 + $0x130] sm:$0xf]
  %v112 = vld [vmem:[%s1 + $0x134] sm:$0xf]
  %v113 = vld [vmem:[%s1 + $0x138] sm:$0xf]
  %v114 = vld [vmem:[%s1 + $0x13c] sm:$0xf]
  %v115 = vld [vmem:[%s1 + $0x140] sm:$0xf]
  %v116 = vld [vmem:[%s1 + $0x144] sm:$0xf]
  %v117 = vld [vmem:[%s1 + $0x148] sm:$0xf]
  %v118 = vld [vmem:[%s1 + $0x14c] sm:$0xf]
  %v119 = vld [vmem:[%s1 + $0x150] sm:$0xf]
  %v120 = vld [vmem:[%s1 + $0x154] sm:$0xf]
  %v121 = vld [vmem:[%s1 + $0x158] sm:$0xf]
  %v122 = vld [vmem:[%s1 + $0x15c] sm:$0xf]
  %v123 = vld [vmem:[%s1 + $0x160] sm:$0xf]
  %v124 = vld [vmem:[%s1 + $0x164] sm:$0xf]
  %v125 = vld [vmem:[%s1 + $0x168] sm:$0xf]
  %v126 = vld [vmem:[%s1 + $0x16c] sm:$0xf]
  %v127 = vld [vmem:[%s1 + $0x170] sm:$0xf]
  %v128 = vld [vmem:[%s1 + $0x174] sm:$0xf]
  %v129 = vld [vmem:[%s1 + $0x178] sm:$0xf]
  %v130 = vld [vmem:[%s1 + $0x17c] sm:$0xf]
  %v131 = vld [vmem:[%s1 + $0x180] sm:$0xf]
  %v132 = vld [vmem:[%s1 + $0x184] sm:$0xf]
  %v133 = vld [vmem:[%s1 + $0x188] sm:$0xf]
  %v134 = vld [vmem:[%s1 + $0x18c] sm:$0xf]
  %v135 = vld [vmem:[%s1 + $0x190] sm:$0xf]
  %v136 = vld [vmem:[%s1 + $0x194] sm:$0xf]
  %v137 = vld [vmem:[%s1 + $0x198] sm:$0xf]
  %v138 = vld [vmem:[%s1 + $0x19c] sm:$0xf]
  %v139 = vld [vmem:[%s1 + $0x1a0] sm:$0xf]
  %v140 = vld [vmem:[%s1 + $0x1a4] sm:$0xf]
  %v141 = vld [vmem:[%s1 + $0x1a8] sm:$0xf]
  %v142 = vld [vmem:[%s1 + $0x1ac] sm:$0xf]
  %v143 = vld [vmem:[%s1 + $0x1b0] sm:$0xf]
  %v144 = vld [vmem:[%s1 + $0x1b4] sm:$0xf]
  %v145 = vld [vmem:[%s1 + $0x1b8] sm:$0xf]
  %v146 = vld [vmem:[%s1 + $0x1bc] sm:$0xf]
  %v147 = vld [vmem:[%s1 + $0x1c0] sm:$0xf]
  %v148 = vld [vmem:[%s1 + $0x1c4] sm:$0xf]
  %v149 = vld [vmem:[%s1 + $0x1c8] sm:$0xf]
  %v150 = vld [vmem:[%s1 + $0x1cc] sm:$0xf]
  %v151 = vld [vmem:[%s1 + $0x1d0] sm:$0xf]
  %v152 = vld [vmem:[%s1 + $0x1d4] sm:$0xf]
  %v153 = vld [vmem:[%s1 + $0x1d8] sm:$0xf]
  %v154 = vld [vmem:[%s1 + $0x1dc] sm:$0xf]
  %v155 = vld [vmem:[%s1 + $0x1e0] sm:$0xf]
  %v156 = vld [vmem:[%s1 + $0x1e4] sm:$0xf]
  %v157 = vld [vmem:[%s1 + $0x1e8] sm:$0xf]
  %v158 = vld [vmem:[%s1 + $0x1ec] sm:$0xf]
  %v159 = vld [vmem:[%s1 + $0x1f0] sm:$0xf]
  %v160 = vld [vmem:[%s1 + $0x1f4] sm:$0xf]
  %v161 = vld [vmem:[%s1 + $0x1f8] sm:$0xf]
  %v162 = vld [vmem:[%s1 + $0x1fc] sm:$0xf]
  %v163 = vld [vmem:[%s1 + $0x200] sm:$0xf]
  %v164 = vld [vmem:[%s1 + $0x204] sm:$0xf]
  %v165 = vld [vmem:[%s1 + $0x208] sm:$0xf]
  %v166 = vld [vmem:[%s1 + $0x20c] sm:$0xf]
  %v167 = vld [vmem:[%s1 + $0x210] sm:$0xf]
  %v168 = vld [vmem:[%s1 + $0x214] sm:$0xf]
  %v169 = vld [vmem:[%s1 + $0x218] sm:$0xf]
  %v170 = vld [vmem:[%s1 + $0x21c] sm:$0xf]
  %v171 = vld [vmem:[%s1 + $0x220] sm:$0xf]
  %v172 = vld [vmem:[%s1 + $0x224] sm:$0xf]
  %v173 = vld [vmem:[%s1 + $0x228] sm:$0xf]
  %v174 = vld [vmem:[%s1 + $0x22c] sm:$0xf]
  %v175 = vld [vmem:[%s1 + $0x230] sm:$0xf]
  %v176 = vld [vmem:[%s1 + $0x234] sm:$0xf]
  %v177 = vld [vmem:[%s1 + $0x238] sm:$0xf]
  %v178 = vld [vmem:[%s1 + $0x23c] sm:$0xf]
  %v179 = vld [vmem:[%s2] sm:$0x1]
  %v181 = vlaneseq
  %v182 = vshrl.u32 %v181, 7
  %v183 = vsub.s32 0, %v182
  %v184 = vrot.slane %v179, %v183
  %v206 = vunpack.c.l.b16 %v15
  %v207 = vunpack.c.h.b16 %v15
  %v208 = vunpack.c.l.b16 %v16
  %v209 = vunpack.c.h.b16 %v16
  %v210 = vunpack.c.l.b16 %v17
  %v211 = vunpack.c.h.b16 %v17
  %v212 = vunpack.c.l.b16 %v18
  %v213 = vunpack.c.h.b16 %v18
  %v214 = vunpack.c.l.b16 %v19
  %v215 = vunpack.c.l.b16 %v20
  %v216 = vunpack.c.h.b16 %v20
  %v217 = vunpack.c.l.b16 %v21
  %v218 = vunpack.c.h.b16 %v21
  %v219 = vunpack.c.l.b16 %v22
  %v220 = vunpack.c.h.b16 %v22
  %v221 = vunpack.c.l.b16 %v23
  %v222 = vunpack.c.h.b16 %v23
  %v223 = vunpack.c.l.b16 %v24
  %v224 = vunpack.c.l.b16 %v25
  %v225 = vunpack.c.h.b16 %v25
  %v226 = vunpack.c.l.b16 %v26
  %v227 = vunpack.c.h.b16 %v26
  %v228 = vunpack.c.l.b16 %v27
  %v229 = vunpack.c.h.b16 %v27
  %v230 = vunpack.c.l.b16 %v28
  %v231 = vunpack.c.h.b16 %v28
  %v232 = vunpack.c.l.b16 %v29
  %v233 = vunpack.c.l.b16 %v30
  %v234 = vunpack.c.h.b16 %v30
  %v235 = vunpack.c.l.b16 %v31
  %v236 = vunpack.c.h.b16 %v31
  %v237 = vunpack.c.l.b16 %v32
  %v238 = vunpack.c.h.b16 %v32
  %v239 = vunpack.c.l.b16 %v33
  %v240 = vunpack.c.h.b16 %v33
  %v241 = vunpack.c.l.b16 %v34
  %v242 = vpack.c.b16 %v215, %v206
  %v243 = vpack.c.b16 %v216, %v207
  %v244 = vpack.c.b16 %v217, %v208
  %v245 = vpack.c.b16 %v218, %v209
  %v246 = vpack.c.b16 %v219, %v210
  %v247 = vpack.c.b16 %v220, %v211
  %v248 = vpack.c.b16 %v221, %v212
  %v249 = vpack.c.b16 %v222, %v213
  %v250 = vpack.c.b16 %v223, %v214
  %v251 = vpack.c.b16 %v233, %v224
  %v252 = vpack.c.b16 %v234, %v225
  %v253 = vpack.c.b16 %v235, %v226
  %v254 = vpack.c.b16 %v236, %v227
  %v255 = vpack.c.b16 %v237, %v228
  %v256 = vpack.c.b16 %v238, %v229
  %v257 = vpack.c.b16 %v239, %v230
  %v258 = vpack.c.b16 %v240, %v231
  %v259 = vpack.c.b16 %v241, %v232
  %v422 = vunpack.c.l.b16 %v35
  %v423 = vunpack.c.l.b16 %v36
  %v424 = vunpack.c.l.b16 %v37
  %v425 = vunpack.c.l.b16 %v38
  %v426 = vunpack.c.l.b16 %v39
  %v427 = vunpack.c.l.b16 %v40
  %v428 = vunpack.c.l.b16 %v41
  %v429 = vunpack.c.l.b16 %v42
  %v430 = vunpack.c.l.b16 %v43
  %v431 = vunpack.c.l.b16 %v44
  %v432 = vunpack.c.l.b16 %v45
  %v433 = vunpack.c.l.b16 %v46
  %v434 = vunpack.c.l.b16 %v47
  %v435 = vunpack.c.l.b16 %v48
  %v436 = vunpack.c.l.b16 %v49
  %v437 = vunpack.c.l.b16 %v50
  %v438 = vunpack.c.l.b16 %v51
  %v439 = vunpack.c.l.b16 %v52
  %v440 = vunpack.c.l.b16 %v53
  %v441 = vunpack.c.l.b16 %v54
  %v442 = vunpack.c.l.b16 %v55
  %v443 = vunpack.c.l.b16 %v56
  %v444 = vunpack.c.l.b16 %v57
  %v445 = vunpack.c.l.b16 %v58
  %v446 = vunpack.c.l.b16 %v59
  %v447 = vunpack.c.l.b16 %v60
  %v448 = vunpack.c.l.b16 %v61
  %v449 = vunpack.c.l.b16 %v62
  %v450 = vunpack.c.l.b16 %v63
  %v451 = vunpack.c.l.b16 %v64
  %v452 = vunpack.c.l.b16 %v65
  %v453 = vunpack.c.l.b16 %v66
  %v454 = vunpack.c.l.b16 %v67
  %v455 = vunpack.c.l.b16 %v68
  %v456 = vunpack.c.l.b16 %v69
  %v457 = vunpack.c.l.b16 %v70
  %v458 = vunpack.c.l.b16 %v71
  %v459 = vunpack.c.l.b16 %v72
  %v460 = vunpack.c.l.b16 %v73
  %v461 = vunpack.c.l.b16 %v74
  %v462 = vunpack.c.l.b16 %v75
  %v463 = vunpack.c.l.b16 %v76
  %v464 = vunpack.c.l.b16 %v77
  %v465 = vunpack.c.l.b16 %v78
  %v466 = vunpack.c.l.b16 %v79
  %v467 = vunpack.c.l.b16 %v80
  %v468 = vunpack.c.l.b16 %v81
  %v469 = vunpack.c.l.b16 %v82
  %v470 = vunpack.c.l.b16 %v83
  %v471 = vunpack.c.l.b16 %v84
  %v472 = vunpack.c.l.b16 %v85
  %v473 = vunpack.c.l.b16 %v86
  %v474 = vunpack.c.l.b16 %v87
  %v475 = vunpack.c.l.b16 %v88
  %v476 = vunpack.c.l.b16 %v89
  %v477 = vunpack.c.l.b16 %v90
  %v478 = vunpack.c.l.b16 %v91
  %v479 = vunpack.c.l.b16 %v92
  %v480 = vunpack.c.l.b16 %v93
  %v481 = vunpack.c.l.b16 %v94
  %v482 = vunpack.c.l.b16 %v95
  %v483 = vunpack.c.l.b16 %v96
  %v484 = vunpack.c.l.b16 %v97
  %v485 = vunpack.c.l.b16 %v98
  %v486 = vunpack.c.l.b16 %v99
  %v487 = vunpack.c.l.b16 %v100
  %v488 = vunpack.c.l.b16 %v101
  %v489 = vunpack.c.l.b16 %v102
  %v490 = vunpack.c.l.b16 %v103
  %v491 = vunpack.c.l.b16 %v104
  %v492 = vunpack.c.l.b16 %v105
  %v493 = vunpack.c.l.b16 %v106
  %v494 = vunpack.c.l.b16 %v107
  %v495 = vunpack.c.l.b16 %v108
  %v496 = vunpack.c.l.b16 %v109
  %v497 = vunpack.c.l.b16 %v110
  %v498 = vunpack.c.l.b16 %v111
  %v499 = vunpack.c.l.b16 %v112
  %v500 = vunpack.c.l.b16 %v113
  %v501 = vunpack.c.l.b16 %v114
  %v502 = vunpack.c.l.b16 %v115
  %v503 = vunpack.c.l.b16 %v116
  %v504 = vunpack.c.l.b16 %v117
  %v505 = vunpack.c.l.b16 %v118
  %v506 = vunpack.c.l.b16 %v119
  %v507 = vunpack.c.l.b16 %v120
  %v508 = vunpack.c.l.b16 %v121
  %v509 = vunpack.c.l.b16 %v122
  %v510 = vunpack.c.l.b16 %v123
  %v511 = vunpack.c.l.b16 %v124
  %v512 = vunpack.c.l.b16 %v125
  %v513 = vunpack.c.l.b16 %v126
  %v514 = vunpack.c.l.b16 %v127
  %v515 = vunpack.c.l.b16 %v128
  %v516 = vunpack.c.l.b16 %v129
  %v517 = vunpack.c.l.b16 %v130
  %v518 = vunpack.c.l.b16 %v131
  %v519 = vunpack.c.l.b16 %v132
  %v520 = vunpack.c.l.b16 %v133
  %v521 = vunpack.c.l.b16 %v134
  %v522 = vunpack.c.l.b16 %v135
  %v523 = vunpack.c.l.b16 %v136
  %v524 = vunpack.c.l.b16 %v137
  %v525 = vunpack.c.l.b16 %v138
  %v526 = vunpack.c.l.b16 %v139
  %v527 = vunpack.c.l.b16 %v140
  %v528 = vunpack.c.l.b16 %v141
  %v529 = vunpack.c.l.b16 %v142
  %v530 = vunpack.c.l.b16 %v143
  %v531 = vunpack.c.l.b16 %v144
  %v532 = vunpack.c.l.b16 %v145
  %v533 = vunpack.c.l.b16 %v146
  %v534 = vunpack.c.l.b16 %v147
  %v535 = vunpack.c.l.b16 %v148
  %v536 = vunpack.c.l.b16 %v149
  %v537 = vunpack.c.l.b16 %v150
  %v538 = vunpack.c.l.b16 %v151
  %v539 = vunpack.c.l.b16 %v152
  %v540 = vunpack.c.l.b16 %v153
  %v541 = vunpack.c.l.b16 %v154
  %v542 = vunpack.c.l.b16 %v155
  %v543 = vunpack.c.l.b16 %v156
  %v544 = vunpack.c.l.b16 %v157
  %v545 = vunpack.c.l.b16 %v158
  %v546 = vunpack.c.l.b16 %v159
  %v547 = vunpack.c.l.b16 %v160
  %v548 = vunpack.c.l.b16 %v161
  %v549 = vunpack.c.l.b16 %v162
  %v550 = vunpack.c.l.b16 %v163
  %v551 = vunpack.c.l.b16 %v164
  %v552 = vunpack.c.l.b16 %v165
  %v553 = vunpack.c.l.b16 %v166
  %v554 = vunpack.c.l.b16 %v167
  %v555 = vunpack.c.l.b16 %v168
  %v556 = vunpack.c.l.b16 %v169
  %v557 = vunpack.c.l.b16 %v170
  %v558 = vunpack.c.l.b16 %v171
  %v559 = vunpack.c.l.b16 %v172
  %v560 = vunpack.c.l.b16 %v173
  %v561 = vunpack.c.l.b16 %v174
  %v562 = vunpack.c.l.b16 %v175
  %v563 = vunpack.c.l.b16 %v176
  %v564 = vunpack.c.l.b16 %v177
  %v565 = vunpack.c.l.b16 %v178
  %v566 = vpack.c.b16 %v423, %v422
  %v567 = vpack.c.b16 %v425, %v424
  %v568 = vpack.c.b16 %v427, %v426
  %v569 = vpack.c.b16 %v429, %v428
  %v570 = vpack.c.b16 %v431, %v430
  %v571 = vpack.c.b16 %v433, %v432
  %v572 = vpack.c.b16 %v435, %v434
  %v573 = vpack.c.b16 %v437, %v436
  %v574 = vpack.c.b16 %v439, %v438
  %v575 = vpack.c.b16 %v441, %v440
  %v576 = vpack.c.b16 %v443, %v442
  %v577 = vpack.c.b16 %v445, %v444
  %v578 = vpack.c.b16 %v447, %v446
  %v579 = vpack.c.b16 %v449, %v448
  %v580 = vpack.c.b16 %v451, %v450
  %v581 = vpack.c.b16 %v453, %v452
  %v582 = vpack.c.b16 %v455, %v454
  %v583 = vpack.c.b16 %v457, %v456
  %v584 = vpack.c.b16 %v459, %v458
  %v585 = vpack.c.b16 %v461, %v460
  %v586 = vpack.c.b16 %v463, %v462
  %v587 = vpack.c.b16 %v465, %v464
  %v588 = vpack.c.b16 %v467, %v466
  %v589 = vpack.c.b16 %v469, %v468
  %v590 = vpack.c.b16 %v471, %v470
  %v591 = vpack.c.b16 %v473, %v472
  %v592 = vpack.c.b16 %v475, %v474
  %v593 = vpack.c.b16 %v477, %v476
  %v594 = vpack.c.b16 %v479, %v478
  %v595 = vpack.c.b16 %v481, %v480
  %v596 = vpack.c.b16 %v483, %v482
  %v597 = vpack.c.b16 %v485, %v484
  %v598 = vpack.c.b16 %v487, %v486
  %v599 = vpack.c.b16 %v489, %v488
  %v600 = vpack.c.b16 %v491, %v490
  %v601 = vpack.c.b16 %v493, %v492
  %v602 = vpack.c.b16 %v495, %v494
  %v603 = vpack.c.b16 %v497, %v496
  %v604 = vpack.c.b16 %v499, %v498
  %v605 = vpack.c.b16 %v501, %v500
  %v606 = vpack.c.b16 %v503, %v502
  %v607 = vpack.c.b16 %v505, %v504
  %v608 = vpack.c.b16 %v507, %v506
  %v609 = vpack.c.b16 %v509, %v508
  %v610 = vpack.c.b16 %v511, %v510
  %v611 = vpack.c.b16 %v513, %v512
  %v612 = vpack.c.b16 %v515, %v514
  %v613 = vpack.c.b16 %v517, %v516
  %v614 = vpack.c.b16 %v519, %v518
  %v615 = vpack.c.b16 %v521, %v520
  %v616 = vpack.c.b16 %v523, %v522
  %v617 = vpack.c.b16 %v525, %v524
  %v618 = vpack.c.b16 %v527, %v526
  %v619 = vpack.c.b16 %v529, %v528
  %v620 = vpack.c.b16 %v531, %v530
  %v621 = vpack.c.b16 %v533, %v532
  %v622 = vpack.c.b16 %v535, %v534
  %v623 = vpack.c.b16 %v537, %v536
  %v624 = vpack.c.b16 %v539, %v538
  %v625 = vpack.c.b16 %v541, %v540
  %v626 = vpack.c.b16 %v543, %v542
  %v627 = vpack.c.b16 %v545, %v544
  %v628 = vpack.c.b16 %v547, %v546
  %v629 = vpack.c.b16 %v549, %v548
  %v630 = vpack.c.b16 %v551, %v550
  %v631 = vpack.c.b16 %v553, %v552
  %v632 = vpack.c.b16 %v555, %v554
  %v633 = vpack.c.b16 %v557, %v556
  %v634 = vpack.c.b16 %v559, %v558
  %v635 = vpack.c.b16 %v561, %v560
  %v636 = vpack.c.b16 %v563, %v562
  %v637 = vpack.c.b16 %v565, %v564
  %710 = vmatprep.subr.bf16.mxu0 0
  %711 = vmatpush1.bf16.msra.mxu0 %v566
  %712 = vmatprep.subr.bf16.mxu0 0
  %713 = vmatpush1.bf16.msra.mxu0 %v567
  %714 = vmatprep.subr.bf16.mxu0 0
  %715 = vmatpush1.bf16.msra.mxu0 %v568
  %716 = vmatprep.subr.bf16.mxu0 0
  %717 = vmatpush1.bf16.msra.mxu0 %v569
  %718 = vmatprep.subr.bf16.mxu0 0
  %719 = vmatpush1.bf16.msra.mxu0 %v570
  %720 = vmatprep.subr.bf16.mxu0 0
  %721 = vmatpush1.bf16.msra.mxu0 %v571
  %722 = vmatprep.subr.bf16.mxu0 0
  %723 = vmatpush1.bf16.msra.mxu0 %v572
  %724 = vmatprep.subr.bf16.mxu0 0
  %725 = vmatpush1.bf16.msra.mxu0 %v573
  %726 = vmatprep.subr.bf16.mxu0 0
  %727 = vmatpush1.bf16.msra.mxu0 %v574
  %728 = vmatprep.subr.bf16.mxu0 0
  %729 = vmatpush1.bf16.msra.mxu0 %v575
  %730 = vmatprep.subr.bf16.mxu0 0
  %731 = vmatpush1.bf16.msra.mxu0 %v576
  %732 = vmatprep.subr.bf16.mxu0 0
  %733 = vmatpush1.bf16.msra.mxu0 %v577
  %734 = vmatprep.subr.bf16.mxu0 0
  %735 = vmatpush1.bf16.msra.mxu0 %v578
  %736 = vmatprep.subr.bf16.mxu0 0
  %737 = vmatpush1.bf16.msra.mxu0 %v579
  %738 = vmatprep.subr.bf16.mxu0 0
  %739 = vmatpush1.bf16.msra.mxu0 %v580
  %740 = vmatprep.subr.bf16.mxu0 0
  %741 = vmatpush1.bf16.msra.mxu0 %v581
  %742 = vmatprep.mubr.bf16.mxu0 %v243
  %743 = vmatmul.mubr.bf16.gmra.mrb[0].mxu0 %v242
  %v744 = vpop.f32.mrb[0].mxu0
  %v745 = vadd.f32 %v184, %v744
  %v746 = vpop.f32.mrb[0].mxu0
  %v747 = vpop.f32.mrb[0].mxu0
  %v748 = vadd.f32 %v184, %v747
  %v749 = vpop.f32.mrb[0].mxu0
  %750 = vmatprep.mubr.bf16.mxu0 %v252
  %751 = vmatmul.mubr.bf16.gmra.mrb[0].mxu0 %v251
  %v752 = vpop.f32.mrb[0].mxu0
  %v753 = vadd.f32 %v184, %v752
  %v754 = vpop.f32.mrb[0].mxu0
  %v755 = vpop.f32.mrb[0].mxu0
  %v756 = vadd.f32 %v184, %v755
  %v757 = vpop.f32.mrb[0].mxu0
  %758 = vdwg.mxu0
  %759 = vmatprep.subr.bf16.mxu0 0
  %760 = vmatpush1.bf16.msra.mxu0 %v582
  %761 = vmatprep.subr.bf16.mxu0 0
  %762 = vmatpush1.bf16.msra.mxu0 %v583
  %763 = vmatprep.subr.bf16.mxu0 0
  %764 = vmatpush1.bf16.msra.mxu0 %v584
  %765 = vmatprep.subr.bf16.mxu0 0
  %766 = vmatpush1.bf16.msra.mxu0 %v585
  %767 = vmatprep.subr.bf16.mxu0 0
  %768 = vmatpush1.bf16.msra.mxu0 %v586
  %769 = vmatprep.subr.bf16.mxu0 0
  %770 = vmatpush1.bf16.msra.mxu0 %v587
  %771 = vmatprep.subr.bf16.mxu0 0
  %772 = vmatpush1.bf16.msra.mxu0 %v588
  %773 = vmatprep.subr.bf16.mxu0 0
  %774 = vmatpush1.bf16.msra.mxu0 %v589
  %775 = vmatprep.subr.bf16.mxu0 0
  %776 = vmatpush1.bf16.msra.mxu0 %v590
  %777 = vmatprep.subr.bf16.mxu0 0
  %778 = vmatpush1.bf16.msra.mxu0 %v591
  %779 = vmatprep.subr.bf16.mxu0 0
  %780 = vmatpush1.bf16.msra.mxu0 %v592
  %781 = vmatprep.subr.bf16.mxu0 0
  %782 = vmatpush1.bf16.msra.mxu0 %v593
  %783 = vmatprep.subr.bf16.mxu0 0
  %784 = vmatpush1.bf16.msra.mxu0 %v594
  %785 = vmatprep.subr.bf16.mxu0 0
  %786 = vmatpush1.bf16.msra.mxu0 %v595
  %787 = vmatprep.subr.bf16.mxu0 0
  %788 = vmatpush1.bf16.msra.mxu0 %v596
  %789 = vmatprep.subr.bf16.mxu0 0
  %790 = vmatpush1.bf16.msra.mxu0 %v597
  %791 = vmatprep.mubr.bf16.mxu0 %v245
  %792 = vmatmul.mubr.bf16.gmra.mrb[0].mxu0 %v244
  %v793 = vpop.f32.mrb[0].mxu0
  %v794 = vadd.f32 %v745, %v793
  %v795 = vpop.f32.mrb[0].mxu0
  %v796 = vpop.f32.mrb[0].mxu0
  %v797 = vadd.f32 %v748, %v796
  %v798 = vpop.f32.mrb[0].mxu0
  %799 = vmatprep.mubr.bf16.mxu0 %v254
  %800 = vmatmul.mubr.bf16.gmra.mrb[0].mxu0 %v253
  %v801 = vpop.f32.mrb[0].mxu0
  %v802 = vadd.f32 %v753, %v801
  %v803 = vpop.f32.mrb[0].mxu0
  %v804 = vpop.f32.mrb[0].mxu0
  %v805 = vadd.f32 %v756, %v804
  %v806 = vpop.f32.mrb[0].mxu0
  %807 = vdwg.mxu0
  %808 = vmatprep.subr.bf16.mxu0 0
  %809 = vmatpush1.bf16.msra.mxu0 %v598
  %810 = vmatprep.subr.bf16.mxu0 0
  %811 = vmatpush1.bf16.msra.mxu0 %v599
  %812 = vmatprep.subr.bf16.mxu0 0
  %813 = vmatpush1.bf16.msra.mxu0 %v600
  %814 = vmatprep.subr.bf16.mxu0 0
  %815 = vmatpush1.bf16.msra.mxu0 %v601
  %816 = vmatprep.subr.bf16.mxu0 0
  %817 = vmatpush1.bf16.msra.mxu0 %v602
  %818 = vmatprep.subr.bf16.mxu0 0
  %819 = vmatpush1.bf16.msra.mxu0 %v603
  %820 = vmatprep.subr.bf16.mxu0 0
  %821 = vmatpush1.bf16.msra.mxu0 %v604
  %822 = vmatprep.subr.bf16.mxu0 0
  %823 = vmatpush1.bf16.msra.mxu0 %v605
  %824 = vmatprep.subr.bf16.mxu0 0
  %825 = vmatpush1.bf16.msra.mxu0 %v606
  %826 = vmatprep.subr.bf16.mxu0 0
  %827 = vmatpush1.bf16.msra.mxu0 %v607
  %828 = vmatprep.subr.bf16.mxu0 0
  %829 = vmatpush1.bf16.msra.mxu0 %v608
  %830 = vmatprep.subr.bf16.mxu0 0
  %831 = vmatpush1.bf16.msra.mxu0 %v609
  %832 = vmatprep.subr.bf16.mxu0 0
  %833 = vmatpush1.bf16.msra.mxu0 %v610
  %834 = vmatprep.subr.bf16.mxu0 0
  %835 = vmatpush1.bf16.msra.mxu0 %v611
  %836 = vmatprep.subr.bf16.mxu0 0
  %837 = vmatpush1.bf16.msra.mxu0 %v612
  %838 = vmatprep.subr.bf16.mxu0 0
  %839 = vmatpush1.bf16.msra.mxu0 %v613
  %840 = vmatprep.mubr.bf16.mxu0 %v247
  %841 = vmatmul.mubr.bf16.gmra.mrb[0].mxu0 %v246
  %v842 = vpop.f32.mrb[0].mxu0
  %v843 = vadd.f32 %v794, %v842
  %v844 = vpop.f32.mrb[0].mxu0
  %v845 = vpop.f32.mrb[0].mxu0
  %v846 = vadd.f32 %v797, %v845
  %v847 = vpop.f32.mrb[0].mxu0
  %848 = vmatprep.mubr.bf16.mxu0 %v256
  %849 = vmatmul.mubr.bf16.gmra.mrb[0].mxu0 %v255
  %v850 = vpop.f32.mrb[0].mxu0
  %v851 = vadd.f32 %v802, %v850
  %v852 = vpop.f32.mrb[0].mxu0
  %v853 = vpop.f32.mrb[0].mxu0
  %v854 = vadd.f32 %v805, %v853
  %v855 = vpop.f32.mrb[0].mxu0
  %856 = vdwg.mxu0
  %857 = vmatprep.subr.bf16.mxu0 0
  %858 = vmatpush1.bf16.msra.mxu0 %v614
  %859 = vmatprep.subr.bf16.mxu0 0
  %860 = vmatpush1.bf16.msra.mxu0 %v615
  %861 = vmatprep.subr.bf16.mxu0 0
  %862 = vmatpush1.bf16.msra.mxu0 %v616
  %863 = vmatprep.subr.bf16.mxu0 0
  %864 = vmatpush1.bf16.msra.mxu0 %v617
  %865 = vmatprep.subr.bf16.mxu0 0
  %866 = vmatpush1.bf16.msra.mxu0 %v618
  %867 = vmatprep.subr.bf16.mxu0 0
  %868 = vmatpush1.bf16.msra.mxu0 %v619
  %869 = vmatprep.subr.bf16.mxu0 0
  %870 = vmatpush1.bf16.msra.mxu0 %v620
  %871 = vmatprep.subr.bf16.mxu0 0
  %872 = vmatpush1.bf16.msra.mxu0 %v621
  %873 = vmatprep.subr.bf16.mxu0 0
  %874 = vmatpush1.bf16.msra.mxu0 %v622
  %875 = vmatprep.subr.bf16.mxu0 0
  %876 = vmatpush1.bf16.msra.mxu0 %v623
  %877 = vmatprep.subr.bf16.mxu0 0
  %878 = vmatpush1.bf16.msra.mxu0 %v624
  %879 = vmatprep.subr.bf16.mxu0 0
  %880 = vmatpush1.bf16.msra.mxu0 %v625
  %881 = vmatprep.subr.bf16.mxu0 0
  %882 = vmatpush1.bf16.msra.mxu0 %v626
  %883 = vmatprep.subr.bf16.mxu0 0
  %884 = vmatpush1.bf16.msra.mxu0 %v627
  %885 = vmatprep.subr.bf16.mxu0 0
  %886 = vmatpush1.bf16.msra.mxu0 %v628
  %887 = vmatprep.subr.bf16.mxu0 0
  %888 = vmatpush1.bf16.msra.mxu0 %v629
  %889 = vmatprep.mubr.bf16.mxu0 %v249
  %890 = vmatmul.mubr.bf16.gmra.mrb[0].mxu0 %v248
  %v891 = vpop.f32.mrb[0].mxu0
  %v892 = vadd.f32 %v843, %v891
  %v893 = vpop.f32.mrb[0].mxu0
  %v894 = vpop.f32.mrb[0].mxu0
  %v895 = vadd.f32 %v846, %v894
  %v896 = vpop.f32.mrb[0].mxu0
  %897 = vmatprep.mubr.bf16.mxu0 %v258
  %898 = vmatmul.mubr.bf16.gmra.mrb[0].mxu0 %v257
  %v899 = vpop.f32.mrb[0].mxu0
  %v900 = vadd.f32 %v851, %v899
  %v901 = vpop.f32.mrb[0].mxu0
  %v902 = vpop.f32.mrb[0].mxu0
  %v903 = vadd.f32 %v854, %v902
  %v904 = vpop.f32.mrb[0].mxu0
  %905 = vdwg.mxu0
  %906 = vmatprep.subr.bf16.mxu0 0
  %907 = vmatpush1.bf16.msra.mxu0 %v630
  %908 = vmatprep.subr.bf16.mxu0 0
  %909 = vmatpush1.bf16.msra.mxu0 %v631
  %910 = vmatprep.subr.bf16.mxu0 0
  %911 = vmatpush1.bf16.msra.mxu0 %v632
  %912 = vmatprep.subr.bf16.mxu0 0
  %913 = vmatpush1.bf16.msra.mxu0 %v633
  %914 = vmatprep.subr.bf16.mxu0 0
  %915 = vmatpush1.bf16.msra.mxu0 %v634
  %916 = vmatprep.subr.bf16.mxu0 0
  %917 = vmatpush1.bf16.msra.mxu0 %v635
  %918 = vmatprep.subr.bf16.mxu0 0
  %919 = vmatpush1.bf16.msra.mxu0 %v636
  %920 = vmatprep.subr.bf16.mxu0 0
  %921 = vmatpush1.bf16.msra.mxu0 %v637
  %922 = vmatprep.subr.bf16.mxu0 0
  %923 = vmatpush1.bf16.msra.mxu0 0
  %924 = vmatprep.subr.bf16.mxu0 0
  %925 = vmatpush1.bf16.msra.mxu0 0
  %926 = vmatprep.subr.bf16.mxu0 0
  %927 = vmatpush1.bf16.msra.mxu0 0
  %928 = vmatprep.subr.bf16.mxu0 0
  %929 = vmatpush1.bf16.msra.mxu0 0
  %930 = vmatprep.subr.bf16.mxu0 0
  %931 = vmatpush1.bf16.msra.mxu0 0
  %932 = vmatprep.subr.bf16.mxu0 0
  %933 = vmatpush1.bf16.msra.mxu0 0
  %934 = vmatprep.subr.bf16.mxu0 0
  %935 = vmatpush1.bf16.msra.mxu0 0
  %936 = vmatprep.subr.bf16.mxu0 0
  %937 = vmatpush1.bf16.msra.mxu0 0
  %938 = vmatprep.mubr.bf16.mxu0 0
  %939 = vmatmul.mubr.bf16.gmra.mrb[0].mxu0 %v250
  %v940 = vpop.f32.mrb[0].mxu0
  %v941 = vadd.f32 %v892, %v940
  %v942 = vpop.f32.mrb[0].mxu0
  %v943 = vpop.f32.mrb[0].mxu0
  %v944 = vadd.f32 %v895, %v943
  %v945 = vpop.f32.mrb[0].mxu0
  %946 = vmatprep.mubr.bf16.mxu0 0
  %947 = vmatmul.mubr.bf16.gmra.mrb[0].mxu0 %v259
  %v948 = vpop.f32.mrb[0].mxu0
  %v949 = vadd.f32 %v900, %v948
  %v950 = vpop.f32.mrb[0].mxu0
  %v951 = vpop.f32.mrb[0].mxu0
  %v952 = vadd.f32 %v903, %v951
  %v953 = vpop.f32.mrb[0].mxu0
  %954 = vdwg.mxu0
  %v955 = vpack.c.bf16 %v944, %v941
  %v956 = vpack.c.bf16 %v952, %v949
  %v959 = vunpack.c.l.b16 %v955
  %v960 = vunpack.c.h.b16 %v955
  %v961 = vunpack.c.l.b16 %v956
  %v962 = vunpack.c.h.b16 %v956
  %v963 = vpack.c.b16 %v959, %v959
  %v964 = vpack.c.b16 %v960, %v960
  %v965 = vpack.c.b16 %v961, %v961
  %v966 = vpack.c.b16 %v962, %v962
  %971 = vst [vmem:[%s3] sm:$0xf] %v963
  %972 = vst [vmem:[%s3 + $0x4] sm:$0xf] %v964
  %973 = vst [vmem:[%s3 + $0x8] sm:$0xf] %v965
  %974 = vst [vmem:[%s3 + $0xc] sm:$0xf] %v966
  // Predicated region
  $region14: #{_lambda_.22} parent=0 // pred_check
    _
  $region15: #{_lambda_.22} parent=0 // pred_check_branch
    %976 = sbr.rel (0) target = $region17
  $region16: #{_lambda_.22} parent=0 // pred_region
    _
  $region17: #{_lambda_.22} parent=0 // pred_fallthru
    _
  // Predicated region
  $region18: #{_lambda_.22} parent=0 // pred_check
    _
  $region19: #{_lambda_.22} parent=0 // pred_check_branch
    %978 = sbr.rel (0) target = $region21
  $region20: #{_lambda_.22} parent=0 // pred_region
    _
  $region21: #{_lambda_.22} parent=0 // pred_fallthru
    _

// kernel: _lambda_.23
$region0: #{_lambda_.23}
  #allocation0 [shape = 'u32[]', space=smem, size = 0x4, offset = 0x4, fixed_abs, tag = 'smem constant byte address 0x4 - core index']
  #allocation1 [shape = 'u32[144,128]{1,0:T(1,128)}', space=vmem, size = 0x12000, scoped, tag = 'internal scratch']
  %s0 = inlined_call_operand.vmem [shape: bf16[16,1152], index: 0, kind: input, shape index: {}]
  %s1 = inlined_call_operand.vmem [shape: bf16[1152,128], index: 1, kind: input, shape index: {}]
  %s2 = inlined_call_operand.vmem [shape: f32[1,128], index: 2, kind: input, shape index: {}]
  %s3 = inlined_call_operand.vmem [shape: bf16[16,128], index: 3, kind: output, shape index: {}]
  %s4 = sld [smem:[#allocation0]]
  $region22: #{_lambda_.23} parent=0
    _
  %s6 = ssub.s32 1, %s4
  %s7 = scalar_select 0, %s6, %s4
  // Predicated region
  $region2: #{_lambda_.23} parent=0 // pred_check
    _
  $region3: #{_lambda_.23} parent=0 // pred_check_branch
    %9 = sbr.rel (0) target = $region5
  $region4: #{_lambda_.23} parent=0 // pred_region
    _
  $region5: #{_lambda_.23} parent=0 // pred_fallthru
    _
  // Predicated region
  $region6: #{_lambda_.23} parent=0 // pred_check
    _
  $region7: #{_lambda_.23} parent=0 // pred_check_branch
    %11 = sbr.rel (0) target = $region9
  $region8: #{_lambda_.23} parent=0 // pred_region
    _
  $region9: #{_lambda_.23} parent=0 // pred_fallthru
    _
  // Predicated region
  $region10: #{_lambda_.23} parent=0 // pred_check
    _
  $region11: #{_lambda_.23} parent=0 // pred_check_branch
    %13 = sbr.rel (0) target = $region13
  $region12: #{_lambda_.23} parent=0 // pred_region
    _
  $region13: #{_lambda_.23} parent=0 // pred_fallthru
    _
  %v15 = vld [vmem:[%s0] sm:$0xff]
  %v16 = vld [vmem:[%s0 + $0x8] sm:$0xff]
  %v17 = vld [vmem:[%s0 + $0x10] sm:$0xff]
  %v18 = vld [vmem:[%s0 + $0x18] sm:$0xff]
  %v19 = vld [vmem:[%s0 + $0x20] sm:$0xf]
  %v20 = vld [vmem:[%s0 + $0x24] sm:$0xff]
  %v21 = vld [vmem:[%s0 + $0x2c] sm:$0xff]
  %v22 = vld [vmem:[%s0 + $0x34] sm:$0xff]
  %v23 = vld [vmem:[%s0 + $0x3c] sm:$0xff]
  %v24 = vld [vmem:[%s0 + $0x44] sm:$0xf]
  %v25 = vld [vmem:[%s1] sm:$0xf]
  %v26 = vld [vmem:[%s1 + $0x4] sm:$0xf]
  %v27 = vld [vmem:[%s1 + $0x8] sm:$0xf]
  %v28 = vld [vmem:[%s1 + $0xc] sm:$0xf]
  %v29 = vld [vmem:[%s1 + $0x10] sm:$0xf]
  %v30 = vld [vmem:[%s1 + $0x14] sm:$0xf]
  %v31 = vld [vmem:[%s1 + $0x18] sm:$0xf]
  %v32 = vld [vmem:[%s1 + $0x1c] sm:$0xf]
  %v33 = vld [vmem:[%s1 + $0x20] sm:$0xf]
  %v34 = vld [vmem:[%s1 + $0x24] sm:$0xf]
  %v35 = vld [vmem:[%s1 + $0x28] sm:$0xf]
  %v36 = vld [vmem:[%s1 + $0x2c] sm:$0xf]
  %v37 = vld [vmem:[%s1 + $0x30] sm:$0xf]
  %v38 = vld [vmem:[%s1 + $0x34] sm:$0xf]
  %v39 = vld [vmem:[%s1 + $0x38] sm:$0xf]
  %v40 = vld [vmem:[%s1 + $0x3c] sm:$0xf]
  %v41 = vld [vmem:[%s1 + $0x40] sm:$0xf]
  %v42 = vld [vmem:[%s1 + $0x44] sm:$0xf]
  %v43 = vld [vmem:[%s1 + $0x48] sm:$0xf]
  %v44 = vld [vmem:[%s1 + $0x4c] sm:$0xf]
  %v45 = vld [vmem:[%s1 + $0x50] sm:$0xf]
  %v46 = vld [vmem:[%s1 + $0x54] sm:$0xf]
  %v47 = vld [vmem:[%s1 + $0x58] sm:$0xf]
  %v48 = vld [vmem:[%s1 + $0x5c] sm:$0xf]
  %v49 = vld [vmem:[%s1 + $0x60] sm:$0xf]
  %v50 = vld [vmem:[%s1 + $0x64] sm:$0xf]
  %v51 = vld [vmem:[%s1 + $0x68] sm:$0xf]
  %v52 = vld [vmem:[%s1 + $0x6c] sm:$0xf]
  %v53 = vld [vmem:[%s1 + $0x70] sm:$0xf]
  %v54 = vld [vmem:[%s1 + $0x74] sm:$0xf]
  %v55 = vld [vmem:[%s1 + $0x78] sm:$0xf]
  %v56 = vld [vmem:[%s1 + $0x7c] sm:$0xf]
  %v57 = vld [vmem:[%s1 + $0x80] sm:$0xf]
  %v58 = vld [vmem:[%s1 + $0x84] sm:$0xf]
  %v59 = vld [vmem:[%s1 + $0x88] sm:$0xf]
  %v60 = vld [vmem:[%s1 + $0x8c] sm:$0xf]
  %v61 = vld [vmem:[%s1 + $0x90] sm:$0xf]
  %v62 = vld [vmem:[%s1 + $0x94] sm:$0xf]
  %v63 = vld [vmem:[%s1 + $0x98] sm:$0xf]
  %v64 = vld [vmem:[%s1 + $0x9c] sm:$0xf]
  %v65 = vld [vmem:[%s1 + $0xa0] sm:$0xf]
  %v66 = vld [vmem:[%s1 + $0xa4] sm:$0xf]
  %v67 = vld [vmem:[%s1 + $0xa8] sm:$0xf]
  %v68 = vld [vmem:[%s1 + $0xac] sm:$0xf]
  %v69 = vld [vmem:[%s1 + $0xb0] sm:$0xf]
  %v70 = vld [vmem:[%s1 + $0xb4] sm:$0xf]
  %v71 = vld [vmem:[%s1 + $0xb8] sm:$0xf]
  %v72 = vld [vmem:[%s1 + $0xbc] sm:$0xf]
  %v73 = vld [vmem:[%s1 + $0xc0] sm:$0xf]
  %v74 = vld [vmem:[%s1 + $0xc4] sm:$0xf]
  %v75 = vld [vmem:[%s1 + $0xc8] sm:$0xf]
  %v76 = vld [vmem:[%s1 + $0xcc] sm:$0xf]
  %v77 = vld [vmem:[%s1 + $0xd0] sm:$0xf]
  %v78 = vld [vmem:[%s1 + $0xd4] sm:$0xf]
  %v79 = vld [vmem:[%s1 + $0xd8] sm:$0xf]
  %v80 = vld [vmem:[%s1 + $0xdc] sm:$0xf]
  %v81 = vld [vmem:[%s1 + $0xe0] sm:$0xf]
  %v82 = vld [vmem:[%s1 + $0xe4] sm:$0xf]
  %v83 = vld [vmem:[%s1 + $0xe8] sm:$0xf]
  %v84 = vld [vmem:[%s1 + $0xec] sm:$0xf]
  %v85 = vld [vmem:[%s1 + $0xf0] sm:$0xf]
  %v86 = vld [vmem:[%s1 + $0xf4] sm:$0xf]
  %v87 = vld [vmem:[%s1 + $0xf8] sm:$0xf]
  %v88 = vld [vmem:[%s1 + $0xfc] sm:$0xf]
  %v89 = vld [vmem:[%s1 + $0x100] sm:$0xf]
  %v90 = vld [vmem:[%s1 + $0x104] sm:$0xf]
  %v91 = vld [vmem:[%s1 + $0x108] sm:$0xf]
  %v92 = vld [vmem:[%s1 + $0x10c] sm:$0xf]
  %v93 = vld [vmem:[%s1 + $0x110] sm:$0xf]
  %v94 = vld [vmem:[%s1 + $0x114] sm:$0xf]
  %v95 = vld [vmem:[%s1 + $0x118] sm:$0xf]
  %v96 = vld [vmem:[%s1 + $0x11c] sm:$0xf]
  %v97 = vld [vmem:[%s1 + $0x120] sm:$0xf]
  %v98 = vld [vmem:[%s1 + $0x124] sm:$0xf]
  %v99 = vld [vmem:[%s1 + $0x128] sm:$0xf]
  %v100 = vld [vmem:[%s1 + $0x12c] sm:$0xf]
  %v101 = vld [vmem:[%s1 + $0x130] sm:$0xf]
  %v102 = vld [vmem:[%s1 + $0x134] sm:$0xf]
  %v103 = vld [vmem:[%s1 + $0x138] sm:$0xf]
  %v104 = vld [vmem:[%s1 + $0x13c] sm:$0xf]
  %v105 = vld [vmem:[%s1 + $0x140] sm:$0xf]
  %v106 = vld [vmem:[%s1 + $0x144] sm:$0xf]
  %v107 = vld [vmem:[%s1 + $0x148] sm:$0xf]
  %v108 = vld [vmem:[%s1 + $0x14c] sm:$0xf]
  %v109 = vld [vmem:[%s1 + $0x150] sm:$0xf]
  %v110 = vld [vmem:[%s1 + $0x154] sm:$0xf]
  %v111 = vld [vmem:[%s1 + $0x158] sm:$0xf]
  %v112 = vld [vmem:[%s1 + $0x15c] sm:$0xf]
  %v113 = vld [vmem:[%s1 + $0x160] sm:$0xf]
  %v114 = vld [vmem:[%s1 + $0x164] sm:$0xf]
  %v115 = vld [vmem:[%s1 + $0x168] sm:$0xf]
  %v116 = vld [vmem:[%s1 + $0x16c] sm:$0xf]
  %v117 = vld [vmem:[%s1 + $0x170] sm:$0xf]
  %v118 = vld [vmem:[%s1 + $0x174] sm:$0xf]
  %v119 = vld [vmem:[%s1 + $0x178] sm:$0xf]
  %v120 = vld [vmem:[%s1 + $0x17c] sm:$0xf]
  %v121 = vld [vmem:[%s1 + $0x180] sm:$0xf]
  %v122 = vld [vmem:[%s1 + $0x184] sm:$0xf]
  %v123 = vld [vmem:[%s1 + $0x188] sm:$0xf]
  %v124 = vld [vmem:[%s1 + $0x18c] sm:$0xf]
  %v125 = vld [vmem:[%s1 + $0x190] sm:$0xf]
  %v126 = vld [vmem:[%s1 + $0x194] sm:$0xf]
  %v127 = vld [vmem:[%s1 + $0x198] sm:$0xf]
  %v128 = vld [vmem:[%s1 + $0x19c] sm:$0xf]
  %v129 = vld [vmem:[%s1 + $0x1a0] sm:$0xf]
  %v130 = vld [vmem:[%s1 + $0x1a4] sm:$0xf]
  %v131 = vld [vmem:[%s1 + $0x1a8] sm:$0xf]
  %v132 = vld [vmem:[%s1 + $0x1ac] sm:$0xf]
  %v133 = vld [vmem:[%s1 + $0x1b0] sm:$0xf]
  %v134 = vld [vmem:[%s1 + $0x1b4] sm:$0xf]
  %v135 = vld [vmem:[%s1 + $0x1b8] sm:$0xf]
  %v136 = vld [vmem:[%s1 + $0x1bc] sm:$0xf]
  %v137 = vld [vmem:[%s1 + $0x1c0] sm:$0xf]
  %v138 = vld [vmem:[%s1 + $0x1c4] sm:$0xf]
  %v139 = vld [vmem:[%s1 + $0x1c8] sm:$0xf]
  %v140 = vld [vmem:[%s1 + $0x1cc] sm:$0xf]
  %v141 = vld [vmem:[%s1 + $0x1d0] sm:$0xf]
  %v142 = vld [vmem:[%s1 + $0x1d4] sm:$0xf]
  %v143 = vld [vmem:[%s1 + $0x1d8] sm:$0xf]
  %v144 = vld [vmem:[%s1 + $0x1dc] sm:$0xf]
  %v145 = vld [vmem:[%s1 + $0x1e0] sm:$0xf]
  %v146 = vld [vmem:[%s1 + $0x1e4] sm:$0xf]
  %v147 = vld [vmem:[%s1 + $0x1e8] sm:$0xf]
  %v148 = vld [vmem:[%s1 + $0x1ec] sm:$0xf]
  %v149 = vld [vmem:[%s1 + $0x1f0] sm:$0xf]
  %v150 = vld [vmem:[%s1 + $0x1f4] sm:$0xf]
  %v151 = vld [vmem:[%s1 + $0x1f8] sm:$0xf]
  %v152 = vld [vmem:[%s1 + $0x1fc] sm:$0xf]
  %v153 = vld [vmem:[%s1 + $0x200] sm:$0xf]
  %v154 = vld [vmem:[%s1 + $0x204] sm:$0xf]
  %v155 = vld [vmem:[%s1 + $0x208] sm:$0xf]
  %v156 = vld [vmem:[%s1 + $0x20c] sm:$0xf]
  %v157 = vld [vmem:[%s1 + $0x210] sm:$0xf]
  %v158 = vld [vmem:[%s1 + $0x214] sm:$0xf]
  %v159 = vld [vmem:[%s1 + $0x218] sm:$0xf]
  %v160 = vld [vmem:[%s1 + $0x21c] sm:$0xf]
  %v161 = vld [vmem:[%s1 + $0x220] sm:$0xf]
  %v162 = vld [vmem:[%s1 + $0x224] sm:$0xf]
  %v163 = vld [vmem:[%s1 + $0x228] sm:$0xf]
  %v164 = vld [vmem:[%s1 + $0x22c] sm:$0xf]
  %v165 = vld [vmem:[%s1 + $0x230] sm:$0xf]
  %v166 = vld [vmem:[%s1 + $0x234] sm:$0xf]
  %v167 = vld [vmem:[%s1 + $0x238] sm:$0xf]
  %v168 = vld [vmem:[%s1 + $0x23c] sm:$0xf]
  %v169 = vld [vmem:[%s2] sm:$0x1]
  %v171 = vlaneseq
  %v172 = vshrl.u32 %v171, 7
  %v173 = vsub.s32 0, %v172
  %v174 = vrot.slane %v169, %v173
  %v186 = vunpack.c.l.b16 %v15
  %v187 = vunpack.c.h.b16 %v15
  %v188 = vunpack.c.l.b16 %v16
  %v189 = vunpack.c.h.b16 %v16
  %v190 = vunpack.c.l.b16 %v17
  %v191 = vunpack.c.h.b16 %v17
  %v192 = vunpack.c.l.b16 %v18
  %v193 = vunpack.c.h.b16 %v18
  %v194 = vunpack.c.l.b16 %v19
  %v195 = vunpack.c.l.b16 %v20
  %v196 = vunpack.c.h.b16 %v20
  %v197 = vunpack.c.l.b16 %v21
  %v198 = vunpack.c.h.b16 %v21
  %v199 = vunpack.c.l.b16 %v22
  %v200 = vunpack.c.h.b16 %v22
  %v201 = vunpack.c.l.b16 %v23
  %v202 = vunpack.c.h.b16 %v23
  %v203 = vunpack.c.l.b16 %v24
  %v204 = vpack.c.b16 %v195, %v186
  %v205 = vpack.c.b16 %v196, %v187
  %v206 = vpack.c.b16 %v197, %v188
  %v207 = vpack.c.b16 %v198, %v189
  %v208 = vpack.c.b16 %v199, %v190
  %v209 = vpack.c.b16 %v200, %v191
  %v210 = vpack.c.b16 %v201, %v192
  %v211 = vpack.c.b16 %v202, %v193
  %v212 = vpack.c.b16 %v203, %v194
  %v366 = vunpack.c.l.b16 %v25
  %v367 = vunpack.c.l.b16 %v26
  %v368 = vunpack.c.l.b16 %v27
  %v369 = vunpack.c.l.b16 %v28
  %v370 = vunpack.c.l.b16 %v29
  %v371 = vunpack.c.l.b16 %v30
  %v372 = vunpack.c.l.b16 %v31
  %v373 = vunpack.c.l.b16 %v32
  %v374 = vunpack.c.l.b16 %v33
  %v375 = vunpack.c.l.b16 %v34
  %v376 = vunpack.c.l.b16 %v35
  %v377 = vunpack.c.l.b16 %v36
  %v378 = vunpack.c.l.b16 %v37
  %v379 = vunpack.c.l.b16 %v38
  %v380 = vunpack.c.l.b16 %v39
  %v381 = vunpack.c.l.b16 %v40
  %v382 = vunpack.c.l.b16 %v41
  %v383 = vunpack.c.l.b16 %v42
  %v384 = vunpack.c.l.b16 %v43
  %v385 = vunpack.c.l.b16 %v44
  %v386 = vunpack.c.l.b16 %v45
  %v387 = vunpack.c.l.b16 %v46
  %v388 = vunpack.c.l.b16 %v47
  %v389 = vunpack.c.l.b16 %v48
  %v390 = vunpack.c.l.b16 %v49
  %v391 = vunpack.c.l.b16 %v50
  %v392 = vunpack.c.l.b16 %v51
  %v393 = vunpack.c.l.b16 %v52
  %v394 = vunpack.c.l.b16 %v53
  %v395 = vunpack.c.l.b16 %v54
  %v396 = vunpack.c.l.b16 %v55
  %v397 = vunpack.c.l.b16 %v56
  %v398 = vunpack.c.l.b16 %v57
  %v399 = vunpack.c.l.b16 %v58
  %v400 = vunpack.c.l.b16 %v59
  %v401 = vunpack.c.l.b16 %v60
  %v402 = vunpack.c.l.b16 %v61
  %v403 = vunpack.c.l.b16 %v62
  %v404 = vunpack.c.l.b16 %v63
  %v405 = vunpack.c.l.b16 %v64
  %v406 = vunpack.c.l.b16 %v65
  %v407 = vunpack.c.l.b16 %v66
  %v408 = vunpack.c.l.b16 %v67
  %v409 = vunpack.c.l.b16 %v68
  %v410 = vunpack.c.l.b16 %v69
  %v411 = vunpack.c.l.b16 %v70
  %v412 = vunpack.c.l.b16 %v71
  %v413 = vunpack.c.l.b16 %v72
  %v414 = vunpack.c.l.b16 %v73
  %v415 = vunpack.c.l.b16 %v74
  %v416 = vunpack.c.l.b16 %v75
  %v417 = vunpack.c.l.b16 %v76
  %v418 = vunpack.c.l.b16 %v77
  %v419 = vunpack.c.l.b16 %v78
  %v420 = vunpack.c.l.b16 %v79
  %v421 = vunpack.c.l.b16 %v80
  %v422 = vunpack.c.l.b16 %v81
  %v423 = vunpack.c.l.b16 %v82
  %v424 = vunpack.c.l.b16 %v83
  %v425 = vunpack.c.l.b16 %v84
  %v426 = vunpack.c.l.b16 %v85
  %v427 = vunpack.c.l.b16 %v86
  %v428 = vunpack.c.l.b16 %v87
  %v429 = vunpack.c.l.b16 %v88
  %v430 = vunpack.c.l.b16 %v89
  %v431 = vunpack.c.l.b16 %v90
  %v432 = vunpack.c.l.b16 %v91
  %v433 = vunpack.c.l.b16 %v92
  %v434 = vunpack.c.l.b16 %v93
  %v435 = vunpack.c.l.b16 %v94
  %v436 = vunpack.c.l.b16 %v95
  %v437 = vunpack.c.l.b16 %v96
  %v438 = vunpack.c.l.b16 %v97
  %v439 = vunpack.c.l.b16 %v98
  %v440 = vunpack.c.l.b16 %v99
  %v441 = vunpack.c.l.b16 %v100
  %v442 = vunpack.c.l.b16 %v101
  %v443 = vunpack.c.l.b16 %v102
  %v444 = vunpack.c.l.b16 %v103
  %v445 = vunpack.c.l.b16 %v104
  %v446 = vunpack.c.l.b16 %v105
  %v447 = vunpack.c.l.b16 %v106
  %v448 = vunpack.c.l.b16 %v107
  %v449 = vunpack.c.l.b16 %v108
  %v450 = vunpack.c.l.b16 %v109
  %v451 = vunpack.c.l.b16 %v110
  %v452 = vunpack.c.l.b16 %v111
  %v453 = vunpack.c.l.b16 %v112
  %v454 = vunpack.c.l.b16 %v113
  %v455 = vunpack.c.l.b16 %v114
  %v456 = vunpack.c.l.b16 %v115
  %v457 = vunpack.c.l.b16 %v116
  %v458 = vunpack.c.l.b16 %v117
  %v459 = vunpack.c.l.b16 %v118
  %v460 = vunpack.c.l.b16 %v119
  %v461 = vunpack.c.l.b16 %v120
  %v462 = vunpack.c.l.b16 %v121
  %v463 = vunpack.c.l.b16 %v122
  %v464 = vunpack.c.l.b16 %v123
  %v465 = vunpack.c.l.b16 %v124
  %v466 = vunpack.c.l.b16 %v125
  %v467 = vunpack.c.l.b16 %v126
  %v468 = vunpack.c.l.b16 %v127
  %v469 = vunpack.c.l.b16 %v128
  %v470 = vunpack.c.l.b16 %v129
  %v471 = vunpack.c.l.b16 %v130
  %v472 = vunpack.c.l.b16 %v131
  %v473 = vunpack.c.l.b16 %v132
  %v474 = vunpack.c.l.b16 %v133
  %v475 = vunpack.c.l.b16 %v134
  %v476 = vunpack.c.l.b16 %v135
  %v477 = vunpack.c.l.b16 %v136
  %v478 = vunpack.c.l.b16 %v137
  %v479 = vunpack.c.l.b16 %v138
  %v480 = vunpack.c.l.b16 %v139
  %v481 = vunpack.c.l.b16 %v140
  %v482 = vunpack.c.l.b16 %v141
  %v483 = vunpack.c.l.b16 %v142
  %v484 = vunpack.c.l.b16 %v143
  %v485 = vunpack.c.l.b16 %v144
  %v486 = vunpack.c.l.b16 %v145
  %v487 = vunpack.c.l.b16 %v146
  %v488 = vunpack.c.l.b16 %v147
  %v489 = vunpack.c.l.b16 %v148
  %v490 = vunpack.c.l.b16 %v149
  %v491 = vunpack.c.l.b16 %v150
  %v492 = vunpack.c.l.b16 %v151
  %v493 = vunpack.c.l.b16 %v152
  %v494 = vunpack.c.l.b16 %v153
  %v495 = vunpack.c.l.b16 %v154
  %v496 = vunpack.c.l.b16 %v155
  %v497 = vunpack.c.l.b16 %v156
  %v498 = vunpack.c.l.b16 %v157
  %v499 = vunpack.c.l.b16 %v158
  %v500 = vunpack.c.l.b16 %v159
  %v501 = vunpack.c.l.b16 %v160
  %v502 = vunpack.c.l.b16 %v161
  %v503 = vunpack.c.l.b16 %v162
  %v504 = vunpack.c.l.b16 %v163
  %v505 = vunpack.c.l.b16 %v164
  %v506 = vunpack.c.l.b16 %v165
  %v507 = vunpack.c.l.b16 %v166
  %v508 = vunpack.c.l.b16 %v167
  %v509 = vunpack.c.l.b16 %v168
  %v510 = vpack.c.b16 %v367, %v366
  %v511 = vpack.c.b16 %v369, %v368
  %v512 = vpack.c.b16 %v371, %v370
  %v513 = vpack.c.b16 %v373, %v372
  %v514 = vpack.c.b16 %v375, %v374
  %v515 = vpack.c.b16 %v377, %v376
  %v516 = vpack.c.b16 %v379, %v378
  %v517 = vpack.c.b16 %v381, %v380
  %v518 = vpack.c.b16 %v383, %v382
  %v519 = vpack.c.b16 %v385, %v384
  %v520 = vpack.c.b16 %v387, %v386
  %v521 = vpack.c.b16 %v389, %v388
  %v522 = vpack.c.b16 %v391, %v390
  %v523 = vpack.c.b16 %v393, %v392
  %v524 = vpack.c.b16 %v395, %v394
  %v525 = vpack.c.b16 %v397, %v396
  %v526 = vpack.c.b16 %v399, %v398
  %v527 = vpack.c.b16 %v401, %v400
  %v528 = vpack.c.b16 %v403, %v402
  %v529 = vpack.c.b16 %v405, %v404
  %v530 = vpack.c.b16 %v407, %v406
  %v531 = vpack.c.b16 %v409, %v408
  %v532 = vpack.c.b16 %v411, %v410
  %v533 = vpack.c.b16 %v413, %v412
  %v534 = vpack.c.b16 %v415, %v414
  %v535 = vpack.c.b16 %v417, %v416
  %v536 = vpack.c.b16 %v419, %v418
  %v537 = vpack.c.b16 %v421, %v420
  %v538 = vpack.c.b16 %v423, %v422
  %v539 = vpack.c.b16 %v425, %v424
  %v540 = vpack.c.b16 %v427, %v426
  %v541 = vpack.c.b16 %v429, %v428
  %v542 = vpack.c.b16 %v431, %v430
  %v543 = vpack.c.b16 %v433, %v432
  %v544 = vpack.c.b16 %v435, %v434
  %v545 = vpack.c.b16 %v437, %v436
  %v546 = vpack.c.b16 %v439, %v438
  %v547 = vpack.c.b16 %v441, %v440
  %v548 = vpack.c.b16 %v443, %v442
  %v549 = vpack.c.b16 %v445, %v444
  %v550 = vpack.c.b16 %v447, %v446
  %v551 = vpack.c.b16 %v449, %v448
  %v552 = vpack.c.b16 %v451, %v450
  %v553 = vpack.c.b16 %v453, %v452
  %v554 = vpack.c.b16 %v455, %v454
  %v555 = vpack.c.b16 %v457, %v456
  %v556 = vpack.c.b16 %v459, %v458
  %v557 = vpack.c.b16 %v461, %v460
  %v558 = vpack.c.b16 %v463, %v462
  %v559 = vpack.c.b16 %v465, %v464
  %v560 = vpack.c.b16 %v467, %v466
  %v561 = vpack.c.b16 %v469, %v468
  %v562 = vpack.c.b16 %v471, %v470
  %v563 = vpack.c.b16 %v473, %v472
  %v564 = vpack.c.b16 %v475, %v474
  %v565 = vpack.c.b16 %v477, %v476
  %v566 = vpack.c.b16 %v479, %v478
  %v567 = vpack.c.b16 %v481, %v480
  %v568 = vpack.c.b16 %v483, %v482
  %v569 = vpack.c.b16 %v485, %v484
  %v570 = vpack.c.b16 %v487, %v486
  %v571 = vpack.c.b16 %v489, %v488
  %v572 = vpack.c.b16 %v491, %v490
  %v573 = vpack.c.b16 %v493, %v492
  %v574 = vpack.c.b16 %v495, %v494
  %v575 = vpack.c.b16 %v497, %v496
  %v576 = vpack.c.b16 %v499, %v498
  %v577 = vpack.c.b16 %v501, %v500
  %v578 = vpack.c.b16 %v503, %v502
  %v579 = vpack.c.b16 %v505, %v504
  %v580 = vpack.c.b16 %v507, %v506
  %v581 = vpack.c.b16 %v509, %v508
  %654 = vmatprep.subr.bf16.mxu0 0
  %655 = vmatpush1.bf16.msra.mxu0 %v510
  %656 = vmatprep.subr.bf16.mxu0 0
  %657 = vmatpush1.bf16.msra.mxu0 %v511
  %658 = vmatprep.subr.bf16.mxu0 0
  %659 = vmatpush1.bf16.msra.mxu0 %v512
  %660 = vmatprep.subr.bf16.mxu0 0
  %661 = vmatpush1.bf16.msra.mxu0 %v513
  %662 = vmatprep.subr.bf16.mxu0 0
  %663 = vmatpush1.bf16.msra.mxu0 %v514
  %664 = vmatprep.subr.bf16.mxu0 0
  %665 = vmatpush1.bf16.msra.mxu0 %v515
  %666 = vmatprep.subr.bf16.mxu0 0
  %667 = vmatpush1.bf16.msra.mxu0 %v516
  %668 = vmatprep.subr.bf16.mxu0 0
  %669 = vmatpush1.bf16.msra.mxu0 %v517
  %670 = vmatprep.subr.bf16.mxu0 0
  %671 = vmatpush1.bf16.msra.mxu0 %v518
  %672 = vmatprep.subr.bf16.mxu0 0
  %673 = vmatpush1.bf16.msra.mxu0 %v519
  %674 = vmatprep.subr.bf16.mxu0 0
  %675 = vmatpush1.bf16.msra.mxu0 %v520
  %676 = vmatprep.subr.bf16.mxu0 0
  %677 = vmatpush1.bf16.msra.mxu0 %v521
  %678 = vmatprep.subr.bf16.mxu0 0
  %679 = vmatpush1.bf16.msra.mxu0 %v522
  %680 = vmatprep.subr.bf16.mxu0 0
  %681 = vmatpush1.bf16.msra.mxu0 %v523
  %682 = vmatprep.subr.bf16.mxu0 0
  %683 = vmatpush1.bf16.msra.mxu0 %v524
  %684 = vmatprep.subr.bf16.mxu0 0
  %685 = vmatpush1.bf16.msra.mxu0 %v525
  %686 = vmatprep.mubr.bf16.mxu0 %v205
  %687 = vmatmul.mubr.bf16.gmra.mrb[0].mxu0 %v204
  %v688 = vpop.f32.mrb[0].mxu0
  %v689 = vadd.f32 %v174, %v688
  %v690 = vpop.f32.mrb[0].mxu0
  %v691 = vpop.f32.mrb[0].mxu0
  %v692 = vadd.f32 %v174, %v691
  %v693 = vpop.f32.mrb[0].mxu0
  %694 = vdwg.mxu0
  %695 = vmatprep.subr.bf16.mxu0 0
  %696 = vmatpush1.bf16.msra.mxu0 %v526
  %697 = vmatprep.subr.bf16.mxu0 0
  %698 = vmatpush1.bf16.msra.mxu0 %v527
  %699 = vmatprep.subr.bf16.mxu0 0
  %700 = vmatpush1.bf16.msra.mxu0 %v528
  %701 = vmatprep.subr.bf16.mxu0 0
  %702 = vmatpush1.bf16.msra.mxu0 %v529
  %703 = vmatprep.subr.bf16.mxu0 0
  %704 = vmatpush1.bf16.msra.mxu0 %v530
  %705 = vmatprep.subr.bf16.mxu0 0
  %706 = vmatpush1.bf16.msra.mxu0 %v531
  %707 = vmatprep.subr.bf16.mxu0 0
  %708 = vmatpush1.bf16.msra.mxu0 %v532
  %709 = vmatprep.subr.bf16.mxu0 0
  %710 = vmatpush1.bf16.msra.mxu0 %v533
  %711 = vmatprep.subr.bf16.mxu0 0
  %712 = vmatpush1.bf16.msra.mxu0 %v534
  %713 = vmatprep.subr.bf16.mxu0 0
  %714 = vmatpush1.bf16.msra.mxu0 %v535
  %715 = vmatprep.subr.bf16.mxu0 0
  %716 = vmatpush1.bf16.msra.mxu0 %v536
  %717 = vmatprep.subr.bf16.mxu0 0
  %718 = vmatpush1.bf16.msra.mxu0 %v537
  %719 = vmatprep.subr.bf16.mxu0 0
  %720 = vmatpush1.bf16.msra.mxu0 %v538
  %721 = vmatprep.subr.bf16.mxu0 0
  %722 = vmatpush1.bf16.msra.mxu0 %v539
  %723 = vmatprep.subr.bf16.mxu0 0
  %724 = vmatpush1.bf16.msra.mxu0 %v540
  %725 = vmatprep.subr.bf16.mxu0 0
  %726 = vmatpush1.bf16.msra.mxu0 %v541
  %727 = vmatprep.mubr.bf16.mxu0 %v207
  %728 = vmatmul.mubr.bf16.gmra.mrb[0].mxu0 %v206
  %v729 = vpop.f32.mrb[0].mxu0
  %v730 = vadd.f32 %v689, %v729
  %v731 = vpop.f32.mrb[0].mxu0
  %v732 = vpop.f32.mrb[0].mxu0
  %v733 = vadd.f32 %v692, %v732
  %v734 = vpop.f32.mrb[0].mxu0
  %735 = vdwg.mxu0
  %736 = vmatprep.subr.bf16.mxu0 0
  %737 = vmatpush1.bf16.msra.mxu0 %v542
  %738 = vmatprep.subr.bf16.mxu0 0
  %739 = vmatpush1.bf16.msra.mxu0 %v543
  %740 = vmatprep.subr.bf16.mxu0 0
  %741 = vmatpush1.bf16.msra.mxu0 %v544
  %742 = vmatprep.subr.bf16.mxu0 0
  %743 = vmatpush1.bf16.msra.mxu0 %v545
  %744 = vmatprep.subr.bf16.mxu0 0
  %745 = vmatpush1.bf16.msra.mxu0 %v546
  %746 = vmatprep.subr.bf16.mxu0 0
  %747 = vmatpush1.bf16.msra.mxu0 %v547
  %748 = vmatprep.subr.bf16.mxu0 0
  %749 = vmatpush1.bf16.msra.mxu0 %v548
  %750 = vmatprep.subr.bf16.mxu0 0
  %751 = vmatpush1.bf16.msra.mxu0 %v549
  %752 = vmatprep.subr.bf16.mxu0 0
  %753 = vmatpush1.bf16.msra.mxu0 %v550
  %754 = vmatprep.subr.bf16.mxu0 0
  %755 = vmatpush1.bf16.msra.mxu0 %v551
  %756 = vmatprep.subr.bf16.mxu0 0
  %757 = vmatpush1.bf16.msra.mxu0 %v552
  %758 = vmatprep.subr.bf16.mxu0 0
  %759 = vmatpush1.bf16.msra.mxu0 %v553
  %760 = vmatprep.subr.bf16.mxu0 0
  %761 = vmatpush1.bf16.msra.mxu0 %v554
  %762 = vmatprep.subr.bf16.mxu0 0
  %763 = vmatpush1.bf16.msra.mxu0 %v555
  %764 = vmatprep.subr.bf16.mxu0 0
  %765 = vmatpush1.bf16.msra.mxu0 %v556
  %766 = vmatprep.subr.bf16.mxu0 0
  %767 = vmatpush1.bf16.msra.mxu0 %v557
  %768 = vmatprep.mubr.bf16.mxu0 %v209
  %769 = vmatmul.mubr.bf16.gmra.mrb[0].mxu0 %v208
  %v770 = vpop.f32.mrb[0].mxu0
  %v771 = vadd.f32 %v730, %v770
  %v772 = vpop.f32.mrb[0].mxu0
  %v773 = vpop.f32.mrb[0].mxu0
  %v774 = vadd.f32 %v733, %v773
  %v775 = vpop.f32.mrb[0].mxu0
  %776 = vdwg.mxu0
  %777 = vmatprep.subr.bf16.mxu0 0
  %778 = vmatpush1.bf16.msra.mxu0 %v558
  %779 = vmatprep.subr.bf16.mxu0 0
  %780 = vmatpush1.bf16.msra.mxu0 %v559
  %781 = vmatprep.subr.bf16.mxu0 0
  %782 = vmatpush1.bf16.msra.mxu0 %v560
  %783 = vmatprep.subr.bf16.mxu0 0
  %784 = vmatpush1.bf16.msra.mxu0 %v561
  %785 = vmatprep.subr.bf16.mxu0 0
  %786 = vmatpush1.bf16.msra.mxu0 %v562
  %787 = vmatprep.subr.bf16.mxu0 0
  %788 = vmatpush1.bf16.msra.mxu0 %v563
  %789 = vmatprep.subr.bf16.mxu0 0
  %790 = vmatpush1.bf16.msra.mxu0 %v564
  %791 = vmatprep.subr.bf16.mxu0 0
  %792 = vmatpush1.bf16.msra.mxu0 %v565
  %793 = vmatprep.subr.bf16.mxu0 0
  %794 = vmatpush1.bf16.msra.mxu0 %v566
  %795 = vmatprep.subr.bf16.mxu0 0
  %796 = vmatpush1.bf16.msra.mxu0 %v567
  %797 = vmatprep.subr.bf16.mxu0 0
  %798 = vmatpush1.bf16.msra.mxu0 %v568
  %799 = vmatprep.subr.bf16.mxu0 0
  %800 = vmatpush1.bf16.msra.mxu0 %v569
  %801 = vmatprep.subr.bf16.mxu0 0
  %802 = vmatpush1.bf16.msra.mxu0 %v570
  %803 = vmatprep.subr.bf16.mxu0 0
  %804 = vmatpush1.bf16.msra.mxu0 %v571
  %805 = vmatprep.subr.bf16.mxu0 0
  %806 = vmatpush1.bf16.msra.mxu0 %v572
  %807 = vmatprep.subr.bf16.mxu0 0
  %808 = vmatpush1.bf16.msra.mxu0 %v573
  %809 = vmatprep.mubr.bf16.mxu0 %v211
  %810 = vmatmul.mubr.bf16.gmra.mrb[0].mxu0 %v210
  %v811 = vpop.f32.mrb[0].mxu0
  %v812 = vadd.f32 %v771, %v811
  %v813 = vpop.f32.mrb[0].mxu0
  %v814 = vpop.f32.mrb[0].mxu0
  %v815 = vadd.f32 %v774, %v814
  %v816 = vpop.f32.mrb[0].mxu0
  %817 = vdwg.mxu0
  %818 = vmatprep.subr.bf16.mxu0 0
  %819 = vmatpush1.bf16.msra.mxu0 %v574
  %820 = vmatprep.subr.bf16.mxu0 0
  %821 = vmatpush1.bf16.msra.mxu0 %v575
  %822 = vmatprep.subr.bf16.mxu0 0
  %823 = vmatpush1.bf16.msra.mxu0 %v576
  %824 = vmatprep.subr.bf16.mxu0 0
  %825 = vmatpush1.bf16.msra.mxu0 %v577
  %826 = vmatprep.subr.bf16.mxu0 0
  %827 = vmatpush1.bf16.msra.mxu0 %v578
  %828 = vmatprep.subr.bf16.mxu0 0
  %829 = vmatpush1.bf16.msra.mxu0 %v579
  %830 = vmatprep.subr.bf16.mxu0 0
  %831 = vmatpush1.bf16.msra.mxu0 %v580
  %832 = vmatprep.subr.bf16.mxu0 0
  %833 = vmatpush1.bf16.msra.mxu0 %v581
  %834 = vmatprep.subr.bf16.mxu0 0
  %835 = vmatpush1.bf16.msra.mxu0 0
  %836 = vmatprep.subr.bf16.mxu0 0
  %837 = vmatpush1.bf16.msra.mxu0 0
  %838 = vmatprep.subr.bf16.mxu0 0
  %839 = vmatpush1.bf16.msra.mxu0 0
  %840 = vmatprep.subr.bf16.mxu0 0
  %841 = vmatpush1.bf16.msra.mxu0 0
  %842 = vmatprep.subr.bf16.mxu0 0
  %843 = vmatpush1.bf16.msra.mxu0 0
  %844 = vmatprep.subr.bf16.mxu0 0
  %845 = vmatpush1.bf16.msra.mxu0 0
  %846 = vmatprep.subr.bf16.mxu0 0
  %847 = vmatpush1.bf16.msra.mxu0 0
  %848 = vmatprep.subr.bf16.mxu0 0
  %849 = vmatpush1.bf16.msra.mxu0 0
  %850 = vmatprep.mubr.bf16.mxu0 0
  %851 = vmatmul.mubr.bf16.gmra.mrb[0].mxu0 %v212
  %v852 = vpop.f32.mrb[0].mxu0
  %v853 = vadd.f32 %v812, %v852
  %v854 = vpop.f32.mrb[0].mxu0
  %v855 = vpop.f32.mrb[0].mxu0
  %v856 = vadd.f32 %v815, %v855
  %v857 = vpop.f32.mrb[0].mxu0
  %858 = vdwg.mxu0
  %v859 = vpack.c.bf16 %v856, %v853
  %v861 = vunpack.c.l.b16 %v859
  %v862 = vunpack.c.h.b16 %v859
  %v863 = vpack.c.b16 %v861, %v861
  %v864 = vpack.c.b16 %v862, %v862
  %867 = vst [vmem:[%s3] sm:$0xf] %v863
  %868 = vst [vmem:[%s3 + $0x4] sm:$0xf] %v864
  // Predicated region
  $region14: #{_lambda_.23} parent=0 // pred_check
    _
  $region15: #{_lambda_.23} parent=0 // pred_check_branch
    %870 = sbr.rel (0) target = $region17
  $region16: #{_lambda_.23} parent=0 // pred_region
    _
  $region17: #{_lambda_.23} parent=0 // pred_fallthru
    _
  // Predicated region
  $region18: #{_lambda_.23} parent=0 // pred_check
    _
  $region19: #{_lambda_.23} parent=0 // pred_check_branch
    %872 = sbr.rel (0) target = $region21
  $region20: #{_lambda_.23} parent=0 // pred_region
    _
  $region21: #{_lambda_.23} parent=0 // pred_fallthru
    _

// kernel: _lambda_.24
$region0: #{_lambda_.24}
  #allocation0 [shape = 'u32[]', space=smem, size = 0x4, offset = 0x4, fixed_abs, tag = 'smem constant byte address 0x4 - core index']
  #allocation1 [shape = 'u32[144,128]{1,0:T(1,128)}', space=vmem, size = 0x12000, scoped, tag = 'internal scratch']
  %s0 = inlined_call_operand.vmem [shape: bf16[176,1152], index: 0, kind: input, shape index: {}]
  %s1 = inlined_call_operand.vmem [shape: bf16[1152,128], index: 1, kind: input, shape index: {}]
  %s2 = inlined_call_operand.vmem [shape: f32[1,128], index: 2, kind: input, shape index: {}]
  %s3 = inlined_call_operand.vmem [shape: bf16[176,128], index: 3, kind: output, shape index: {}]
  %s4 = sld [smem:[#allocation0]]
  $region22: #{_lambda_.24} parent=0
    _
  %s6 = ssub.s32 1, %s4
  %s7 = scalar_select 0, %s6, %s4
  // Predicated region
  $region2: #{_lambda_.24} parent=0 // pred_check
    _
  $region3: #{_lambda_.24} parent=0 // pred_check_branch
    %9 = sbr.rel (0) target = $region5
  $region4: #{_lambda_.24} parent=0 // pred_region
    _
  $region5: #{_lambda_.24} parent=0 // pred_fallthru
    _
  // Predicated region
  $region6: #{_lambda_.24} parent=0 // pred_check
    _
  $region7: #{_lambda_.24} parent=0 // pred_check_branch
    %11 = sbr.rel (0) target = $region9
  $region8: #{_lambda_.24} parent=0 // pred_region
    _
  $region9: #{_lambda_.24} parent=0 // pred_fallthru
    _
  // Predicated region
  $region10: #{_lambda_.24} parent=0 // pred_check
    _
  $region11: #{_lambda_.24} parent=0 // pred_check_branch
    %13 = sbr.rel (0) target = $region13
  $region12: #{_lambda_.24} parent=0 // pred_region
    _
  $region13: #{_lambda_.24} parent=0 // pred_fallthru
    _
  %v15 = vld [vmem:[%s0] sm:$0xff]
  %v16 = vld [vmem:[%s0 + $0x8] sm:$0xff]
  %v17 = vld [vmem:[%s0 + $0x10] sm:$0xff]
  %v18 = vld [vmem:[%s0 + $0x18] sm:$0xff]
  %v19 = vld [vmem:[%s0 + $0x20] sm:$0xf]
  %v20 = vld [vmem:[%s0 + $0x24] sm:$0xff]
  %v21 = vld [vmem:[%s0 + $0x2c] sm:$0xff]
  %v22 = vld [vmem:[%s0 + $0x34] sm:$0xff]
  %v23 = vld [vmem:[%s0 + $0x3c] sm:$0xff]
  %v24 = vld [vmem:[%s0 + $0x44] sm:$0xf]
  %v25 = vld [vmem:[%s0 + $0x48] sm:$0xff]
  %v26 = vld [vmem:[%s0 + $0x50] sm:$0xff]
  %v27 = vld [vmem:[%s0 + $0x58] sm:$0xff]
  %v28 = vld [vmem:[%s0 + $0x60] sm:$0xff]
  %v29 = vld [vmem:[%s0 + $0x68] sm:$0xf]
  %v30 = vld [vmem:[%s0 + $0x6c] sm:$0xff]
  %v31 = vld [vmem:[%s0 + $0x74] sm:$0xff]
  %v32 = vld [vmem:[%s0 + $0x7c] sm:$0xff]
  %v33 = vld [vmem:[%s0 + $0x84] sm:$0xff]
  %v34 = vld [vmem:[%s0 + $0x8c] sm:$0xf]
  %v35 = vld [vmem:[%s0 + $0x90] sm:$0xff]
  %v36 = vld [vmem:[%s0 + $0x98] sm:$0xff]
  %v37 = vld [vmem:[%s0 + $0xa0] sm:$0xff]
  %v38 = vld [vmem:[%s0 + $0xa8] sm:$0xff]
  %v39 = vld [vmem:[%s0 + $0xb0] sm:$0xf]
  %v40 = vld [vmem:[%s0 + $0xb4] sm:$0xff]
  %v41 = vld [vmem:[%s0 + $0xbc] sm:$0xff]
  %v42 = vld [vmem:[%s0 + $0xc4] sm:$0xff]
  %v43 = vld [vmem:[%s0 + $0xcc] sm:$0xff]
  %v44 = vld [vmem:[%s0 + $0xd4] sm:$0xf]
  %v45 = vld [vmem:[%s0 + $0xd8] sm:$0xff]
  %v46 = vld [vmem:[%s0 + $0xe0] sm:$0xff]
  %v47 = vld [vmem:[%s0 + $0xe8] sm:$0xff]
  %v48 = vld [vmem:[%s0 + $0xf0] sm:$0xff]
  %v49 = vld [vmem:[%s0 + $0xf8] sm:$0xf]
  %v50 = vld [vmem:[%s0 + $0xfc] sm:$0xff]
  %v51 = vld [vmem:[%s0 + $0x104] sm:$0xff]
  %v52 = vld [vmem:[%s0 + $0x10c] sm:$0xff]
  %v53 = vld [vmem:[%s0 + $0x114] sm:$0xff]
  %v54 = vld [vmem:[%s0 + $0x11c] sm:$0xf]
  %v55 = vld [vmem:[%s0 + $0x120] sm:$0xff]
  %v56 = vld [vmem:[%s0 + $0x128] sm:$0xff]
  %v57 = vld [vmem:[%s0 + $0x130] sm:$0xff]
  %v58 = vld [vmem:[%s0 + $0x138] sm:$0xff]
  %v59 = vld [vmem:[%s0 + $0x140] sm:$0xf]
  %v60 = vld [vmem:[%s0 + $0x144] sm:$0xff]
  %v61 = vld [vmem:[%s0 + $0x14c] sm:$0xff]
  %v62 = vld [vmem:[%s0 + $0x154] sm:$0xff]
  %v63 = vld [vmem:[%s0 + $0x15c] sm:$0xff]
  %v64 = vld [vmem:[%s0 + $0x164] sm:$0xf]
  %v65 = vld [vmem:[%s0 + $0x168] sm:$0xff]
  %v66 = vld [vmem:[%s0 + $0x170] sm:$0xff]
  %v67 = vld [vmem:[%s0 + $0x178] sm:$0xff]
  %v68 = vld [vmem:[%s0 + $0x180] sm:$0xff]
  %v69 = vld [vmem:[%s0 + $0x188] sm:$0xf]
  %v70 = vld [vmem:[%s0 + $0x18c] sm:$0xff]
  %v71 = vld [vmem:[%s0 + $0x194] sm:$0xff]
  %v72 = vld [vmem:[%s0 + $0x19c] sm:$0xff]
  %v73 = vld [vmem:[%s0 + $0x1a4] sm:$0xff]
  %v74 = vld [vmem:[%s0 + $0x1ac] sm:$0xf]
  %v75 = vld [vmem:[%s0 + $0x1b0] sm:$0xff]
  %v76 = vld [vmem:[%s0 + $0x1b8] sm:$0xff]
  %v77 = vld [vmem:[%s0 + $0x1c0] sm:$0xff]
  %v78 = vld [vmem:[%s0 + $0x1c8] sm:$0xff]
  %v79 = vld [vmem:[%s0 + $0x1d0] sm:$0xf]
  %v80 = vld [vmem:[%s0 + $0x1d4] sm:$0xff]
  %v81 = vld [vmem:[%s0 + $0x1dc] sm:$0xff]
  %v82 = vld [vmem:[%s0 + $0x1e4] sm:$0xff]
  %v83 = vld [vmem:[%s0 + $0x1ec] sm:$0xff]
  %v84 = vld [vmem:[%s0 + $0x1f4] sm:$0xf]
  %v85 = vld [vmem:[%s0 + $0x1f8] sm:$0xff]
  %v86 = vld [vmem:[%s0 + $0x200] sm:$0xff]
  %v87 = vld [vmem:[%s0 + $0x208] sm:$0xff]
  %v88 = vld [vmem:[%s0 + $0x210] sm:$0xff]
  %v89 = vld [vmem:[%s0 + $0x218] sm:$0xf]
  %v90 = vld [vmem:[%s0 + $0x21c] sm:$0xff]
  %v91 = vld [vmem:[%s0 + $0x224] sm:$0xff]
  %v92 = vld [vmem:[%s0 + $0x22c] sm:$0xff]
  %v93 = vld [vmem:[%s0 + $0x234] sm:$0xff]
  %v94 = vld [vmem:[%s0 + $0x23c] sm:$0xf]
  %v95 = vld [vmem:[%s0 + $0x240] sm:$0xff]
  %v96 = vld [vmem:[%s0 + $0x248] sm:$0xff]
  %v97 = vld [vmem:[%s0 + $0x250] sm:$0xff]
  %v98 = vld [vmem:[%s0 + $0x258] sm:$0xff]
  %v99 = vld [vmem:[%s0 + $0x260] sm:$0xf]
  %v100 = vld [vmem:[%s0 + $0x264] sm:$0xff]
  %v101 = vld [vmem:[%s0 + $0x26c] sm:$0xff]
  %v102 = vld [vmem:[%s0 + $0x274] sm:$0xff]
  %v103 = vld [vmem:[%s0 + $0x27c] sm:$0xff]
  %v104 = vld [vmem:[%s0 + $0x284] sm:$0xf]
  %v105 = vld [vmem:[%s0 + $0x288] sm:$0xff]
  %v106 = vld [vmem:[%s0 + $0x290] sm:$0xff]
  %v107 = vld [vmem:[%s0 + $0x298] sm:$0xff]
  %v108 = vld [vmem:[%s0 + $0x2a0] sm:$0xff]
  %v109 = vld [vmem:[%s0 + $0x2a8] sm:$0xf]
  %v110 = vld [vmem:[%s0 + $0x2ac] sm:$0xff]
  %v111 = vld [vmem:[%s0 + $0x2b4] sm:$0xff]
  %v112 = vld [vmem:[%s0 + $0x2bc] sm:$0xff]
  %v113 = vld [vmem:[%s0 + $0x2c4] sm:$0xff]
  %v114 = vld [vmem:[%s0 + $0x2cc] sm:$0xf]
  %v115 = vld [vmem:[%s0 + $0x2d0] sm:$0xff]
  %v116 = vld [vmem:[%s0 + $0x2d8] sm:$0xff]
  %v117 = vld [vmem:[%s0 + $0x2e0] sm:$0xff]
  %v118 = vld [vmem:[%s0 + $0x2e8] sm:$0xff]
  %v119 = vld [vmem:[%s0 + $0x2f0] sm:$0xf]
  %v120 = vld [vmem:[%s0 + $0x2f4] sm:$0xff]
  %v121 = vld [vmem:[%s0 + $0x2fc] sm:$0xff]
  %v122 = vld [vmem:[%s0 + $0x304] sm:$0xff]
  %v123 = vld [vmem:[%s0 + $0x30c] sm:$0xff]
  %v124 = vld [vmem:[%s0 + $0x314] sm:$0xf]
  %v125 = vld [vmem:[%s1] sm:$0xf]
  %v126 = vld [vmem:[%s1 + $0x4] sm:$0xf]
  %v127 = vld [vmem:[%s1 + $0x8] sm:$0xf]
  %v128 = vld [vmem:[%s1 + $0xc] sm:$0xf]
  %v129 = vld [vmem:[%s1 + $0x10] sm:$0xf]
  %v130 = vld [vmem:[%s1 + $0x14] sm:$0xf]
  %v131 = vld [vmem:[%s1 + $0x18] sm:$0xf]
  %v132 = vld [vmem:[%s1 + $0x1c] sm:$0xf]
  %v133 = vld [vmem:[%s1 + $0x20] sm:$0xf]
  %v134 = vld [vmem:[%s1 + $0x24] sm:$0xf]
  %v135 = vld [vmem:[%s1 + $0x28] sm:$0xf]
  %v136 = vld [vmem:[%s1 + $0x2c] sm:$0xf]
  %v137 = vld [vmem:[%s1 + $0x30] sm:$0xf]
  %v138 = vld [vmem:[%s1 + $0x34] sm:$0xf]
  %v139 = vld [vmem:[%s1 + $0x38] sm:$0xf]
  %v140 = vld [vmem:[%s1 + $0x3c] sm:$0xf]
  %v141 = vld [vmem:[%s1 + $0x40] sm:$0xf]
  %v142 = vld [vmem:[%s1 + $0x44] sm:$0xf]
  %v143 = vld [vmem:[%s1 + $0x48] sm:$0xf]
  %v144 = vld [vmem:[%s1 + $0x4c] sm:$0xf]
  %v145 = vld [vmem:[%s1 + $0x50] sm:$0xf]
  %v146 = vld [vmem:[%s1 + $0x54] sm:$0xf]
  %v147 = vld [vmem:[%s1 + $0x58] sm:$0xf]
  %v148 = vld [vmem:[%s1 + $0x5c] sm:$0xf]
  %v149 = vld [vmem:[%s1 + $0x60] sm:$0xf]
  %v150 = vld [vmem:[%s1 + $0x64] sm:$0xf]
  %v151 = vld [vmem:[%s1 + $0x68] sm:$0xf]
  %v152 = vld [vmem:[%s1 + $0x6c] sm:$0xf]
  %v153 = vld [vmem:[%s1 + $0x70] sm:$0xf]
  %v154 = vld [vmem:[%s1 + $0x74] sm:$0xf]
  %v155 = vld [vmem:[%s1 + $0x78] sm:$0xf]
  %v156 = vld [vmem:[%s1 + $0x7c] sm:$0xf]
  %v157 = vld [vmem:[%s1 + $0x80] sm:$0xf]
  %v158 = vld [vmem:[%s1 + $0x84] sm:$0xf]
  %v159 = vld [vmem:[%s1 + $0x88] sm:$0xf]
  %v160 = vld [vmem:[%s1 + $0x8c] sm:$0xf]
  %v161 = vld [vmem:[%s1 + $0x90] sm:$0xf]
  %v162 = vld [vmem:[%s1 + $0x94] sm:$0xf]
  %v163 = vld [vmem:[%s1 + $0x98] sm:$0xf]
  %v164 = vld [vmem:[%s1 + $0x9c] sm:$0xf]
  %v165 = vld [vmem:[%s1 + $0xa0] sm:$0xf]
  %v166 = vld [vmem:[%s1 + $0xa4] sm:$0xf]
  %v167 = vld [vmem:[%s1 + $0xa8] sm:$0xf]
  %v168 = vld [vmem:[%s1 + $0xac] sm:$0xf]
  %v169 = vld [vmem:[%s1 + $0xb0] sm:$0xf]
  %v170 = vld [vmem:[%s1 + $0xb4] sm:$0xf]
  %v171 = vld [vmem:[%s1 + $0xb8] sm:$0xf]
  %v172 = vld [vmem:[%s1 + $0xbc] sm:$0xf]
  %v173 = vld [vmem:[%s1 + $0xc0] sm:$0xf]
  %v174 = vld [vmem:[%s1 + $0xc4] sm:$0xf]
  %v175 = vld [vmem:[%s1 + $0xc8] sm:$0xf]
  %v176 = vld [vmem:[%s1 + $0xcc] sm:$0xf]
  %v177 = vld [vmem:[%s1 + $0xd0] sm:$0xf]
  %v178 = vld [vmem:[%s1 + $0xd4] sm:$0xf]
  %v179 = vld [vmem:[%s1 + $0xd8] sm:$0xf]
  %v180 = vld [vmem:[%s1 + $0xdc] sm:$0xf]
  %v181 = vld [vmem:[%s1 + $0xe0] sm:$0xf]
  %v182 = vld [vmem:[%s1 + $0xe4] sm:$0xf]
  %v183 = vld [vmem:[%s1 + $0xe8] sm:$0xf]
  %v184 = vld [vmem:[%s1 + $0xec] sm:$0xf]
  %v185 = vld [vmem:[%s1 + $0xf0] sm:$0xf]
  %v186 = vld [vmem:[%s1 + $0xf4] sm:$0xf]
  %v187 = vld [vmem:[%s1 + $0xf8] sm:$0xf]
  %v188 = vld [vmem:[%s1 + $0xfc] sm:$0xf]
  %v189 = vld [vmem:[%s1 + $0x100] sm:$0xf]
  %v190 = vld [vmem:[%s1 + $0x104] sm:$0xf]
  %v191 = vld [vmem:[%s1 + $0x108] sm:$0xf]
  %v192 = vld [vmem:[%s1 + $0x10c] sm:$0xf]
  %v193 = vld [vmem:[%s1 + $0x110] sm:$0xf]
  %v194 = vld [vmem:[%s1 + $0x114] sm:$0xf]
  %v195 = vld [vmem:[%s1 + $0x118] sm:$0xf]
  %v196 = vld [vmem:[%s1 + $0x11c] sm:$0xf]
  %v197 = vld [vmem:[%s1 + $0x120] sm:$0xf]
  %v198 = vld [vmem:[%s1 + $0x124] sm:$0xf]
  %v199 = vld [vmem:[%s1 + $0x128] sm:$0xf]
  %v200 = vld [vmem:[%s1 + $0x12c] sm:$0xf]
  %v201 = vld [vmem:[%s1 + $0x130] sm:$0xf]
  %v202 = vld [vmem:[%s1 + $0x134] sm:$0xf]
  %v203 = vld [vmem:[%s1 + $0x138] sm:$0xf]
  %v204 = vld [vmem:[%s1 + $0x13c] sm:$0xf]
  %v205 = vld [vmem:[%s1 + $0x140] sm:$0xf]
  %v206 = vld [vmem:[%s1 + $0x144] sm:$0xf]
  %v207 = vld [vmem:[%s1 + $0x148] sm:$0xf]
  %v208 = vld [vmem:[%s1 + $0x14c] sm:$0xf]
  %v209 = vld [vmem:[%s1 + $0x150] sm:$0xf]
  %v210 = vld [vmem:[%s1 + $0x154] sm:$0xf]
  %v211 = vld [vmem:[%s1 + $0x158] sm:$0xf]
  %v212 = vld [vmem:[%s1 + $0x15c] sm:$0xf]
  %v213 = vld [vmem:[%s1 + $0x160] sm:$0xf]
  %v214 = vld [vmem:[%s1 + $0x164] sm:$0xf]
  %v215 = vld [vmem:[%s1 + $0x168] sm:$0xf]
  %v216 = vld [vmem:[%s1 + $0x16c] sm:$0xf]
  %v217 = vld [vmem:[%s1 + $0x170] sm:$0xf]
  %v218 = vld [vmem:[%s1 + $0x174] sm:$0xf]
  %v219 = vld [vmem:[%s1 + $0x178] sm:$0xf]
  %v220 = vld [vmem:[%s1 + $0x17c] sm:$0xf]
  %v221 = vld [vmem:[%s1 + $0x180] sm:$0xf]
  %v222 = vld [vmem:[%s1 + $0x184] sm:$0xf]
  %v223 = vld [vmem:[%s1 + $0x188] sm:$0xf]
  %v224 = vld [vmem:[%s1 + $0x18c] sm:$0xf]
  %v225 = vld [vmem:[%s1 + $0x190] sm:$0xf]
  %v226 = vld [vmem:[%s1 + $0x194] sm:$0xf]
  %v227 = vld [vmem:[%s1 + $0x198] sm:$0xf]
  %v228 = vld [vmem:[%s1 + $0x19c] sm:$0xf]
  %v229 = vld [vmem:[%s1 + $0x1a0] sm:$0xf]
  %v230 = vld [vmem:[%s1 + $0x1a4] sm:$0xf]
  %v231 = vld [vmem:[%s1 + $0x1a8] sm:$0xf]
  %v232 = vld [vmem:[%s1 + $0x1ac] sm:$0xf]
  %v233 = vld [vmem:[%s1 + $0x1b0] sm:$0xf]
  %v234 = vld [vmem:[%s1 + $0x1b4] sm:$0xf]
  %v235 = vld [vmem:[%s1 + $0x1b8] sm:$0xf]
  %v236 = vld [vmem:[%s1 + $0x1bc] sm:$0xf]
  %v237 = vld [vmem:[%s1 + $0x1c0] sm:$0xf]
  %v238 = vld [vmem:[%s1 + $0x1c4] sm:$0xf]
  %v239 = vld [vmem:[%s1 + $0x1c8] sm:$0xf]
  %v240 = vld [vmem:[%s1 + $0x1cc] sm:$0xf]
  %v241 = vld [vmem:[%s1 + $0x1d0] sm:$0xf]
  %v242 = vld [vmem:[%s1 + $0x1d4] sm:$0xf]
  %v243 = vld [vmem:[%s1 + $0x1d8] sm:$0xf]
  %v244 = vld [vmem:[%s1 + $0x1dc] sm:$0xf]
  %v245 = vld [vmem:[%s1 + $0x1e0] sm:$0xf]
  %v246 = vld [vmem:[%s1 + $0x1e4] sm:$0xf]
  %v247 = vld [vmem:[%s1 + $0x1e8] sm:$0xf]
  %v248 = vld [vmem:[%s1 + $0x1ec] sm:$0xf]
  %v249 = vld [vmem:[%s1 + $0x1f0] sm:$0xf]
  %v250 = vld [vmem:[%s1 + $0x1f4] sm:$0xf]
  %v251 = vld [vmem:[%s1 + $0x1f8] sm:$0xf]
  %v252 = vld [vmem:[%s1 + $0x1fc] sm:$0xf]
  %v253 = vld [vmem:[%s1 + $0x200] sm:$0xf]
  %v254 = vld [vmem:[%s1 + $0x204] sm:$0xf]
  %v255 = vld [vmem:[%s1 + $0x208] sm:$0xf]
  %v256 = vld [vmem:[%s1 + $0x20c] sm:$0xf]
  %v257 = vld [vmem:[%s1 + $0x210] sm:$0xf]
  %v258 = vld [vmem:[%s1 + $0x214] sm:$0xf]
  %v259 = vld [vmem:[%s1 + $0x218] sm:$0xf]
  %v260 = vld [vmem:[%s1 + $0x21c] sm:$0xf]
  %v261 = vld [vmem:[%s1 + $0x220] sm:$0xf]
  %v262 = vld [vmem:[%s1 + $0x224] sm:$0xf]
  %v263 = vld [vmem:[%s1 + $0x228] sm:$0xf]
  %v264 = vld [vmem:[%s1 + $0x22c] sm:$0xf]
  %v265 = vld [vmem:[%s1 + $0x230] sm:$0xf]
  %v266 = vld [vmem:[%s1 + $0x234] sm:$0xf]
  %v267 = vld [vmem:[%s1 + $0x238] sm:$0xf]
  %v268 = vld [vmem:[%s1 + $0x23c] sm:$0xf]
  %v269 = vld [vmem:[%s2] sm:$0x1]
  %v271 = vlaneseq
  %v272 = vshrl.u32 %v271, 7
  %v273 = vsub.s32 0, %v272
  %v274 = vrot.slane %v269, %v273
  %v386 = vunpack.c.l.b16 %v15
  %v387 = vunpack.c.h.b16 %v15
  %v388 = vunpack.c.l.b16 %v16
  %v389 = vunpack.c.h.b16 %v16
  %v390 = vunpack.c.l.b16 %v17
  %v391 = vunpack.c.h.b16 %v17
  %v392 = vunpack.c.l.b16 %v18
  %v393 = vunpack.c.h.b16 %v18
  %v394 = vunpack.c.l.b16 %v19
  %v395 = vunpack.c.l.b16 %v20
  %v396 = vunpack.c.h.b16 %v20
  %v397 = vunpack.c.l.b16 %v21
  %v398 = vunpack.c.h.b16 %v21
  %v399 = vunpack.c.l.b16 %v22
  %v400 = vunpack.c.h.b16 %v22
  %v401 = vunpack.c.l.b16 %v23
  %v402 = vunpack.c.h.b16 %v23
  %v403 = vunpack.c.l.b16 %v24
  %v404 = vunpack.c.l.b16 %v25
  %v405 = vunpack.c.h.b16 %v25
  %v406 = vunpack.c.l.b16 %v26
  %v407 = vunpack.c.h.b16 %v26
  %v408 = vunpack.c.l.b16 %v27
  %v409 = vunpack.c.h.b16 %v27
  %v410 = vunpack.c.l.b16 %v28
  %v411 = vunpack.c.h.b16 %v28
  %v412 = vunpack.c.l.b16 %v29
  %v413 = vunpack.c.l.b16 %v30
  %v414 = vunpack.c.h.b16 %v30
  %v415 = vunpack.c.l.b16 %v31
  %v416 = vunpack.c.h.b16 %v31
  %v417 = vunpack.c.l.b16 %v32
  %v418 = vunpack.c.h.b16 %v32
  %v419 = vunpack.c.l.b16 %v33
  %v420 = vunpack.c.h.b16 %v33
  %v421 = vunpack.c.l.b16 %v34
  %v422 = vunpack.c.l.b16 %v35
  %v423 = vunpack.c.h.b16 %v35
  %v424 = vunpack.c.l.b16 %v36
  %v425 = vunpack.c.h.b16 %v36
  %v426 = vunpack.c.l.b16 %v37
  %v427 = vunpack.c.h.b16 %v37
  %v428 = vunpack.c.l.b16 %v38
  %v429 = vunpack.c.h.b16 %v38
  %v430 = vunpack.c.l.b16 %v39
  %v431 = vunpack.c.l.b16 %v40
  %v432 = vunpack.c.h.b16 %v40
  %v433 = vunpack.c.l.b16 %v41
  %v434 = vunpack.c.h.b16 %v41
  %v435 = vunpack.c.l.b16 %v42
  %v436 = vunpack.c.h.b16 %v42
  %v437 = vunpack.c.l.b16 %v43
  %v438 = vunpack.c.h.b16 %v43
  %v439 = vunpack.c.l.b16 %v44
  %v440 = vunpack.c.l.b16 %v45
  %v441 = vunpack.c.h.b16 %v45
  %v442 = vunpack.c.l.b16 %v46
  %v443 = vunpack.c.h.b16 %v46
  %v444 = vunpack.c.l.b16 %v47
  %v445 = vunpack.c.h.b16 %v47
  %v446 = vunpack.c.l.b16 %v48
  %v447 = vunpack.c.h.b16 %v48
  %v448 = vunpack.c.l.b16 %v49
  %v449 = vunpack.c.l.b16 %v50
  %v450 = vunpack.c.h.b16 %v50
  %v451 = vunpack.c.l.b16 %v51
  %v452 = vunpack.c.h.b16 %v51
  %v453 = vunpack.c.l.b16 %v52
  %v454 = vunpack.c.h.b16 %v52
  %v455 = vunpack.c.l.b16 %v53
  %v456 = vunpack.c.h.b16 %v53
  %v457 = vunpack.c.l.b16 %v54
  %v458 = vunpack.c.l.b16 %v55
  %v459 = vunpack.c.h.b16 %v55
  %v460 = vunpack.c.l.b16 %v56
  %v461 = vunpack.c.h.b16 %v56
  %v462 = vunpack.c.l.b16 %v57
  %v463 = vunpack.c.h.b16 %v57
  %v464 = vunpack.c.l.b16 %v58
  %v465 = vunpack.c.h.b16 %v58
  %v466 = vunpack.c.l.b16 %v59
  %v467 = vunpack.c.l.b16 %v60
  %v468 = vunpack.c.h.b16 %v60
  %v469 = vunpack.c.l.b16 %v61
  %v470 = vunpack.c.h.b16 %v61
  %v471 = vunpack.c.l.b16 %v62
  %v472 = vunpack.c.h.b16 %v62
  %v473 = vunpack.c.l.b16 %v63
  %v474 = vunpack.c.h.b16 %v63
  %v475 = vunpack.c.l.b16 %v64
  %v476 = vunpack.c.l.b16 %v65
  %v477 = vunpack.c.h.b16 %v65
  %v478 = vunpack.c.l.b16 %v66
  %v479 = vunpack.c.h.b16 %v66
  %v480 = vunpack.c.l.b16 %v67
  %v481 = vunpack.c.h.b16 %v67
  %v482 = vunpack.c.l.b16 %v68
  %v483 = vunpack.c.h.b16 %v68
  %v484 = vunpack.c.l.b16 %v69
  %v485 = vunpack.c.l.b16 %v70
  %v486 = vunpack.c.h.b16 %v70
  %v487 = vunpack.c.l.b16 %v71
  %v488 = vunpack.c.h.b16 %v71
  %v489 = vunpack.c.l.b16 %v72
  %v490 = vunpack.c.h.b16 %v72
  %v491 = vunpack.c.l.b16 %v73
  %v492 = vunpack.c.h.b16 %v73
  %v493 = vunpack.c.l.b16 %v74
  %v494 = vunpack.c.l.b16 %v75
  %v495 = vunpack.c.h.b16 %v75
  %v496 = vunpack.c.l.b16 %v76
  %v497 = vunpack.c.h.b16 %v76
  %v498 = vunpack.c.l.b16 %v77
  %v499 = vunpack.c.h.b16 %v77
  %v500 = vunpack.c.l.b16 %v78
  %v501 = vunpack.c.h.b16 %v78
  %v502 = vunpack.c.l.b16 %v79
  %v503 = vunpack.c.l.b16 %v80
  %v504 = vunpack.c.h.b16 %v80
  %v505 = vunpack.c.l.b16 %v81
  %v506 = vunpack.c.h.b16 %v81
  %v507 = vunpack.c.l.b16 %v82
  %v508 = vunpack.c.h.b16 %v82
  %v509 = vunpack.c.l.b16 %v83
  %v510 = vunpack.c.h.b16 %v83
  %v511 = vunpack.c.l.b16 %v84
  %v512 = vunpack.c.l.b16 %v85
  %v513 = vunpack.c.h.b16 %v85
  %v514 = vunpack.c.l.b16 %v86
  %v515 = vunpack.c.h.b16 %v86
  %v516 = vunpack.c.l.b16 %v87
  %v517 = vunpack.c.h.b16 %v87
  %v518 = vunpack.c.l.b16 %v88
  %v519 = vunpack.c.h.b16 %v88
  %v520 = vunpack.c.l.b16 %v89
  %v521 = vunpack.c.l.b16 %v90
  %v522 = vunpack.c.h.b16 %v90
  %v523 = vunpack.c.l.b16 %v91
  %v524 = vunpack.c.h.b16 %v91
  %v525 = vunpack.c.l.b16 %v92
  %v526 = vunpack.c.h.b16 %v92
  %v527 = vunpack.c.l.b16 %v93
  %v528 = vunpack.c.h.b16 %v93
  %v529 = vunpack.c.l.b16 %v94
  %v530 = vunpack.c.l.b16 %v95
  %v531 = vunpack.c.h.b16 %v95
  %v532 = vunpack.c.l.b16 %v96
  %v533 = vunpack.c.h.b16 %v96
  %v534 = vunpack.c.l.b16 %v97
  %v535 = vunpack.c.h.b16 %v97
  %v536 = vunpack.c.l.b16 %v98
  %v537 = vunpack.c.h.b16 %v98
  %v538 = vunpack.c.l.b16 %v99
  %v539 = vunpack.c.l.b16 %v100
  %v540 = vunpack.c.h.b16 %v100
  %v541 = vunpack.c.l.b16 %v101
  %v542 = vunpack.c.h.b16 %v101
  %v543 = vunpack.c.l.b16 %v102
  %v544 = vunpack.c.h.b16 %v102
  %v545 = vunpack.c.l.b16 %v103
  %v546 = vunpack.c.h.b16 %v103
  %v547 = vunpack.c.l.b16 %v104
  %v548 = vunpack.c.l.b16 %v105
  %v549 = vunpack.c.h.b16 %v105
  %v550 = vunpack.c.l.b16 %v106
  %v551 = vunpack.c.h.b16 %v106
  %v552 = vunpack.c.l.b16 %v107
  %v553 = vunpack.c.h.b16 %v107
  %v554 = vunpack.c.l.b16 %v108
  %v555 = vunpack.c.h.b16 %v108
  %v556 = vunpack.c.l.b16 %v109
  %v557 = vunpack.c.l.b16 %v110
  %v558 = vunpack.c.h.b16 %v110
  %v559 = vunpack.c.l.b16 %v111
  %v560 = vunpack.c.h.b16 %v111
  %v561 = vunpack.c.l.b16 %v112
  %v562 = vunpack.c.h.b16 %v112
  %v563 = vunpack.c.l.b16 %v113
  %v564 = vunpack.c.h.b16 %v113
  %v565 = vunpack.c.l.b16 %v114
  %v566 = vunpack.c.l.b16 %v115
  %v567 = vunpack.c.h.b16 %v115
  %v568 = vunpack.c.l.b16 %v116
  %v569 = vunpack.c.h.b16 %v116
  %v570 = vunpack.c.l.b16 %v117
  %v571 = vunpack.c.h.b16 %v117
  %v572 = vunpack.c.l.b16 %v118
  %v573 = vunpack.c.h.b16 %v118
  %v574 = vunpack.c.l.b16 %v119
  %v575 = vunpack.c.l.b16 %v120
  %v576 = vunpack.c.h.b16 %v120
  %v577 = vunpack.c.l.b16 %v121
  %v578 = vunpack.c.h.b16 %v121
  %v579 = vunpack.c.l.b16 %v122
  %v580 = vunpack.c.h.b16 %v122
  %v581 = vunpack.c.l.b16 %v123
  %v582 = vunpack.c.h.b16 %v123
  %v583 = vunpack.c.l.b16 %v124
  %v584 = vpack.c.b16 %v395, %v386
  %v585 = vpack.c.b16 %v396, %v387
  %v586 = vpack.c.b16 %v397, %v388
  %v587 = vpack.c.b16 %v398, %v389
  %v588 = vpack.c.b16 %v399, %v390
  %v589 = vpack.c.b16 %v400, %v391
  %v590 = vpack.c.b16 %v401, %v392
  %v591 = vpack.c.b16 %v402, %v393
  %v592 = vpack.c.b16 %v403, %v394
  %v593 = vpack.c.b16 %v413, %v404
  %v594 = vpack.c.b16 %v414, %v405
  %v595 = vpack.c.b16 %v415, %v406
  %v596 = vpack.c.b16 %v416, %v407
  %v597 = vpack.c.b16 %v417, %v408
  %v598 = vpack.c.b16 %v418, %v409
  %v599 = vpack.c.b16 %v419, %v410
  %v600 = vpack.c.b16 %v420, %v411
  %v601 = vpack.c.b16 %v421, %v412
  %v602 = vpack.c.b16 %v431, %v422
  %v603 = vpack.c.b16 %v432, %v423
  %v604 = vpack.c.b16 %v433, %v424
  %v605 = vpack.c.b16 %v434, %v425
  %v606 = vpack.c.b16 %v435, %v426
  %v607 = vpack.c.b16 %v436, %v427
  %v608 = vpack.c.b16 %v437, %v428
  %v609 = vpack.c.b16 %v438, %v429
  %v610 = vpack.c.b16 %v439, %v430
  %v611 = vpack.c.b16 %v449, %v440
  %v612 = vpack.c.b16 %v450, %v441
  %v613 = vpack.c.b16 %v451, %v442
  %v614 = vpack.c.b16 %v452, %v443
  %v615 = vpack.c.b16 %v453, %v444
  %v616 = vpack.c.b16 %v454, %v445
  %v617 = vpack.c.b16 %v455, %v446
  %v618 = vpack.c.b16 %v456, %v447
  %v619 = vpack.c.b16 %v457, %v448
  %v620 = vpack.c.b16 %v467, %v458
  %v621 = vpack.c.b16 %v468, %v459
  %v622 = vpack.c.b16 %v469, %v460
  %v623 = vpack.c.b16 %v470, %v461
  %v624 = vpack.c.b16 %v471, %v462
  %v625 = vpack.c.b16 %v472, %v463
  %v626 = vpack.c.b16 %v473, %v464
  %v627 = vpack.c.b16 %v474, %v465
  %v628 = vpack.c.b16 %v475, %v466
  %v629 = vpack.c.b16 %v485, %v476
  %v630 = vpack.c.b16 %v486, %v477
  %v631 = vpack.c.b16 %v487, %v478
  %v632 = vpack.c.b16 %v488, %v479
  %v633 = vpack.c.b16 %v489, %v480
  %v634 = vpack.c.b16 %v490, %v481
  %v635 = vpack.c.b16 %v491, %v482
  %v636 = vpack.c.b16 %v492, %v483
  %v637 = vpack.c.b16 %v493, %v484
  %v638 = vpack.c.b16 %v503, %v494
  %v639 = vpack.c.b16 %v504, %v495
  %v640 = vpack.c.b16 %v505, %v496
  %v641 = vpack.c.b16 %v506, %v497
  %v642 = vpack.c.b16 %v507, %v498
  %v643 = vpack.c.b16 %v508, %v499
  %v644 = vpack.c.b16 %v509, %v500
  %v645 = vpack.c.b16 %v510, %v501
  %v646 = vpack.c.b16 %v511, %v502
  %v647 = vpack.c.b16 %v521, %v512
  %v648 = vpack.c.b16 %v522, %v513
  %v649 = vpack.c.b16 %v523, %v514
  %v650 = vpack.c.b16 %v524, %v515
  %v651 = vpack.c.b16 %v525, %v516
  %v652 = vpack.c.b16 %v526, %v517
  %v653 = vpack.c.b16 %v527, %v518
  %v654 = vpack.c.b16 %v528, %v519
  %v655 = vpack.c.b16 %v529, %v520
  %v656 = vpack.c.b16 %v539, %v530
  %v657 = vpack.c.b16 %v540, %v531
  %v658 = vpack.c.b16 %v541, %v532
  %v659 = vpack.c.b16 %v542, %v533
  %v660 = vpack.c.b16 %v543, %v534
  %v661 = vpack.c.b16 %v544, %v535
  %v662 = vpack.c.b16 %v545, %v536
  %v663 = vpack.c.b16 %v546, %v537
  %v664 = vpack.c.b16 %v547, %v538
  %v665 = vpack.c.b16 %v557, %v548
  %v666 = vpack.c.b16 %v558, %v549
  %v667 = vpack.c.b16 %v559, %v550
  %v668 = vpack.c.b16 %v560, %v551
  %v669 = vpack.c.b16 %v561, %v552
  %v670 = vpack.c.b16 %v562, %v553
  %v671 = vpack.c.b16 %v563, %v554
  %v672 = vpack.c.b16 %v564, %v555
  %v673 = vpack.c.b16 %v565, %v556
  %v674 = vpack.c.b16 %v575, %v566
  %v675 = vpack.c.b16 %v576, %v567
  %v676 = vpack.c.b16 %v577, %v568
  %v677 = vpack.c.b16 %v578, %v569
  %v678 = vpack.c.b16 %v579, %v570
  %v679 = vpack.c.b16 %v580, %v571
  %v680 = vpack.c.b16 %v581, %v572
  %v681 = vpack.c.b16 %v582, %v573
  %v682 = vpack.c.b16 %v583, %v574
  %v926 = vunpack.c.l.b16 %v125
  %v927 = vunpack.c.l.b16 %v126
  %v928 = vunpack.c.l.b16 %v127
  %v929 = vunpack.c.l.b16 %v128
  %v930 = vunpack.c.l.b16 %v129
  %v931 = vunpack.c.l.b16 %v130
  %v932 = vunpack.c.l.b16 %v131
  %v933 = vunpack.c.l.b16 %v132
  %v934 = vunpack.c.l.b16 %v133
  %v935 = vunpack.c.l.b16 %v134
  %v936 = vunpack.c.l.b16 %v135
  %v937 = vunpack.c.l.b16 %v136
  %v938 = vunpack.c.l.b16 %v137
  %v939 = vunpack.c.l.b16 %v138
  %v940 = vunpack.c.l.b16 %v139
  %v941 = vunpack.c.l.b16 %v140
  %v942 = vunpack.c.l.b16 %v141
  %v943 = vunpack.c.l.b16 %v142
  %v944 = vunpack.c.l.b16 %v143
  %v945 = vunpack.c.l.b16 %v144
  %v946 = vunpack.c.l.b16 %v145
  %v947 = vunpack.c.l.b16 %v146
  %v948 = vunpack.c.l.b16 %v147
  %v949 = vunpack.c.l.b16 %v148
  %v950 = vunpack.c.l.b16 %v149
  %v951 = vunpack.c.l.b16 %v150
  %v952 = vunpack.c.l.b16 %v151
  %v953 = vunpack.c.l.b16 %v152
  %v954 = vunpack.c.l.b16 %v153
  %v955 = vunpack.c.l.b16 %v154
  %v956 = vunpack.c.l.b16 %v155
  %v957 = vunpack.c.l.b16 %v156
  %v958 = vunpack.c.l.b16 %v157
  %v959 = vunpack.c.l.b16 %v158
  %v960 = vunpack.c.l.b16 %v159
  %v961 = vunpack.c.l.b16 %v160
  %v962 = vunpack.c.l.b16 %v161
  %v963 = vunpack.c.l.b16 %v162
  %v964 = vunpack.c.l.b16 %v163
  %v965 = vunpack.c.l.b16 %v164
  %v966 = vunpack.c.l.b16 %v165
  %v967 = vunpack.c.l.b16 %v166
  %v968 = vunpack.c.l.b16 %v167
  %v969 = vunpack.c.l.b16 %v168
  %v970 = vunpack.c.l.b16 %v169
  %v971 = vunpack.c.l.b16 %v170
  %v972 = vunpack.c.l.b16 %v171
  %v973 = vunpack.c.l.b16 %v172
  %v974 = vunpack.c.l.b16 %v173
  %v975 = vunpack.c.l.b16 %v174
  %v976 = vunpack.c.l.b16 %v175
  %v977 = vunpack.c.l.b16 %v176
  %v978 = vunpack.c.l.b16 %v177
  %v979 = vunpack.c.l.b16 %v178
  %v980 = vunpack.c.l.b16 %v179
  %v981 = vunpack.c.l.b16 %v180
  %v982 = vunpack.c.l.b16 %v181
  %v983 = vunpack.c.l.b16 %v182
  %v984 = vunpack.c.l.b16 %v183
  %v985 = vunpack.c.l.b16 %v184
  %v986 = vunpack.c.l.b16 %v185
  %v987 = vunpack.c.l.b16 %v186
  %v988 = vunpack.c.l.b16 %v187
  %v989 = vunpack.c.l.b16 %v188
  %v990 = vunpack.c.l.b16 %v189
  %v991 = vunpack.c.l.b16 %v190
  %v992 = vunpack.c.l.b16 %v191
  %v993 = vunpack.c.l.b16 %v192
  %v994 = vunpack.c.l.b16 %v193
  %v995 = vunpack.c.l.b16 %v194
  %v996 = vunpack.c.l.b16 %v195
  %v997 = vunpack.c.l.b16 %v196
  %v998 = vunpack.c.l.b16 %v197
  %v999 = vunpack.c.l.b16 %v198
  %v1000 = vunpack.c.l.b16 %v199
  %v1001 = vunpack.c.l.b16 %v200
  %v1002 = vunpack.c.l.b16 %v201
  %v1003 = vunpack.c.l.b16 %v202
  %v1004 = vunpack.c.l.b16 %v203
  %v1005 = vunpack.c.l.b16 %v204
  %v1006 = vunpack.c.l.b16 %v205
  %v1007 = vunpack.c.l.b16 %v206
  %v1008 = vunpack.c.l.b16 %v207
  %v1009 = vunpack.c.l.b16 %v208
  %v1010 = vunpack.c.l.b16 %v209
  %v1011 = vunpack.c.l.b16 %v210
  %v1012 = vunpack.c.l.b16 %v211
  %v1013 = vunpack.c.l.b16 %v212
  %v1014 = vunpack.c.l.b16 %v213
  %v1015 = vunpack.c.l.b16 %v214
  %v1016 = vunpack.c.l.b16 %v215
  %v1017 = vunpack.c.l.b16 %v216
  %v1018 = vunpack.c.l.b16 %v217
  %v1019 = vunpack.c.l.b16 %v218
  %v1020 = vunpack.c.l.b16 %v219
  %v1021 = vunpack.c.l.b16 %v220
  %v1022 = vunpack.c.l.b16 %v221
  %v1023 = vunpack.c.l.b16 %v222
  %v1024 = vunpack.c.l.b16 %v223
  %v1025 = vunpack.c.l.b16 %v224
  %v1026 = vunpack.c.l.b16 %v225
  %v1027 = vunpack.c.l.b16 %v226
  %v1028 = vunpack.c.l.b16 %v227
  %v1029 = vunpack.c.l.b16 %v228
  %v1030 = vunpack.c.l.b16 %v229
  %v1031 = vunpack.c.l.b16 %v230
  %v1032 = vunpack.c.l.b16 %v231
  %v1033 = vunpack.c.l.b16 %v232
  %v1034 = vunpack.c.l.b16 %v233
  %v1035 = vunpack.c.l.b16 %v234
  %v1036 = vunpack.c.l.b16 %v235
  %v1037 = vunpack.c.l.b16 %v236
  %v1038 = vunpack.c.l.b16 %v237
  %v1039 = vunpack.c.l.b16 %v238
  %v1040 = vunpack.c.l.b16 %v239
  %v1041 = vunpack.c.l.b16 %v240
  %v1042 = vunpack.c.l.b16 %v241
  %v1043 = vunpack.c.l.b16 %v242
  %v1044 = vunpack.c.l.b16 %v243
  %v1045 = vunpack.c.l.b16 %v244
  %v1046 = vunpack.c.l.b16 %v245
  %v1047 = vunpack.c.l.b16 %v246
  %v1048 = vunpack.c.l.b16 %v247
  %v1049 = vunpack.c.l.b16 %v248
  %v1050 = vunpack.c.l.b16 %v249
  %v1051 = vunpack.c.l.b16 %v250
  %v1052 = vunpack.c.l.b16 %v251
  %v1053 = vunpack.c.l.b16 %v252
  %v1054 = vunpack.c.l.b16 %v253
  %v1055 = vunpack.c.l.b16 %v254
  %v1056 = vunpack.c.l.b16 %v255
  %v1057 = vunpack.c.l.b16 %v256
  %v1058 = vunpack.c.l.b16 %v257
  %v1059 = vunpack.c.l.b16 %v258
  %v1060 = vunpack.c.l.b16 %v259
  %v1061 = vunpack.c.l.b16 %v260
  %v1062 = vunpack.c.l.b16 %v261
  %v1063 = vunpack.c.l.b16 %v262
  %v1064 = vunpack.c.l.b16 %v263
  %v1065 = vunpack.c.l.b16 %v264
  %v1066 = vunpack.c.l.b16 %v265
  %v1067 = vunpack.c.l.b16 %v266
  %v1068 = vunpack.c.l.b16 %v267
  %v1069 = vunpack.c.l.b16 %v268
  %v1070 = vpack.c.b16 %v927, %v926
  %v1071 = vpack.c.b16 %v929, %v928
  %v1072 = vpack.c.b16 %v931, %v930
  %v1073 = vpack.c.b16 %v933, %v932
  %v1074 = vpack.c.b16 %v935, %v934
  %v1075 = vpack.c.b16 %v937, %v936
  %v1076 = vpack.c.b16 %v939, %v938
  %v1077 = vpack.c.b16 %v941, %v940
  %v1078 = vpack.c.b16 %v943, %v942
  %v1079 = vpack.c.b16 %v945, %v944
  %v1080 = vpack.c.b16 %v947, %v946
  %v1081 = vpack.c.b16 %v949, %v948
  %v1082 = vpack.c.b16 %v951, %v950
  %v1083 = vpack.c.b16 %v953, %v952
  %v1084 = vpack.c.b16 %v955, %v954
  %v1085 = vpack.c.b16 %v957, %v956
  %v1086 = vpack.c.b16 %v959, %v958
  %v1087 = vpack.c.b16 %v961, %v960
  %v1088 = vpack.c.b16 %v963, %v962
  %v1089 = vpack.c.b16 %v965, %v964
  %v1090 = vpack.c.b16 %v967, %v966
  %v1091 = vpack.c.b16 %v969, %v968
  %v1092 = vpack.c.b16 %v971, %v970
  %v1093 = vpack.c.b16 %v973, %v972
  %v1094 = vpack.c.b16 %v975, %v974
  %v1095 = vpack.c.b16 %v977, %v976
  %v1096 = vpack.c.b16 %v979, %v978
  %v1097 = vpack.c.b16 %v981, %v980
  %v1098 = vpack.c.b16 %v983, %v982
  %v1099 = vpack.c.b16 %v985, %v984
  %v1100 = vpack.c.b16 %v987, %v986
  %v1101 = vpack.c.b16 %v989, %v988
  %v1102 = vpack.c.b16 %v991, %v990
  %v1103 = vpack.c.b16 %v993, %v992
  %v1104 = vpack.c.b16 %v995, %v994
  %v1105 = vpack.c.b16 %v997, %v996
  %v1106 = vpack.c.b16 %v999, %v998
  %v1107 = vpack.c.b16 %v1001, %v1000
  %v1108 = vpack.c.b16 %v1003, %v1002
  %v1109 = vpack.c.b16 %v1005, %v1004
  %v1110 = vpack.c.b16 %v1007, %v1006
  %v1111 = vpack.c.b16 %v1009, %v1008
  %v1112 = vpack.c.b16 %v1011, %v1010
  %v1113 = vpack.c.b16 %v1013, %v1012
  %v1114 = vpack.c.b16 %v1015, %v1014
  %v1115 = vpack.c.b16 %v1017, %v1016
  %v1116 = vpack.c.b16 %v1019, %v1018
  %v1117 = vpack.c.b16 %v1021, %v1020
  %v1118 = vpack.c.b16 %v1023, %v1022
  %v1119 = vpack.c.b16 %v1025, %v1024
  %v1120 = vpack.c.b16 %v1027, %v1026
  %v1121 = vpack.c.b16 %v1029, %v1028
  %v1122 = vpack.c.b16 %v1031, %v1030
  %v1123 = vpack.c.b16 %v1033, %v1032
  %v1124 = vpack.c.b16 %v1035, %v1034
  %v1125 = vpack.c.b16 %v1037, %v1036
  %v1126 = vpack.c.b16 %v1039, %v1038
  %v1127 = vpack.c.b16 %v1041, %v1040
  %v1128 = vpack.c.b16 %v1043, %v1042
  %v1129 = vpack.c.b16 %v1045, %v1044
  %v1130 = vpack.c.b16 %v1047, %v1046
  %v1131 = vpack.c.b16 %v1049, %v1048
  %v1132 = vpack.c.b16 %v1051, %v1050
  %v1133 = vpack.c.b16 %v1053, %v1052
  %v1134 = vpack.c.b16 %v1055, %v1054
  %v1135 = vpack.c.b16 %v1057, %v1056
  %v1136 = vpack.c.b16 %v1059, %v1058
  %v1137 = vpack.c.b16 %v1061, %v1060
  %v1138 = vpack.c.b16 %v1063, %v1062
  %v1139 = vpack.c.b16 %v1065, %v1064
  %v1140 = vpack.c.b16 %v1067, %v1066
  %v1141 = vpack.c.b16 %v1069, %v1068
  %1214 = vmatprep.subr.bf16.mxu0 0
  %1215 = vmatpush1.bf16.msra.mxu0 %v1070
  %1216 = vmatprep.subr.bf16.mxu0 0
  %1217 = vmatpush1.bf16.msra.mxu0 %v1071
  %1218 = vmatprep.subr.bf16.mxu0 0
  %1219 = vmatpush1.bf16.msra.mxu0 %v1072
  %1220 = vmatprep.subr.bf16.mxu0 0
  %1221 = vmatpush1.bf16.msra.mxu0 %v1073
  %1222 = vmatprep.subr.bf16.mxu0 0
  %1223 = vmatpush1.bf16.msra.mxu0 %v1074
  %1224 = vmatprep.subr.bf16.mxu0 0
  %1225 = vmatpush1.bf16.msra.mxu0 %v1075
  %1226 = vmatprep.subr.bf16.mxu0 0
  %1227 = vmatpush1.bf16.msra.mxu0 %v1076
  %1228 = vmatprep.subr.bf16.mxu0 0
  %1229 = vmatpush1.bf16.msra.mxu0 %v1077
  %1230 = vmatprep.subr.bf16.mxu0 0
  %1231 = vmatpush1.bf16.msra.mxu0 %v1078
  %1232 = vmatprep.subr.bf16.mxu0 0
  %1233 = vmatpush1.bf16.msra.mxu0 %v1079
  %1234 = vmatprep.subr.bf16.mxu0 0
  %1235 = vmatpush1.bf16.msra.mxu0 %v1080
  %1236 = vmatprep.subr.bf16.mxu0 0
  %1237 = vmatpush1.bf16.msra.mxu0 %v1081
  %1238 = vmatprep.subr.bf16.mxu0 0
  %1239 = vmatpush1.bf16.msra.mxu0 %v1082
  %1240 = vmatprep.subr.bf16.mxu0 0
  %1241 = vmatpush1.bf16.msra.mxu0 %v1083
  %1242 = vmatprep.subr.bf16.mxu0 0
  %1243 = vmatpush1.bf16.msra.mxu0 %v1084
  %1244 = vmatprep.subr.bf16.mxu0 0
  %1245 = vmatpush1.bf16.msra.mxu0 %v1085
  %1246 = vmatprep.mubr.bf16.mxu0 %v585
  %1247 = vmatmul.mubr.bf16.gmra.mrb[0].mxu0 %v584
  %v1248 = vpop.f32.mrb[0].mxu0
  %v1249 = vadd.f32 %v274, %v1248
  %v1250 = vpop.f32.mrb[0].mxu0
  %v1251 = vpop.f32.mrb[0].mxu0
  %v1252 = vadd.f32 %v274, %v1251
  %v1253 = vpop.f32.mrb[0].mxu0
  %1254 = vmatprep.mubr.bf16.mxu0 %v594
  %1255 = vmatmul.mubr.bf16.gmra.mrb[0].mxu0 %v593
  %v1256 = vpop.f32.mrb[0].mxu0
  %v1257 = vadd.f32 %v274, %v1256
  %v1258 = vpop.f32.mrb[0].mxu0
  %v1259 = vpop.f32.mrb[0].mxu0
  %v1260 = vadd.f32 %v274, %v1259
  %v1261 = vpop.f32.mrb[0].mxu0
  %1262 = vmatprep.mubr.bf16.mxu0 %v603
  %1263 = vmatmul.mubr.bf16.gmra.mrb[0].mxu0 %v602
  %v1264 = vpop.f32.mrb[0].mxu0
  %v1265 = vadd.f32 %v274, %v1264
  %v1266 = vpop.f32.mrb[0].mxu0
  %v1267 = vpop.f32.mrb[0].mxu0
  %v1268 = vadd.f32 %v274, %v1267
  %v1269 = vpop.f32.mrb[0].mxu0
  %1270 = vmatprep.mubr.bf16.mxu0 %v612
  %1271 = vmatmul.mubr.bf16.gmra.mrb[0].mxu0 %v611
  %v1272 = vpop.f32.mrb[0].mxu0
  %v1273 = vadd.f32 %v274, %v1272
  %v1274 = vpop.f32.mrb[0].mxu0
  %v1275 = vpop.f32.mrb[0].mxu0
  %v1276 = vadd.f32 %v274, %v1275
  %v1277 = vpop.f32.mrb[0].mxu0
  %1278 = vmatprep.mubr.bf16.mxu0 %v621
  %1279 = vmatmul.mubr.bf16.gmra.mrb[0].mxu0 %v620
  %v1280 = vpop.f32.mrb[0].mxu0
  %v1281 = vadd.f32 %v274, %v1280
  %v1282 = vpop.f32.mrb[0].mxu0
  %v1283 = vpop.f32.mrb[0].mxu0
  %v1284 = vadd.f32 %v274, %v1283
  %v1285 = vpop.f32.mrb[0].mxu0
  %1286 = vmatprep.mubr.bf16.mxu0 %v630
  %1287 = vmatmul.mubr.bf16.gmra.mrb[0].mxu0 %v629
  %v1288 = vpop.f32.mrb[0].mxu0
  %v1289 = vadd.f32 %v274, %v1288
  %v1290 = vpop.f32.mrb[0].mxu0
  %v1291 = vpop.f32.mrb[0].mxu0
  %v1292 = vadd.f32 %v274, %v1291
  %v1293 = vpop.f32.mrb[0].mxu0
  %1294 = vmatprep.mubr.bf16.mxu0 %v639
  %1295 = vmatmul.mubr.bf16.gmra.mrb[0].mxu0 %v638
  %v1296 = vpop.f32.mrb[0].mxu0
  %v1297 = vadd.f32 %v274, %v1296
  %v1298 = vpop.f32.mrb[0].mxu0
  %v1299 = vpop.f32.mrb[0].mxu0
  %v1300 = vadd.f32 %v274, %v1299
  %v1301 = vpop.f32.mrb[0].mxu0
  %1302 = vmatprep.mubr.bf16.mxu0 %v648
  %1303 = vmatmul.mubr.bf16.gmra.mrb[0].mxu0 %v647
  %v1304 = vpop.f32.mrb[0].mxu0
  %v1305 = vadd.f32 %v274, %v1304
  %v1306 = vpop.f32.mrb[0].mxu0
  %v1307 = vpop.f32.mrb[0].mxu0
  %v1308 = vadd.f32 %v274, %v1307
  %v1309 = vpop.f32.mrb[0].mxu0
  %1310 = vmatprep.mubr.bf16.mxu0 %v657
  %1311 = vmatmul.mubr.bf16.gmra.mrb[0].mxu0 %v656
  %v1312 = vpop.f32.mrb[0].mxu0
  %v1313 = vadd.f32 %v274, %v1312
  %v1314 = vpop.f32.mrb[0].mxu0
  %v1315 = vpop.f32.mrb[0].mxu0
  %v1316 = vadd.f32 %v274, %v1315
  %v1317 = vpop.f32.mrb[0].mxu0
  %1318 = vmatprep.mubr.bf16.mxu0 %v666
  %1319 = vmatmul.mubr.bf16.gmra.mrb[0].mxu0 %v665
  %v1320 = vpop.f32.mrb[0].mxu0
  %v1321 = vadd.f32 %v274, %v1320
  %v1322 = vpop.f32.mrb[0].mxu0
  %v1323 = vpop.f32.mrb[0].mxu0
  %v1324 = vadd.f32 %v274, %v1323
  %v1325 = vpop.f32.mrb[0].mxu0
  %1326 = vmatprep.mubr.bf16.mxu0 %v675
  %1327 = vmatmul.mubr.bf16.gmra.mrb[0].mxu0 %v674
  %v1328 = vpop.f32.mrb[0].mxu0
  %v1329 = vadd.f32 %v274, %v1328
  %v1330 = vpop.f32.mrb[0].mxu0
  %v1331 = vpop.f32.mrb[0].mxu0
  %v1332 = vadd.f32 %v274, %v1331
  %v1333 = vpop.f32.mrb[0].mxu0
  %1334 = vdwg.mxu0
  %1335 = vmatprep.subr.bf16.mxu0 0
  %1336 = vmatpush1.bf16.msra.mxu0 %v1086
  %1337 = vmatprep.subr.bf16.mxu0 0
  %1338 = vmatpush1.bf16.msra.mxu0 %v1087
  %1339 = vmatprep.subr.bf16.mxu0 0
  %1340 = vmatpush1.bf16.msra.mxu0 %v1088
  %1341 = vmatprep.subr.bf16.mxu0 0
  %1342 = vmatpush1.bf16.msra.mxu0 %v1089
  %1343 = vmatprep.subr.bf16.mxu0 0
  %1344 = vmatpush1.bf16.msra.mxu0 %v1090
  %1345 = vmatprep.subr.bf16.mxu0 0
  %1346 = vmatpush1.bf16.msra.mxu0 %v1091
  %1347 = vmatprep.subr.bf16.mxu0 0
  %1348 = vmatpush1.bf16.msra.mxu0 %v1092
  %1349 = vmatprep.subr.bf16.mxu0 0
  %1350 = vmatpush1.bf16.msra.mxu0 %v1093
  %1351 = vmatprep.subr.bf16.mxu0 0
  %1352 = vmatpush1.bf16.msra.mxu0 %v1094
  %1353 = vmatprep.subr.bf16.mxu0 0
  %1354 = vmatpush1.bf16.msra.mxu0 %v1095
  %1355 = vmatprep.subr.bf16.mxu0 0
  %1356 = vmatpush1.bf16.msra.mxu0 %v1096
  %1357 = vmatprep.subr.bf16.mxu0 0
  %1358 = vmatpush1.bf16.msra.mxu0 %v1097
  %1359 = vmatprep.subr.bf16.mxu0 0
  %1360 = vmatpush1.bf16.msra.mxu0 %v1098
  %1361 = vmatprep.subr.bf16.mxu0 0
  %1362 = vmatpush1.bf16.msra.mxu0 %v1099
  %1363 = vmatprep.subr.bf16.mxu0 0
  %1364 = vmatpush1.bf16.msra.mxu0 %v1100
  %1365 = vmatprep.subr.bf16.mxu0 0
  %1366 = vmatpush1.bf16.msra.mxu0 %v1101
  %1367 = vmatprep.mubr.bf16.mxu0 %v587
  %1368 = vmatmul.mubr.bf16.gmra.mrb[0].mxu0 %v586
  %v1369 = vpop.f32.mrb[0].mxu0
  %v1370 = vadd.f32 %v1249, %v1369
  %v1371 = vpop.f32.mrb[0].mxu0
  %v1372 = vpop.f32.mrb[0].mxu0
  %v1373 = vadd.f32 %v1252, %v1372
  %v1374 = vpop.f32.mrb[0].mxu0
  %1375 = vmatprep.mubr.bf16.mxu0 %v596
  %1376 = vmatmul.mubr.bf16.gmra.mrb[0].mxu0 %v595
  %v1377 = vpop.f32.mrb[0].mxu0
  %v1378 = vadd.f32 %v1257, %v1377
  %v1379 = vpop.f32.mrb[0].mxu0
  %v1380 = vpop.f32.mrb[0].mxu0
  %v1381 = vadd.f32 %v1260, %v1380
  %v1382 = vpop.f32.mrb[0].mxu0
  %1383 = vmatprep.mubr.bf16.mxu0 %v605
  %1384 = vmatmul.mubr.bf16.gmra.mrb[0].mxu0 %v604
  %v1385 = vpop.f32.mrb[0].mxu0
  %v1386 = vadd.f32 %v1265, %v1385
  %v1387 = vpop.f32.mrb[0].mxu0
  %v1388 = vpop.f32.mrb[0].mxu0
  %v1389 = vadd.f32 %v1268, %v1388
  %v1390 = vpop.f32.mrb[0].mxu0
  %1391 = vmatprep.mubr.bf16.mxu0 %v614
  %1392 = vmatmul.mubr.bf16.gmra.mrb[0].mxu0 %v613
  %v1393 = vpop.f32.mrb[0].mxu0
  %v1394 = vadd.f32 %v1273, %v1393
  %v1395 = vpop.f32.mrb[0].mxu0
  %v1396 = vpop.f32.mrb[0].mxu0
  %v1397 = vadd.f32 %v1276, %v1396
  %v1398 = vpop.f32.mrb[0].mxu0
  %1399 = vmatprep.mubr.bf16.mxu0 %v623
  %1400 = vmatmul.mubr.bf16.gmra.mrb[0].mxu0 %v622
  %v1401 = vpop.f32.mrb[0].mxu0
  %v1402 = vadd.f32 %v1281, %v1401
  %v1403 = vpop.f32.mrb[0].mxu0
  %v1404 = vpop.f32.mrb[0].mxu0
  %v1405 = vadd.f32 %v1284, %v1404
  %v1406 = vpop.f32.mrb[0].mxu0
  %1407 = vmatprep.mubr.bf16.mxu0 %v632
  %1408 = vmatmul.mubr.bf16.gmra.mrb[0].mxu0 %v631
  %v1409 = vpop.f32.mrb[0].mxu0
  %v1410 = vadd.f32 %v1289, %v1409
  %v1411 = vpop.f32.mrb[0].mxu0
  %v1412 = vpop.f32.mrb[0].mxu0
  %v1413 = vadd.f32 %v1292, %v1412
  %v1414 = vpop.f32.mrb[0].mxu0
  %1415 = vmatprep.mubr.bf16.mxu0 %v641
  %1416 = vmatmul.mubr.bf16.gmra.mrb[0].mxu0 %v640
  %v1417 = vpop.f32.mrb[0].mxu0
  %v1418 = vadd.f32 %v1297, %v1417
  %v1419 = vpop.f32.mrb[0].mxu0
  %v1420 = vpop.f32.mrb[0].mxu0
  %v1421 = vadd.f32 %v1300, %v1420
  %v1422 = vpop.f32.mrb[0].mxu0
  %1423 = vmatprep.mubr.bf16.mxu0 %v650
  %1424 = vmatmul.mubr.bf16.gmra.mrb[0].mxu0 %v649
  %v1425 = vpop.f32.mrb[0].mxu0
  %v1426 = vadd.f32 %v1305, %v1425
  %v1427 = vpop.f32.mrb[0].mxu0
  %v1428 = vpop.f32.mrb[0].mxu0
  %v1429 = vadd.f32 %v1308, %v1428
  %v1430 = vpop.f32.mrb[0].mxu0
  %1431 = vmatprep.mubr.bf16.mxu0 %v659
  %1432 = vmatmul.mubr.bf16.gmra.mrb[0].mxu0 %v658
  %v1433 = vpop.f32.mrb[0].mxu0
  %v1434 = vadd.f32 %v1313, %v1433
  %v1435 = vpop.f32.mrb[0].mxu0
  %v1436 = vpop.f32.mrb[0].mxu0
  %v1437 = vadd.f32 %v1316, %v1436
  %v1438 = vpop.f32.mrb[0].mxu0
  %1439 = vmatprep.mubr.bf16.mxu0 %v668
  %1440 = vmatmul.mubr.bf16.gmra.mrb[0].mxu0 %v667
  %v1441 = vpop.f32.mrb[0].mxu0
  %v1442 = vadd.f32 %v1321, %v1441
  %v1443 = vpop.f32.mrb[0].mxu0
  %v1444 = vpop.f32.mrb[0].mxu0
  %v1445 = vadd.f32 %v1324, %v1444
  %v1446 = vpop.f32.mrb[0].mxu0
  %1447 = vmatprep.mubr.bf16.mxu0 %v677
  %1448 = vmatmul.mubr.bf16.gmra.mrb[0].mxu0 %v676
  %v1449 = vpop.f32.mrb[0].mxu0
  %v1450 = vadd.f32 %v1329, %v1449
  %v1451 = vpop.f32.mrb[0].mxu0
  %v1452 = vpop.f32.mrb[0].mxu0
  %v1453 = vadd.f32 %v1332, %v1452
  %v1454 = vpop.f32.mrb[0].mxu0
  %1455 = vdwg.mxu0
  %1456 = vmatprep.subr.bf16.mxu0 0
  %1457 = vmatpush1.bf16.msra.mxu0 %v1102
  %1458 = vmatprep.subr.bf16.mxu0 0
  %1459 = vmatpush1.bf16.msra.mxu0 %v1103
  %1460 = vmatprep.subr.bf16.mxu0 0
  %1461 = vmatpush1.bf16.msra.mxu0 %v1104
  %1462 = vmatprep.subr.bf16.mxu0 0
  %1463 = vmatpush1.bf16.msra.mxu0 %v1105
  %1464 = vmatprep.subr.bf16.mxu0 0
  %1465 = vmatpush1.bf16.msra.mxu0 %v1106
  %1466 = vmatprep.subr.bf16.mxu0 0
  %1467 = vmatpush1.bf16.msra.mxu0 %v1107
  %1468 = vmatprep.subr.bf16.mxu0 0
  %1469 = vmatpush1.bf16.msra.mxu0 %v1108
  %1470 = vmatprep.subr.bf16.mxu0 0
  %1471 = vmatpush1.bf16.msra.mxu0 %v1109
  %1472 = vmatprep.subr.bf16.mxu0 0
  %1473 = vmatpush1.bf16.msra.mxu0 %v1110
  %1474 = vmatprep.subr.bf16.mxu0 0
  %1475 = vmatpush1.bf16.msra.mxu0 %v1111
  %1476 = vmatprep.subr.bf16.mxu0 0
  %1477 = vmatpush1.bf16.msra.mxu0 %v1112
  %1478 = vmatprep.subr.bf16.mxu0 0
  %1479 = vmatpush1.bf16.msra.mxu0 %v1113
  %1480 = vmatprep.subr.bf16.mxu0 0
  %1481 = vmatpush1.bf16.msra.mxu0 %v1114
  %1482 = vmatprep.subr.bf16.mxu0 0
  %1483 = vmatpush1.bf16.msra.mxu0 %v1115
  %1484 = vmatprep.subr.bf16.mxu0 0
  %1485 = vmatpush1.bf16.msra.mxu0 %v1116
  %1486 = vmatprep.subr.bf16.mxu0 0
  %1487 = vmatpush1.bf16.msra.mxu0 %v1117
  %1488 = vmatprep.mubr.bf16.mxu0 %v589
  %1489 = vmatmul.mubr.bf16.gmra.mrb[0].mxu0 %v588
  %v1490 = vpop.f32.mrb[0].mxu0
  %v1491 = vadd.f32 %v1370, %v1490
  %v1492 = vpop.f32.mrb[0].mxu0
  %v1493 = vpop.f32.mrb[0].mxu0
  %v1494 = vadd.f32 %v1373, %v1493
  %v1495 = vpop.f32.mrb[0].mxu0
  %1496 = vmatprep.mubr.bf16.mxu0 %v598
  %1497 = vmatmul.mubr.bf16.gmra.mrb[0].mxu0 %v597
  %v1498 = vpop.f32.mrb[0].mxu0
  %v1499 = vadd.f32 %v1378, %v1498
  %v1500 = vpop.f32.mrb[0].mxu0
  %v1501 = vpop.f32.mrb[0].mxu0
  %v1502 = vadd.f32 %v1381, %v1501
  %v1503 = vpop.f32.mrb[0].mxu0
  %1504 = vmatprep.mubr.bf16.mxu0 %v607
  %1505 = vmatmul.mubr.bf16.gmra.mrb[0].mxu0 %v606
  %v1506 = vpop.f32.mrb[0].mxu0
  %v1507 = vadd.f32 %v1386, %v1506
  %v1508 = vpop.f32.mrb[0].mxu0
  %v1509 = vpop.f32.mrb[0].mxu0
  %v1510 = vadd.f32 %v1389, %v1509
  %v1511 = vpop.f32.mrb[0].mxu0
  %1512 = vmatprep.mubr.bf16.mxu0 %v616
  %1513 = vmatmul.mubr.bf16.gmra.mrb[0].mxu0 %v615
  %v1514 = vpop.f32.mrb[0].mxu0
  %v1515 = vadd.f32 %v1394, %v1514
  %v1516 = vpop.f32.mrb[0].mxu0
  %v1517 = vpop.f32.mrb[0].mxu0
  %v1518 = vadd.f32 %v1397, %v1517
  %v1519 = vpop.f32.mrb[0].mxu0
  %1520 = vmatprep.mubr.bf16.mxu0 %v625
  %1521 = vmatmul.mubr.bf16.gmra.mrb[0].mxu0 %v624
  %v1522 = vpop.f32.mrb[0].mxu0
  %v1523 = vadd.f32 %v1402, %v1522
  %v1524 = vpop.f32.mrb[0].mxu0
  %v1525 = vpop.f32.mrb[0].mxu0
  %v1526 = vadd.f32 %v1405, %v1525
  %v1527 = vpop.f32.mrb[0].mxu0
  %1528 = vmatprep.mubr.bf16.mxu0 %v634
  %1529 = vmatmul.mubr.bf16.gmra.mrb[0].mxu0 %v633
  %v1530 = vpop.f32.mrb[0].mxu0
  %v1531 = vadd.f32 %v1410, %v1530
  %v1532 = vpop.f32.mrb[0].mxu0
  %v1533 = vpop.f32.mrb[0].mxu0
  %v1534 = vadd.f32 %v1413, %v1533
  %v1535 = vpop.f32.mrb[0].mxu0
  %1536 = vmatprep.mubr.bf16.mxu0 %v643
  %1537 = vmatmul.mubr.bf16.gmra.mrb[0].mxu0 %v642
  %v1538 = vpop.f32.mrb[0].mxu0
  %v1539 = vadd.f32 %v1418, %v1538
  %v1540 = vpop.f32.mrb[0].mxu0
  %v1541 = vpop.f32.mrb[0].mxu0
  %v1542 = vadd.f32 %v1421, %v1541
  %v1543 = vpop.f32.mrb[0].mxu0
  %1544 = vmatprep.mubr.bf16.mxu0 %v652
  %1545 = vmatmul.mubr.bf16.gmra.mrb[0].mxu0 %v651
  %v1546 = vpop.f32.mrb[0].mxu0
  %v1547 = vadd.f32 %v1426, %v1546
  %v1548 = vpop.f32.mrb[0].mxu0
  %v1549 = vpop.f32.mrb[0].mxu0
  %v1550 = vadd.f32 %v1429, %v1549
  %v1551 = vpop.f32.mrb[0].mxu0
  %1552 = vmatprep.mubr.bf16.mxu0 %v661
  %1553 = vmatmul.mubr.bf16.gmra.mrb[0].mxu0 %v660
  %v1554 = vpop.f32.mrb[0].mxu0
  %v1555 = vadd.f32 %v1434, %v1554
  %v1556 = vpop.f32.mrb[0].mxu0
  %v1557 = vpop.f32.mrb[0].mxu0
  %v1558 = vadd.f32 %v1437, %v1557
  %v1559 = vpop.f32.mrb[0].mxu0
  %1560 = vmatprep.mubr.bf16.mxu0 %v670
  %1561 = vmatmul.mubr.bf16.gmra.mrb[0].mxu0 %v669
  %v1562 = vpop.f32.mrb[0].mxu0
  %v1563 = vadd.f32 %v1442, %v1562
  %v1564 = vpop.f32.mrb[0].mxu0
  %v1565 = vpop.f32.mrb[0].mxu0
  %v1566 = vadd.f32 %v1445, %v1565
  %v1567 = vpop.f32.mrb[0].mxu0
  %1568 = vmatprep.mubr.bf16.mxu0 %v679
  %1569 = vmatmul.mubr.bf16.gmra.mrb[0].mxu0 %v678
  %v1570 = vpop.f32.mrb[0].mxu0
  %v1571 = vadd.f32 %v1450, %v1570
  %v1572 = vpop.f32.mrb[0].mxu0
  %v1573 = vpop.f32.mrb[0].mxu0
  %v1574 = vadd.f32 %v1453, %v1573
  %v1575 = vpop.f32.mrb[0].mxu0
  %1576 = vdwg.mxu0
  %1577 = vmatprep.subr.bf16.mxu0 0
  %1578 = vmatpush1.bf16.msra.mxu0 %v1118
  %1579 = vmatprep.subr.bf16.mxu0 0
  %1580 = vmatpush1.bf16.msra.mxu0 %v1119
  %1581 = vmatprep.subr.bf16.mxu0 0
  %1582 = vmatpush1.bf16.msra.mxu0 %v1120
  %1583 = vmatprep.subr.bf16.mxu0 0
  %1584 = vmatpush1.bf16.msra.mxu0 %v1121
  %1585 = vmatprep.subr.bf16.mxu0 0
  %1586 = vmatpush1.bf16.msra.mxu0 %v1122
  %1587 = vmatprep.subr.bf16.mxu0 0
  %1588 = vmatpush1.bf16.msra.mxu0 %v1123
  %1589 = vmatprep.subr.bf16.mxu0 0
  %1590 = vmatpush1.bf16.msra.mxu0 %v1124
  %1591 = vmatprep.subr.bf16.mxu0 0
  %1592 = vmatpush1.bf16.msra.mxu0 %v1125
  %1593 = vmatprep.subr.bf16.mxu0 0
  %1594 = vmatpush1.bf16.msra.mxu0 %v1126
  %1595 = vmatprep.subr.bf16.mxu0 0
  %1596 = vmatpush1.bf16.msra.mxu0 %v1127
  %1597 = vmatprep.subr.bf16.mxu0 0
  %1598 = vmatpush1.bf16.msra.mxu0 %v1128
  %1599 = vmatprep.subr.bf16.mxu0 0
  %1600 = vmatpush1.bf16.msra.mxu0 %v1129
  %1601 = vmatprep.subr.bf16.mxu0 0
  %1602 = vmatpush1.bf16.msra.mxu0 %v1130
  %1603 = vmatprep.subr.bf16.mxu0 0
  %1604 = vmatpush1.bf16.msra.mxu0 %v1131
  %1605 = vmatprep.subr.bf16.mxu0 0
  %1606 = vmatpush1.bf16.msra.mxu0 %v1132
  %1607 = vmatprep.subr.bf16.mxu0 0
  %1608 = vmatpush1.bf16.msra.mxu0 %v1133
  %1609 = vmatprep.mubr.bf16.mxu0 %v591
  %1610 = vmatmul.mubr.bf16.gmra.mrb[0].mxu0 %v590
  %v1611 = vpop.f32.mrb[0].mxu0
  %v1612 = vadd.f32 %v1491, %v1611
  %v1613 = vpop.f32.mrb[0].mxu0
  %v1614 = vpop.f32.mrb[0].mxu0
  %v1615 = vadd.f32 %v1494, %v1614
  %v1616 = vpop.f32.mrb[0].mxu0
  %1617 = vmatprep.mubr.bf16.mxu0 %v600
  %1618 = vmatmul.mubr.bf16.gmra.mrb[0].mxu0 %v599
  %v1619 = vpop.f32.mrb[0].mxu0
  %v1620 = vadd.f32 %v1499, %v1619
  %v1621 = vpop.f32.mrb[0].mxu0
  %v1622 = vpop.f32.mrb[0].mxu0
  %v1623 = vadd.f32 %v1502, %v1622
  %v1624 = vpop.f32.mrb[0].mxu0
  %1625 = vmatprep.mubr.bf16.mxu0 %v609
  %1626 = vmatmul.mubr.bf16.gmra.mrb[0].mxu0 %v608
  %v1627 = vpop.f32.mrb[0].mxu0
  %v1628 = vadd.f32 %v1507, %v1627
  %v1629 = vpop.f32.mrb[0].mxu0
  %v1630 = vpop.f32.mrb[0].mxu0
  %v1631 = vadd.f32 %v1510, %v1630
  %v1632 = vpop.f32.mrb[0].mxu0
  %1633 = vmatprep.mubr.bf16.mxu0 %v618
  %1634 = vmatmul.mubr.bf16.gmra.mrb[0].mxu0 %v617
  %v1635 = vpop.f32.mrb[0].mxu0
  %v1636 = vadd.f32 %v1515, %v1635
  %v1637 = vpop.f32.mrb[0].mxu0
  %v1638 = vpop.f32.mrb[0].mxu0
  %v1639 = vadd.f32 %v1518, %v1638
  %v1640 = vpop.f32.mrb[0].mxu0
  %1641 = vmatprep.mubr.bf16.mxu0 %v627
  %1642 = vmatmul.mubr.bf16.gmra.mrb[0].mxu0 %v626
  %v1643 = vpop.f32.mrb[0].mxu0
  %v1644 = vadd.f32 %v1523, %v1643
  %v1645 = vpop.f32.mrb[0].mxu0
  %v1646 = vpop.f32.mrb[0].mxu0
  %v1647 = vadd.f32 %v1526, %v1646
  %v1648 = vpop.f32.mrb[0].mxu0
  %1649 = vmatprep.mubr.bf16.mxu0 %v636
  %1650 = vmatmul.mubr.bf16.gmra.mrb[0].mxu0 %v635
  %v1651 = vpop.f32.mrb[0].mxu0
  %v1652 = vadd.f32 %v1531, %v1651
  %v1653 = vpop.f32.mrb[0].mxu0
  %v1654 = vpop.f32.mrb[0].mxu0
  %v1655 = vadd.f32 %v1534, %v1654
  %v1656 = vpop.f32.mrb[0].mxu0
  %1657 = vmatprep.mubr.bf16.mxu0 %v645
  %1658 = vmatmul.mubr.bf16.gmra.mrb[0].mxu0 %v644
  %v1659 = vpop.f32.mrb[0].mxu0
  %v1660 = vadd.f32 %v1539, %v1659
  %v1661 = vpop.f32.mrb[0].mxu0
  %v1662 = vpop.f32.mrb[0].mxu0
  %v1663 = vadd.f32 %v1542, %v1662
  %v1664 = vpop.f32.mrb[0].mxu0
  %1665 = vmatprep.mubr.bf16.mxu0 %v654
  %1666 = vmatmul.mubr.bf16.gmra.mrb[0].mxu0 %v653
  %v1667 = vpop.f32.mrb[0].mxu0
  %v1668 = vadd.f32 %v1547, %v1667
  %v1669 = vpop.f32.mrb[0].mxu0
  %v1670 = vpop.f32.mrb[0].mxu0
  %v1671 = vadd.f32 %v1550, %v1670
  %v1672 = vpop.f32.mrb[0].mxu0
  %1673 = vmatprep.mubr.bf16.mxu0 %v663
  %1674 = vmatmul.mubr.bf16.gmra.mrb[0].mxu0 %v662
  %v1675 = vpop.f32.mrb[0].mxu0
  %v1676 = vadd.f32 %v1555, %v1675
  %v1677 = vpop.f32.mrb[0].mxu0
  %v1678 = vpop.f32.mrb[0].mxu0
  %v1679 = vadd.f32 %v1558, %v1678
  %v1680 = vpop.f32.mrb[0].mxu0
  %1681 = vmatprep.mubr.bf16.mxu0 %v672
  %1682 = vmatmul.mubr.bf16.gmra.mrb[0].mxu0 %v671
  %v1683 = vpop.f32.mrb[0].mxu0
  %v1684 = vadd.f32 %v1563, %v1683
  %v1685 = vpop.f32.mrb[0].mxu0
  %v1686 = vpop.f32.mrb[0].mxu0
  %v1687 = vadd.f32 %v1566, %v1686
  %v1688 = vpop.f32.mrb[0].mxu0
  %1689 = vmatprep.mubr.bf16.mxu0 %v681
  %1690 = vmatmul.mubr.bf16.gmra.mrb[0].mxu0 %v680
  %v1691 = vpop.f32.mrb[0].mxu0
  %v1692 = vadd.f32 %v1571, %v1691
  %v1693 = vpop.f32.mrb[0].mxu0
  %v1694 = vpop.f32.mrb[0].mxu0
  %v1695 = vadd.f32 %v1574, %v1694
  %v1696 = vpop.f32.mrb[0].mxu0
  %1697 = vdwg.mxu0
  %1698 = vmatprep.subr.bf16.mxu0 0
  %1699 = vmatpush1.bf16.msra.mxu0 %v1134
  %1700 = vmatprep.subr.bf16.mxu0 0
  %1701 = vmatpush1.bf16.msra.mxu0 %v1135
  %1702 = vmatprep.subr.bf16.mxu0 0
  %1703 = vmatpush1.bf16.msra.mxu0 %v1136
  %1704 = vmatprep.subr.bf16.mxu0 0
  %1705 = vmatpush1.bf16.msra.mxu0 %v1137
  %1706 = vmatprep.subr.bf16.mxu0 0
  %1707 = vmatpush1.bf16.msra.mxu0 %v1138
  %1708 = vmatprep.subr.bf16.mxu0 0
  %1709 = vmatpush1.bf16.msra.mxu0 %v1139
  %1710 = vmatprep.subr.bf16.mxu0 0
  %1711 = vmatpush1.bf16.msra.mxu0 %v1140
  %1712 = vmatprep.subr.bf16.mxu0 0
  %1713 = vmatpush1.bf16.msra.mxu0 %v1141
  %1714 = vmatprep.subr.bf16.mxu0 0
  %1715 = vmatpush1.bf16.msra.mxu0 0
  %1716 = vmatprep.subr.bf16.mxu0 0
  %1717 = vmatpush1.bf16.msra.mxu0 0
  %1718 = vmatprep.subr.bf16.mxu0 0
  %1719 = vmatpush1.bf16.msra.mxu0 0
  %1720 = vmatprep.subr.bf16.mxu0 0
  %1721 = vmatpush1.bf16.msra.mxu0 0
  %1722 = vmatprep.subr.bf16.mxu0 0
  %1723 = vmatpush1.bf16.msra.mxu0 0
  %1724 = vmatprep.subr.bf16.mxu0 0
  %1725 = vmatpush1.bf16.msra.mxu0 0
  %1726 = vmatprep.subr.bf16.mxu0 0
  %1727 = vmatpush1.bf16.msra.mxu0 0
  %1728 = vmatprep.subr.bf16.mxu0 0
  %1729 = vmatpush1.bf16.msra.mxu0 0
  %1730 = vmatprep.mubr.bf16.mxu0 0
  %1731 = vmatmul.mubr.bf16.gmra.mrb[0].mxu0 %v592
  %v1732 = vpop.f32.mrb[0].mxu0
  %v1733 = vadd.f32 %v1612, %v1732
  %v1734 = vpop.f32.mrb[0].mxu0
  %v1735 = vpop.f32.mrb[0].mxu0
  %v1736 = vadd.f32 %v1615, %v1735
  %v1737 = vpop.f32.mrb[0].mxu0
  %1738 = vmatprep.mubr.bf16.mxu0 0
  %1739 = vmatmul.mubr.bf16.gmra.mrb[0].mxu0 %v601
  %v1740 = vpop.f32.mrb[0].mxu0
  %v1741 = vadd.f32 %v1620, %v1740
  %v1742 = vpop.f32.mrb[0].mxu0
  %v1743 = vpop.f32.mrb[0].mxu0
  %v1744 = vadd.f32 %v1623, %v1743
  %v1745 = vpop.f32.mrb[0].mxu0
  %1746 = vmatprep.mubr.bf16.mxu0 0
  %1747 = vmatmul.mubr.bf16.gmra.mrb[0].mxu0 %v610
  %v1748 = vpop.f32.mrb[0].mxu0
  %v1749 = vadd.f32 %v1628, %v1748
  %v1750 = vpop.f32.mrb[0].mxu0
  %v1751 = vpop.f32.mrb[0].mxu0
  %v1752 = vadd.f32 %v1631, %v1751
  %v1753 = vpop.f32.mrb[0].mxu0
  %1754 = vmatprep.mubr.bf16.mxu0 0
  %1755 = vmatmul.mubr.bf16.gmra.mrb[0].mxu0 %v619
  %v1756 = vpop.f32.mrb[0].mxu0
  %v1757 = vadd.f32 %v1636, %v1756
  %v1758 = vpop.f32.mrb[0].mxu0
  %v1759 = vpop.f32.mrb[0].mxu0
  %v1760 = vadd.f32 %v1639, %v1759
  %v1761 = vpop.f32.mrb[0].mxu0
  %1762 = vmatprep.mubr.bf16.mxu0 0
  %1763 = vmatmul.mubr.bf16.gmra.mrb[0].mxu0 %v628
  %v1764 = vpop.f32.mrb[0].mxu0
  %v1765 = vadd.f32 %v1644, %v1764
  %v1766 = vpop.f32.mrb[0].mxu0
  %v1767 = vpop.f32.mrb[0].mxu0
  %v1768 = vadd.f32 %v1647, %v1767
  %v1769 = vpop.f32.mrb[0].mxu0
  %1770 = vmatprep.mubr.bf16.mxu0 0
  %1771 = vmatmul.mubr.bf16.gmra.mrb[0].mxu0 %v637
  %v1772 = vpop.f32.mrb[0].mxu0
  %v1773 = vadd.f32 %v1652, %v1772
  %v1774 = vpop.f32.mrb[0].mxu0
  %v1775 = vpop.f32.mrb[0].mxu0
  %v1776 = vadd.f32 %v1655, %v1775
  %v1777 = vpop.f32.mrb[0].mxu0
  %1778 = vmatprep.mubr.bf16.mxu0 0
  %1779 = vmatmul.mubr.bf16.gmra.mrb[0].mxu0 %v646
  %v1780 = vpop.f32.mrb[0].mxu0
  %v1781 = vadd.f32 %v1660, %v1780
  %v1782 = vpop.f32.mrb[0].mxu0
  %v1783 = vpop.f32.mrb[0].mxu0
  %v1784 = vadd.f32 %v1663, %v1783
  %v1785 = vpop.f32.mrb[0].mxu0
  %1786 = vmatprep.mubr.bf16.mxu0 0
  %1787 = vmatmul.mubr.bf16.gmra.mrb[0].mxu0 %v655
  %v1788 = vpop.f32.mrb[0].mxu0
  %v1789 = vadd.f32 %v1668, %v1788
  %v1790 = vpop.f32.mrb[0].mxu0
  %v1791 = vpop.f32.mrb[0].mxu0
  %v1792 = vadd.f32 %v1671, %v1791
  %v1793 = vpop.f32.mrb[0].mxu0
  %1794 = vmatprep.mubr.bf16.mxu0 0
  %1795 = vmatmul.mubr.bf16.gmra.mrb[0].mxu0 %v664
  %v1796 = vpop.f32.mrb[0].mxu0
  %v1797 = vadd.f32 %v1676, %v1796
  %v1798 = vpop.f32.mrb[0].mxu0
  %v1799 = vpop.f32.mrb[0].mxu0
  %v1800 = vadd.f32 %v1679, %v1799
  %v1801 = vpop.f32.mrb[0].mxu0
  %1802 = vmatprep.mubr.bf16.mxu0 0
  %1803 = vmatmul.mubr.bf16.gmra.mrb[0].mxu0 %v673
  %v1804 = vpop.f32.mrb[0].mxu0
  %v1805 = vadd.f32 %v1684, %v1804
  %v1806 = vpop.f32.mrb[0].mxu0
  %v1807 = vpop.f32.mrb[0].mxu0
  %v1808 = vadd.f32 %v1687, %v1807
  %v1809 = vpop.f32.mrb[0].mxu0
  %1810 = vmatprep.mubr.bf16.mxu0 0
  %1811 = vmatmul.mubr.bf16.gmra.mrb[0].mxu0 %v682
  %v1812 = vpop.f32.mrb[0].mxu0
  %v1813 = vadd.f32 %v1692, %v1812
  %v1814 = vpop.f32.mrb[0].mxu0
  %v1815 = vpop.f32.mrb[0].mxu0
  %v1816 = vadd.f32 %v1695, %v1815
  %v1817 = vpop.f32.mrb[0].mxu0
  %1818 = vdwg.mxu0
  %v1819 = vmax.f32 %v1733, 0.0
  %v1820 = vmax.f32 %v1736, 0.0
  %v1821 = vmax.f32 %v1741, 0.0
  %v1822 = vmax.f32 %v1744, 0.0
  %v1823 = vmax.f32 %v1749, 0.0
  %v1824 = vmax.f32 %v1752, 0.0
  %v1825 = vmax.f32 %v1757, 0.0
  %v1826 = vmax.f32 %v1760, 0.0
  %v1827 = vmax.f32 %v1765, 0.0
  %v1828 = vmax.f32 %v1768, 0.0
  %v1829 = vmax.f32 %v1773, 0.0
  %v1830 = vmax.f32 %v1776, 0.0
  %v1831 = vmax.f32 %v1781, 0.0
  %v1832 = vmax.f32 %v1784, 0.0
  %v1833 = vmax.f32 %v1789, 0.0
  %v1834 = vmax.f32 %v1792, 0.0
  %v1835 = vmax.f32 %v1797, 0.0
  %v1836 = vmax.f32 %v1800, 0.0
  %v1837 = vmax.f32 %v1805, 0.0
  %v1838 = vmax.f32 %v1808, 0.0
  %v1839 = vmax.f32 %v1813, 0.0
  %v1840 = vmax.f32 %v1816, 0.0
  %v1841 = vpack.c.bf16 %v1820, %v1819
  %v1842 = vpack.c.bf16 %v1822, %v1821
  %v1843 = vpack.c.bf16 %v1824, %v1823
  %v1844 = vpack.c.bf16 %v1826, %v1825
  %v1845 = vpack.c.bf16 %v1828, %v1827
  %v1846 = vpack.c.bf16 %v1830, %v1829
  %v1847 = vpack.c.bf16 %v1832, %v1831
  %v1848 = vpack.c.bf16 %v1834, %v1833
  %v1849 = vpack.c.bf16 %v1836, %v1835
  %v1850 = vpack.c.bf16 %v1838, %v1837
  %v1851 = vpack.c.bf16 %v1840, %v1839
  %v1863 = vunpack.c.l.b16 %v1841
  %v1864 = vunpack.c.h.b16 %v1841
  %v1865 = vunpack.c.l.b16 %v1842
  %v1866 = vunpack.c.h.b16 %v1842
  %v1867 = vunpack.c.l.b16 %v1843
  %v1868 = vunpack.c.h.b16 %v1843
  %v1869 = vunpack.c.l.b16 %v1844
  %v1870 = vunpack.c.h.b16 %v1844
  %v1871 = vunpack.c.l.b16 %v1845
  %v1872 = vunpack.c.h.b16 %v1845
  %v1873 = vunpack.c.l.b16 %v1846
  %v1874 = vunpack.c.h.b16 %v1846
  %v1875 = vunpack.c.l.b16 %v1847
  %v1876 = vunpack.c.h.b16 %v1847
  %v1877 = vunpack.c.l.b16 %v1848
  %v1878 = vunpack.c.h.b16 %v1848
  %v1879 = vunpack.c.l.b16 %v1849
  %v1880 = vunpack.c.h.b16 %v1849
  %v1881 = vunpack.c.l.b16 %v1850
  %v1882 = vunpack.c.h.b16 %v1850
  %v1883 = vunpack.c.l.b16 %v1851
  %v1884 = vunpack.c.h.b16 %v1851
  %v1885 = vpack.c.b16 %v1863, %v1863
  %v1886 = vpack.c.b16 %v1864, %v1864
  %v1887 = vpack.c.b16 %v1865, %v1865
  %v1888 = vpack.c.b16 %v1866, %v1866
  %v1889 = vpack.c.b16 %v1867, %v1867
  %v1890 = vpack.c.b16 %v1868, %v1868
  %v1891 = vpack.c.b16 %v1869, %v1869
  %v1892 = vpack.c.b16 %v1870, %v1870
  %v1893 = vpack.c.b16 %v1871, %v1871
  %v1894 = vpack.c.b16 %v1872, %v1872
  %v1895 = vpack.c.b16 %v1873, %v1873
  %v1896 = vpack.c.b16 %v1874, %v1874
  %v1897 = vpack.c.b16 %v1875, %v1875
  %v1898 = vpack.c.b16 %v1876, %v1876
  %v1899 = vpack.c.b16 %v1877, %v1877
  %v1900 = vpack.c.b16 %v1878, %v1878
  %v1901 = vpack.c.b16 %v1879, %v1879
  %v1902 = vpack.c.b16 %v1880, %v1880
  %v1903 = vpack.c.b16 %v1881, %v1881
  %v1904 = vpack.c.b16 %v1882, %v1882
  %v1905 = vpack.c.b16 %v1883, %v1883
  %v1906 = vpack.c.b16 %v1884, %v1884
  %1929 = vst [vmem:[%s3] sm:$0xf] %v1885
  %1930 = vst [vmem:[%s3 + $0x4] sm:$0xf] %v1886
  %1931 = vst [vmem:[%s3 + $0x8] sm:$0xf] %v1887
  %1932 = vst [vmem:[%s3 + $0xc] sm:$0xf] %v1888
  %1933 = vst [vmem:[%s3 + $0x10] sm:$0xf] %v1889
  %1934 = vst [vmem:[%s3 + $0x14] sm:$0xf] %v1890
  %1935 = vst [vmem:[%s3 + $0x18] sm:$0xf] %v1891
  %1936 = vst [vmem:[%s3 + $0x1c] sm:$0xf] %v1892
  %1937 = vst [vmem:[%s3 + $0x20] sm:$0xf] %v1893
  %1938 = vst [vmem:[%s3 + $0x24] sm:$0xf] %v1894
  %1939 = vst [vmem:[%s3 + $0x28] sm:$0xf] %v1895
  %1940 = vst [vmem:[%s3 + $0x2c] sm:$0xf] %v1896
  %1941 = vst [vmem:[%s3 + $0x30] sm:$0xf] %v1897
  %1942 = vst [vmem:[%s3 + $0x34] sm:$0xf] %v1898
  %1943 = vst [vmem:[%s3 + $0x38] sm:$0xf] %v1899
  %1944 = vst [vmem:[%s3 + $0x3c] sm:$0xf] %v1900
  %1945 = vst [vmem:[%s3 + $0x40] sm:$0xf] %v1901
  %1946 = vst [vmem:[%s3 + $0x44] sm:$0xf] %v1902
  %1947 = vst [vmem:[%s3 + $0x48] sm:$0xf] %v1903
  %1948 = vst [vmem:[%s3 + $0x4c] sm:$0xf] %v1904
  %1949 = vst [vmem:[%s3 + $0x50] sm:$0xf] %v1905
  %1950 = vst [vmem:[%s3 + $0x54] sm:$0xf] %v1906
  // Predicated region
  $region14: #{_lambda_.24} parent=0 // pred_check
    _
  $region15: #{_lambda_.24} parent=0 // pred_check_branch
    %1952 = sbr.rel (0) target = $region17
  $region16: #{_lambda_.24} parent=0 // pred_region
    _
  $region17: #{_lambda_.24} parent=0 // pred_fallthru
    _
  // Predicated region
  $region18: #{_lambda_.24} parent=0 // pred_check
    _
  $region19: #{_lambda_.24} parent=0 // pred_check_branch
    %1954 = sbr.rel (0) target = $region21
  $region20: #{_lambda_.24} parent=0 // pred_region
    _
  $region21: #{_lambda_.24} parent=0 // pred_fallthru
    _

// kernel: _lambda_.26
$region0: #{_lambda_.26}
  #allocation0 [shape = 'u32[]', space=smem, size = 0x4, offset = 0x4, fixed_abs, tag = 'smem constant byte address 0x4 - core index']
  #allocation1 [shape = 'u32[144,128]{1,0:T(1,128)}', space=vmem, size = 0x12000, scoped, tag = 'internal scratch']
  %s0 = inlined_call_operand.vmem [shape: bf16[176,1152], index: 0, kind: input, shape index: {}]
  %s1 = inlined_call_operand.vmem [shape: bf16[1152,128], index: 1, kind: input, shape index: {}]
  %s2 = inlined_call_operand.vmem [shape: f32[1,128], index: 2, kind: input, shape index: {}]
  %s3 = inlined_call_operand.vmem [shape: f32[176,128], index: 3, kind: output, shape index: {}]
  %s4 = sld [smem:[#allocation0]]
  $region22: #{_lambda_.26} parent=0
    _
  %s6 = ssub.s32 1, %s4
  %s7 = scalar_select 0, %s6, %s4
  // Predicated region
  $region2: #{_lambda_.26} parent=0 // pred_check
    _
  $region3: #{_lambda_.26} parent=0 // pred_check_branch
    %9 = sbr.rel (0) target = $region5
  $region4: #{_lambda_.26} parent=0 // pred_region
    _
  $region5: #{_lambda_.26} parent=0 // pred_fallthru
    _
  // Predicated region
  $region6: #{_lambda_.26} parent=0 // pred_check
    _
  $region7: #{_lambda_.26} parent=0 // pred_check_branch
    %11 = sbr.rel (0) target = $region9
  $region8: #{_lambda_.26} parent=0 // pred_region
    _
  $region9: #{_lambda_.26} parent=0 // pred_fallthru
    _
  // Predicated region
  $region10: #{_lambda_.26} parent=0 // pred_check
    _
  $region11: #{_lambda_.26} parent=0 // pred_check_branch
    %13 = sbr.rel (0) target = $region13
  $region12: #{_lambda_.26} parent=0 // pred_region
    _
  $region13: #{_lambda_.26} parent=0 // pred_fallthru
    _
  %v15 = vld [vmem:[%s0] sm:$0xff]
  %v16 = vld [vmem:[%s0 + $0x8] sm:$0xff]
  %v17 = vld [vmem:[%s0 + $0x10] sm:$0xff]
  %v18 = vld [vmem:[%s0 + $0x18] sm:$0xff]
  %v19 = vld [vmem:[%s0 + $0x20] sm:$0xf]
  %v20 = vld [vmem:[%s0 + $0x24] sm:$0xff]
  %v21 = vld [vmem:[%s0 + $0x2c] sm:$0xff]
  %v22 = vld [vmem:[%s0 + $0x34] sm:$0xff]
  %v23 = vld [vmem:[%s0 + $0x3c] sm:$0xff]
  %v24 = vld [vmem:[%s0 + $0x44] sm:$0xf]
  %v25 = vld [vmem:[%s0 + $0x48] sm:$0xff]
  %v26 = vld [vmem:[%s0 + $0x50] sm:$0xff]
  %v27 = vld [vmem:[%s0 + $0x58] sm:$0xff]
  %v28 = vld [vmem:[%s0 + $0x60] sm:$0xff]
  %v29 = vld [vmem:[%s0 + $0x68] sm:$0xf]
  %v30 = vld [vmem:[%s0 + $0x6c] sm:$0xff]
  %v31 = vld [vmem:[%s0 + $0x74] sm:$0xff]
  %v32 = vld [vmem:[%s0 + $0x7c] sm:$0xff]
  %v33 = vld [vmem:[%s0 + $0x84] sm:$0xff]
  %v34 = vld [vmem:[%s0 + $0x8c] sm:$0xf]
  %v35 = vld [vmem:[%s0 + $0x90] sm:$0xff]
  %v36 = vld [vmem:[%s0 + $0x98] sm:$0xff]
  %v37 = vld [vmem:[%s0 + $0xa0] sm:$0xff]
  %v38 = vld [vmem:[%s0 + $0xa8] sm:$0xff]
  %v39 = vld [vmem:[%s0 + $0xb0] sm:$0xf]
  %v40 = vld [vmem:[%s0 + $0xb4] sm:$0xff]
  %v41 = vld [vmem:[%s0 + $0xbc] sm:$0xff]
  %v42 = vld [vmem:[%s0 + $0xc4] sm:$0xff]
  %v43 = vld [vmem:[%s0 + $0xcc] sm:$0xff]
  %v44 = vld [vmem:[%s0 + $0xd4] sm:$0xf]
  %v45 = vld [vmem:[%s0 + $0xd8] sm:$0xff]
  %v46 = vld [vmem:[%s0 + $0xe0] sm:$0xff]
  %v47 = vld [vmem:[%s0 + $0xe8] sm:$0xff]
  %v48 = vld [vmem:[%s0 + $0xf0] sm:$0xff]
  %v49 = vld [vmem:[%s0 + $0xf8] sm:$0xf]
  %v50 = vld [vmem:[%s0 + $0xfc] sm:$0xff]
  %v51 = vld [vmem:[%s0 + $0x104] sm:$0xff]
  %v52 = vld [vmem:[%s0 + $0x10c] sm:$0xff]
  %v53 = vld [vmem:[%s0 + $0x114] sm:$0xff]
  %v54 = vld [vmem:[%s0 + $0x11c] sm:$0xf]
  %v55 = vld [vmem:[%s0 + $0x120] sm:$0xff]
  %v56 = vld [vmem:[%s0 + $0x128] sm:$0xff]
  %v57 = vld [vmem:[%s0 + $0x130] sm:$0xff]
  %v58 = vld [vmem:[%s0 + $0x138] sm:$0xff]
  %v59 = vld [vmem:[%s0 + $0x140] sm:$0xf]
  %v60 = vld [vmem:[%s0 + $0x144] sm:$0xff]
  %v61 = vld [vmem:[%s0 + $0x14c] sm:$0xff]
  %v62 = vld [vmem:[%s0 + $0x154] sm:$0xff]
  %v63 = vld [vmem:[%s0 + $0x15c] sm:$0xff]
  %v64 = vld [vmem:[%s0 + $0x164] sm:$0xf]
  %v65 = vld [vmem:[%s0 + $0x168] sm:$0xff]
  %v66 = vld [vmem:[%s0 + $0x170] sm:$0xff]
  %v67 = vld [vmem:[%s0 + $0x178] sm:$0xff]
  %v68 = vld [vmem:[%s0 + $0x180] sm:$0xff]
  %v69 = vld [vmem:[%s0 + $0x188] sm:$0xf]
  %v70 = vld [vmem:[%s0 + $0x18c] sm:$0xff]
  %v71 = vld [vmem:[%s0 + $0x194] sm:$0xff]
  %v72 = vld [vmem:[%s0 + $0x19c] sm:$0xff]
  %v73 = vld [vmem:[%s0 + $0x1a4] sm:$0xff]
  %v74 = vld [vmem:[%s0 + $0x1ac] sm:$0xf]
  %v75 = vld [vmem:[%s0 + $0x1b0] sm:$0xff]
  %v76 = vld [vmem:[%s0 + $0x1b8] sm:$0xff]
  %v77 = vld [vmem:[%s0 + $0x1c0] sm:$0xff]
  %v78 = vld [vmem:[%s0 + $0x1c8] sm:$0xff]
  %v79 = vld [vmem:[%s0 + $0x1d0] sm:$0xf]
  %v80 = vld [vmem:[%s0 + $0x1d4] sm:$0xff]
  %v81 = vld [vmem:[%s0 + $0x1dc] sm:$0xff]
  %v82 = vld [vmem:[%s0 + $0x1e4] sm:$0xff]
  %v83 = vld [vmem:[%s0 + $0x1ec] sm:$0xff]
  %v84 = vld [vmem:[%s0 + $0x1f4] sm:$0xf]
  %v85 = vld [vmem:[%s0 + $0x1f8] sm:$0xff]
  %v86 = vld [vmem:[%s0 + $0x200] sm:$0xff]
  %v87 = vld [vmem:[%s0 + $0x208] sm:$0xff]
  %v88 = vld [vmem:[%s0 + $0x210] sm:$0xff]
  %v89 = vld [vmem:[%s0 + $0x218] sm:$0xf]
  %v90 = vld [vmem:[%s0 + $0x21c] sm:$0xff]
  %v91 = vld [vmem:[%s0 + $0x224] sm:$0xff]
  %v92 = vld [vmem:[%s0 + $0x22c] sm:$0xff]
  %v93 = vld [vmem:[%s0 + $0x234] sm:$0xff]
  %v94 = vld [vmem:[%s0 + $0x23c] sm:$0xf]
  %v95 = vld [vmem:[%s0 + $0x240] sm:$0xff]
  %v96 = vld [vmem:[%s0 + $0x248] sm:$0xff]
  %v97 = vld [vmem:[%s0 + $0x250] sm:$0xff]
  %v98 = vld [vmem:[%s0 + $0x258] sm:$0xff]
  %v99 = vld [vmem:[%s0 + $0x260] sm:$0xf]
  %v100 = vld [vmem:[%s0 + $0x264] sm:$0xff]
  %v101 = vld [vmem:[%s0 + $0x26c] sm:$0xff]
  %v102 = vld [vmem:[%s0 + $0x274] sm:$0xff]
  %v103 = vld [vmem:[%s0 + $0x27c] sm:$0xff]
  %v104 = vld [vmem:[%s0 + $0x284] sm:$0xf]
  %v105 = vld [vmem:[%s0 + $0x288] sm:$0xff]
  %v106 = vld [vmem:[%s0 + $0x290] sm:$0xff]
  %v107 = vld [vmem:[%s0 + $0x298] sm:$0xff]
  %v108 = vld [vmem:[%s0 + $0x2a0] sm:$0xff]
  %v109 = vld [vmem:[%s0 + $0x2a8] sm:$0xf]
  %v110 = vld [vmem:[%s0 + $0x2ac] sm:$0xff]
  %v111 = vld [vmem:[%s0 + $0x2b4] sm:$0xff]
  %v112 = vld [vmem:[%s0 + $0x2bc] sm:$0xff]
  %v113 = vld [vmem:[%s0 + $0x2c4] sm:$0xff]
  %v114 = vld [vmem:[%s0 + $0x2cc] sm:$0xf]
  %v115 = vld [vmem:[%s0 + $0x2d0] sm:$0xff]
  %v116 = vld [vmem:[%s0 + $0x2d8] sm:$0xff]
  %v117 = vld [vmem:[%s0 + $0x2e0] sm:$0xff]
  %v118 = vld [vmem:[%s0 + $0x2e8] sm:$0xff]
  %v119 = vld [vmem:[%s0 + $0x2f0] sm:$0xf]
  %v120 = vld [vmem:[%s0 + $0x2f4] sm:$0xff]
  %v121 = vld [vmem:[%s0 + $0x2fc] sm:$0xff]
  %v122 = vld [vmem:[%s0 + $0x304] sm:$0xff]
  %v123 = vld [vmem:[%s0 + $0x30c] sm:$0xff]
  %v124 = vld [vmem:[%s0 + $0x314] sm:$0xf]
  %v125 = vld [vmem:[%s1] sm:$0xf]
  %v126 = vld [vmem:[%s1 + $0x4] sm:$0xf]
  %v127 = vld [vmem:[%s1 + $0x8] sm:$0xf]
  %v128 = vld [vmem:[%s1 + $0xc] sm:$0xf]
  %v129 = vld [vmem:[%s1 + $0x10] sm:$0xf]
  %v130 = vld [vmem:[%s1 + $0x14] sm:$0xf]
  %v131 = vld [vmem:[%s1 + $0x18] sm:$0xf]
  %v132 = vld [vmem:[%s1 + $0x1c] sm:$0xf]
  %v133 = vld [vmem:[%s1 + $0x20] sm:$0xf]
  %v134 = vld [vmem:[%s1 + $0x24] sm:$0xf]
  %v135 = vld [vmem:[%s1 + $0x28] sm:$0xf]
  %v136 = vld [vmem:[%s1 + $0x2c] sm:$0xf]
  %v137 = vld [vmem:[%s1 + $0x30] sm:$0xf]
  %v138 = vld [vmem:[%s1 + $0x34] sm:$0xf]
  %v139 = vld [vmem:[%s1 + $0x38] sm:$0xf]
  %v140 = vld [vmem:[%s1 + $0x3c] sm:$0xf]
  %v141 = vld [vmem:[%s1 + $0x40] sm:$0xf]
  %v142 = vld [vmem:[%s1 + $0x44] sm:$0xf]
  %v143 = vld [vmem:[%s1 + $0x48] sm:$0xf]
  %v144 = vld [vmem:[%s1 + $0x4c] sm:$0xf]
  %v145 = vld [vmem:[%s1 + $0x50] sm:$0xf]
  %v146 = vld [vmem:[%s1 + $0x54] sm:$0xf]
  %v147 = vld [vmem:[%s1 + $0x58] sm:$0xf]
  %v148 = vld [vmem:[%s1 + $0x5c] sm:$0xf]
  %v149 = vld [vmem:[%s1 + $0x60] sm:$0xf]
  %v150 = vld [vmem:[%s1 + $0x64] sm:$0xf]
  %v151 = vld [vmem:[%s1 + $0x68] sm:$0xf]
  %v152 = vld [vmem:[%s1 + $0x6c] sm:$0xf]
  %v153 = vld [vmem:[%s1 + $0x70] sm:$0xf]
  %v154 = vld [vmem:[%s1 + $0x74] sm:$0xf]
  %v155 = vld [vmem:[%s1 + $0x78] sm:$0xf]
  %v156 = vld [vmem:[%s1 + $0x7c] sm:$0xf]
  %v157 = vld [vmem:[%s1 + $0x80] sm:$0xf]
  %v158 = vld [vmem:[%s1 + $0x84] sm:$0xf]
  %v159 = vld [vmem:[%s1 + $0x88] sm:$0xf]
  %v160 = vld [vmem:[%s1 + $0x8c] sm:$0xf]
  %v161 = vld [vmem:[%s1 + $0x90] sm:$0xf]
  %v162 = vld [vmem:[%s1 + $0x94] sm:$0xf]
  %v163 = vld [vmem:[%s1 + $0x98] sm:$0xf]
  %v164 = vld [vmem:[%s1 + $0x9c] sm:$0xf]
  %v165 = vld [vmem:[%s1 + $0xa0] sm:$0xf]
  %v166 = vld [vmem:[%s1 + $0xa4] sm:$0xf]
  %v167 = vld [vmem:[%s1 + $0xa8] sm:$0xf]
  %v168 = vld [vmem:[%s1 + $0xac] sm:$0xf]
  %v169 = vld [vmem:[%s1 + $0xb0] sm:$0xf]
  %v170 = vld [vmem:[%s1 + $0xb4] sm:$0xf]
  %v171 = vld [vmem:[%s1 + $0xb8] sm:$0xf]
  %v172 = vld [vmem:[%s1 + $0xbc] sm:$0xf]
  %v173 = vld [vmem:[%s1 + $0xc0] sm:$0xf]
  %v174 = vld [vmem:[%s1 + $0xc4] sm:$0xf]
  %v175 = vld [vmem:[%s1 + $0xc8] sm:$0xf]
  %v176 = vld [vmem:[%s1 + $0xcc] sm:$0xf]
  %v177 = vld [vmem:[%s1 + $0xd0] sm:$0xf]
  %v178 = vld [vmem:[%s1 + $0xd4] sm:$0xf]
  %v179 = vld [vmem:[%s1 + $0xd8] sm:$0xf]
  %v180 = vld [vmem:[%s1 + $0xdc] sm:$0xf]
  %v181 = vld [vmem:[%s1 + $0xe0] sm:$0xf]
  %v182 = vld [vmem:[%s1 + $0xe4] sm:$0xf]
  %v183 = vld [vmem:[%s1 + $0xe8] sm:$0xf]
  %v184 = vld [vmem:[%s1 + $0xec] sm:$0xf]
  %v185 = vld [vmem:[%s1 + $0xf0] sm:$0xf]
  %v186 = vld [vmem:[%s1 + $0xf4] sm:$0xf]
  %v187 = vld [vmem:[%s1 + $0xf8] sm:$0xf]
  %v188 = vld [vmem:[%s1 + $0xfc] sm:$0xf]
  %v189 = vld [vmem:[%s1 + $0x100] sm:$0xf]
  %v190 = vld [vmem:[%s1 + $0x104] sm:$0xf]
  %v191 = vld [vmem:[%s1 + $0x108] sm:$0xf]
  %v192 = vld [vmem:[%s1 + $0x10c] sm:$0xf]
  %v193 = vld [vmem:[%s1 + $0x110] sm:$0xf]
  %v194 = vld [vmem:[%s1 + $0x114] sm:$0xf]
  %v195 = vld [vmem:[%s1 + $0x118] sm:$0xf]
  %v196 = vld [vmem:[%s1 + $0x11c] sm:$0xf]
  %v197 = vld [vmem:[%s1 + $0x120] sm:$0xf]
  %v198 = vld [vmem:[%s1 + $0x124] sm:$0xf]
  %v199 = vld [vmem:[%s1 + $0x128] sm:$0xf]
  %v200 = vld [vmem:[%s1 + $0x12c] sm:$0xf]
  %v201 = vld [vmem:[%s1 + $0x130] sm:$0xf]
  %v202 = vld [vmem:[%s1 + $0x134] sm:$0xf]
  %v203 = vld [vmem:[%s1 + $0x138] sm:$0xf]
  %v204 = vld [vmem:[%s1 + $0x13c] sm:$0xf]
  %v205 = vld [vmem:[%s1 + $0x140] sm:$0xf]
  %v206 = vld [vmem:[%s1 + $0x144] sm:$0xf]
  %v207 = vld [vmem:[%s1 + $0x148] sm:$0xf]
  %v208 = vld [vmem:[%s1 + $0x14c] sm:$0xf]
  %v209 = vld [vmem:[%s1 + $0x150] sm:$0xf]
  %v210 = vld [vmem:[%s1 + $0x154] sm:$0xf]
  %v211 = vld [vmem:[%s1 + $0x158] sm:$0xf]
  %v212 = vld [vmem:[%s1 + $0x15c] sm:$0xf]
  %v213 = vld [vmem:[%s1 + $0x160] sm:$0xf]
  %v214 = vld [vmem:[%s1 + $0x164] sm:$0xf]
  %v215 = vld [vmem:[%s1 + $0x168] sm:$0xf]
  %v216 = vld [vmem:[%s1 + $0x16c] sm:$0xf]
  %v217 = vld [vmem:[%s1 + $0x170] sm:$0xf]
  %v218 = vld [vmem:[%s1 + $0x174] sm:$0xf]
  %v219 = vld [vmem:[%s1 + $0x178] sm:$0xf]
  %v220 = vld [vmem:[%s1 + $0x17c] sm:$0xf]
  %v221 = vld [vmem:[%s1 + $0x180] sm:$0xf]
  %v222 = vld [vmem:[%s1 + $0x184] sm:$0xf]
  %v223 = vld [vmem:[%s1 + $0x188] sm:$0xf]
  %v224 = vld [vmem:[%s1 + $0x18c] sm:$0xf]
  %v225 = vld [vmem:[%s1 + $0x190] sm:$0xf]
  %v226 = vld [vmem:[%s1 + $0x194] sm:$0xf]
  %v227 = vld [vmem:[%s1 + $0x198] sm:$0xf]
  %v228 = vld [vmem:[%s1 + $0x19c] sm:$0xf]
  %v229 = vld [vmem:[%s1 + $0x1a0] sm:$0xf]
  %v230 = vld [vmem:[%s1 + $0x1a4] sm:$0xf]
  %v231 = vld [vmem:[%s1 + $0x1a8] sm:$0xf]
  %v232 = vld [vmem:[%s1 + $0x1ac] sm:$0xf]
  %v233 = vld [vmem:[%s1 + $0x1b0] sm:$0xf]
  %v234 = vld [vmem:[%s1 + $0x1b4] sm:$0xf]
  %v235 = vld [vmem:[%s1 + $0x1b8] sm:$0xf]
  %v236 = vld [vmem:[%s1 + $0x1bc] sm:$0xf]
  %v237 = vld [vmem:[%s1 + $0x1c0] sm:$0xf]
  %v238 = vld [vmem:[%s1 + $0x1c4] sm:$0xf]
  %v239 = vld [vmem:[%s1 + $0x1c8] sm:$0xf]
  %v240 = vld [vmem:[%s1 + $0x1cc] sm:$0xf]
  %v241 = vld [vmem:[%s1 + $0x1d0] sm:$0xf]
  %v242 = vld [vmem:[%s1 + $0x1d4] sm:$0xf]
  %v243 = vld [vmem:[%s1 + $0x1d8] sm:$0xf]
  %v244 = vld [vmem:[%s1 + $0x1dc] sm:$0xf]
  %v245 = vld [vmem:[%s1 + $0x1e0] sm:$0xf]
  %v246 = vld [vmem:[%s1 + $0x1e4] sm:$0xf]
  %v247 = vld [vmem:[%s1 + $0x1e8] sm:$0xf]
  %v248 = vld [vmem:[%s1 + $0x1ec] sm:$0xf]
  %v249 = vld [vmem:[%s1 + $0x1f0] sm:$0xf]
  %v250 = vld [vmem:[%s1 + $0x1f4] sm:$0xf]
  %v251 = vld [vmem:[%s1 + $0x1f8] sm:$0xf]
  %v252 = vld [vmem:[%s1 + $0x1fc] sm:$0xf]
  %v253 = vld [vmem:[%s1 + $0x200] sm:$0xf]
  %v254 = vld [vmem:[%s1 + $0x204] sm:$0xf]
  %v255 = vld [vmem:[%s1 + $0x208] sm:$0xf]
  %v256 = vld [vmem:[%s1 + $0x20c] sm:$0xf]
  %v257 = vld [vmem:[%s1 + $0x210] sm:$0xf]
  %v258 = vld [vmem:[%s1 + $0x214] sm:$0xf]
  %v259 = vld [vmem:[%s1 + $0x218] sm:$0xf]
  %v260 = vld [vmem:[%s1 + $0x21c] sm:$0xf]
  %v261 = vld [vmem:[%s1 + $0x220] sm:$0xf]
  %v262 = vld [vmem:[%s1 + $0x224] sm:$0xf]
  %v263 = vld [vmem:[%s1 + $0x228] sm:$0xf]
  %v264 = vld [vmem:[%s1 + $0x22c] sm:$0xf]
  %v265 = vld [vmem:[%s1 + $0x230] sm:$0xf]
  %v266 = vld [vmem:[%s1 + $0x234] sm:$0xf]
  %v267 = vld [vmem:[%s1 + $0x238] sm:$0xf]
  %v268 = vld [vmem:[%s1 + $0x23c] sm:$0xf]
  %v269 = vld [vmem:[%s2] sm:$0x1]
  %v271 = vlaneseq
  %v272 = vshrl.u32 %v271, 7
  %v273 = vsub.s32 0, %v272
  %v274 = vrot.slane %v269, %v273
  %v386 = vunpack.c.l.b16 %v15
  %v387 = vunpack.c.h.b16 %v15
  %v388 = vunpack.c.l.b16 %v16
  %v389 = vunpack.c.h.b16 %v16
  %v390 = vunpack.c.l.b16 %v17
  %v391 = vunpack.c.h.b16 %v17
  %v392 = vunpack.c.l.b16 %v18
  %v393 = vunpack.c.h.b16 %v18
  %v394 = vunpack.c.l.b16 %v19
  %v395 = vunpack.c.l.b16 %v20
  %v396 = vunpack.c.h.b16 %v20
  %v397 = vunpack.c.l.b16 %v21
  %v398 = vunpack.c.h.b16 %v21
  %v399 = vunpack.c.l.b16 %v22
  %v400 = vunpack.c.h.b16 %v22
  %v401 = vunpack.c.l.b16 %v23
  %v402 = vunpack.c.h.b16 %v23
  %v403 = vunpack.c.l.b16 %v24
  %v404 = vunpack.c.l.b16 %v25
  %v405 = vunpack.c.h.b16 %v25
  %v406 = vunpack.c.l.b16 %v26
  %v407 = vunpack.c.h.b16 %v26
  %v408 = vunpack.c.l.b16 %v27
  %v409 = vunpack.c.h.b16 %v27
  %v410 = vunpack.c.l.b16 %v28
  %v411 = vunpack.c.h.b16 %v28
  %v412 = vunpack.c.l.b16 %v29
  %v413 = vunpack.c.l.b16 %v30
  %v414 = vunpack.c.h.b16 %v30
  %v415 = vunpack.c.l.b16 %v31
  %v416 = vunpack.c.h.b16 %v31
  %v417 = vunpack.c.l.b16 %v32
  %v418 = vunpack.c.h.b16 %v32
  %v419 = vunpack.c.l.b16 %v33
  %v420 = vunpack.c.h.b16 %v33
  %v421 = vunpack.c.l.b16 %v34
  %v422 = vunpack.c.l.b16 %v35
  %v423 = vunpack.c.h.b16 %v35
  %v424 = vunpack.c.l.b16 %v36
  %v425 = vunpack.c.h.b16 %v36
  %v426 = vunpack.c.l.b16 %v37
  %v427 = vunpack.c.h.b16 %v37
  %v428 = vunpack.c.l.b16 %v38
  %v429 = vunpack.c.h.b16 %v38
  %v430 = vunpack.c.l.b16 %v39
  %v431 = vunpack.c.l.b16 %v40
  %v432 = vunpack.c.h.b16 %v40
  %v433 = vunpack.c.l.b16 %v41
  %v434 = vunpack.c.h.b16 %v41
  %v435 = vunpack.c.l.b16 %v42
  %v436 = vunpack.c.h.b16 %v42
  %v437 = vunpack.c.l.b16 %v43
  %v438 = vunpack.c.h.b16 %v43
  %v439 = vunpack.c.l.b16 %v44
  %v440 = vunpack.c.l.b16 %v45
  %v441 = vunpack.c.h.b16 %v45
  %v442 = vunpack.c.l.b16 %v46
  %v443 = vunpack.c.h.b16 %v46
  %v444 = vunpack.c.l.b16 %v47
  %v445 = vunpack.c.h.b16 %v47
  %v446 = vunpack.c.l.b16 %v48
  %v447 = vunpack.c.h.b16 %v48
  %v448 = vunpack.c.l.b16 %v49
  %v449 = vunpack.c.l.b16 %v50
  %v450 = vunpack.c.h.b16 %v50
  %v451 = vunpack.c.l.b16 %v51
  %v452 = vunpack.c.h.b16 %v51
  %v453 = vunpack.c.l.b16 %v52
  %v454 = vunpack.c.h.b16 %v52
  %v455 = vunpack.c.l.b16 %v53
  %v456 = vunpack.c.h.b16 %v53
  %v457 = vunpack.c.l.b16 %v54
  %v458 = vunpack.c.l.b16 %v55
  %v459 = vunpack.c.h.b16 %v55
  %v460 = vunpack.c.l.b16 %v56
  %v461 = vunpack.c.h.b16 %v56
  %v462 = vunpack.c.l.b16 %v57
  %v463 = vunpack.c.h.b16 %v57
  %v464 = vunpack.c.l.b16 %v58
  %v465 = vunpack.c.h.b16 %v58
  %v466 = vunpack.c.l.b16 %v59
  %v467 = vunpack.c.l.b16 %v60
  %v468 = vunpack.c.h.b16 %v60
  %v469 = vunpack.c.l.b16 %v61
  %v470 = vunpack.c.h.b16 %v61
  %v471 = vunpack.c.l.b16 %v62
  %v472 = vunpack.c.h.b16 %v62
  %v473 = vunpack.c.l.b16 %v63
  %v474 = vunpack.c.h.b16 %v63
  %v475 = vunpack.c.l.b16 %v64
  %v476 = vunpack.c.l.b16 %v65
  %v477 = vunpack.c.h.b16 %v65
  %v478 = vunpack.c.l.b16 %v66
  %v479 = vunpack.c.h.b16 %v66
  %v480 = vunpack.c.l.b16 %v67
  %v481 = vunpack.c.h.b16 %v67
  %v482 = vunpack.c.l.b16 %v68
  %v483 = vunpack.c.h.b16 %v68
  %v484 = vunpack.c.l.b16 %v69
  %v485 = vunpack.c.l.b16 %v70
  %v486 = vunpack.c.h.b16 %v70
  %v487 = vunpack.c.l.b16 %v71
  %v488 = vunpack.c.h.b16 %v71
  %v489 = vunpack.c.l.b16 %v72
  %v490 = vunpack.c.h.b16 %v72
  %v491 = vunpack.c.l.b16 %v73
  %v492 = vunpack.c.h.b16 %v73
  %v493 = vunpack.c.l.b16 %v74
  %v494 = vunpack.c.l.b16 %v75
  %v495 = vunpack.c.h.b16 %v75
  %v496 = vunpack.c.l.b16 %v76
  %v497 = vunpack.c.h.b16 %v76
  %v498 = vunpack.c.l.b16 %v77
  %v499 = vunpack.c.h.b16 %v77
  %v500 = vunpack.c.l.b16 %v78
  %v501 = vunpack.c.h.b16 %v78
  %v502 = vunpack.c.l.b16 %v79
  %v503 = vunpack.c.l.b16 %v80
  %v504 = vunpack.c.h.b16 %v80
  %v505 = vunpack.c.l.b16 %v81
  %v506 = vunpack.c.h.b16 %v81
  %v507 = vunpack.c.l.b16 %v82
  %v508 = vunpack.c.h.b16 %v82
  %v509 = vunpack.c.l.b16 %v83
  %v510 = vunpack.c.h.b16 %v83
  %v511 = vunpack.c.l.b16 %v84
  %v512 = vunpack.c.l.b16 %v85
  %v513 = vunpack.c.h.b16 %v85
  %v514 = vunpack.c.l.b16 %v86
  %v515 = vunpack.c.h.b16 %v86
  %v516 = vunpack.c.l.b16 %v87
  %v517 = vunpack.c.h.b16 %v87
  %v518 = vunpack.c.l.b16 %v88
  %v519 = vunpack.c.h.b16 %v88
  %v520 = vunpack.c.l.b16 %v89
  %v521 = vunpack.c.l.b16 %v90
  %v522 = vunpack.c.h.b16 %v90
  %v523 = vunpack.c.l.b16 %v91
  %v524 = vunpack.c.h.b16 %v91
  %v525 = vunpack.c.l.b16 %v92
  %v526 = vunpack.c.h.b16 %v92
  %v527 = vunpack.c.l.b16 %v93
  %v528 = vunpack.c.h.b16 %v93
  %v529 = vunpack.c.l.b16 %v94
  %v530 = vunpack.c.l.b16 %v95
  %v531 = vunpack.c.h.b16 %v95
  %v532 = vunpack.c.l.b16 %v96
  %v533 = vunpack.c.h.b16 %v96
  %v534 = vunpack.c.l.b16 %v97
  %v535 = vunpack.c.h.b16 %v97
  %v536 = vunpack.c.l.b16 %v98
  %v537 = vunpack.c.h.b16 %v98
  %v538 = vunpack.c.l.b16 %v99
  %v539 = vunpack.c.l.b16 %v100
  %v540 = vunpack.c.h.b16 %v100
  %v541 = vunpack.c.l.b16 %v101
  %v542 = vunpack.c.h.b16 %v101
  %v543 = vunpack.c.l.b16 %v102
  %v544 = vunpack.c.h.b16 %v102
  %v545 = vunpack.c.l.b16 %v103
  %v546 = vunpack.c.h.b16 %v103
  %v547 = vunpack.c.l.b16 %v104
  %v548 = vunpack.c.l.b16 %v105
  %v549 = vunpack.c.h.b16 %v105
  %v550 = vunpack.c.l.b16 %v106
  %v551 = vunpack.c.h.b16 %v106
  %v552 = vunpack.c.l.b16 %v107
  %v553 = vunpack.c.h.b16 %v107
  %v554 = vunpack.c.l.b16 %v108
  %v555 = vunpack.c.h.b16 %v108
  %v556 = vunpack.c.l.b16 %v109
  %v557 = vunpack.c.l.b16 %v110
  %v558 = vunpack.c.h.b16 %v110
  %v559 = vunpack.c.l.b16 %v111
  %v560 = vunpack.c.h.b16 %v111
  %v561 = vunpack.c.l.b16 %v112
  %v562 = vunpack.c.h.b16 %v112
  %v563 = vunpack.c.l.b16 %v113
  %v564 = vunpack.c.h.b16 %v113
  %v565 = vunpack.c.l.b16 %v114
  %v566 = vunpack.c.l.b16 %v115
  %v567 = vunpack.c.h.b16 %v115
  %v568 = vunpack.c.l.b16 %v116
  %v569 = vunpack.c.h.b16 %v116
  %v570 = vunpack.c.l.b16 %v117
  %v571 = vunpack.c.h.b16 %v117
  %v572 = vunpack.c.l.b16 %v118
  %v573 = vunpack.c.h.b16 %v118
  %v574 = vunpack.c.l.b16 %v119
  %v575 = vunpack.c.l.b16 %v120
  %v576 = vunpack.c.h.b16 %v120
  %v577 = vunpack.c.l.b16 %v121
  %v578 = vunpack.c.h.b16 %v121
  %v579 = vunpack.c.l.b16 %v122
  %v580 = vunpack.c.h.b16 %v122
  %v581 = vunpack.c.l.b16 %v123
  %v582 = vunpack.c.h.b16 %v123
  %v583 = vunpack.c.l.b16 %v124
  %v584 = vpack.c.b16 %v395, %v386
  %v585 = vpack.c.b16 %v396, %v387
  %v586 = vpack.c.b16 %v397, %v388
  %v587 = vpack.c.b16 %v398, %v389
  %v588 = vpack.c.b16 %v399, %v390
  %v589 = vpack.c.b16 %v400, %v391
  %v590 = vpack.c.b16 %v401, %v392
  %v591 = vpack.c.b16 %v402, %v393
  %v592 = vpack.c.b16 %v403, %v394
  %v593 = vpack.c.b16 %v413, %v404
  %v594 = vpack.c.b16 %v414, %v405
  %v595 = vpack.c.b16 %v415, %v406
  %v596 = vpack.c.b16 %v416, %v407
  %v597 = vpack.c.b16 %v417, %v408
  %v598 = vpack.c.b16 %v418, %v409
  %v599 = vpack.c.b16 %v419, %v410
  %v600 = vpack.c.b16 %v420, %v411
  %v601 = vpack.c.b16 %v421, %v412
  %v602 = vpack.c.b16 %v431, %v422
  %v603 = vpack.c.b16 %v432, %v423
  %v604 = vpack.c.b16 %v433, %v424
  %v605 = vpack.c.b16 %v434, %v425
  %v606 = vpack.c.b16 %v435, %v426
  %v607 = vpack.c.b16 %v436, %v427
  %v608 = vpack.c.b16 %v437, %v428
  %v609 = vpack.c.b16 %v438, %v429
  %v610 = vpack.c.b16 %v439, %v430
  %v611 = vpack.c.b16 %v449, %v440
  %v612 = vpack.c.b16 %v450, %v441
  %v613 = vpack.c.b16 %v451, %v442
  %v614 = vpack.c.b16 %v452, %v443
  %v615 = vpack.c.b16 %v453, %v444
  %v616 = vpack.c.b16 %v454, %v445
  %v617 = vpack.c.b16 %v455, %v446
  %v618 = vpack.c.b16 %v456, %v447
  %v619 = vpack.c.b16 %v457, %v448
  %v620 = vpack.c.b16 %v467, %v458
  %v621 = vpack.c.b16 %v468, %v459
  %v622 = vpack.c.b16 %v469, %v460
  %v623 = vpack.c.b16 %v470, %v461
  %v624 = vpack.c.b16 %v471, %v462
  %v625 = vpack.c.b16 %v472, %v463
  %v626 = vpack.c.b16 %v473, %v464
  %v627 = vpack.c.b16 %v474, %v465
  %v628 = vpack.c.b16 %v475, %v466
  %v629 = vpack.c.b16 %v485, %v476
  %v630 = vpack.c.b16 %v486, %v477
  %v631 = vpack.c.b16 %v487, %v478
  %v632 = vpack.c.b16 %v488, %v479
  %v633 = vpack.c.b16 %v489, %v480
  %v634 = vpack.c.b16 %v490, %v481
  %v635 = vpack.c.b16 %v491, %v482
  %v636 = vpack.c.b16 %v492, %v483
  %v637 = vpack.c.b16 %v493, %v484
  %v638 = vpack.c.b16 %v503, %v494
  %v639 = vpack.c.b16 %v504, %v495
  %v640 = vpack.c.b16 %v505, %v496
  %v641 = vpack.c.b16 %v506, %v497
  %v642 = vpack.c.b16 %v507, %v498
  %v643 = vpack.c.b16 %v508, %v499
  %v644 = vpack.c.b16 %v509, %v500
  %v645 = vpack.c.b16 %v510, %v501
  %v646 = vpack.c.b16 %v511, %v502
  %v647 = vpack.c.b16 %v521, %v512
  %v648 = vpack.c.b16 %v522, %v513
  %v649 = vpack.c.b16 %v523, %v514
  %v650 = vpack.c.b16 %v524, %v515
  %v651 = vpack.c.b16 %v525, %v516
  %v652 = vpack.c.b16 %v526, %v517
  %v653 = vpack.c.b16 %v527, %v518
  %v654 = vpack.c.b16 %v528, %v519
  %v655 = vpack.c.b16 %v529, %v520
  %v656 = vpack.c.b16 %v539, %v530
  %v657 = vpack.c.b16 %v540, %v531
  %v658 = vpack.c.b16 %v541, %v532
  %v659 = vpack.c.b16 %v542, %v533
  %v660 = vpack.c.b16 %v543, %v534
  %v661 = vpack.c.b16 %v544, %v535
  %v662 = vpack.c.b16 %v545, %v536
  %v663 = vpack.c.b16 %v546, %v537
  %v664 = vpack.c.b16 %v547, %v538
  %v665 = vpack.c.b16 %v557, %v548
  %v666 = vpack.c.b16 %v558, %v549
  %v667 = vpack.c.b16 %v559, %v550
  %v668 = vpack.c.b16 %v560, %v551
  %v669 = vpack.c.b16 %v561, %v552
  %v670 = vpack.c.b16 %v562, %v553
  %v671 = vpack.c.b16 %v563, %v554
  %v672 = vpack.c.b16 %v564, %v555
  %v673 = vpack.c.b16 %v565, %v556
  %v674 = vpack.c.b16 %v575, %v566
  %v675 = vpack.c.b16 %v576, %v567
  %v676 = vpack.c.b16 %v577, %v568
  %v677 = vpack.c.b16 %v578, %v569
  %v678 = vpack.c.b16 %v579, %v570
  %v679 = vpack.c.b16 %v580, %v571
  %v680 = vpack.c.b16 %v581, %v572
  %v681 = vpack.c.b16 %v582, %v573
  %v682 = vpack.c.b16 %v583, %v574
  %v926 = vunpack.c.l.b16 %v125
  %v927 = vunpack.c.l.b16 %v126
  %v928 = vunpack.c.l.b16 %v127
  %v929 = vunpack.c.l.b16 %v128
  %v930 = vunpack.c.l.b16 %v129
  %v931 = vunpack.c.l.b16 %v130
  %v932 = vunpack.c.l.b16 %v131
  %v933 = vunpack.c.l.b16 %v132
  %v934 = vunpack.c.l.b16 %v133
  %v935 = vunpack.c.l.b16 %v134
  %v936 = vunpack.c.l.b16 %v135
  %v937 = vunpack.c.l.b16 %v136
  %v938 = vunpack.c.l.b16 %v137
  %v939 = vunpack.c.l.b16 %v138
  %v940 = vunpack.c.l.b16 %v139
  %v941 = vunpack.c.l.b16 %v140
  %v942 = vunpack.c.l.b16 %v141
  %v943 = vunpack.c.l.b16 %v142
  %v944 = vunpack.c.l.b16 %v143
  %v945 = vunpack.c.l.b16 %v144
  %v946 = vunpack.c.l.b16 %v145
  %v947 = vunpack.c.l.b16 %v146
  %v948 = vunpack.c.l.b16 %v147
  %v949 = vunpack.c.l.b16 %v148
  %v950 = vunpack.c.l.b16 %v149
  %v951 = vunpack.c.l.b16 %v150
  %v952 = vunpack.c.l.b16 %v151
  %v953 = vunpack.c.l.b16 %v152
  %v954 = vunpack.c.l.b16 %v153
  %v955 = vunpack.c.l.b16 %v154
  %v956 = vunpack.c.l.b16 %v155
  %v957 = vunpack.c.l.b16 %v156
  %v958 = vunpack.c.l.b16 %v157
  %v959 = vunpack.c.l.b16 %v158
  %v960 = vunpack.c.l.b16 %v159
  %v961 = vunpack.c.l.b16 %v160
  %v962 = vunpack.c.l.b16 %v161
  %v963 = vunpack.c.l.b16 %v162
  %v964 = vunpack.c.l.b16 %v163
  %v965 = vunpack.c.l.b16 %v164
  %v966 = vunpack.c.l.b16 %v165
  %v967 = vunpack.c.l.b16 %v166
  %v968 = vunpack.c.l.b16 %v167
  %v969 = vunpack.c.l.b16 %v168
  %v970 = vunpack.c.l.b16 %v169
  %v971 = vunpack.c.l.b16 %v170
  %v972 = vunpack.c.l.b16 %v171
  %v973 = vunpack.c.l.b16 %v172
  %v974 = vunpack.c.l.b16 %v173
  %v975 = vunpack.c.l.b16 %v174
  %v976 = vunpack.c.l.b16 %v175
  %v977 = vunpack.c.l.b16 %v176
  %v978 = vunpack.c.l.b16 %v177
  %v979 = vunpack.c.l.b16 %v178
  %v980 = vunpack.c.l.b16 %v179
  %v981 = vunpack.c.l.b16 %v180
  %v982 = vunpack.c.l.b16 %v181
  %v983 = vunpack.c.l.b16 %v182
  %v984 = vunpack.c.l.b16 %v183
  %v985 = vunpack.c.l.b16 %v184
  %v986 = vunpack.c.l.b16 %v185
  %v987 = vunpack.c.l.b16 %v186
  %v988 = vunpack.c.l.b16 %v187
  %v989 = vunpack.c.l.b16 %v188
  %v990 = vunpack.c.l.b16 %v189
  %v991 = vunpack.c.l.b16 %v190
  %v992 = vunpack.c.l.b16 %v191
  %v993 = vunpack.c.l.b16 %v192
  %v994 = vunpack.c.l.b16 %v193
  %v995 = vunpack.c.l.b16 %v194
  %v996 = vunpack.c.l.b16 %v195
  %v997 = vunpack.c.l.b16 %v196
  %v998 = vunpack.c.l.b16 %v197
  %v999 = vunpack.c.l.b16 %v198
  %v1000 = vunpack.c.l.b16 %v199
  %v1001 = vunpack.c.l.b16 %v200
  %v1002 = vunpack.c.l.b16 %v201
  %v1003 = vunpack.c.l.b16 %v202
  %v1004 = vunpack.c.l.b16 %v203
  %v1005 = vunpack.c.l.b16 %v204
  %v1006 = vunpack.c.l.b16 %v205
  %v1007 = vunpack.c.l.b16 %v206
  %v1008 = vunpack.c.l.b16 %v207
  %v1009 = vunpack.c.l.b16 %v208
  %v1010 = vunpack.c.l.b16 %v209
  %v1011 = vunpack.c.l.b16 %v210
  %v1012 = vunpack.c.l.b16 %v211
  %v1013 = vunpack.c.l.b16 %v212
  %v1014 = vunpack.c.l.b16 %v213
  %v1015 = vunpack.c.l.b16 %v214
  %v1016 = vunpack.c.l.b16 %v215
  %v1017 = vunpack.c.l.b16 %v216
  %v1018 = vunpack.c.l.b16 %v217
  %v1019 = vunpack.c.l.b16 %v218
  %v1020 = vunpack.c.l.b16 %v219
  %v1021 = vunpack.c.l.b16 %v220
  %v1022 = vunpack.c.l.b16 %v221
  %v1023 = vunpack.c.l.b16 %v222
  %v1024 = vunpack.c.l.b16 %v223
  %v1025 = vunpack.c.l.b16 %v224
  %v1026 = vunpack.c.l.b16 %v225
  %v1027 = vunpack.c.l.b16 %v226
  %v1028 = vunpack.c.l.b16 %v227
  %v1029 = vunpack.c.l.b16 %v228
  %v1030 = vunpack.c.l.b16 %v229
  %v1031 = vunpack.c.l.b16 %v230
  %v1032 = vunpack.c.l.b16 %v231
  %v1033 = vunpack.c.l.b16 %v232
  %v1034 = vunpack.c.l.b16 %v233
  %v1035 = vunpack.c.l.b16 %v234
  %v1036 = vunpack.c.l.b16 %v235
  %v1037 = vunpack.c.l.b16 %v236
  %v1038 = vunpack.c.l.b16 %v237
  %v1039 = vunpack.c.l.b16 %v238
  %v1040 = vunpack.c.l.b16 %v239
  %v1041 = vunpack.c.l.b16 %v240
  %v1042 = vunpack.c.l.b16 %v241
  %v1043 = vunpack.c.l.b16 %v242
  %v1044 = vunpack.c.l.b16 %v243
  %v1045 = vunpack.c.l.b16 %v244
  %v1046 = vunpack.c.l.b16 %v245
  %v1047 = vunpack.c.l.b16 %v246
  %v1048 = vunpack.c.l.b16 %v247
  %v1049 = vunpack.c.l.b16 %v248
  %v1050 = vunpack.c.l.b16 %v249
  %v1051 = vunpack.c.l.b16 %v250
  %v1052 = vunpack.c.l.b16 %v251
  %v1053 = vunpack.c.l.b16 %v252
  %v1054 = vunpack.c.l.b16 %v253
  %v1055 = vunpack.c.l.b16 %v254
  %v1056 = vunpack.c.l.b16 %v255
  %v1057 = vunpack.c.l.b16 %v256
  %v1058 = vunpack.c.l.b16 %v257
  %v1059 = vunpack.c.l.b16 %v258
  %v1060 = vunpack.c.l.b16 %v259
  %v1061 = vunpack.c.l.b16 %v260
  %v1062 = vunpack.c.l.b16 %v261
  %v1063 = vunpack.c.l.b16 %v262
  %v1064 = vunpack.c.l.b16 %v263
  %v1065 = vunpack.c.l.b16 %v264
  %v1066 = vunpack.c.l.b16 %v265
  %v1067 = vunpack.c.l.b16 %v266
  %v1068 = vunpack.c.l.b16 %v267
  %v1069 = vunpack.c.l.b16 %v268
  %v1070 = vpack.c.b16 %v927, %v926
  %v1071 = vpack.c.b16 %v929, %v928
  %v1072 = vpack.c.b16 %v931, %v930
  %v1073 = vpack.c.b16 %v933, %v932
  %v1074 = vpack.c.b16 %v935, %v934
  %v1075 = vpack.c.b16 %v937, %v936
  %v1076 = vpack.c.b16 %v939, %v938
  %v1077 = vpack.c.b16 %v941, %v940
  %v1078 = vpack.c.b16 %v943, %v942
  %v1079 = vpack.c.b16 %v945, %v944
  %v1080 = vpack.c.b16 %v947, %v946
  %v1081 = vpack.c.b16 %v949, %v948
  %v1082 = vpack.c.b16 %v951, %v950
  %v1083 = vpack.c.b16 %v953, %v952
  %v1084 = vpack.c.b16 %v955, %v954
  %v1085 = vpack.c.b16 %v957, %v956
  %v1086 = vpack.c.b16 %v959, %v958
  %v1087 = vpack.c.b16 %v961, %v960
  %v1088 = vpack.c.b16 %v963, %v962
  %v1089 = vpack.c.b16 %v965, %v964
  %v1090 = vpack.c.b16 %v967, %v966
  %v1091 = vpack.c.b16 %v969, %v968
  %v1092 = vpack.c.b16 %v971, %v970
  %v1093 = vpack.c.b16 %v973, %v972
  %v1094 = vpack.c.b16 %v975, %v974
  %v1095 = vpack.c.b16 %v977, %v976
  %v1096 = vpack.c.b16 %v979, %v978
  %v1097 = vpack.c.b16 %v981, %v980
  %v1098 = vpack.c.b16 %v983, %v982
  %v1099 = vpack.c.b16 %v985, %v984
  %v1100 = vpack.c.b16 %v987, %v986
  %v1101 = vpack.c.b16 %v989, %v988
  %v1102 = vpack.c.b16 %v991, %v990
  %v1103 = vpack.c.b16 %v993, %v992
  %v1104 = vpack.c.b16 %v995, %v994
  %v1105 = vpack.c.b16 %v997, %v996
  %v1106 = vpack.c.b16 %v999, %v998
  %v1107 = vpack.c.b16 %v1001, %v1000
  %v1108 = vpack.c.b16 %v1003, %v1002
  %v1109 = vpack.c.b16 %v1005, %v1004
  %v1110 = vpack.c.b16 %v1007, %v1006
  %v1111 = vpack.c.b16 %v1009, %v1008
  %v1112 = vpack.c.b16 %v1011, %v1010
  %v1113 = vpack.c.b16 %v1013, %v1012
  %v1114 = vpack.c.b16 %v1015, %v1014
  %v1115 = vpack.c.b16 %v1017, %v1016
  %v1116 = vpack.c.b16 %v1019, %v1018
  %v1117 = vpack.c.b16 %v1021, %v1020
  %v1118 = vpack.c.b16 %v1023, %v1022
  %v1119 = vpack.c.b16 %v1025, %v1024
  %v1120 = vpack.c.b16 %v1027, %v1026
  %v1121 = vpack.c.b16 %v1029, %v1028
  %v1122 = vpack.c.b16 %v1031, %v1030
  %v1123 = vpack.c.b16 %v1033, %v1032
  %v1124 = vpack.c.b16 %v1035, %v1034
  %v1125 = vpack.c.b16 %v1037, %v1036
  %v1126 = vpack.c.b16 %v1039, %v1038
  %v1127 = vpack.c.b16 %v1041, %v1040
  %v1128 = vpack.c.b16 %v1043, %v1042
  %v1129 = vpack.c.b16 %v1045, %v1044
  %v1130 = vpack.c.b16 %v1047, %v1046
  %v1131 = vpack.c.b16 %v1049, %v1048
  %v1132 = vpack.c.b16 %v1051, %v1050
  %v1133 = vpack.c.b16 %v1053, %v1052
  %v1134 = vpack.c.b16 %v1055, %v1054
  %v1135 = vpack.c.b16 %v1057, %v1056
  %v1136 = vpack.c.b16 %v1059, %v1058
  %v1137 = vpack.c.b16 %v1061, %v1060
  %v1138 = vpack.c.b16 %v1063, %v1062
  %v1139 = vpack.c.b16 %v1065, %v1064
  %v1140 = vpack.c.b16 %v1067, %v1066
  %v1141 = vpack.c.b16 %v1069, %v1068
  %1214 = vmatprep.subr.bf16.mxu0 0
  %1215 = vmatpush1.bf16.msra.mxu0 %v1070
  %1216 = vmatprep.subr.bf16.mxu0 0
  %1217 = vmatpush1.bf16.msra.mxu0 %v1071
  %1218 = vmatprep.subr.bf16.mxu0 0
  %1219 = vmatpush1.bf16.msra.mxu0 %v1072
  %1220 = vmatprep.subr.bf16.mxu0 0
  %1221 = vmatpush1.bf16.msra.mxu0 %v1073
  %1222 = vmatprep.subr.bf16.mxu0 0
  %1223 = vmatpush1.bf16.msra.mxu0 %v1074
  %1224 = vmatprep.subr.bf16.mxu0 0
  %1225 = vmatpush1.bf16.msra.mxu0 %v1075
  %1226 = vmatprep.subr.bf16.mxu0 0
  %1227 = vmatpush1.bf16.msra.mxu0 %v1076
  %1228 = vmatprep.subr.bf16.mxu0 0
  %1229 = vmatpush1.bf16.msra.mxu0 %v1077
  %1230 = vmatprep.subr.bf16.mxu0 0
  %1231 = vmatpush1.bf16.msra.mxu0 %v1078
  %1232 = vmatprep.subr.bf16.mxu0 0
  %1233 = vmatpush1.bf16.msra.mxu0 %v1079
  %1234 = vmatprep.subr.bf16.mxu0 0
  %1235 = vmatpush1.bf16.msra.mxu0 %v1080
  %1236 = vmatprep.subr.bf16.mxu0 0
  %1237 = vmatpush1.bf16.msra.mxu0 %v1081
  %1238 = vmatprep.subr.bf16.mxu0 0
  %1239 = vmatpush1.bf16.msra.mxu0 %v1082
  %1240 = vmatprep.subr.bf16.mxu0 0
  %1241 = vmatpush1.bf16.msra.mxu0 %v1083
  %1242 = vmatprep.subr.bf16.mxu0 0
  %1243 = vmatpush1.bf16.msra.mxu0 %v1084
  %1244 = vmatprep.subr.bf16.mxu0 0
  %1245 = vmatpush1.bf16.msra.mxu0 %v1085
  %1246 = vmatprep.mubr.bf16.mxu0 %v585
  %1247 = vmatmul.mubr.bf16.gmra.mrb[0].mxu0 %v584
  %v1248 = vpop.f32.mrb[0].mxu0
  %v1249 = vadd.f32 %v274, %v1248
  %v1250 = vpop.f32.mrb[0].mxu0
  %v1251 = vpop.f32.mrb[0].mxu0
  %v1252 = vadd.f32 %v274, %v1251
  %v1253 = vpop.f32.mrb[0].mxu0
  %1254 = vmatprep.mubr.bf16.mxu0 %v594
  %1255 = vmatmul.mubr.bf16.gmra.mrb[0].mxu0 %v593
  %v1256 = vpop.f32.mrb[0].mxu0
  %v1257 = vadd.f32 %v274, %v1256
  %v1258 = vpop.f32.mrb[0].mxu0
  %v1259 = vpop.f32.mrb[0].mxu0
  %v1260 = vadd.f32 %v274, %v1259
  %v1261 = vpop.f32.mrb[0].mxu0
  %1262 = vmatprep.mubr.bf16.mxu0 %v603
  %1263 = vmatmul.mubr.bf16.gmra.mrb[0].mxu0 %v602
  %v1264 = vpop.f32.mrb[0].mxu0
  %v1265 = vadd.f32 %v274, %v1264
  %v1266 = vpop.f32.mrb[0].mxu0
  %v1267 = vpop.f32.mrb[0].mxu0
  %v1268 = vadd.f32 %v274, %v1267
  %v1269 = vpop.f32.mrb[0].mxu0
  %1270 = vmatprep.mubr.bf16.mxu0 %v612
  %1271 = vmatmul.mubr.bf16.gmra.mrb[0].mxu0 %v611
  %v1272 = vpop.f32.mrb[0].mxu0
  %v1273 = vadd.f32 %v274, %v1272
  %v1274 = vpop.f32.mrb[0].mxu0
  %v1275 = vpop.f32.mrb[0].mxu0
  %v1276 = vadd.f32 %v274, %v1275
  %v1277 = vpop.f32.mrb[0].mxu0
  %1278 = vmatprep.mubr.bf16.mxu0 %v621
  %1279 = vmatmul.mubr.bf16.gmra.mrb[0].mxu0 %v620
  %v1280 = vpop.f32.mrb[0].mxu0
  %v1281 = vadd.f32 %v274, %v1280
  %v1282 = vpop.f32.mrb[0].mxu0
  %v1283 = vpop.f32.mrb[0].mxu0
  %v1284 = vadd.f32 %v274, %v1283
  %v1285 = vpop.f32.mrb[0].mxu0
  %1286 = vmatprep.mubr.bf16.mxu0 %v630
  %1287 = vmatmul.mubr.bf16.gmra.mrb[0].mxu0 %v629
  %v1288 = vpop.f32.mrb[0].mxu0
  %v1289 = vadd.f32 %v274, %v1288
  %v1290 = vpop.f32.mrb[0].mxu0
  %v1291 = vpop.f32.mrb[0].mxu0
  %v1292 = vadd.f32 %v274, %v1291
  %v1293 = vpop.f32.mrb[0].mxu0
  %1294 = vmatprep.mubr.bf16.mxu0 %v639
  %1295 = vmatmul.mubr.bf16.gmra.mrb[0].mxu0 %v638
  %v1296 = vpop.f32.mrb[0].mxu0
  %v1297 = vadd.f32 %v274, %v1296
  %v1298 = vpop.f32.mrb[0].mxu0
  %v1299 = vpop.f32.mrb[0].mxu0
  %v1300 = vadd.f32 %v274, %v1299
  %v1301 = vpop.f32.mrb[0].mxu0
  %1302 = vmatprep.mubr.bf16.mxu0 %v648
  %1303 = vmatmul.mubr.bf16.gmra.mrb[0].mxu0 %v647
  %v1304 = vpop.f32.mrb[0].mxu0
  %v1305 = vadd.f32 %v274, %v1304
  %v1306 = vpop.f32.mrb[0].mxu0
  %v1307 = vpop.f32.mrb[0].mxu0
  %v1308 = vadd.f32 %v274, %v1307
  %v1309 = vpop.f32.mrb[0].mxu0
  %1310 = vmatprep.mubr.bf16.mxu0 %v657
  %1311 = vmatmul.mubr.bf16.gmra.mrb[0].mxu0 %v656
  %v1312 = vpop.f32.mrb[0].mxu0
  %v1313 = vadd.f32 %v274, %v1312
  %v1314 = vpop.f32.mrb[0].mxu0
  %v1315 = vpop.f32.mrb[0].mxu0
  %v1316 = vadd.f32 %v274, %v1315
  %v1317 = vpop.f32.mrb[0].mxu0
  %1318 = vmatprep.mubr.bf16.mxu0 %v666
  %1319 = vmatmul.mubr.bf16.gmra.mrb[0].mxu0 %v665
  %v1320 = vpop.f32.mrb[0].mxu0
  %v1321 = vadd.f32 %v274, %v1320
  %v1322 = vpop.f32.mrb[0].mxu0
  %v1323 = vpop.f32.mrb[0].mxu0
  %v1324 = vadd.f32 %v274, %v1323
  %v1325 = vpop.f32.mrb[0].mxu0
  %1326 = vmatprep.mubr.bf16.mxu0 %v675
  %1327 = vmatmul.mubr.bf16.gmra.mrb[0].mxu0 %v674
  %v1328 = vpop.f32.mrb[0].mxu0
  %v1329 = vadd.f32 %v274, %v1328
  %v1330 = vpop.f32.mrb[0].mxu0
  %v1331 = vpop.f32.mrb[0].mxu0
  %v1332 = vadd.f32 %v274, %v1331
  %v1333 = vpop.f32.mrb[0].mxu0
  %1334 = vdwg.mxu0
  %1335 = vmatprep.subr.bf16.mxu0 0
  %1336 = vmatpush1.bf16.msra.mxu0 %v1086
  %1337 = vmatprep.subr.bf16.mxu0 0
  %1338 = vmatpush1.bf16.msra.mxu0 %v1087
  %1339 = vmatprep.subr.bf16.mxu0 0
  %1340 = vmatpush1.bf16.msra.mxu0 %v1088
  %1341 = vmatprep.subr.bf16.mxu0 0
  %1342 = vmatpush1.bf16.msra.mxu0 %v1089
  %1343 = vmatprep.subr.bf16.mxu0 0
  %1344 = vmatpush1.bf16.msra.mxu0 %v1090
  %1345 = vmatprep.subr.bf16.mxu0 0
  %1346 = vmatpush1.bf16.msra.mxu0 %v1091
  %1347 = vmatprep.subr.bf16.mxu0 0
  %1348 = vmatpush1.bf16.msra.mxu0 %v1092
  %1349 = vmatprep.subr.bf16.mxu0 0
  %1350 = vmatpush1.bf16.msra.mxu0 %v1093
  %1351 = vmatprep.subr.bf16.mxu0 0
  %1352 = vmatpush1.bf16.msra.mxu0 %v1094
  %1353 = vmatprep.subr.bf16.mxu0 0
  %1354 = vmatpush1.bf16.msra.mxu0 %v1095
  %1355 = vmatprep.subr.bf16.mxu0 0
  %1356 = vmatpush1.bf16.msra.mxu0 %v1096
  %1357 = vmatprep.subr.bf16.mxu0 0
  %1358 = vmatpush1.bf16.msra.mxu0 %v1097
  %1359 = vmatprep.subr.bf16.mxu0 0
  %1360 = vmatpush1.bf16.msra.mxu0 %v1098
  %1361 = vmatprep.subr.bf16.mxu0 0
  %1362 = vmatpush1.bf16.msra.mxu0 %v1099
  %1363 = vmatprep.subr.bf16.mxu0 0
  %1364 = vmatpush1.bf16.msra.mxu0 %v1100
  %1365 = vmatprep.subr.bf16.mxu0 0
  %1366 = vmatpush1.bf16.msra.mxu0 %v1101
  %1367 = vmatprep.mubr.bf16.mxu0 %v587
  %1368 = vmatmul.mubr.bf16.gmra.mrb[0].mxu0 %v586
  %v1369 = vpop.f32.mrb[0].mxu0
  %v1370 = vadd.f32 %v1249, %v1369
  %v1371 = vpop.f32.mrb[0].mxu0
  %v1372 = vpop.f32.mrb[0].mxu0
  %v1373 = vadd.f32 %v1252, %v1372
  %v1374 = vpop.f32.mrb[0].mxu0
  %1375 = vmatprep.mubr.bf16.mxu0 %v596
  %1376 = vmatmul.mubr.bf16.gmra.mrb[0].mxu0 %v595
  %v1377 = vpop.f32.mrb[0].mxu0
  %v1378 = vadd.f32 %v1257, %v1377
  %v1379 = vpop.f32.mrb[0].mxu0
  %v1380 = vpop.f32.mrb[0].mxu0
  %v1381 = vadd.f32 %v1260, %v1380
  %v1382 = vpop.f32.mrb[0].mxu0
  %1383 = vmatprep.mubr.bf16.mxu0 %v605
  %1384 = vmatmul.mubr.bf16.gmra.mrb[0].mxu0 %v604
  %v1385 = vpop.f32.mrb[0].mxu0
  %v1386 = vadd.f32 %v1265, %v1385
  %v1387 = vpop.f32.mrb[0].mxu0
  %v1388 = vpop.f32.mrb[0].mxu0
  %v1389 = vadd.f32 %v1268, %v1388
  %v1390 = vpop.f32.mrb[0].mxu0
  %1391 = vmatprep.mubr.bf16.mxu0 %v614
  %1392 = vmatmul.mubr.bf16.gmra.mrb[0].mxu0 %v613
  %v1393 = vpop.f32.mrb[0].mxu0
  %v1394 = vadd.f32 %v1273, %v1393
  %v1395 = vpop.f32.mrb[0].mxu0
  %v1396 = vpop.f32.mrb[0].mxu0
  %v1397 = vadd.f32 %v1276, %v1396
  %v1398 = vpop.f32.mrb[0].mxu0
  %1399 = vmatprep.mubr.bf16.mxu0 %v623
  %1400 = vmatmul.mubr.bf16.gmra.mrb[0].mxu0 %v622
  %v1401 = vpop.f32.mrb[0].mxu0
  %v1402 = vadd.f32 %v1281, %v1401
  %v1403 = vpop.f32.mrb[0].mxu0
  %v1404 = vpop.f32.mrb[0].mxu0
  %v1405 = vadd.f32 %v1284, %v1404
  %v1406 = vpop.f32.mrb[0].mxu0
  %1407 = vmatprep.mubr.bf16.mxu0 %v632
  %1408 = vmatmul.mubr.bf16.gmra.mrb[0].mxu0 %v631
  %v1409 = vpop.f32.mrb[0].mxu0
  %v1410 = vadd.f32 %v1289, %v1409
  %v1411 = vpop.f32.mrb[0].mxu0
  %v1412 = vpop.f32.mrb[0].mxu0
  %v1413 = vadd.f32 %v1292, %v1412
  %v1414 = vpop.f32.mrb[0].mxu0
  %1415 = vmatprep.mubr.bf16.mxu0 %v641
  %1416 = vmatmul.mubr.bf16.gmra.mrb[0].mxu0 %v640
  %v1417 = vpop.f32.mrb[0].mxu0
  %v1418 = vadd.f32 %v1297, %v1417
  %v1419 = vpop.f32.mrb[0].mxu0
  %v1420 = vpop.f32.mrb[0].mxu0
  %v1421 = vadd.f32 %v1300, %v1420
  %v1422 = vpop.f32.mrb[0].mxu0
  %1423 = vmatprep.mubr.bf16.mxu0 %v650
  %1424 = vmatmul.mubr.bf16.gmra.mrb[0].mxu0 %v649
  %v1425 = vpop.f32.mrb[0].mxu0
  %v1426 = vadd.f32 %v1305, %v1425
  %v1427 = vpop.f32.mrb[0].mxu0
  %v1428 = vpop.f32.mrb[0].mxu0
  %v1429 = vadd.f32 %v1308, %v1428
  %v1430 = vpop.f32.mrb[0].mxu0
  %1431 = vmatprep.mubr.bf16.mxu0 %v659
  %1432 = vmatmul.mubr.bf16.gmra.mrb[0].mxu0 %v658
  %v1433 = vpop.f32.mrb[0].mxu0
  %v1434 = vadd.f32 %v1313, %v1433
  %v1435 = vpop.f32.mrb[0].mxu0
  %v1436 = vpop.f32.mrb[0].mxu0
  %v1437 = vadd.f32 %v1316, %v1436
  %v1438 = vpop.f32.mrb[0].mxu0
  %1439 = vmatprep.mubr.bf16.mxu0 %v668
  %1440 = vmatmul.mubr.bf16.gmra.mrb[0].mxu0 %v667
  %v1441 = vpop.f32.mrb[0].mxu0
  %v1442 = vadd.f32 %v1321, %v1441
  %v1443 = vpop.f32.mrb[0].mxu0
  %v1444 = vpop.f32.mrb[0].mxu0
  %v1445 = vadd.f32 %v1324, %v1444
  %v1446 = vpop.f32.mrb[0].mxu0
  %1447 = vmatprep.mubr.bf16.mxu0 %v677
  %1448 = vmatmul.mubr.bf16.gmra.mrb[0].mxu0 %v676
  %v1449 = vpop.f32.mrb[0].mxu0
  %v1450 = vadd.f32 %v1329, %v1449
  %v1451 = vpop.f32.mrb[0].mxu0
  %v1452 = vpop.f32.mrb[0].mxu0
  %v1453 = vadd.f32 %v1332, %v1452
  %v1454 = vpop.f32.mrb[0].mxu0
  %1455 = vdwg.mxu0
  %1456 = vmatprep.subr.bf16.mxu0 0
  %1457 = vmatpush1.bf16.msra.mxu0 %v1102
  %1458 = vmatprep.subr.bf16.mxu0 0
  %1459 = vmatpush1.bf16.msra.mxu0 %v1103
  %1460 = vmatprep.subr.bf16.mxu0 0
  %1461 = vmatpush1.bf16.msra.mxu0 %v1104
  %1462 = vmatprep.subr.bf16.mxu0 0
  %1463 = vmatpush1.bf16.msra.mxu0 %v1105
  %1464 = vmatprep.subr.bf16.mxu0 0
  %1465 = vmatpush1.bf16.msra.mxu0 %v1106
  %1466 = vmatprep.subr.bf16.mxu0 0
  %1467 = vmatpush1.bf16.msra.mxu0 %v1107
  %1468 = vmatprep.subr.bf16.mxu0 0
  %1469 = vmatpush1.bf16.msra.mxu0 %v1108
  %1470 = vmatprep.subr.bf16.mxu0 0
  %1471 = vmatpush1.bf16.msra.mxu0 %v1109
  %1472 = vmatprep.subr.bf16.mxu0 0
  %1473 = vmatpush1.bf16.msra.mxu0 %v1110
  %1474 = vmatprep.subr.bf16.mxu0 0
  %1475 = vmatpush1.bf16.msra.mxu0 %v1111
  %1476 = vmatprep.subr.bf16.mxu0 0
  %1477 = vmatpush1.bf16.msra.mxu0 %v1112
  %1478 = vmatprep.subr.bf16.mxu0 0
  %1479 = vmatpush1.bf16.msra.mxu0 %v1113
  %1480 = vmatprep.subr.bf16.mxu0 0
  %1481 = vmatpush1.bf16.msra.mxu0 %v1114
  %1482 = vmatprep.subr.bf16.mxu0 0
  %1483 = vmatpush1.bf16.msra.mxu0 %v1115
  %1484 = vmatprep.subr.bf16.mxu0 0
  %1485 = vmatpush1.bf16.msra.mxu0 %v1116
  %1486 = vmatprep.subr.bf16.mxu0 0
  %1487 = vmatpush1.bf16.msra.mxu0 %v1117
  %1488 = vmatprep.mubr.bf16.mxu0 %v589
  %1489 = vmatmul.mubr.bf16.gmra.mrb[0].mxu0 %v588
  %v1490 = vpop.f32.mrb[0].mxu0
  %v1491 = vadd.f32 %v1370, %v1490
  %v1492 = vpop.f32.mrb[0].mxu0
  %v1493 = vpop.f32.mrb[0].mxu0
  %v1494 = vadd.f32 %v1373, %v1493
  %v1495 = vpop.f32.mrb[0].mxu0
  %1496 = vmatprep.mubr.bf16.mxu0 %v598
  %1497 = vmatmul.mubr.bf16.gmra.mrb[0].mxu0 %v597
  %v1498 = vpop.f32.mrb[0].mxu0
  %v1499 = vadd.f32 %v1378, %v1498
  %v1500 = vpop.f32.mrb[0].mxu0
  %v1501 = vpop.f32.mrb[0].mxu0
  %v1502 = vadd.f32 %v1381, %v1501
  %v1503 = vpop.f32.mrb[0].mxu0
  %1504 = vmatprep.mubr.bf16.mxu0 %v607
  %1505 = vmatmul.mubr.bf16.gmra.mrb[0].mxu0 %v606
  %v1506 = vpop.f32.mrb[0].mxu0
  %v1507 = vadd.f32 %v1386, %v1506
  %v1508 = vpop.f32.mrb[0].mxu0
  %v1509 = vpop.f32.mrb[0].mxu0
  %v1510 = vadd.f32 %v1389, %v1509
  %v1511 = vpop.f32.mrb[0].mxu0
  %1512 = vmatprep.mubr.bf16.mxu0 %v616
  %1513 = vmatmul.mubr.bf16.gmra.mrb[0].mxu0 %v615
  %v1514 = vpop.f32.mrb[0].mxu0
  %v1515 = vadd.f32 %v1394, %v1514
  %v1516 = vpop.f32.mrb[0].mxu0
  %v1517 = vpop.f32.mrb[0].mxu0
  %v1518 = vadd.f32 %v1397, %v1517
  %v1519 = vpop.f32.mrb[0].mxu0
  %1520 = vmatprep.mubr.bf16.mxu0 %v625
  %1521 = vmatmul.mubr.bf16.gmra.mrb[0].mxu0 %v624
  %v1522 = vpop.f32.mrb[0].mxu0
  %v1523 = vadd.f32 %v1402, %v1522
  %v1524 = vpop.f32.mrb[0].mxu0
  %v1525 = vpop.f32.mrb[0].mxu0
  %v1526 = vadd.f32 %v1405, %v1525
  %v1527 = vpop.f32.mrb[0].mxu0
  %1528 = vmatprep.mubr.bf16.mxu0 %v634
  %1529 = vmatmul.mubr.bf16.gmra.mrb[0].mxu0 %v633
  %v1530 = vpop.f32.mrb[0].mxu0
  %v1531 = vadd.f32 %v1410, %v1530
  %v1532 = vpop.f32.mrb[0].mxu0
  %v1533 = vpop.f32.mrb[0].mxu0
  %v1534 = vadd.f32 %v1413, %v1533
  %v1535 = vpop.f32.mrb[0].mxu0
  %1536 = vmatprep.mubr.bf16.mxu0 %v643
  %1537 = vmatmul.mubr.bf16.gmra.mrb[0].mxu0 %v642
  %v1538 = vpop.f32.mrb[0].mxu0
  %v1539 = vadd.f32 %v1418, %v1538
  %v1540 = vpop.f32.mrb[0].mxu0
  %v1541 = vpop.f32.mrb[0].mxu0
  %v1542 = vadd.f32 %v1421, %v1541
  %v1543 = vpop.f32.mrb[0].mxu0
  %1544 = vmatprep.mubr.bf16.mxu0 %v652
  %1545 = vmatmul.mubr.bf16.gmra.mrb[0].mxu0 %v651
  %v1546 = vpop.f32.mrb[0].mxu0
  %v1547 = vadd.f32 %v1426, %v1546
  %v1548 = vpop.f32.mrb[0].mxu0
  %v1549 = vpop.f32.mrb[0].mxu0
  %v1550 = vadd.f32 %v1429, %v1549
  %v1551 = vpop.f32.mrb[0].mxu0
  %1552 = vmatprep.mubr.bf16.mxu0 %v661
  %1553 = vmatmul.mubr.bf16.gmra.mrb[0].mxu0 %v660
  %v1554 = vpop.f32.mrb[0].mxu0
  %v1555 = vadd.f32 %v1434, %v1554
  %v1556 = vpop.f32.mrb[0].mxu0
  %v1557 = vpop.f32.mrb[0].mxu0
  %v1558 = vadd.f32 %v1437, %v1557
  %v1559 = vpop.f32.mrb[0].mxu0
  %1560 = vmatprep.mubr.bf16.mxu0 %v670
  %1561 = vmatmul.mubr.bf16.gmra.mrb[0].mxu0 %v669
  %v1562 = vpop.f32.mrb[0].mxu0
  %v1563 = vadd.f32 %v1442, %v1562
  %v1564 = vpop.f32.mrb[0].mxu0
  %v1565 = vpop.f32.mrb[0].mxu0
  %v1566 = vadd.f32 %v1445, %v1565
  %v1567 = vpop.f32.mrb[0].mxu0
  %1568 = vmatprep.mubr.bf16.mxu0 %v679
  %1569 = vmatmul.mubr.bf16.gmra.mrb[0].mxu0 %v678
  %v1570 = vpop.f32.mrb[0].mxu0
  %v1571 = vadd.f32 %v1450, %v1570
  %v1572 = vpop.f32.mrb[0].mxu0
  %v1573 = vpop.f32.mrb[0].mxu0
  %v1574 = vadd.f32 %v1453, %v1573
  %v1575 = vpop.f32.mrb[0].mxu0
  %1576 = vdwg.mxu0
  %1577 = vmatprep.subr.bf16.mxu0 0
  %1578 = vmatpush1.bf16.msra.mxu0 %v1118
  %1579 = vmatprep.subr.bf16.mxu0 0
  %1580 = vmatpush1.bf16.msra.mxu0 %v1119
  %1581 = vmatprep.subr.bf16.mxu0 0
  %1582 = vmatpush1.bf16.msra.mxu0 %v1120
  %1583 = vmatprep.subr.bf16.mxu0 0
  %1584 = vmatpush1.bf16.msra.mxu0 %v1121
  %1585 = vmatprep.subr.bf16.mxu0 0
  %1586 = vmatpush1.bf16.msra.mxu0 %v1122
  %1587 = vmatprep.subr.bf16.mxu0 0
  %1588 = vmatpush1.bf16.msra.mxu0 %v1123
  %1589 = vmatprep.subr.bf16.mxu0 0
  %1590 = vmatpush1.bf16.msra.mxu0 %v1124
  %1591 = vmatprep.subr.bf16.mxu0 0
  %1592 = vmatpush1.bf16.msra.mxu0 %v1125
  %1593 = vmatprep.subr.bf16.mxu0 0
  %1594 = vmatpush1.bf16.msra.mxu0 %v1126
  %1595 = vmatprep.subr.bf16.mxu0 0
  %1596 = vmatpush1.bf16.msra.mxu0 %v1127
  %1597 = vmatprep.subr.bf16.mxu0 0
  %1598 = vmatpush1.bf16.msra.mxu0 %v1128
  %1599 = vmatprep.subr.bf16.mxu0 0
  %1600 = vmatpush1.bf16.msra.mxu0 %v1129
  %1601 = vmatprep.subr.bf16.mxu0 0
  %1602 = vmatpush1.bf16.msra.mxu0 %v1130
  %1603 = vmatprep.subr.bf16.mxu0 0
  %1604 = vmatpush1.bf16.msra.mxu0 %v1131
  %1605 = vmatprep.subr.bf16.mxu0 0
  %1606 = vmatpush1.bf16.msra.mxu0 %v1132
  %1607 = vmatprep.subr.bf16.mxu0 0
  %1608 = vmatpush1.bf16.msra.mxu0 %v1133
  %1609 = vmatprep.mubr.bf16.mxu0 %v591
  %1610 = vmatmul.mubr.bf16.gmra.mrb[0].mxu0 %v590
  %v1611 = vpop.f32.mrb[0].mxu0
  %v1612 = vadd.f32 %v1491, %v1611
  %v1613 = vpop.f32.mrb[0].mxu0
  %v1614 = vpop.f32.mrb[0].mxu0
  %v1615 = vadd.f32 %v1494, %v1614
  %v1616 = vpop.f32.mrb[0].mxu0
  %1617 = vmatprep.mubr.bf16.mxu0 %v600
  %1618 = vmatmul.mubr.bf16.gmra.mrb[0].mxu0 %v599
  %v1619 = vpop.f32.mrb[0].mxu0
  %v1620 = vadd.f32 %v1499, %v1619
  %v1621 = vpop.f32.mrb[0].mxu0
  %v1622 = vpop.f32.mrb[0].mxu0
  %v1623 = vadd.f32 %v1502, %v1622
  %v1624 = vpop.f32.mrb[0].mxu0
  %1625 = vmatprep.mubr.bf16.mxu0 %v609
  %1626 = vmatmul.mubr.bf16.gmra.mrb[0].mxu0 %v608
  %v1627 = vpop.f32.mrb[0].mxu0
  %v1628 = vadd.f32 %v1507, %v1627
  %v1629 = vpop.f32.mrb[0].mxu0
  %v1630 = vpop.f32.mrb[0].mxu0
  %v1631 = vadd.f32 %v1510, %v1630
  %v1632 = vpop.f32.mrb[0].mxu0
  %1633 = vmatprep.mubr.bf16.mxu0 %v618
  %1634 = vmatmul.mubr.bf16.gmra.mrb[0].mxu0 %v617
  %v1635 = vpop.f32.mrb[0].mxu0
  %v1636 = vadd.f32 %v1515, %v1635
  %v1637 = vpop.f32.mrb[0].mxu0
  %v1638 = vpop.f32.mrb[0].mxu0
  %v1639 = vadd.f32 %v1518, %v1638
  %v1640 = vpop.f32.mrb[0].mxu0
  %1641 = vmatprep.mubr.bf16.mxu0 %v627
  %1642 = vmatmul.mubr.bf16.gmra.mrb[0].mxu0 %v626
  %v1643 = vpop.f32.mrb[0].mxu0
  %v1644 = vadd.f32 %v1523, %v1643
  %v1645 = vpop.f32.mrb[0].mxu0
  %v1646 = vpop.f32.mrb[0].mxu0
  %v1647 = vadd.f32 %v1526, %v1646
  %v1648 = vpop.f32.mrb[0].mxu0
  %1649 = vmatprep.mubr.bf16.mxu0 %v636
  %1650 = vmatmul.mubr.bf16.gmra.mrb[0].mxu0 %v635
  %v1651 = vpop.f32.mrb[0].mxu0
  %v1652 = vadd.f32 %v1531, %v1651
  %v1653 = vpop.f32.mrb[0].mxu0
  %v1654 = vpop.f32.mrb[0].mxu0
  %v1655 = vadd.f32 %v1534, %v1654
  %v1656 = vpop.f32.mrb[0].mxu0
  %1657 = vmatprep.mubr.bf16.mxu0 %v645
  %1658 = vmatmul.mubr.bf16.gmra.mrb[0].mxu0 %v644
  %v1659 = vpop.f32.mrb[0].mxu0
  %v1660 = vadd.f32 %v1539, %v1659
  %v1661 = vpop.f32.mrb[0].mxu0
  %v1662 = vpop.f32.mrb[0].mxu0
  %v1663 = vadd.f32 %v1542, %v1662
  %v1664 = vpop.f32.mrb[0].mxu0
  %1665 = vmatprep.mubr.bf16.mxu0 %v654
  %1666 = vmatmul.mubr.bf16.gmra.mrb[0].mxu0 %v653
  %v1667 = vpop.f32.mrb[0].mxu0
  %v1668 = vadd.f32 %v1547, %v1667
  %v1669 = vpop.f32.mrb[0].mxu0
  %v1670 = vpop.f32.mrb[0].mxu0
  %v1671 = vadd.f32 %v1550, %v1670
  %v1672 = vpop.f32.mrb[0].mxu0
  %1673 = vmatprep.mubr.bf16.mxu0 %v663
  %1674 = vmatmul.mubr.bf16.gmra.mrb[0].mxu0 %v662
  %v1675 = vpop.f32.mrb[0].mxu0
  %v1676 = vadd.f32 %v1555, %v1675
  %v1677 = vpop.f32.mrb[0].mxu0
  %v1678 = vpop.f32.mrb[0].mxu0
  %v1679 = vadd.f32 %v1558, %v1678
  %v1680 = vpop.f32.mrb[0].mxu0
  %1681 = vmatprep.mubr.bf16.mxu0 %v672
  %1682 = vmatmul.mubr.bf16.gmra.mrb[0].mxu0 %v671
  %v1683 = vpop.f32.mrb[0].mxu0
  %v1684 = vadd.f32 %v1563, %v1683
  %v1685 = vpop.f32.mrb[0].mxu0
  %v1686 = vpop.f32.mrb[0].mxu0
  %v1687 = vadd.f32 %v1566, %v1686
  %v1688 = vpop.f32.mrb[0].mxu0
  %1689 = vmatprep.mubr.bf16.mxu0 %v681
  %1690 = vmatmul.mubr.bf16.gmra.mrb[0].mxu0 %v680
  %v1691 = vpop.f32.mrb[0].mxu0
  %v1692 = vadd.f32 %v1571, %v1691
  %v1693 = vpop.f32.mrb[0].mxu0
  %v1694 = vpop.f32.mrb[0].mxu0
  %v1695 = vadd.f32 %v1574, %v1694
  %v1696 = vpop.f32.mrb[0].mxu0
  %1697 = vdwg.mxu0
  %1698 = vmatprep.subr.bf16.mxu0 0
  %1699 = vmatpush1.bf16.msra.mxu0 %v1134
  %1700 = vmatprep.subr.bf16.mxu0 0
  %1701 = vmatpush1.bf16.msra.mxu0 %v1135
  %1702 = vmatprep.subr.bf16.mxu0 0
  %1703 = vmatpush1.bf16.msra.mxu0 %v1136
  %1704 = vmatprep.subr.bf16.mxu0 0
  %1705 = vmatpush1.bf16.msra.mxu0 %v1137
  %1706 = vmatprep.subr.bf16.mxu0 0
  %1707 = vmatpush1.bf16.msra.mxu0 %v1138
  %1708 = vmatprep.subr.bf16.mxu0 0
  %1709 = vmatpush1.bf16.msra.mxu0 %v1139
  %1710 = vmatprep.subr.bf16.mxu0 0
  %1711 = vmatpush1.bf16.msra.mxu0 %v1140
  %1712 = vmatprep.subr.bf16.mxu0 0
  %1713 = vmatpush1.bf16.msra.mxu0 %v1141
  %1714 = vmatprep.subr.bf16.mxu0 0
  %1715 = vmatpush1.bf16.msra.mxu0 0
  %1716 = vmatprep.subr.bf16.mxu0 0
  %1717 = vmatpush1.bf16.msra.mxu0 0
  %1718 = vmatprep.subr.bf16.mxu0 0
  %1719 = vmatpush1.bf16.msra.mxu0 0
  %1720 = vmatprep.subr.bf16.mxu0 0
  %1721 = vmatpush1.bf16.msra.mxu0 0
  %1722 = vmatprep.subr.bf16.mxu0 0
  %1723 = vmatpush1.bf16.msra.mxu0 0
  %1724 = vmatprep.subr.bf16.mxu0 0
  %1725 = vmatpush1.bf16.msra.mxu0 0
  %1726 = vmatprep.subr.bf16.mxu0 0
  %1727 = vmatpush1.bf16.msra.mxu0 0
  %1728 = vmatprep.subr.bf16.mxu0 0
  %1729 = vmatpush1.bf16.msra.mxu0 0
  %1730 = vmatprep.mubr.bf16.mxu0 0
  %1731 = vmatmul.mubr.bf16.gmra.mrb[0].mxu0 %v592
  %v1732 = vpop.f32.mrb[0].mxu0
  %v1733 = vadd.f32 %v1612, %v1732
  %v1734 = vpop.f32.mrb[0].mxu0
  %v1735 = vpop.f32.mrb[0].mxu0
  %v1736 = vadd.f32 %v1615, %v1735
  %v1737 = vpop.f32.mrb[0].mxu0
  %1738 = vmatprep.mubr.bf16.mxu0 0
  %1739 = vmatmul.mubr.bf16.gmra.mrb[0].mxu0 %v601
  %v1740 = vpop.f32.mrb[0].mxu0
  %v1741 = vadd.f32 %v1620, %v1740
  %v1742 = vpop.f32.mrb[0].mxu0
  %v1743 = vpop.f32.mrb[0].mxu0
  %v1744 = vadd.f32 %v1623, %v1743
  %v1745 = vpop.f32.mrb[0].mxu0
  %1746 = vmatprep.mubr.bf16.mxu0 0
  %1747 = vmatmul.mubr.bf16.gmra.mrb[0].mxu0 %v610
  %v1748 = vpop.f32.mrb[0].mxu0
  %v1749 = vadd.f32 %v1628, %v1748
  %v1750 = vpop.f32.mrb[0].mxu0
  %v1751 = vpop.f32.mrb[0].mxu0
  %v1752 = vadd.f32 %v1631, %v1751
  %v1753 = vpop.f32.mrb[0].mxu0
  %1754 = vmatprep.mubr.bf16.mxu0 0
  %1755 = vmatmul.mubr.bf16.gmra.mrb[0].mxu0 %v619
  %v1756 = vpop.f32.mrb[0].mxu0
  %v1757 = vadd.f32 %v1636, %v1756
  %v1758 = vpop.f32.mrb[0].mxu0
  %v1759 = vpop.f32.mrb[0].mxu0
  %v1760 = vadd.f32 %v1639, %v1759
  %v1761 = vpop.f32.mrb[0].mxu0
  %1762 = vmatprep.mubr.bf16.mxu0 0
  %1763 = vmatmul.mubr.bf16.gmra.mrb[0].mxu0 %v628
  %v1764 = vpop.f32.mrb[0].mxu0
  %v1765 = vadd.f32 %v1644, %v1764
  %v1766 = vpop.f32.mrb[0].mxu0
  %v1767 = vpop.f32.mrb[0].mxu0
  %v1768 = vadd.f32 %v1647, %v1767
  %v1769 = vpop.f32.mrb[0].mxu0
  %1770 = vmatprep.mubr.bf16.mxu0 0
  %1771 = vmatmul.mubr.bf16.gmra.mrb[0].mxu0 %v637
  %v1772 = vpop.f32.mrb[0].mxu0
  %v1773 = vadd.f32 %v1652, %v1772
  %v1774 = vpop.f32.mrb[0].mxu0
  %v1775 = vpop.f32.mrb[0].mxu0
  %v1776 = vadd.f32 %v1655, %v1775
  %v1777 = vpop.f32.mrb[0].mxu0
  %1778 = vmatprep.mubr.bf16.mxu0 0
  %1779 = vmatmul.mubr.bf16.gmra.mrb[0].mxu0 %v646
  %v1780 = vpop.f32.mrb[0].mxu0
  %v1781 = vadd.f32 %v1660, %v1780
  %v1782 = vpop.f32.mrb[0].mxu0
  %v1783 = vpop.f32.mrb[0].mxu0
  %v1784 = vadd.f32 %v1663, %v1783
  %v1785 = vpop.f32.mrb[0].mxu0
  %1786 = vmatprep.mubr.bf16.mxu0 0
  %1787 = vmatmul.mubr.bf16.gmra.mrb[0].mxu0 %v655
  %v1788 = vpop.f32.mrb[0].mxu0
  %v1789 = vadd.f32 %v1668, %v1788
  %v1790 = vpop.f32.mrb[0].mxu0
  %v1791 = vpop.f32.mrb[0].mxu0
  %v1792 = vadd.f32 %v1671, %v1791
  %v1793 = vpop.f32.mrb[0].mxu0
  %1794 = vmatprep.mubr.bf16.mxu0 0
  %1795 = vmatmul.mubr.bf16.gmra.mrb[0].mxu0 %v664
  %v1796 = vpop.f32.mrb[0].mxu0
  %v1797 = vadd.f32 %v1676, %v1796
  %v1798 = vpop.f32.mrb[0].mxu0
  %v1799 = vpop.f32.mrb[0].mxu0
  %v1800 = vadd.f32 %v1679, %v1799
  %v1801 = vpop.f32.mrb[0].mxu0
  %1802 = vmatprep.mubr.bf16.mxu0 0
  %1803 = vmatmul.mubr.bf16.gmra.mrb[0].mxu0 %v673
  %v1804 = vpop.f32.mrb[0].mxu0
  %v1805 = vadd.f32 %v1684, %v1804
  %v1806 = vpop.f32.mrb[0].mxu0
  %v1807 = vpop.f32.mrb[0].mxu0
  %v1808 = vadd.f32 %v1687, %v1807
  %v1809 = vpop.f32.mrb[0].mxu0
  %1810 = vmatprep.mubr.bf16.mxu0 0
  %1811 = vmatmul.mubr.bf16.gmra.mrb[0].mxu0 %v682
  %v1812 = vpop.f32.mrb[0].mxu0
  %v1813 = vadd.f32 %v1692, %v1812
  %v1814 = vpop.f32.mrb[0].mxu0
  %v1815 = vpop.f32.mrb[0].mxu0
  %v1816 = vadd.f32 %v1695, %v1815
  %v1817 = vpop.f32.mrb[0].mxu0
  %1818 = vdwg.mxu0
  %1819 = vst [vmem:[%s3] sm:$0xff] %v1733
  %1820 = vst [vmem:[%s3 + $0x8] sm:$0xff] %v1736
  %1821 = vst [vmem:[%s3 + $0x10] sm:$0xff] %v1741
  %1822 = vst [vmem:[%s3 + $0x18] sm:$0xff] %v1744
  %1823 = vst [vmem:[%s3 + $0x20] sm:$0xff] %v1749
  %1824 = vst [vmem:[%s3 + $0x28] sm:$0xff] %v1752
  %1825 = vst [vmem:[%s3 + $0x30] sm:$0xff] %v1757
  %1826 = vst [vmem:[%s3 + $0x38] sm:$0xff] %v1760
  %1827 = vst [vmem:[%s3 + $0x40] sm:$0xff] %v1765
  %1828 = vst [vmem:[%s3 + $0x48] sm:$0xff] %v1768
  %1829 = vst [vmem:[%s3 + $0x50] sm:$0xff] %v1773
  %1830 = vst [vmem:[%s3 + $0x58] sm:$0xff] %v1776
  %1831 = vst [vmem:[%s3 + $0x60] sm:$0xff] %v1781
  %1832 = vst [vmem:[%s3 + $0x68] sm:$0xff] %v1784
  %1833 = vst [vmem:[%s3 + $0x70] sm:$0xff] %v1789
  %1834 = vst [vmem:[%s3 + $0x78] sm:$0xff] %v1792
  %1835 = vst [vmem:[%s3 + $0x80] sm:$0xff] %v1797
  %1836 = vst [vmem:[%s3 + $0x88] sm:$0xff] %v1800
  %1837 = vst [vmem:[%s3 + $0x90] sm:$0xff] %v1805
  %1838 = vst [vmem:[%s3 + $0x98] sm:$0xff] %v1808
  %1839 = vst [vmem:[%s3 + $0xa0] sm:$0xff] %v1813
  %1840 = vst [vmem:[%s3 + $0xa8] sm:$0xff] %v1816
  // Predicated region
  $region14: #{_lambda_.26} parent=0 // pred_check
    _
  $region15: #{_lambda_.26} parent=0 // pred_check_branch
    %1842 = sbr.rel (0) target = $region17
  $region16: #{_lambda_.26} parent=0 // pred_region
    _
  $region17: #{_lambda_.26} parent=0 // pred_fallthru
    _
  // Predicated region
  $region18: #{_lambda_.26} parent=0 // pred_check
    _
  $region19: #{_lambda_.26} parent=0 // pred_check_branch
    %1844 = sbr.rel (0) target = $region21
  $region20: #{_lambda_.26} parent=0 // pred_region
    _
  $region21: #{_lambda_.26} parent=0 // pred_fallthru
    _

// kernel: _lambda_.27
$region0: #{_lambda_.27}
  #allocation0 [shape = 'u32[]', space=smem, size = 0x4, offset = 0x4, fixed_abs, tag = 'smem constant byte address 0x4 - core index']
  #allocation1 [shape = 'u32[144,128]{1,0:T(1,128)}', space=vmem, size = 0x12000, scoped, tag = 'internal scratch']
  #allocation2 [shape = 'f32[1,128]{1,0:T(1,128)}', space=vmem, size = 0x200, scoped, tag = 'scratch operand']
  #allocation3 [shape = 'f32[1,128]{1,0:T(1,128)}', space=vmem, size = 0x200, scoped, tag = 'scratch operand']
  %s0 = inlined_call_operand.vmem [shape: f32[16,128], index: 0, kind: input, shape index: {}]
  %s1 = inlined_call_operand.vmem [shape: f32[16,128], index: 1, kind: input, shape index: {}]
  %s2 = inlined_call_operand.vmem [shape: f32[16,128], index: 2, kind: input, shape index: {}]
  %s3 = inlined_call_operand.vmem [shape: f32[16,128], index: 3, kind: input, shape index: {}]
  %s4 = inlined_call_operand.vmem [shape: f32[16,128], index: 4, kind: input, shape index: {}]
  %s5 = inlined_call_operand.vmem [shape: f32[16,128], index: 5, kind: input, shape index: {}]
  %s6 = inlined_call_operand.vmem [shape: f32[1,128], index: 6, kind: output, shape index: {}]
  %s7 = sld [smem:[#allocation0]]
  $region42: #{_lambda_.27} parent=0
    _
  %s9 = ssub.s32 1, %s7
  %s10 = scalar_select 0, %s9, %s7
  // Predicated region
  $region2: #{_lambda_.27} parent=0 // pred_check
    _
  $region3: #{_lambda_.27} parent=0 // pred_check_branch
    %12 = sbr.rel (0) target = $region5
  $region4: #{_lambda_.27} parent=0 // pred_region
    _
  $region5: #{_lambda_.27} parent=0 // pred_fallthru
    _
  // Predicated region
  $region6: #{_lambda_.27} parent=0 // pred_check
    _
  $region7: #{_lambda_.27} parent=0 // pred_check_branch
    %14 = sbr.rel (0) target = $region9
  $region8: #{_lambda_.27} parent=0 // pred_region
    _
  $region9: #{_lambda_.27} parent=0 // pred_fallthru
    _
  // Predicated region
  $region10: #{_lambda_.27} parent=0 // pred_check
    _
  $region11: #{_lambda_.27} parent=0 // pred_check_branch
    %16 = sbr.rel (0) target = $region13
  $region12: #{_lambda_.27} parent=0 // pred_region
    _
  $region13: #{_lambda_.27} parent=0 // pred_fallthru
    _
  // Predicated region
  $region14: #{_lambda_.27} parent=0 // pred_check
    _
  $region15: #{_lambda_.27} parent=0 // pred_check_branch
    %18 = sbr.rel (0) target = $region17
  $region16: #{_lambda_.27} parent=0 // pred_region
    _
  $region17: #{_lambda_.27} parent=0 // pred_fallthru
    _
  // Predicated region
  $region18: #{_lambda_.27} parent=0 // pred_check
    _
  $region19: #{_lambda_.27} parent=0 // pred_check_branch
    %20 = sbr.rel (0) target = $region21
  $region20: #{_lambda_.27} parent=0 // pred_region
    _
  $region21: #{_lambda_.27} parent=0 // pred_fallthru
    _
  // Predicated region
  $region22: #{_lambda_.27} parent=0 // pred_check
    _
  $region23: #{_lambda_.27} parent=0 // pred_check_branch
    %22 = sbr.rel (0) target = $region25
  $region24: #{_lambda_.27} parent=0 // pred_region
    _
  $region25: #{_lambda_.27} parent=0 // pred_fallthru
    _
  %p23 = scmp.eq.s32.totalorder 0, 0
  // Predicated region
  $region26: #{_lambda_.27} parent=0 // pred_check
    %p24 = pneg %p23
  $region27: #{_lambda_.27} parent=0 // pred_check_branch
    %26 = sbr.rel (%p24) target = $region29
  $region28: #{_lambda_.27} parent=0 // pred_region
    %27 = vst [vmem:[#allocation2] sm:$0x1] 0.0
    %28 = vst [vmem:[#allocation3] sm:$0x1] 0.0
  $region29: #{_lambda_.27} parent=0 // pred_fallthru
    _
  %v29 = vld [vmem:[%s0] sm:$0xff]
  %v30 = vld [vmem:[%s0 + $0x8] sm:$0xff]
  %v31 = vld [vmem:[%s1] sm:$0xff]
  %v32 = vld [vmem:[%s1 + $0x8] sm:$0xff]
  %v33 = vld [vmem:[%s2] sm:$0xff]
  %v34 = vld [vmem:[%s2 + $0x8] sm:$0xff]
  %v35 = vand.u32 2147483647, %v29
  %v36 = vand.u32 2147483647, %v30
  %v37 = vsub.f32 0.0, %v35
  %v38 = vsub.f32 0.0, %v36
  %v39 = vmul.f32 %v37, 1.442695
  %v40 = vpow.pop %v39
  %v41 = vmul.f32 %v38, 1.442695
  %v42 = vpow.pop %v41
  %v43 = vadd.f32 %v40, 1.0
  %v44 = vadd.f32 %v42, 1.0
  %v45 = vrcp.pop %v43
  %v46 = vrcp.pop %v44
  %vm47 = vcmp.ge.f32.partialorder %v29, 0.0
  %vm48 = vcmp.ge.f32.partialorder %v30, 0.0
  %v49 = vmul.f32 %v40, %v45
  %v50 = vmul.f32 %v42, %v46
  %v51 = vsel %vm47, %v45, %v49
  %v52 = vsel %vm48, %v46, %v50
  %v53 = vmul.f32 %v51, %v31
  %v54 = vmul.f32 %v52, %v32
  %v55 = vsub.f32 1.0, %v51
  %v56 = vsub.f32 1.0, %v52
  %v57 = vsub.f32 1.0, %v31
  %v58 = vsub.f32 1.0, %v32
  %v59 = vmul.f32 %v55, %v57
  %v60 = vmul.f32 %v56, %v58
  %v61 = vadd.f32 %v53, %v59
  %v62 = vadd.f32 %v54, %v60
  %v63 = vmax.f32 %v29, 0.0
  %v64 = vmax.f32 %v30, 0.0
  %v65 = vmul.f32 %v29, %v31
  %v66 = vmul.f32 %v30, %v32
  %v67 = vsub.f32 %v63, %v65
  %v68 = vsub.f32 %v64, %v66
  %v69 = vlog2.pop %v43
  %v70 = vmul.f32 %v69, 0.6931472
  %v71 = vlog2.pop %v44
  %v72 = vmul.f32 %v71, 0.6931472
  %v73 = vadd.f32 %v67, %v70
  %v74 = vadd.f32 %v68, %v72
  %v75 = vmul.f32 %v31, 0.25
  %v76 = vmul.f32 %v32, 0.25
  %v77 = vmul.f32 %v57, 0.75
  %v78 = vmul.f32 %v58, 0.75
  %v79 = vadd.f32 %v75, %v77
  %v80 = vadd.f32 %v76, %v78
  %v81 = vsub.f32 1.0, %v61
  %v82 = vsub.f32 1.0, %v62
  %v83 = vmul.f32 %v79, %v81
  %v84 = vmul.f32 %v80, %v82
  %v85 = vmul.f32 %v83, %v81
  %v86 = vmul.f32 %v84, %v82
  %v87 = vmul.f32 %v85, %v73
  %v88 = vmul.f32 %v86, %v74
  %v89 = vld [vmem:[#allocation2] sm:$0x1]
  %v90 = vmul.f32 %v87, %v33
  %v91 = vmul.f32 %v88, %v34
  %v92 = vadd.f32 %v90, %v91
  %v93 = vrot.slane %v92, 4
  %v94 = vadd.f32 %v92, %v93
  %v95 = vrot.slane %v94, 2
  %v96 = vadd.f32 %v94, %v95
  %v97 = vrot.slane %v96, 1
  %v98 = vadd.f32 %v96, %v97
  %v99 = vadd.f32 %v89, %v98
  %100 = vst [vmem:[#allocation2] sm:$0x1] %v99
  %v101 = vld [vmem:[%s3] sm:$0xff]
  %v102 = vld [vmem:[%s3 + $0x8] sm:$0xff]
  %v103 = vld [vmem:[%s4] sm:$0xff]
  %v104 = vld [vmem:[%s4 + $0x8] sm:$0xff]
  %v105 = vsub.f32 %v101, %v103
  %v106 = vsub.f32 %v102, %v104
  %v107 = vand.u32 2147483647, %v105
  %v108 = vand.u32 2147483647, %v106
  %vm109 = vcmp.lt.f32.partialorder %v107, 0.11111111
  %vm110 = vcmp.lt.f32.partialorder %v108, 0.11111111
  %v111 = vmul.f32 %v107, 4.5
  %v112 = vmul.f32 %v108, 4.5
  %v113 = vmul.f32 %v111, %v107
  %v114 = vmul.f32 %v112, %v108
  %v115 = vsub.f32 %v107, 0.055555556
  %v116 = vsub.f32 %v108, 0.055555556
  %v117 = vsel %vm109, %v113, %v115
  %v118 = vsel %vm110, %v114, %v116
  %v119 = vld [vmem:[#allocation3] sm:$0x1]
  %v120 = vld [vmem:[%s5] sm:$0xff]
  %v121 = vld [vmem:[%s5 + $0x8] sm:$0xff]
  %v122 = vmul.f32 %v117, %v120
  %v123 = vmul.f32 %v118, %v121
  %v124 = vadd.f32 %v122, %v123
  %v125 = vrot.slane %v124, 4
  %v126 = vadd.f32 %v124, %v125
  %v127 = vrot.slane %v126, 2
  %v128 = vadd.f32 %v126, %v127
  %v129 = vrot.slane %v128, 1
  %v130 = vadd.f32 %v128, %v129
  %v131 = vadd.f32 %v119, %v130
  %132 = vst [vmem:[#allocation3] sm:$0x1] %v131
  // Predicated region
  $region30: #{_lambda_.27} parent=0 // pred_check
    %p133 = pneg %p23
  $region31: #{_lambda_.27} parent=0 // pred_check_branch
    %135 = sbr.rel (%p133) target = $region33
  $region32: #{_lambda_.27} parent=0 // pred_region
    %v136 = vld [vmem:[#allocation2] sm:$0x1]
    %vm137 = vcmask 1040384
    %v138 = vsel %vm137, %v136, 0.0
    %139 = vadd.xlane.f32.xlu0 %v138
    %v140 = vpop.xlane.xlu0 %139
    %v141 = vrot.slane %v140, 4
    %v142 = vadd.f32 %v140, %v141
    %v143 = vrot.slane %v142, 2
    %v144 = vadd.f32 %v142, %v143
    %v145 = vrot.slane %v144, 1
    %v146 = vadd.f32 %v144, %v145
    %s147 = vtos %v146
    %v148 = vld [vmem:[#allocation3] sm:$0x1]
    %v149 = vsel %vm137, %v148, 0.0
    %150 = vadd.xlane.f32.xlu0 %v149
    %v151 = vpop.xlane.xlu0 %150
    %v152 = vrot.slane %v151, 4
    %v153 = vadd.f32 %v151, %v152
    %v154 = vrot.slane %v153, 2
    %v155 = vadd.f32 %v153, %v154
    %v156 = vrot.slane %v155, 1
    %v157 = vadd.f32 %v155, %v156
    %s158 = vtos %v157
    %v159 = vlaneseq
    %v160 = vand.u32 %v159, 127
    %vm161 = vcmp.eq.s32.totalorder %v160, 0
    %vm162 = vcmp.eq.s32.totalorder %v160, 1
    %v163 = vstv %s158
    %v164 = vsel %vm162, %v163, 0.0
    %v165 = vstv %s147
    %v166 = vsel %vm161, %v165, %v164
    %167 = vst [vmem:[%s6] sm:$0x1] %v166
  $region33: #{_lambda_.27} parent=0 // pred_fallthru
    _
  // Predicated region
  $region34: #{_lambda_.27} parent=0 // pred_check
    _
  $region35: #{_lambda_.27} parent=0 // pred_check_branch
    %169 = sbr.rel (0) target = $region37
  $region36: #{_lambda_.27} parent=0 // pred_region
    _
  $region37: #{_lambda_.27} parent=0 // pred_fallthru
    _
  // Predicated region
  $region38: #{_lambda_.27} parent=0 // pred_check
    _
  $region39: #{_lambda_.27} parent=0 // pred_check_branch
    %171 = sbr.rel (0) target = $region41
  $region40: #{_lambda_.27} parent=0 // pred_region
    _
  $region41: #{_lambda_.27} parent=0 // pred_fallthru
    _

</llo_original>
